<compile_context>
chip_gen: v7x
topology: tpu7x:2x2x1
jax: 0.10.0
libtpu: 0.0.40
codegen_flags: <defaults>
</compile_context>

<pallas_src>
import functools
import math

import numpy as np
import jax
import jax.numpy as jnp
from jax.experimental import pallas as pl
from jax.experimental.pallas import tpu as pltpu

MAX_LENGTH = 1000


# ------------------------------------------------------------------ utilities
def gen_timing_signal(length, channels, min_timescale=1.0, max_timescale=1.0e4):
    """JAX port of _gen_timing_signal (returns (1, length, channels) float32)."""
    position = np.arange(length, dtype=np.float64)
    num_timescales = channels // 2
    log_timescale_increment = math.log(float(max_timescale) / float(min_timescale)) / max(
        float(num_timescales) - 1.0, 1.0
    )
    inv_timescales = min_timescale * np.exp(
        np.arange(num_timescales, dtype=np.float64) * -log_timescale_increment
    )
    scaled_time = position[:, None] * inv_timescales[None, :]
    signal = np.concatenate([np.sin(scaled_time), np.cos(scaled_time)], axis=1)
    signal = np.pad(signal, [[0, 0], [0, channels % 2]], "constant")
    return jnp.asarray(signal.reshape(1, length, channels), dtype=jnp.float32)


def _pick_block_batch(batch, seq, max_block_tokens=512):
    """Fold batch into the matmul M dim while keeping >=2 grid steps (megacore)
    and a bounded per-step token count."""
    if batch <= 1 or seq % 8 != 0:
        return 1
    cap = max(1, max_block_tokens // seq)
    best = 1
    for bt in range(1, min(batch, cap) + 1):
        if batch % bt == 0 and batch // bt >= 2:
            best = bt
    return best


# ------------------------------------------------------------------ kernel
def encoder_act_kernel(
    inputs_ref,                       # (Bt, S, E)   f32
    w_emb_ref,                        # (E, H)       bf16
    time_ref,                         # (Bt*S, H)    f32  (timing signal, host-tiled over Bt)
    pos_ref,                          # (L, H)       f32  position_signal[0]
    pw_ref, pb_ref,                   # (1, H), (1, 1) f32   ACT halting linear (row layout)
    g_mha_ref, b_mha_ref,             # (1, H) f32
    wq_ref, wk_ref, wv_ref, wo_ref,   # (nh,H,dk),(nh,H,dk),(nh,H,dv),(nh,dv,H) bf16; wq pre-scaled
    g_ffn_ref, b_ffn_ref,             # (1, H) f32
    wc1_ref, bc1_ref,                 # (3, H, F) bf16, (1, F) f32
    wc2_ref, bc2_ref,                 # (3, F, H) bf16, (1, H) f32
    mprev_ref, mnext_ref,             # (Bt*S, 1) f32 conv edge masks (zero at seq start / end)
    g_out_ref, b_out_ref,             # (1, H) f32
    y_ref,                            # (Bt, S, H)
    aux_ref,                          # (Bt, S, 2)   col 0 = remainders, col 1 = n_updates
    *, num_heads, num_layers,
):
    f32 = jnp.float32
    bf16 = jnp.bfloat16
    threshold = 1.0 - 0.1

    Bt, S, E = inputs_ref.shape
    T = Bt * S
    H = w_emb_ref.shape[1]
    nh = num_heads
    dk = wq_ref.shape[2]
    dv = wv_ref.shape[2]

    # Token-flattened embedding projection: M = Bt*S rows on the MXU.
    x_in = inputs_ref[...].reshape(T, E)
    state0 = jnp.dot(x_in.astype(bf16), w_emb_ref[...],
                     preferred_element_type=f32)                            # (T, H)

    # Hoisted loop-invariant loads.
    time_enc = time_ref[...]
    pw_row = pw_ref[...]
    pb = pb_ref[...]
    g_mha, b_mha = g_mha_ref[...], b_mha_ref[...]
    g_ffn, b_ffn = g_ffn_ref[...], b_ffn_ref[...]
    bc1, bc2 = bc1_ref[...], bc2_ref[...]
    mask_prev = mprev_ref[...]                                              # (T, 1)
    mask_next = mnext_ref[...]                                              # (T, 1)

    def layer_norm(x, g, b):
        # matches repo LayerNorm: unbiased std, eps added to std
        mean = jnp.mean(x, axis=-1, keepdims=True)
        var = jnp.sum((x - mean) ** 2, axis=-1, keepdims=True) / (x.shape[-1] - 1)
        inv = pl.reciprocal(jnp.sqrt(var) + 1e-6, approx=True)              # EUP slot
        return g * (x - mean) * inv + b

    def conv3(x, w_ref, b):
        # Conv1d(kernel=3, padding 'both') as three accumulated matmuls against
        # the taps; shifted inputs via a sublane roll + per-sequence edge masks
        # (masks also cut the wrap across batch boundaries in the flattened layout).
        xp = pltpu.roll(x, 1, axis=0) * mask_prev                           # x[t-1]
        xn = pltpu.roll(x, T - 1, axis=0) * mask_next                       # x[t+1]
        out = jnp.dot(x.astype(bf16), w_ref[1], preferred_element_type=f32)
        out = out + jnp.dot(xp.astype(bf16), w_ref[0], preferred_element_type=f32)
        out = out + jnp.dot(xn.astype(bf16), w_ref[2], preferred_element_type=f32)
        return out + b

    def mha(xn):
        # 1/sqrt(dk) is folded into wq at the wrapper.  Heads come from static
        # leading-dim indexing of the (nh, ...) weight refs: no value lane slices,
        # no scratch staging, no head merge.
        xb = xn.astype(bf16)
        out = jnp.zeros((T, H), f32)
        for h in range(nh):
            q = jnp.dot(xb, wq_ref[h], preferred_element_type=f32)          # (T, dk)
            k = jnp.dot(xb, wk_ref[h], preferred_element_type=f32)          # (T, dk)
            v = jnp.dot(xb, wv_ref[h], preferred_element_type=f32)          # (T, dv)
            q3 = q.reshape(Bt, S, dk).astype(bf16)
            k3 = k.reshape(Bt, S, dk).astype(bf16)
            v3 = v.reshape(Bt, S, dv).astype(bf16)
            logits = jnp.einsum("bqd,bkd->bqk", q3, k3,
                                preferred_element_type=f32)                 # (Bt, S, S)
            logits = logits - jnp.max(logits, axis=-1, keepdims=True)
            e = jnp.exp(logits)
            w = e * pl.reciprocal(jnp.sum(e, axis=-1, keepdims=True), approx=True)
            ctx = jnp.einsum("bqk,bkd->bqd", w.astype(bf16), v3,
                             preferred_element_type=f32)                    # (Bt, S, dv)
            out = out + jnp.dot(ctx.reshape(T, dv).astype(bf16), wo_ref[h],
                                preferred_element_type=f32)                 # (T, H)
        return out

    def enc_layer(x):
        xn = layer_norm(x, g_mha, b_mha)
        x = x + mha(xn)                                                     # layer_dropout = 0
        xn2 = layer_norm(x, g_ffn, b_ffn)
        h1 = jnp.maximum(conv3(xn2, wc1_ref, bc1), 0.0)
        # ReLU after the last conv as well (repo's `if i < len(self.layers)` quirk).
        h2 = jnp.maximum(conv3(h1, wc2_ref, bc2), 0.0)
        return x + h2

    # ---- ACT_basic ---------------------------------------------------------
    # Fixed max_hop (= num_layers) iterations: once an element halts, its
    # still_running / new_halted / update_weights are all zero, so further steps
    # are elementwise no-ops for prev_state, remainders and n_updates — exactly
    # equivalent to the data-dependent while loop.
    def act_step(step, carry):
        state, prev_state, halting, remainders, n_updates = carry
        state = state + time_enc
        state = state + pos_ref[pl.ds(step, 1), :]                          # (1,H) bcast over T
        # Halting logit: VPU multiply + lane reduce (no N=1 MXU matmul).
        z = jnp.sum(state * pw_row, axis=-1, keepdims=True) + pb            # (T, 1)
        # Exact sigmoid: this feeds hard threshold comparisons, so no approx here.
        p = 1.0 / (1.0 + jnp.exp(-z))

        still_running = (halting < 1.0).astype(f32)
        add = halting + p * still_running
        new_halted = (add > threshold).astype(f32) * still_running
        still_running = (add <= threshold).astype(f32) * still_running
        halting = halting + p * still_running
        remainders = remainders + new_halted * (1.0 - halting)
        halting = halting + new_halted * remainders
        n_updates = n_updates + still_running + new_halted
        update_weights = p * still_running + new_halted * remainders

        state = enc_layer(state)
        prev_state = state * update_weights + prev_state * (1.0 - update_weights)
        return state, prev_state, halting, remainders, n_updates

    zeros_t1 = jnp.zeros((T, 1), f32)
    carry0 = (state0, jnp.zeros_like(state0), zeros_t1, zeros_t1, zeros_t1)
    _, prev_state, _, remainders, n_updates = jax.lax.fori_loop(
        0, num_layers, act_step, carry0, unroll=(num_layers <= 4))

    y = layer_norm(prev_state, g_out_ref[...], b_out_ref[...])
    y_ref[...] = y.reshape(Bt, S, H)
    # Two plain sliced stores (no concatenate / transpose on the epilogue path).
    aux_ref[:, :, 0:1] = remainders.reshape(Bt, S, 1)
    aux_ref[:, :, 1:2] = n_updates.reshape(Bt, S, 1)


# ------------------------------------------------------------------ wrapper
def init_params(key, embedding_size, hidden_size, total_key_depth,
                total_value_depth, filter_size):
    ks = jax.random.split(key, 10)

    def u(k, shape, fan_in):
        return jax.random.uniform(k, shape, jnp.float32, -1.0, 1.0) / np.sqrt(fan_in)

    H, E, Dk, Dv, F = hidden_size, embedding_size, total_key_depth, total_value_depth, filter_size
    return dict(
        w_emb=u(ks[0], (E, H), E),                 # embedding_proj (no bias), stored transposed
        p_w=u(ks[1], (H, 1), H),
        p_b=jnp.ones((1, 1), jnp.float32),         # ACT_basic: p.bias.data.fill_(1)
        g_mha=jnp.ones((1, H), jnp.float32), b_mha=jnp.zeros((1, H), jnp.float32),
        wq=u(ks[2], (H, Dk), H), wk=u(ks[3], (H, Dk), H),
        wv=u(ks[4], (H, Dv), H), wo=u(ks[5], (Dv, H), Dv),
        g_ffn=jnp.ones((1, H), jnp.float32), b_ffn=jnp.zeros((1, H), jnp.float32),
        wc1=u(ks[6], (3, H, F), 3 * H), bc1=u(ks[7], (1, F), 3 * H),
        wc2=u(ks[8], (3, F, H), 3 * F), bc2=u(ks[9], (1, H), 3 * F),
        g_out=jnp.ones((1, H), jnp.float32), b_out=jnp.zeros((1, H), jnp.float32),
    )


def encoder_forward(inputs, mask, params, *, num_heads, num_layers, block_batch=None):
    """Universal + ACT Encoder.forward.  `mask` is unused in this path (fn(state)
    is invoked without a mask inside ACT_basic) and kept for API parity."""
    del mask
    B, S, E = inputs.shape
    H = params["w_emb"].shape[1]
    Dk = params["wq"].shape[1]
    Dv = params["wv"].shape[1]
    F = params["wc1"].shape[2]
    assert E == H, "ACT_basic's zeros_like(inputs) broadcast requires embedding == hidden"
    assert Dk % num_heads == 0 and Dv % num_heads == 0
    dk, dv = Dk // num_heads, Dv // num_heads

    # Batch tile folded into the matmul M dimension (keep >=2 grid steps for megacore).
    Bt = block_batch if block_batch is not None else _pick_block_batch(B, S)
    if S % 8 != 0:
        Bt = 1                       # (Bt,S,*) <-> (Bt*S,*) reshapes need S % 8 == 0
    assert B % Bt == 0
    grid_steps = B // Bt
    T = Bt * S

    bf16 = jnp.bfloat16
    time_sig = gen_timing_signal(MAX_LENGTH, H)[0, :S, :]                    # (S, H)
    time_tiled = jnp.tile(time_sig, (Bt, 1))                                 # (T, H)
    pos_enc = gen_timing_signal(num_layers, H)[0]                            # (L, H)

    # Host-side weight packing: fold the attention scale into wq, split heads on
    # the leading axis (so the kernel never lane-slices values), bf16 MXU operands.
    wq_nh = (params["wq"] * (dk ** -0.5)).reshape(H, num_heads, dk).transpose(1, 0, 2).astype(bf16)
    wk_nh = params["wk"].reshape(H, num_heads, dk).transpose(1, 0, 2).astype(bf16)
    wv_nh = params["wv"].reshape(H, num_heads, dv).transpose(1, 0, 2).astype(bf16)
    wo_nh = params["wo"].reshape(num_heads, dv, H).astype(bf16)
    w_emb_b = params["w_emb"].astype(bf16)
    wc1_b = params["wc1"].astype(bf16)
    wc2_b = params["wc2"].astype(bf16)
    pw_row = params["p_w"].reshape(1, H)

    # Conv edge masks (also cut the batch-boundary wrap in the flattened layout).
    pos_idx = np.arange(T) % S
    mask_prev = jnp.asarray((pos_idx != 0).astype(np.float32).reshape(T, 1))
    mask_next = jnp.asarray((pos_idx != S - 1).astype(np.float32).reshape(T, 1))

    weights = [
        w_emb_b, time_tiled, pos_enc,
        pw_row, params["p_b"],
        params["g_mha"], params["b_mha"],
        wq_nh, wk_nh, wv_nh, wo_nh,
        params["g_ffn"], params["b_ffn"],
        wc1_b, params["bc1"], wc2_b, params["bc2"],
        mask_prev, mask_next,
        params["g_out"], params["b_out"],
    ]

    def full_spec(a):
        nd = a.ndim
        return pl.BlockSpec(a.shape, lambda b, _nd=nd: (0,) * _nd)

    in_specs = [pl.BlockSpec((Bt, S, E), lambda b: (b, 0, 0))] + [full_spec(a) for a in weights]
    out_specs = (
        pl.BlockSpec((Bt, S, H), lambda b: (b, 0, 0)),
        pl.BlockSpec((Bt, S, 2), lambda b: (b, 0, 0)),
    )
    out_shape = (
        jax.ShapeDtypeStruct((B, S, H), jnp.float32),
        jax.ShapeDtypeStruct((B, S, 2), jnp.float32),
    )

    # Advisory cost estimate so XLA schedules around the real work, not grid size.
    flops_layer = 2 * S * (2 * H * Dk + H * Dv + Dv * H + S * Dk + S * Dv
                           + 3 * H * F + 3 * F * H)
    flops = B * (2 * S * E * H + num_layers * flops_layer)
    transcendentals = B * num_layers * (num_heads * S * S + 4 * S)
    weight_bytes = sum(int(w.size) * w.dtype.itemsize for w in weights)
    bytes_accessed = (int(inputs.size) * 4 + weight_bytes * grid_steps
                      + (B * S * H + B * S * 2) * 4)
    cost = pl.CostEstimate(flops=int(flops), transcendentals=int(transcendentals),
                           bytes_accessed=int(bytes_accessed))

    # Real footprint (double-buffered pipeline blocks + resident weights) with
    # headroom; never request the whole 64 MiB of a v7x TensorCore.
    io_bytes = Bt * S * (E + H + 2) * 4
    footprint = 2 * (weight_bytes + io_bytes)
    vmem_limit = int(min(32 << 20, max(16 << 20, 4 * footprint)))

    kernel = functools.partial(encoder_act_kernel, num_heads=num_heads, num_layers=num_layers)
    y, aux = pl.pallas_call(
        kernel,
        grid=(grid_steps,),
        in_specs=in_specs,
        out_specs=out_specs,
        out_shape=out_shape,
        cost_estimate=cost,
        compiler_params=pltpu.CompilerParams(
            dimension_semantics=("parallel",),          # batch blocks across TCs on megacore chips
            vmem_limit_bytes=vmem_limit,
        ),
    )(inputs, *weights)
    return y, aux[..., 0], aux[..., 1]


# ------------------------------------------------------------------ main
if __name__ == "__main__":
    # small, module-consistent shapes (B=4 exercises the batch-folding path: Bt=2, grid=2)
    B, S = 4, 8
    embedding_size = hidden_size = 32
    num_layers = 2
    num_heads = 4
    total_key_depth = 32
    total_value_depth = 32
    filter_size = 64

    key = jax.random.PRNGKey(0)
    k_in, k_par = jax.random.split(key)
    inputs = jax.random.normal(k_in, (B, S, embedding_size), dtype=jnp.float32)
    mask = jnp.zeros((B, 1, S), dtype=jnp.bool_)   # unused in the universal+ACT path

    params = init_params(k_par, embedding_size, hidden_size,
                         total_key_depth, total_value_depth, filter_size)

    y, remainders, n_updates = encoder_forward(
        inputs, mask, params, num_heads=num_heads, num_layers=num_layers)
    jax.block_until_ready((y, remainders, n_updates))

    assert y.shape == (B, S, hidden_size)
    assert remainders.shape == (B, S) and n_updates.shape == (B, S)
    assert bool(jnp.all(jnp.isfinite(y)))
    # ACT invariants (hold exactly regardless of tiny numeric jitter).
    assert bool(jnp.all((n_updates >= 1.0 - 1e-6) & (n_updates <= num_layers + 1e-6)))
    assert bool(jnp.all((remainders >= -1e-6) & (remainders <= 1.0 + 1e-6)))
    print("KERNEL_OK")
</pallas_src>

<mosaic_0001>
module attributes {stable_mosaic.version = 11 : i64} {
  func.func @encoder_act_kernel(%arg0: i32, %arg1: memref<2x8x32xf32, #tpu.memory_space<vmem>>, %arg2: memref<32x32xbf16, #tpu.memory_space<vmem>>, %arg3: memref<16x32xf32, #tpu.memory_space<vmem>>, %arg4: memref<2x32xf32, #tpu.memory_space<vmem>>, %arg5: memref<1x32xf32, #tpu.memory_space<vmem>>, %arg6: memref<1x1xf32, #tpu.memory_space<vmem>>, %arg7: memref<1x32xf32, #tpu.memory_space<vmem>>, %arg8: memref<1x32xf32, #tpu.memory_space<vmem>>, %arg9: memref<4x32x8xbf16, #tpu.memory_space<vmem>>, %arg10: memref<4x32x8xbf16, #tpu.memory_space<vmem>>, %arg11: memref<4x32x8xbf16, #tpu.memory_space<vmem>>, %arg12: memref<4x8x32xbf16, #tpu.memory_space<vmem>>, %arg13: memref<1x32xf32, #tpu.memory_space<vmem>>, %arg14: memref<1x32xf32, #tpu.memory_space<vmem>>, %arg15: memref<3x32x64xbf16, #tpu.memory_space<vmem>>, %arg16: memref<1x64xf32, #tpu.memory_space<vmem>>, %arg17: memref<3x64x32xbf16, #tpu.memory_space<vmem>>, %arg18: memref<1x32xf32, #tpu.memory_space<vmem>>, %arg19: memref<16x1xf32, #tpu.memory_space<vmem>>, %arg20: memref<16x1xf32, #tpu.memory_space<vmem>>, %arg21: memref<1x32xf32, #tpu.memory_space<vmem>>, %arg22: memref<1x32xf32, #tpu.memory_space<vmem>>, %arg23: memref<2x8x32xf32, #tpu.memory_space<vmem>>, %arg24: memref<2x8x2xf32, #tpu.memory_space<vmem>>) attributes {dimension_semantics = [#tpu.dimension_semantics<parallel>], iteration_bounds = array<i64: 2>, scalar_prefetch = 0 : i64, scratch_operands = 0 : i64, tpu.core_type = #tpu.core_type<tc>, window_params = [{transform_indices = @transform_0, window_bounds = array<i64: 2, 8, 32>}, {pipeline_mode = #tpu.pipeline_mode<synchronous>, transform_indices = @transform_1, window_bounds = array<i64: 32, 32>}, {pipeline_mode = #tpu.pipeline_mode<synchronous>, transform_indices = @transform_2, window_bounds = array<i64: 16, 32>}, {pipeline_mode = #tpu.pipeline_mode<synchronous>, transform_indices = @transform_3, window_bounds = array<i64: 2, 32>}, {pipeline_mode = #tpu.pipeline_mode<synchronous>, transform_indices = @transform_4, window_bounds = array<i64: 1, 32>}, {pipeline_mode = #tpu.pipeline_mode<synchronous>, transform_indices = @transform_5, window_bounds = array<i64: 1, 1>}, {pipeline_mode = #tpu.pipeline_mode<synchronous>, transform_indices = @transform_6, window_bounds = array<i64: 1, 32>}, {pipeline_mode = #tpu.pipeline_mode<synchronous>, transform_indices = @transform_7, window_bounds = array<i64: 1, 32>}, {pipeline_mode = #tpu.pipeline_mode<synchronous>, transform_indices = @transform_8, window_bounds = array<i64: 4, 32, 8>}, {pipeline_mode = #tpu.pipeline_mode<synchronous>, transform_indices = @transform_9, window_bounds = array<i64: 4, 32, 8>}, {pipeline_mode = #tpu.pipeline_mode<synchronous>, transform_indices = @transform_10, window_bounds = array<i64: 4, 32, 8>}, {pipeline_mode = #tpu.pipeline_mode<synchronous>, transform_indices = @transform_11, window_bounds = array<i64: 4, 8, 32>}, {pipeline_mode = #tpu.pipeline_mode<synchronous>, transform_indices = @transform_12, window_bounds = array<i64: 1, 32>}, {pipeline_mode = #tpu.pipeline_mode<synchronous>, transform_indices = @transform_13, window_bounds = array<i64: 1, 32>}, {pipeline_mode = #tpu.pipeline_mode<synchronous>, transform_indices = @transform_14, window_bounds = array<i64: 3, 32, 64>}, {pipeline_mode = #tpu.pipeline_mode<synchronous>, transform_indices = @transform_15, window_bounds = array<i64: 1, 64>}, {pipeline_mode = #tpu.pipeline_mode<synchronous>, transform_indices = @transform_16, window_bounds = array<i64: 3, 64, 32>}, {pipeline_mode = #tpu.pipeline_mode<synchronous>, transform_indices = @transform_17, window_bounds = array<i64: 1, 32>}, {pipeline_mode = #tpu.pipeline_mode<synchronous>, transform_indices = @transform_18, window_bounds = array<i64: 16, 1>}, {pipeline_mode = #tpu.pipeline_mode<synchronous>, transform_indices = @transform_19, window_bounds = array<i64: 16, 1>}, {pipeline_mode = #tpu.pipeline_mode<synchronous>, transform_indices = @transform_20, window_bounds = array<i64: 1, 32>}, {pipeline_mode = #tpu.pipeline_mode<synchronous>, transform_indices = @transform_21, window_bounds = array<i64: 1, 32>}, {transform_indices = @transform_22, window_bounds = array<i64: 2, 8, 32>}, {transform_indices = @transform_23, window_bounds = array<i64: 2, 8, 2>}]} {
    %c0 = arith.constant 0 : index
    %c0_0 = arith.constant 0 : index
    %c0_1 = arith.constant 0 : index
    %0 = vector.load %arg1[%c0, %c0_0, %c0_1] : memref<2x8x32xf32, #tpu.memory_space<vmem>>, vector<2x8x32xf32>
    %1 = vector.shape_cast %0 : vector<2x8x32xf32> to vector<16x32xf32>
    %2 = arith.truncf %1 : vector<16x32xf32> to vector<16x32xbf16>
    %c0_2 = arith.constant 0 : index
    %c0_3 = arith.constant 0 : index
    %3 = vector.load %arg2[%c0_2, %c0_3] : memref<32x32xbf16, #tpu.memory_space<vmem>>, vector<32x32xbf16>
    %cst = arith.constant dense<0.000000e+00> : vector<16x32xf32>
    %4 = tpu.matmul %2, %3, %cst {dimension_numbers = #tpu.dot_dimension_numbers<[1], [0], [0], [1], [0, 0, 1, 1], [], []>} : vector<16x32xbf16>, vector<32x32xbf16>, vector<16x32xf32> -> vector<16x32xf32>
    %c0_4 = arith.constant 0 : index
    %c0_5 = arith.constant 0 : index
    %5 = vector.load %arg3[%c0_4, %c0_5] : memref<16x32xf32, #tpu.memory_space<vmem>>, vector<16x32xf32>
    %c0_6 = arith.constant 0 : index
    %c0_7 = arith.constant 0 : index
    %6 = vector.load %arg5[%c0_6, %c0_7] : memref<1x32xf32, #tpu.memory_space<vmem>>, vector<1x32xf32>
    %c0_8 = arith.constant 0 : index
    %c0_9 = arith.constant 0 : index
    %7 = vector.load %arg6[%c0_8, %c0_9] : memref<1x1xf32, #tpu.memory_space<vmem>>, vector<1x1xf32>
    %c0_10 = arith.constant 0 : index
    %c0_11 = arith.constant 0 : index
    %8 = vector.load %arg7[%c0_10, %c0_11] : memref<1x32xf32, #tpu.memory_space<vmem>>, vector<1x32xf32>
    %c0_12 = arith.constant 0 : index
    %c0_13 = arith.constant 0 : index
    %9 = vector.load %arg8[%c0_12, %c0_13] : memref<1x32xf32, #tpu.memory_space<vmem>>, vector<1x32xf32>
    %c0_14 = arith.constant 0 : index
    %c0_15 = arith.constant 0 : index
    %10 = vector.load %arg13[%c0_14, %c0_15] : memref<1x32xf32, #tpu.memory_space<vmem>>, vector<1x32xf32>
    %c0_16 = arith.constant 0 : index
    %c0_17 = arith.constant 0 : index
    %11 = vector.load %arg14[%c0_16, %c0_17] : memref<1x32xf32, #tpu.memory_space<vmem>>, vector<1x32xf32>
    %c0_18 = arith.constant 0 : index
    %c0_19 = arith.constant 0 : index
    %12 = vector.load %arg16[%c0_18, %c0_19] : memref<1x64xf32, #tpu.memory_space<vmem>>, vector<1x64xf32>
    %c0_20 = arith.constant 0 : index
    %c0_21 = arith.constant 0 : index
    %13 = vector.load %arg18[%c0_20, %c0_21] : memref<1x32xf32, #tpu.memory_space<vmem>>, vector<1x32xf32>
    %c0_22 = arith.constant 0 : index
    %c0_23 = arith.constant 0 : index
    %14 = vector.load %arg19[%c0_22, %c0_23] : memref<16x1xf32, #tpu.memory_space<vmem>>, vector<16x1xf32>
    %c0_24 = arith.constant 0 : index
    %c0_25 = arith.constant 0 : index
    %15 = vector.load %arg20[%c0_24, %c0_25] : memref<16x1xf32, #tpu.memory_space<vmem>>, vector<16x1xf32>
    %cst_26 = arith.constant 0.000000e+00 : f32
    %16 = vector.broadcast %cst_26 : f32 to vector<16x1xf32>
    %cst_27 = arith.constant 0.000000e+00 : f32
    %17 = vector.broadcast %cst_27 : f32 to vector<16x32xf32>
    %c0_i32 = arith.constant 0 : i32
    %18 = arith.addf %4, %5 : vector<16x32xf32>
    %19 = arith.index_cast %c0_i32 : i32 to index
    %c0_28 = arith.constant 0 : index
    %20 = vector.load %arg4[%19, %c0_28] : memref<2x32xf32, #tpu.memory_space<vmem>>, vector<1x32xf32>
    %21 = vector.broadcast %20 : vector<1x32xf32> to vector<16x32xf32>
    %22 = arith.addf %18, %21 : vector<16x32xf32>
    %23 = vector.broadcast %6 : vector<1x32xf32> to vector<16x32xf32>
    %24 = arith.mulf %22, %23 : vector<16x32xf32>
    %cst_29 = arith.constant dense<0.000000e+00> : vector<16xf32>
    %25 = vector.multi_reduction <add>, %24, %cst_29 [1] : vector<16x32xf32> to vector<16xf32>
    %26 = vector.shape_cast %25 : vector<16xf32> to vector<16x1xf32>
    %27 = vector.broadcast %7 : vector<1x1xf32> to vector<16x1xf32>
    %28 = arith.addf %26, %27 : vector<16x1xf32>
    %cst_30 = arith.constant 0.000000e+00 : f32
    %29 = vector.broadcast %cst_30 : f32 to vector<16x1xf32>
    %30 = arith.subf %29, %28 : vector<16x1xf32>
    %31 = math.exp %30 : vector<16x1xf32>
    %cst_31 = arith.constant 1.000000e+00 : f32
    %32 = vector.broadcast %cst_31 : f32 to vector<16x1xf32>
    %33 = arith.addf %32, %31 : vector<16x1xf32>
    %cst_32 = arith.constant 1.000000e+00 : f32
    %34 = vector.broadcast %cst_32 : f32 to vector<16x1xf32>
    %35 = arith.divf %34, %33 : vector<16x1xf32>
    %cst_33 = arith.constant 1.000000e+00 : f32
    %36 = vector.broadcast %cst_33 : f32 to vector<16x1xf32>
    %37 = arith.cmpf olt, %16, %36 : vector<16x1xf32>
    %38 = arith.extui %37 : vector<16x1xi1> to vector<16x1xi32>
    %39 = arith.sitofp %38 : vector<16x1xi32> to vector<16x1xf32>
    %40 = arith.mulf %35, %39 : vector<16x1xf32>
    %41 = arith.addf %16, %40 : vector<16x1xf32>
    %cst_34 = arith.constant 0.899999976 : f32
    %42 = vector.broadcast %cst_34 : f32 to vector<16x1xf32>
    %43 = arith.cmpf ogt, %41, %42 : vector<16x1xf32>
    %44 = arith.extui %43 : vector<16x1xi1> to vector<16x1xi32>
    %45 = arith.sitofp %44 : vector<16x1xi32> to vector<16x1xf32>
    %46 = arith.mulf %45, %39 : vector<16x1xf32>
    %cst_35 = arith.constant 0.899999976 : f32
    %47 = vector.broadcast %cst_35 : f32 to vector<16x1xf32>
    %48 = arith.cmpf ole, %41, %47 : vector<16x1xf32>
    %49 = arith.extui %48 : vector<16x1xi1> to vector<16x1xi32>
    %50 = arith.sitofp %49 : vector<16x1xi32> to vector<16x1xf32>
    %51 = arith.mulf %50, %39 : vector<16x1xf32>
    %52 = arith.mulf %35, %51 : vector<16x1xf32>
    %53 = arith.addf %16, %52 : vector<16x1xf32>
    %cst_36 = arith.constant 1.000000e+00 : f32
    %54 = vector.broadcast %cst_36 : f32 to vector<16x1xf32>
    %55 = arith.subf %54, %53 : vector<16x1xf32>
    %56 = arith.mulf %46, %55 : vector<16x1xf32>
    %57 = arith.addf %16, %56 : vector<16x1xf32>
    %58 = arith.mulf %46, %57 : vector<16x1xf32>
    %59 = arith.addf %53, %58 : vector<16x1xf32>
    %60 = arith.addf %16, %51 : vector<16x1xf32>
    %61 = arith.addf %60, %46 : vector<16x1xf32>
    %62 = arith.mulf %35, %51 : vector<16x1xf32>
    %63 = arith.mulf %46, %57 : vector<16x1xf32>
    %64 = arith.addf %62, %63 : vector<16x1xf32>
    %cst_37 = arith.constant dense<0.000000e+00> : vector<16xf32>
    %65 = vector.multi_reduction <add>, %22, %cst_37 [1] : vector<16x32xf32> to vector<16xf32>
    %66 = vector.shape_cast %65 : vector<16xf32> to vector<16x1xf32>
    %cst_38 = arith.constant 3.200000e+01 : f32
    %67 = vector.broadcast %cst_38 : f32 to vector<16x1xf32>
    %68 = arith.divf %66, %67 : vector<16x1xf32>
    %69 = vector.broadcast %68 : vector<16x1xf32> to vector<16x32xf32>
    %70 = arith.subf %22, %69 : vector<16x32xf32>
    %71 = arith.mulf %70, %70 : vector<16x32xf32>
    %cst_39 = arith.constant dense<0.000000e+00> : vector<16xf32>
    %72 = vector.multi_reduction <add>, %71, %cst_39 [1] : vector<16x32xf32> to vector<16xf32>
    %73 = vector.shape_cast %72 : vector<16xf32> to vector<16x1xf32>
    %cst_40 = arith.constant 3.100000e+01 : f32
    %74 = vector.broadcast %cst_40 : f32 to vector<16x1xf32>
    %75 = arith.divf %73, %74 : vector<16x1xf32>
    %76 = math.sqrt %75 : vector<16x1xf32>
    %cst_41 = arith.constant 9.99999997E-7 : f32
    %77 = vector.broadcast %cst_41 : f32 to vector<16x1xf32>
    %78 = arith.addf %76, %77 : vector<16x1xf32>
    %79 = tpu.reciprocal %78 {approx = true} : vector<16x1xf32> -> vector<16x1xf32>
    %80 = vector.broadcast %68 : vector<16x1xf32> to vector<16x32xf32>
    %81 = arith.subf %22, %80 : vector<16x32xf32>
    %82 = vector.broadcast %8 : vector<1x32xf32> to vector<16x32xf32>
    %83 = arith.mulf %82, %81 : vector<16x32xf32>
    %84 = vector.broadcast %79 : vector<16x1xf32> to vector<16x32xf32>
    %85 = arith.mulf %83, %84 : vector<16x32xf32>
    %86 = vector.broadcast %9 : vector<1x32xf32> to vector<16x32xf32>
    %87 = arith.addf %85, %86 : vector<16x32xf32>
    %88 = arith.truncf %87 : vector<16x32xf32> to vector<16x32xbf16>
    %cst_42 = arith.constant 0.000000e+00 : f32
    %89 = vector.broadcast %cst_42 : f32 to vector<16x32xf32>
    %c0_43 = arith.constant 0 : index
    %c0_44 = arith.constant 0 : index
    %c0_45 = arith.constant 0 : index
    %90 = vector.load %arg9[%c0_43, %c0_44, %c0_45] : memref<4x32x8xbf16, #tpu.memory_space<vmem>>, vector<1x32x8xbf16>
    %91 = vector.shape_cast %90 : vector<1x32x8xbf16> to vector<32x8xbf16>
    %cst_46 = arith.constant dense<0.000000e+00> : vector<16x8xf32>
    %92 = tpu.matmul %88, %91, %cst_46 {dimension_numbers = #tpu.dot_dimension_numbers<[1], [0], [0], [1], [0, 0, 1, 1], [], []>} : vector<16x32xbf16>, vector<32x8xbf16>, vector<16x8xf32> -> vector<16x8xf32>
    %c0_47 = arith.constant 0 : index
    %c0_48 = arith.constant 0 : index
    %c0_49 = arith.constant 0 : index
    %93 = vector.load %arg10[%c0_47, %c0_48, %c0_49] : memref<4x32x8xbf16, #tpu.memory_space<vmem>>, vector<1x32x8xbf16>
    %94 = vector.shape_cast %93 : vector<1x32x8xbf16> to vector<32x8xbf16>
    %cst_50 = arith.constant dense<0.000000e+00> : vector<16x8xf32>
    %95 = tpu.matmul %88, %94, %cst_50 {dimension_numbers = #tpu.dot_dimension_numbers<[1], [0], [0], [1], [0, 0, 1, 1], [], []>} : vector<16x32xbf16>, vector<32x8xbf16>, vector<16x8xf32> -> vector<16x8xf32>
    %c0_51 = arith.constant 0 : index
    %c0_52 = arith.constant 0 : index
    %c0_53 = arith.constant 0 : index
    %96 = vector.load %arg11[%c0_51, %c0_52, %c0_53] : memref<4x32x8xbf16, #tpu.memory_space<vmem>>, vector<1x32x8xbf16>
    %97 = vector.shape_cast %96 : vector<1x32x8xbf16> to vector<32x8xbf16>
    %cst_54 = arith.constant dense<0.000000e+00> : vector<16x8xf32>
    %98 = tpu.matmul %88, %97, %cst_54 {dimension_numbers = #tpu.dot_dimension_numbers<[1], [0], [0], [1], [0, 0, 1, 1], [], []>} : vector<16x32xbf16>, vector<32x8xbf16>, vector<16x8xf32> -> vector<16x8xf32>
    %99 = vector.shape_cast %92 : vector<16x8xf32> to vector<2x8x8xf32>
    %100 = arith.truncf %99 : vector<2x8x8xf32> to vector<2x8x8xbf16>
    %101 = vector.shape_cast %95 : vector<16x8xf32> to vector<2x8x8xf32>
    %102 = arith.truncf %101 : vector<2x8x8xf32> to vector<2x8x8xbf16>
    %103 = vector.shape_cast %98 : vector<16x8xf32> to vector<2x8x8xf32>
    %104 = arith.truncf %103 : vector<2x8x8xf32> to vector<2x8x8xbf16>
    "tpu.trace_start"() <{level = 10 : i32, message = "bqd,bkd->bqk"}> : () -> ()
    %cst_55 = arith.constant dense<0.000000e+00> : vector<2x8x8xf32>
    %105 = tpu.matmul %100, %102, %cst_55 {dimension_numbers = #tpu.dot_dimension_numbers<[2], [2], [1], [1], [0, 0, 0, 1, 1, 1], [0], [0]>} : vector<2x8x8xbf16>, vector<2x8x8xbf16>, vector<2x8x8xf32> -> vector<2x8x8xf32>
    "tpu.trace_stop"() : () -> ()
    %cst_56 = arith.constant dense<0xFF800000> : vector<2x8xf32>
    %106 = vector.multi_reduction <maximumf>, %105, %cst_56 [2] : vector<2x8x8xf32> to vector<2x8xf32>
    %107 = vector.shape_cast %106 : vector<2x8xf32> to vector<2x8x1xf32>
    %108 = vector.broadcast %107 : vector<2x8x1xf32> to vector<2x8x8xf32>
    %109 = arith.subf %105, %108 : vector<2x8x8xf32>
    %110 = math.exp %109 : vector<2x8x8xf32>
    %cst_57 = arith.constant dense<0.000000e+00> : vector<2x8xf32>
    %111 = vector.multi_reduction <add>, %110, %cst_57 [2] : vector<2x8x8xf32> to vector<2x8xf32>
    %112 = vector.shape_cast %111 : vector<2x8xf32> to vector<2x8x1xf32>
    %113 = tpu.reciprocal %112 {approx = true} : vector<2x8x1xf32> -> vector<2x8x1xf32>
    %114 = vector.broadcast %113 : vector<2x8x1xf32> to vector<2x8x8xf32>
    %115 = arith.mulf %110, %114 : vector<2x8x8xf32>
    %116 = arith.truncf %115 : vector<2x8x8xf32> to vector<2x8x8xbf16>
    "tpu.trace_start"() <{level = 10 : i32, message = "bqk,bkd->bqd"}> : () -> ()
    %cst_58 = arith.constant dense<0.000000e+00> : vector<2x8x8xf32>
    %117 = tpu.matmul %116, %104, %cst_58 {dimension_numbers = #tpu.dot_dimension_numbers<[2], [1], [1], [2], [0, 0, 0, 1, 1, 2], [0], [0]>} : vector<2x8x8xbf16>, vector<2x8x8xbf16>, vector<2x8x8xf32> -> vector<2x8x8xf32>
    "tpu.trace_stop"() : () -> ()
    %118 = vector.shape_cast %117 : vector<2x8x8xf32> to vector<16x8xf32>
    %119 = arith.truncf %118 : vector<16x8xf32> to vector<16x8xbf16>
    %c0_59 = arith.constant 0 : index
    %c0_60 = arith.constant 0 : index
    %c0_61 = arith.constant 0 : index
    %120 = vector.load %arg12[%c0_59, %c0_60, %c0_61] : memref<4x8x32xbf16, #tpu.memory_space<vmem>>, vector<1x8x32xbf16>
    %121 = vector.shape_cast %120 : vector<1x8x32xbf16> to vector<8x32xbf16>
    %cst_62 = arith.constant dense<0.000000e+00> : vector<16x32xf32>
    %122 = tpu.matmul %119, %121, %cst_62 {dimension_numbers = #tpu.dot_dimension_numbers<[1], [0], [0], [1], [0, 0, 1, 1], [], []>} : vector<16x8xbf16>, vector<8x32xbf16>, vector<16x32xf32> -> vector<16x32xf32>
    %123 = arith.addf %89, %122 : vector<16x32xf32>
    %c1 = arith.constant 1 : index
    %c0_63 = arith.constant 0 : index
    %c0_64 = arith.constant 0 : index
    %124 = vector.load %arg9[%c1, %c0_63, %c0_64] : memref<4x32x8xbf16, #tpu.memory_space<vmem>>, vector<1x32x8xbf16>
    %125 = vector.shape_cast %124 : vector<1x32x8xbf16> to vector<32x8xbf16>
    %cst_65 = arith.constant dense<0.000000e+00> : vector<16x8xf32>
    %126 = tpu.matmul %88, %125, %cst_65 {dimension_numbers = #tpu.dot_dimension_numbers<[1], [0], [0], [1], [0, 0, 1, 1], [], []>} : vector<16x32xbf16>, vector<32x8xbf16>, vector<16x8xf32> -> vector<16x8xf32>
    %c1_66 = arith.constant 1 : index
    %c0_67 = arith.constant 0 : index
    %c0_68 = arith.constant 0 : index
    %127 = vector.load %arg10[%c1_66, %c0_67, %c0_68] : memref<4x32x8xbf16, #tpu.memory_space<vmem>>, vector<1x32x8xbf16>
    %128 = vector.shape_cast %127 : vector<1x32x8xbf16> to vector<32x8xbf16>
    %cst_69 = arith.constant dense<0.000000e+00> : vector<16x8xf32>
    %129 = tpu.matmul %88, %128, %cst_69 {dimension_numbers = #tpu.dot_dimension_numbers<[1], [0], [0], [1], [0, 0, 1, 1], [], []>} : vector<16x32xbf16>, vector<32x8xbf16>, vector<16x8xf32> -> vector<16x8xf32>
    %c1_70 = arith.constant 1 : index
    %c0_71 = arith.constant 0 : index
    %c0_72 = arith.constant 0 : index
    %130 = vector.load %arg11[%c1_70, %c0_71, %c0_72] : memref<4x32x8xbf16, #tpu.memory_space<vmem>>, vector<1x32x8xbf16>
    %131 = vector.shape_cast %130 : vector<1x32x8xbf16> to vector<32x8xbf16>
    %cst_73 = arith.constant dense<0.000000e+00> : vector<16x8xf32>
    %132 = tpu.matmul %88, %131, %cst_73 {dimension_numbers = #tpu.dot_dimension_numbers<[1], [0], [0], [1], [0, 0, 1, 1], [], []>} : vector<16x32xbf16>, vector<32x8xbf16>, vector<16x8xf32> -> vector<16x8xf32>
    %133 = vector.shape_cast %126 : vector<16x8xf32> to vector<2x8x8xf32>
    %134 = arith.truncf %133 : vector<2x8x8xf32> to vector<2x8x8xbf16>
    %135 = vector.shape_cast %129 : vector<16x8xf32> to vector<2x8x8xf32>
    %136 = arith.truncf %135 : vector<2x8x8xf32> to vector<2x8x8xbf16>
    %137 = vector.shape_cast %132 : vector<16x8xf32> to vector<2x8x8xf32>
    %138 = arith.truncf %137 : vector<2x8x8xf32> to vector<2x8x8xbf16>
    "tpu.trace_start"() <{level = 10 : i32, message = "bqd,bkd->bqk"}> : () -> ()
    %cst_74 = arith.constant dense<0.000000e+00> : vector<2x8x8xf32>
    %139 = tpu.matmul %134, %136, %cst_74 {dimension_numbers = #tpu.dot_dimension_numbers<[2], [2], [1], [1], [0, 0, 0, 1, 1, 1], [0], [0]>} : vector<2x8x8xbf16>, vector<2x8x8xbf16>, vector<2x8x8xf32> -> vector<2x8x8xf32>
    "tpu.trace_stop"() : () -> ()
    %cst_75 = arith.constant dense<0xFF800000> : vector<2x8xf32>
    %140 = vector.multi_reduction <maximumf>, %139, %cst_75 [2] : vector<2x8x8xf32> to vector<2x8xf32>
    %141 = vector.shape_cast %140 : vector<2x8xf32> to vector<2x8x1xf32>
    %142 = vector.broadcast %141 : vector<2x8x1xf32> to vector<2x8x8xf32>
    %143 = arith.subf %139, %142 : vector<2x8x8xf32>
    %144 = math.exp %143 : vector<2x8x8xf32>
    %cst_76 = arith.constant dense<0.000000e+00> : vector<2x8xf32>
    %145 = vector.multi_reduction <add>, %144, %cst_76 [2] : vector<2x8x8xf32> to vector<2x8xf32>
    %146 = vector.shape_cast %145 : vector<2x8xf32> to vector<2x8x1xf32>
    %147 = tpu.reciprocal %146 {approx = true} : vector<2x8x1xf32> -> vector<2x8x1xf32>
    %148 = vector.broadcast %147 : vector<2x8x1xf32> to vector<2x8x8xf32>
    %149 = arith.mulf %144, %148 : vector<2x8x8xf32>
    %150 = arith.truncf %149 : vector<2x8x8xf32> to vector<2x8x8xbf16>
    "tpu.trace_start"() <{level = 10 : i32, message = "bqk,bkd->bqd"}> : () -> ()
    %cst_77 = arith.constant dense<0.000000e+00> : vector<2x8x8xf32>
    %151 = tpu.matmul %150, %138, %cst_77 {dimension_numbers = #tpu.dot_dimension_numbers<[2], [1], [1], [2], [0, 0, 0, 1, 1, 2], [0], [0]>} : vector<2x8x8xbf16>, vector<2x8x8xbf16>, vector<2x8x8xf32> -> vector<2x8x8xf32>
    "tpu.trace_stop"() : () -> ()
    %152 = vector.shape_cast %151 : vector<2x8x8xf32> to vector<16x8xf32>
    %153 = arith.truncf %152 : vector<16x8xf32> to vector<16x8xbf16>
    %c1_78 = arith.constant 1 : index
    %c0_79 = arith.constant 0 : index
    %c0_80 = arith.constant 0 : index
    %154 = vector.load %arg12[%c1_78, %c0_79, %c0_80] : memref<4x8x32xbf16, #tpu.memory_space<vmem>>, vector<1x8x32xbf16>
    %155 = vector.shape_cast %154 : vector<1x8x32xbf16> to vector<8x32xbf16>
    %cst_81 = arith.constant dense<0.000000e+00> : vector<16x32xf32>
    %156 = tpu.matmul %153, %155, %cst_81 {dimension_numbers = #tpu.dot_dimension_numbers<[1], [0], [0], [1], [0, 0, 1, 1], [], []>} : vector<16x8xbf16>, vector<8x32xbf16>, vector<16x32xf32> -> vector<16x32xf32>
    %157 = arith.addf %123, %156 : vector<16x32xf32>
    %c2 = arith.constant 2 : index
    %c0_82 = arith.constant 0 : index
    %c0_83 = arith.constant 0 : index
    %158 = vector.load %arg9[%c2, %c0_82, %c0_83] : memref<4x32x8xbf16, #tpu.memory_space<vmem>>, vector<1x32x8xbf16>
    %159 = vector.shape_cast %158 : vector<1x32x8xbf16> to vector<32x8xbf16>
    %cst_84 = arith.constant dense<0.000000e+00> : vector<16x8xf32>
    %160 = tpu.matmul %88, %159, %cst_84 {dimension_numbers = #tpu.dot_dimension_numbers<[1], [0], [0], [1], [0, 0, 1, 1], [], []>} : vector<16x32xbf16>, vector<32x8xbf16>, vector<16x8xf32> -> vector<16x8xf32>
    %c2_85 = arith.constant 2 : index
    %c0_86 = arith.constant 0 : index
    %c0_87 = arith.constant 0 : index
    %161 = vector.load %arg10[%c2_85, %c0_86, %c0_87] : memref<4x32x8xbf16, #tpu.memory_space<vmem>>, vector<1x32x8xbf16>
    %162 = vector.shape_cast %161 : vector<1x32x8xbf16> to vector<32x8xbf16>
    %cst_88 = arith.constant dense<0.000000e+00> : vector<16x8xf32>
    %163 = tpu.matmul %88, %162, %cst_88 {dimension_numbers = #tpu.dot_dimension_numbers<[1], [0], [0], [1], [0, 0, 1, 1], [], []>} : vector<16x32xbf16>, vector<32x8xbf16>, vector<16x8xf32> -> vector<16x8xf32>
    %c2_89 = arith.constant 2 : index
    %c0_90 = arith.constant 0 : index
    %c0_91 = arith.constant 0 : index
    %164 = vector.load %arg11[%c2_89, %c0_90, %c0_91] : memref<4x32x8xbf16, #tpu.memory_space<vmem>>, vector<1x32x8xbf16>
    %165 = vector.shape_cast %164 : vector<1x32x8xbf16> to vector<32x8xbf16>
    %cst_92 = arith.constant dense<0.000000e+00> : vector<16x8xf32>
    %166 = tpu.matmul %88, %165, %cst_92 {dimension_numbers = #tpu.dot_dimension_numbers<[1], [0], [0], [1], [0, 0, 1, 1], [], []>} : vector<16x32xbf16>, vector<32x8xbf16>, vector<16x8xf32> -> vector<16x8xf32>
    %167 = vector.shape_cast %160 : vector<16x8xf32> to vector<2x8x8xf32>
    %168 = arith.truncf %167 : vector<2x8x8xf32> to vector<2x8x8xbf16>
    %169 = vector.shape_cast %163 : vector<16x8xf32> to vector<2x8x8xf32>
    %170 = arith.truncf %169 : vector<2x8x8xf32> to vector<2x8x8xbf16>
    %171 = vector.shape_cast %166 : vector<16x8xf32> to vector<2x8x8xf32>
    %172 = arith.truncf %171 : vector<2x8x8xf32> to vector<2x8x8xbf16>
    "tpu.trace_start"() <{level = 10 : i32, message = "bqd,bkd->bqk"}> : () -> ()
    %cst_93 = arith.constant dense<0.000000e+00> : vector<2x8x8xf32>
    %173 = tpu.matmul %168, %170, %cst_93 {dimension_numbers = #tpu.dot_dimension_numbers<[2], [2], [1], [1], [0, 0, 0, 1, 1, 1], [0], [0]>} : vector<2x8x8xbf16>, vector<2x8x8xbf16>, vector<2x8x8xf32> -> vector<2x8x8xf32>
    "tpu.trace_stop"() : () -> ()
    %cst_94 = arith.constant dense<0xFF800000> : vector<2x8xf32>
    %174 = vector.multi_reduction <maximumf>, %173, %cst_94 [2] : vector<2x8x8xf32> to vector<2x8xf32>
    %175 = vector.shape_cast %174 : vector<2x8xf32> to vector<2x8x1xf32>
    %176 = vector.broadcast %175 : vector<2x8x1xf32> to vector<2x8x8xf32>
    %177 = arith.subf %173, %176 : vector<2x8x8xf32>
    %178 = math.exp %177 : vector<2x8x8xf32>
    %cst_95 = arith.constant dense<0.000000e+00> : vector<2x8xf32>
    %179 = vector.multi_reduction <add>, %178, %cst_95 [2] : vector<2x8x8xf32> to vector<2x8xf32>
    %180 = vector.shape_cast %179 : vector<2x8xf32> to vector<2x8x1xf32>
    %181 = tpu.reciprocal %180 {approx = true} : vector<2x8x1xf32> -> vector<2x8x1xf32>
    %182 = vector.broadcast %181 : vector<2x8x1xf32> to vector<2x8x8xf32>
    %183 = arith.mulf %178, %182 : vector<2x8x8xf32>
    %184 = arith.truncf %183 : vector<2x8x8xf32> to vector<2x8x8xbf16>
    "tpu.trace_start"() <{level = 10 : i32, message = "bqk,bkd->bqd"}> : () -> ()
    %cst_96 = arith.constant dense<0.000000e+00> : vector<2x8x8xf32>
    %185 = tpu.matmul %184, %172, %cst_96 {dimension_numbers = #tpu.dot_dimension_numbers<[2], [1], [1], [2], [0, 0, 0, 1, 1, 2], [0], [0]>} : vector<2x8x8xbf16>, vector<2x8x8xbf16>, vector<2x8x8xf32> -> vector<2x8x8xf32>
    "tpu.trace_stop"() : () -> ()
    %186 = vector.shape_cast %185 : vector<2x8x8xf32> to vector<16x8xf32>
    %187 = arith.truncf %186 : vector<16x8xf32> to vector<16x8xbf16>
    %c2_97 = arith.constant 2 : index
    %c0_98 = arith.constant 0 : index
    %c0_99 = arith.constant 0 : index
    %188 = vector.load %arg12[%c2_97, %c0_98, %c0_99] : memref<4x8x32xbf16, #tpu.memory_space<vmem>>, vector<1x8x32xbf16>
    %189 = vector.shape_cast %188 : vector<1x8x32xbf16> to vector<8x32xbf16>
    %cst_100 = arith.constant dense<0.000000e+00> : vector<16x32xf32>
    %190 = tpu.matmul %187, %189, %cst_100 {dimension_numbers = #tpu.dot_dimension_numbers<[1], [0], [0], [1], [0, 0, 1, 1], [], []>} : vector<16x8xbf16>, vector<8x32xbf16>, vector<16x32xf32> -> vector<16x32xf32>
    %191 = arith.addf %157, %190 : vector<16x32xf32>
    %c3 = arith.constant 3 : index
    %c0_101 = arith.constant 0 : index
    %c0_102 = arith.constant 0 : index
    %192 = vector.load %arg9[%c3, %c0_101, %c0_102] : memref<4x32x8xbf16, #tpu.memory_space<vmem>>, vector<1x32x8xbf16>
    %193 = vector.shape_cast %192 : vector<1x32x8xbf16> to vector<32x8xbf16>
    %cst_103 = arith.constant dense<0.000000e+00> : vector<16x8xf32>
    %194 = tpu.matmul %88, %193, %cst_103 {dimension_numbers = #tpu.dot_dimension_numbers<[1], [0], [0], [1], [0, 0, 1, 1], [], []>} : vector<16x32xbf16>, vector<32x8xbf16>, vector<16x8xf32> -> vector<16x8xf32>
    %c3_104 = arith.constant 3 : index
    %c0_105 = arith.constant 0 : index
    %c0_106 = arith.constant 0 : index
    %195 = vector.load %arg10[%c3_104, %c0_105, %c0_106] : memref<4x32x8xbf16, #tpu.memory_space<vmem>>, vector<1x32x8xbf16>
    %196 = vector.shape_cast %195 : vector<1x32x8xbf16> to vector<32x8xbf16>
    %cst_107 = arith.constant dense<0.000000e+00> : vector<16x8xf32>
    %197 = tpu.matmul %88, %196, %cst_107 {dimension_numbers = #tpu.dot_dimension_numbers<[1], [0], [0], [1], [0, 0, 1, 1], [], []>} : vector<16x32xbf16>, vector<32x8xbf16>, vector<16x8xf32> -> vector<16x8xf32>
    %c3_108 = arith.constant 3 : index
    %c0_109 = arith.constant 0 : index
    %c0_110 = arith.constant 0 : index
    %198 = vector.load %arg11[%c3_108, %c0_109, %c0_110] : memref<4x32x8xbf16, #tpu.memory_space<vmem>>, vector<1x32x8xbf16>
    %199 = vector.shape_cast %198 : vector<1x32x8xbf16> to vector<32x8xbf16>
    %cst_111 = arith.constant dense<0.000000e+00> : vector<16x8xf32>
    %200 = tpu.matmul %88, %199, %cst_111 {dimension_numbers = #tpu.dot_dimension_numbers<[1], [0], [0], [1], [0, 0, 1, 1], [], []>} : vector<16x32xbf16>, vector<32x8xbf16>, vector<16x8xf32> -> vector<16x8xf32>
    %201 = vector.shape_cast %194 : vector<16x8xf32> to vector<2x8x8xf32>
    %202 = arith.truncf %201 : vector<2x8x8xf32> to vector<2x8x8xbf16>
    %203 = vector.shape_cast %197 : vector<16x8xf32> to vector<2x8x8xf32>
    %204 = arith.truncf %203 : vector<2x8x8xf32> to vector<2x8x8xbf16>
    %205 = vector.shape_cast %200 : vector<16x8xf32> to vector<2x8x8xf32>
    %206 = arith.truncf %205 : vector<2x8x8xf32> to vector<2x8x8xbf16>
    "tpu.trace_start"() <{level = 10 : i32, message = "bqd,bkd->bqk"}> : () -> ()
    %cst_112 = arith.constant dense<0.000000e+00> : vector<2x8x8xf32>
    %207 = tpu.matmul %202, %204, %cst_112 {dimension_numbers = #tpu.dot_dimension_numbers<[2], [2], [1], [1], [0, 0, 0, 1, 1, 1], [0], [0]>} : vector<2x8x8xbf16>, vector<2x8x8xbf16>, vector<2x8x8xf32> -> vector<2x8x8xf32>
    "tpu.trace_stop"() : () -> ()
    %cst_113 = arith.constant dense<0xFF800000> : vector<2x8xf32>
    %208 = vector.multi_reduction <maximumf>, %207, %cst_113 [2] : vector<2x8x8xf32> to vector<2x8xf32>
    %209 = vector.shape_cast %208 : vector<2x8xf32> to vector<2x8x1xf32>
    %210 = vector.broadcast %209 : vector<2x8x1xf32> to vector<2x8x8xf32>
    %211 = arith.subf %207, %210 : vector<2x8x8xf32>
    %212 = math.exp %211 : vector<2x8x8xf32>
    %cst_114 = arith.constant dense<0.000000e+00> : vector<2x8xf32>
    %213 = vector.multi_reduction <add>, %212, %cst_114 [2] : vector<2x8x8xf32> to vector<2x8xf32>
    %214 = vector.shape_cast %213 : vector<2x8xf32> to vector<2x8x1xf32>
    %215 = tpu.reciprocal %214 {approx = true} : vector<2x8x1xf32> -> vector<2x8x1xf32>
    %216 = vector.broadcast %215 : vector<2x8x1xf32> to vector<2x8x8xf32>
    %217 = arith.mulf %212, %216 : vector<2x8x8xf32>
    %218 = arith.truncf %217 : vector<2x8x8xf32> to vector<2x8x8xbf16>
    "tpu.trace_start"() <{level = 10 : i32, message = "bqk,bkd->bqd"}> : () -> ()
    %cst_115 = arith.constant dense<0.000000e+00> : vector<2x8x8xf32>
    %219 = tpu.matmul %218, %206, %cst_115 {dimension_numbers = #tpu.dot_dimension_numbers<[2], [1], [1], [2], [0, 0, 0, 1, 1, 2], [0], [0]>} : vector<2x8x8xbf16>, vector<2x8x8xbf16>, vector<2x8x8xf32> -> vector<2x8x8xf32>
    "tpu.trace_stop"() : () -> ()
    %220 = vector.shape_cast %219 : vector<2x8x8xf32> to vector<16x8xf32>
    %221 = arith.truncf %220 : vector<16x8xf32> to vector<16x8xbf16>
    %c3_116 = arith.constant 3 : index
    %c0_117 = arith.constant 0 : index
    %c0_118 = arith.constant 0 : index
    %222 = vector.load %arg12[%c3_116, %c0_117, %c0_118] : memref<4x8x32xbf16, #tpu.memory_space<vmem>>, vector<1x8x32xbf16>
    %223 = vector.shape_cast %222 : vector<1x8x32xbf16> to vector<8x32xbf16>
    %cst_119 = arith.constant dense<0.000000e+00> : vector<16x32xf32>
    %224 = tpu.matmul %221, %223, %cst_119 {dimension_numbers = #tpu.dot_dimension_numbers<[1], [0], [0], [1], [0, 0, 1, 1], [], []>} : vector<16x8xbf16>, vector<8x32xbf16>, vector<16x32xf32> -> vector<16x32xf32>
    %225 = arith.addf %191, %224 : vector<16x32xf32>
    %226 = arith.addf %22, %225 : vector<16x32xf32>
    %cst_120 = arith.constant dense<0.000000e+00> : vector<16xf32>
    %227 = vector.multi_reduction <add>, %226, %cst_120 [1] : vector<16x32xf32> to vector<16xf32>
    %228 = vector.shape_cast %227 : vector<16xf32> to vector<16x1xf32>
    %cst_121 = arith.constant 3.200000e+01 : f32
    %229 = vector.broadcast %cst_121 : f32 to vector<16x1xf32>
    %230 = arith.divf %228, %229 : vector<16x1xf32>
    %231 = vector.broadcast %230 : vector<16x1xf32> to vector<16x32xf32>
    %232 = arith.subf %226, %231 : vector<16x32xf32>
    %233 = arith.mulf %232, %232 : vector<16x32xf32>
    %cst_122 = arith.constant dense<0.000000e+00> : vector<16xf32>
    %234 = vector.multi_reduction <add>, %233, %cst_122 [1] : vector<16x32xf32> to vector<16xf32>
    %235 = vector.shape_cast %234 : vector<16xf32> to vector<16x1xf32>
    %cst_123 = arith.constant 3.100000e+01 : f32
    %236 = vector.broadcast %cst_123 : f32 to vector<16x1xf32>
    %237 = arith.divf %235, %236 : vector<16x1xf32>
    %238 = math.sqrt %237 : vector<16x1xf32>
    %cst_124 = arith.constant 9.99999997E-7 : f32
    %239 = vector.broadcast %cst_124 : f32 to vector<16x1xf32>
    %240 = arith.addf %238, %239 : vector<16x1xf32>
    %241 = tpu.reciprocal %240 {approx = true} : vector<16x1xf32> -> vector<16x1xf32>
    %242 = vector.broadcast %230 : vector<16x1xf32> to vector<16x32xf32>
    %243 = arith.subf %226, %242 : vector<16x32xf32>
    %244 = vector.broadcast %10 : vector<1x32xf32> to vector<16x32xf32>
    %245 = arith.mulf %244, %243 : vector<16x32xf32>
    %246 = vector.broadcast %241 : vector<16x1xf32> to vector<16x32xf32>
    %247 = arith.mulf %245, %246 : vector<16x32xf32>
    %248 = vector.broadcast %11 : vector<1x32xf32> to vector<16x32xf32>
    %249 = arith.addf %247, %248 : vector<16x32xf32>
    %c1_i32 = arith.constant 1 : i32
    %250 = tpu.dynamic_rotate %249 by %c1_i32 dim 0 : vector<16x32xf32>, i32 -> vector<16x32xf32>
    %251 = vector.broadcast %14 : vector<16x1xf32> to vector<16x32xf32>
    %252 = arith.mulf %250, %251 : vector<16x32xf32>
    %c15_i32 = arith.constant 15 : i32
    %253 = tpu.dynamic_rotate %249 by %c15_i32 dim 0 : vector<16x32xf32>, i32 -> vector<16x32xf32>
    %254 = vector.broadcast %15 : vector<16x1xf32> to vector<16x32xf32>
    %255 = arith.mulf %253, %254 : vector<16x32xf32>
    %256 = arith.truncf %249 : vector<16x32xf32> to vector<16x32xbf16>
    %c1_125 = arith.constant 1 : index
    %c0_126 = arith.constant 0 : index
    %c0_127 = arith.constant 0 : index
    %257 = vector.load %arg15[%c1_125, %c0_126, %c0_127] : memref<3x32x64xbf16, #tpu.memory_space<vmem>>, vector<1x32x64xbf16>
    %258 = vector.shape_cast %257 : vector<1x32x64xbf16> to vector<32x64xbf16>
    %cst_128 = arith.constant dense<0.000000e+00> : vector<16x64xf32>
    %259 = tpu.matmul %256, %258, %cst_128 {dimension_numbers = #tpu.dot_dimension_numbers<[1], [0], [0], [1], [0, 0, 1, 1], [], []>} : vector<16x32xbf16>, vector<32x64xbf16>, vector<16x64xf32> -> vector<16x64xf32>
    %260 = arith.truncf %252 : vector<16x32xf32> to vector<16x32xbf16>
    %c0_129 = arith.constant 0 : index
    %c0_130 = arith.constant 0 : index
    %c0_131 = arith.constant 0 : index
    %261 = vector.load %arg15[%c0_129, %c0_130, %c0_131] : memref<3x32x64xbf16, #tpu.memory_space<vmem>>, vector<1x32x64xbf16>
    %262 = vector.shape_cast %261 : vector<1x32x64xbf16> to vector<32x64xbf16>
    %cst_132 = arith.constant dense<0.000000e+00> : vector<16x64xf32>
    %263 = tpu.matmul %260, %262, %cst_132 {dimension_numbers = #tpu.dot_dimension_numbers<[1], [0], [0], [1], [0, 0, 1, 1], [], []>} : vector<16x32xbf16>, vector<32x64xbf16>, vector<16x64xf32> -> vector<16x64xf32>
    %264 = arith.addf %259, %263 : vector<16x64xf32>
    %265 = arith.truncf %255 : vector<16x32xf32> to vector<16x32xbf16>
    %c2_133 = arith.constant 2 : index
    %c0_134 = arith.constant 0 : index
    %c0_135 = arith.constant 0 : index
    %266 = vector.load %arg15[%c2_133, %c0_134, %c0_135] : memref<3x32x64xbf16, #tpu.memory_space<vmem>>, vector<1x32x64xbf16>
    %267 = vector.shape_cast %266 : vector<1x32x64xbf16> to vector<32x64xbf16>
    %cst_136 = arith.constant dense<0.000000e+00> : vector<16x64xf32>
    %268 = tpu.matmul %265, %267, %cst_136 {dimension_numbers = #tpu.dot_dimension_numbers<[1], [0], [0], [1], [0, 0, 1, 1], [], []>} : vector<16x32xbf16>, vector<32x64xbf16>, vector<16x64xf32> -> vector<16x64xf32>
    %269 = arith.addf %264, %268 : vector<16x64xf32>
    %270 = vector.broadcast %12 : vector<1x64xf32> to vector<16x64xf32>
    %271 = arith.addf %269, %270 : vector<16x64xf32>
    %cst_137 = arith.constant 0.000000e+00 : f32
    %272 = vector.broadcast %cst_137 : f32 to vector<16x64xf32>
    %273 = arith.maximumf %271, %272 : vector<16x64xf32>
    %c1_i32_138 = arith.constant 1 : i32
    %274 = tpu.dynamic_rotate %273 by %c1_i32_138 dim 0 : vector<16x64xf32>, i32 -> vector<16x64xf32>
    %275 = vector.broadcast %14 : vector<16x1xf32> to vector<16x64xf32>
    %276 = arith.mulf %274, %275 : vector<16x64xf32>
    %c15_i32_139 = arith.constant 15 : i32
    %277 = tpu.dynamic_rotate %273 by %c15_i32_139 dim 0 : vector<16x64xf32>, i32 -> vector<16x64xf32>
    %278 = vector.broadcast %15 : vector<16x1xf32> to vector<16x64xf32>
    %279 = arith.mulf %277, %278 : vector<16x64xf32>
    %280 = arith.truncf %273 : vector<16x64xf32> to vector<16x64xbf16>
    %c1_140 = arith.constant 1 : index
    %c0_141 = arith.constant 0 : index
    %c0_142 = arith.constant 0 : index
    %281 = vector.load %arg17[%c1_140, %c0_141, %c0_142] : memref<3x64x32xbf16, #tpu.memory_space<vmem>>, vector<1x64x32xbf16>
    %282 = vector.shape_cast %281 : vector<1x64x32xbf16> to vector<64x32xbf16>
    %cst_143 = arith.constant dense<0.000000e+00> : vector<16x32xf32>
    %283 = tpu.matmul %280, %282, %cst_143 {dimension_numbers = #tpu.dot_dimension_numbers<[1], [0], [0], [1], [0, 0, 1, 1], [], []>} : vector<16x64xbf16>, vector<64x32xbf16>, vector<16x32xf32> -> vector<16x32xf32>
    %284 = arith.truncf %276 : vector<16x64xf32> to vector<16x64xbf16>
    %c0_144 = arith.constant 0 : index
    %c0_145 = arith.constant 0 : index
    %c0_146 = arith.constant 0 : index
    %285 = vector.load %arg17[%c0_144, %c0_145, %c0_146] : memref<3x64x32xbf16, #tpu.memory_space<vmem>>, vector<1x64x32xbf16>
    %286 = vector.shape_cast %285 : vector<1x64x32xbf16> to vector<64x32xbf16>
    %cst_147 = arith.constant dense<0.000000e+00> : vector<16x32xf32>
    %287 = tpu.matmul %284, %286, %cst_147 {dimension_numbers = #tpu.dot_dimension_numbers<[1], [0], [0], [1], [0, 0, 1, 1], [], []>} : vector<16x64xbf16>, vector<64x32xbf16>, vector<16x32xf32> -> vector<16x32xf32>
    %288 = arith.addf %283, %287 : vector<16x32xf32>
    %289 = arith.truncf %279 : vector<16x64xf32> to vector<16x64xbf16>
    %c2_148 = arith.constant 2 : index
    %c0_149 = arith.constant 0 : index
    %c0_150 = arith.constant 0 : index
    %290 = vector.load %arg17[%c2_148, %c0_149, %c0_150] : memref<3x64x32xbf16, #tpu.memory_space<vmem>>, vector<1x64x32xbf16>
    %291 = vector.shape_cast %290 : vector<1x64x32xbf16> to vector<64x32xbf16>
    %cst_151 = arith.constant dense<0.000000e+00> : vector<16x32xf32>
    %292 = tpu.matmul %289, %291, %cst_151 {dimension_numbers = #tpu.dot_dimension_numbers<[1], [0], [0], [1], [0, 0, 1, 1], [], []>} : vector<16x64xbf16>, vector<64x32xbf16>, vector<16x32xf32> -> vector<16x32xf32>
    %293 = arith.addf %288, %292 : vector<16x32xf32>
    %294 = vector.broadcast %13 : vector<1x32xf32> to vector<16x32xf32>
    %295 = arith.addf %293, %294 : vector<16x32xf32>
    %cst_152 = arith.constant 0.000000e+00 : f32
    %296 = vector.broadcast %cst_152 : f32 to vector<16x32xf32>
    %297 = arith.maximumf %295, %296 : vector<16x32xf32>
    %298 = arith.addf %226, %297 : vector<16x32xf32>
    %299 = vector.broadcast %64 : vector<16x1xf32> to vector<16x32xf32>
    %300 = arith.mulf %298, %299 : vector<16x32xf32>
    %cst_153 = arith.constant 1.000000e+00 : f32
    %301 = vector.broadcast %cst_153 : f32 to vector<16x1xf32>
    %302 = arith.subf %301, %64 : vector<16x1xf32>
    %303 = vector.broadcast %302 : vector<16x1xf32> to vector<16x32xf32>
    %304 = arith.mulf %17, %303 : vector<16x32xf32>
    %305 = arith.addf %300, %304 : vector<16x32xf32>
    %c1_i32_154 = arith.constant 1 : i32
    %306 = arith.addf %298, %5 : vector<16x32xf32>
    %307 = arith.index_cast %c1_i32_154 : i32 to index
    %c0_155 = arith.constant 0 : index
    %308 = vector.load %arg4[%307, %c0_155] : memref<2x32xf32, #tpu.memory_space<vmem>>, vector<1x32xf32>
    %309 = vector.broadcast %308 : vector<1x32xf32> to vector<16x32xf32>
    %310 = arith.addf %306, %309 : vector<16x32xf32>
    %311 = vector.broadcast %6 : vector<1x32xf32> to vector<16x32xf32>
    %312 = arith.mulf %310, %311 : vector<16x32xf32>
    %cst_156 = arith.constant dense<0.000000e+00> : vector<16xf32>
    %313 = vector.multi_reduction <add>, %312, %cst_156 [1] : vector<16x32xf32> to vector<16xf32>
    %314 = vector.shape_cast %313 : vector<16xf32> to vector<16x1xf32>
    %315 = vector.broadcast %7 : vector<1x1xf32> to vector<16x1xf32>
    %316 = arith.addf %314, %315 : vector<16x1xf32>
    %cst_157 = arith.constant 0.000000e+00 : f32
    %317 = vector.broadcast %cst_157 : f32 to vector<16x1xf32>
    %318 = arith.subf %317, %316 : vector<16x1xf32>
    %319 = math.exp %318 : vector<16x1xf32>
    %cst_158 = arith.constant 1.000000e+00 : f32
    %320 = vector.broadcast %cst_158 : f32 to vector<16x1xf32>
    %321 = arith.addf %320, %319 : vector<16x1xf32>
    %cst_159 = arith.constant 1.000000e+00 : f32
    %322 = vector.broadcast %cst_159 : f32 to vector<16x1xf32>
    %323 = arith.divf %322, %321 : vector<16x1xf32>
    %cst_160 = arith.constant 1.000000e+00 : f32
    %324 = vector.broadcast %cst_160 : f32 to vector<16x1xf32>
    %325 = arith.cmpf olt, %59, %324 : vector<16x1xf32>
    %326 = arith.extui %325 : vector<16x1xi1> to vector<16x1xi32>
    %327 = arith.sitofp %326 : vector<16x1xi32> to vector<16x1xf32>
    %328 = arith.mulf %323, %327 : vector<16x1xf32>
    %329 = arith.addf %59, %328 : vector<16x1xf32>
    %cst_161 = arith.constant 0.899999976 : f32
    %330 = vector.broadcast %cst_161 : f32 to vector<16x1xf32>
    %331 = arith.cmpf ogt, %329, %330 : vector<16x1xf32>
    %332 = arith.extui %331 : vector<16x1xi1> to vector<16x1xi32>
    %333 = arith.sitofp %332 : vector<16x1xi32> to vector<16x1xf32>
    %334 = arith.mulf %333, %327 : vector<16x1xf32>
    %cst_162 = arith.constant 0.899999976 : f32
    %335 = vector.broadcast %cst_162 : f32 to vector<16x1xf32>
    %336 = arith.cmpf ole, %329, %335 : vector<16x1xf32>
    %337 = arith.extui %336 : vector<16x1xi1> to vector<16x1xi32>
    %338 = arith.sitofp %337 : vector<16x1xi32> to vector<16x1xf32>
    %339 = arith.mulf %338, %327 : vector<16x1xf32>
    %340 = arith.mulf %323, %339 : vector<16x1xf32>
    %341 = arith.addf %59, %340 : vector<16x1xf32>
    %cst_163 = arith.constant 1.000000e+00 : f32
    %342 = vector.broadcast %cst_163 : f32 to vector<16x1xf32>
    %343 = arith.subf %342, %341 : vector<16x1xf32>
    %344 = arith.mulf %334, %343 : vector<16x1xf32>
    %345 = arith.addf %57, %344 : vector<16x1xf32>
    %346 = arith.mulf %334, %345 : vector<16x1xf32>
    %347 = arith.addf %341, %346 : vector<16x1xf32>
    %348 = arith.addf %61, %339 : vector<16x1xf32>
    %349 = arith.addf %348, %334 : vector<16x1xf32>
    %350 = arith.mulf %323, %339 : vector<16x1xf32>
    %351 = arith.mulf %334, %345 : vector<16x1xf32>
    %352 = arith.addf %350, %351 : vector<16x1xf32>
    %cst_164 = arith.constant dense<0.000000e+00> : vector<16xf32>
    %353 = vector.multi_reduction <add>, %310, %cst_164 [1] : vector<16x32xf32> to vector<16xf32>
    %354 = vector.shape_cast %353 : vector<16xf32> to vector<16x1xf32>
    %cst_165 = arith.constant 3.200000e+01 : f32
    %355 = vector.broadcast %cst_165 : f32 to vector<16x1xf32>
    %356 = arith.divf %354, %355 : vector<16x1xf32>
    %357 = vector.broadcast %356 : vector<16x1xf32> to vector<16x32xf32>
    %358 = arith.subf %310, %357 : vector<16x32xf32>
    %359 = arith.mulf %358, %358 : vector<16x32xf32>
    %cst_166 = arith.constant dense<0.000000e+00> : vector<16xf32>
    %360 = vector.multi_reduction <add>, %359, %cst_166 [1] : vector<16x32xf32> to vector<16xf32>
    %361 = vector.shape_cast %360 : vector<16xf32> to vector<16x1xf32>
    %cst_167 = arith.constant 3.100000e+01 : f32
    %362 = vector.broadcast %cst_167 : f32 to vector<16x1xf32>
    %363 = arith.divf %361, %362 : vector<16x1xf32>
    %364 = math.sqrt %363 : vector<16x1xf32>
    %cst_168 = arith.constant 9.99999997E-7 : f32
    %365 = vector.broadcast %cst_168 : f32 to vector<16x1xf32>
    %366 = arith.addf %364, %365 : vector<16x1xf32>
    %367 = tpu.reciprocal %366 {approx = true} : vector<16x1xf32> -> vector<16x1xf32>
    %368 = vector.broadcast %356 : vector<16x1xf32> to vector<16x32xf32>
    %369 = arith.subf %310, %368 : vector<16x32xf32>
    %370 = vector.broadcast %8 : vector<1x32xf32> to vector<16x32xf32>
    %371 = arith.mulf %370, %369 : vector<16x32xf32>
    %372 = vector.broadcast %367 : vector<16x1xf32> to vector<16x32xf32>
    %373 = arith.mulf %371, %372 : vector<16x32xf32>
    %374 = vector.broadcast %9 : vector<1x32xf32> to vector<16x32xf32>
    %375 = arith.addf %373, %374 : vector<16x32xf32>
    %376 = arith.truncf %375 : vector<16x32xf32> to vector<16x32xbf16>
    %cst_169 = arith.constant 0.000000e+00 : f32
    %377 = vector.broadcast %cst_169 : f32 to vector<16x32xf32>
    %c0_170 = arith.constant 0 : index
    %c0_171 = arith.constant 0 : index
    %c0_172 = arith.constant 0 : index
    %378 = vector.load %arg9[%c0_170, %c0_171, %c0_172] : memref<4x32x8xbf16, #tpu.memory_space<vmem>>, vector<1x32x8xbf16>
    %379 = vector.shape_cast %378 : vector<1x32x8xbf16> to vector<32x8xbf16>
    %cst_173 = arith.constant dense<0.000000e+00> : vector<16x8xf32>
    %380 = tpu.matmul %376, %379, %cst_173 {dimension_numbers = #tpu.dot_dimension_numbers<[1], [0], [0], [1], [0, 0, 1, 1], [], []>} : vector<16x32xbf16>, vector<32x8xbf16>, vector<16x8xf32> -> vector<16x8xf32>
    %c0_174 = arith.constant 0 : index
    %c0_175 = arith.constant 0 : index
    %c0_176 = arith.constant 0 : index
    %381 = vector.load %arg10[%c0_174, %c0_175, %c0_176] : memref<4x32x8xbf16, #tpu.memory_space<vmem>>, vector<1x32x8xbf16>
    %382 = vector.shape_cast %381 : vector<1x32x8xbf16> to vector<32x8xbf16>
    %cst_177 = arith.constant dense<0.000000e+00> : vector<16x8xf32>
    %383 = tpu.matmul %376, %382, %cst_177 {dimension_numbers = #tpu.dot_dimension_numbers<[1], [0], [0], [1], [0, 0, 1, 1], [], []>} : vector<16x32xbf16>, vector<32x8xbf16>, vector<16x8xf32> -> vector<16x8xf32>
    %c0_178 = arith.constant 0 : index
    %c0_179 = arith.constant 0 : index
    %c0_180 = arith.constant 0 : index
    %384 = vector.load %arg11[%c0_178, %c0_179, %c0_180] : memref<4x32x8xbf16, #tpu.memory_space<vmem>>, vector<1x32x8xbf16>
    %385 = vector.shape_cast %384 : vector<1x32x8xbf16> to vector<32x8xbf16>
    %cst_181 = arith.constant dense<0.000000e+00> : vector<16x8xf32>
    %386 = tpu.matmul %376, %385, %cst_181 {dimension_numbers = #tpu.dot_dimension_numbers<[1], [0], [0], [1], [0, 0, 1, 1], [], []>} : vector<16x32xbf16>, vector<32x8xbf16>, vector<16x8xf32> -> vector<16x8xf32>
    %387 = vector.shape_cast %380 : vector<16x8xf32> to vector<2x8x8xf32>
    %388 = arith.truncf %387 : vector<2x8x8xf32> to vector<2x8x8xbf16>
    %389 = vector.shape_cast %383 : vector<16x8xf32> to vector<2x8x8xf32>
    %390 = arith.truncf %389 : vector<2x8x8xf32> to vector<2x8x8xbf16>
    %391 = vector.shape_cast %386 : vector<16x8xf32> to vector<2x8x8xf32>
    %392 = arith.truncf %391 : vector<2x8x8xf32> to vector<2x8x8xbf16>
    "tpu.trace_start"() <{level = 10 : i32, message = "bqd,bkd->bqk"}> : () -> ()
    %cst_182 = arith.constant dense<0.000000e+00> : vector<2x8x8xf32>
    %393 = tpu.matmul %388, %390, %cst_182 {dimension_numbers = #tpu.dot_dimension_numbers<[2], [2], [1], [1], [0, 0, 0, 1, 1, 1], [0], [0]>} : vector<2x8x8xbf16>, vector<2x8x8xbf16>, vector<2x8x8xf32> -> vector<2x8x8xf32>
    "tpu.trace_stop"() : () -> ()
    %cst_183 = arith.constant dense<0xFF800000> : vector<2x8xf32>
    %394 = vector.multi_reduction <maximumf>, %393, %cst_183 [2] : vector<2x8x8xf32> to vector<2x8xf32>
    %395 = vector.shape_cast %394 : vector<2x8xf32> to vector<2x8x1xf32>
    %396 = vector.broadcast %395 : vector<2x8x1xf32> to vector<2x8x8xf32>
    %397 = arith.subf %393, %396 : vector<2x8x8xf32>
    %398 = math.exp %397 : vector<2x8x8xf32>
    %cst_184 = arith.constant dense<0.000000e+00> : vector<2x8xf32>
    %399 = vector.multi_reduction <add>, %398, %cst_184 [2] : vector<2x8x8xf32> to vector<2x8xf32>
    %400 = vector.shape_cast %399 : vector<2x8xf32> to vector<2x8x1xf32>
    %401 = tpu.reciprocal %400 {approx = true} : vector<2x8x1xf32> -> vector<2x8x1xf32>
    %402 = vector.broadcast %401 : vector<2x8x1xf32> to vector<2x8x8xf32>
    %403 = arith.mulf %398, %402 : vector<2x8x8xf32>
    %404 = arith.truncf %403 : vector<2x8x8xf32> to vector<2x8x8xbf16>
    "tpu.trace_start"() <{level = 10 : i32, message = "bqk,bkd->bqd"}> : () -> ()
    %cst_185 = arith.constant dense<0.000000e+00> : vector<2x8x8xf32>
    %405 = tpu.matmul %404, %392, %cst_185 {dimension_numbers = #tpu.dot_dimension_numbers<[2], [1], [1], [2], [0, 0, 0, 1, 1, 2], [0], [0]>} : vector<2x8x8xbf16>, vector<2x8x8xbf16>, vector<2x8x8xf32> -> vector<2x8x8xf32>
    "tpu.trace_stop"() : () -> ()
    %406 = vector.shape_cast %405 : vector<2x8x8xf32> to vector<16x8xf32>
    %407 = arith.truncf %406 : vector<16x8xf32> to vector<16x8xbf16>
    %c0_186 = arith.constant 0 : index
    %c0_187 = arith.constant 0 : index
    %c0_188 = arith.constant 0 : index
    %408 = vector.load %arg12[%c0_186, %c0_187, %c0_188] : memref<4x8x32xbf16, #tpu.memory_space<vmem>>, vector<1x8x32xbf16>
    %409 = vector.shape_cast %408 : vector<1x8x32xbf16> to vector<8x32xbf16>
    %cst_189 = arith.constant dense<0.000000e+00> : vector<16x32xf32>
    %410 = tpu.matmul %407, %409, %cst_189 {dimension_numbers = #tpu.dot_dimension_numbers<[1], [0], [0], [1], [0, 0, 1, 1], [], []>} : vector<16x8xbf16>, vector<8x32xbf16>, vector<16x32xf32> -> vector<16x32xf32>
    %411 = arith.addf %377, %410 : vector<16x32xf32>
    %c1_190 = arith.constant 1 : index
    %c0_191 = arith.constant 0 : index
    %c0_192 = arith.constant 0 : index
    %412 = vector.load %arg9[%c1_190, %c0_191, %c0_192] : memref<4x32x8xbf16, #tpu.memory_space<vmem>>, vector<1x32x8xbf16>
    %413 = vector.shape_cast %412 : vector<1x32x8xbf16> to vector<32x8xbf16>
    %cst_193 = arith.constant dense<0.000000e+00> : vector<16x8xf32>
    %414 = tpu.matmul %376, %413, %cst_193 {dimension_numbers = #tpu.dot_dimension_numbers<[1], [0], [0], [1], [0, 0, 1, 1], [], []>} : vector<16x32xbf16>, vector<32x8xbf16>, vector<16x8xf32> -> vector<16x8xf32>
    %c1_194 = arith.constant 1 : index
    %c0_195 = arith.constant 0 : index
    %c0_196 = arith.constant 0 : index
    %415 = vector.load %arg10[%c1_194, %c0_195, %c0_196] : memref<4x32x8xbf16, #tpu.memory_space<vmem>>, vector<1x32x8xbf16>
    %416 = vector.shape_cast %415 : vector<1x32x8xbf16> to vector<32x8xbf16>
    %cst_197 = arith.constant dense<0.000000e+00> : vector<16x8xf32>
    %417 = tpu.matmul %376, %416, %cst_197 {dimension_numbers = #tpu.dot_dimension_numbers<[1], [0], [0], [1], [0, 0, 1, 1], [], []>} : vector<16x32xbf16>, vector<32x8xbf16>, vector<16x8xf32> -> vector<16x8xf32>
    %c1_198 = arith.constant 1 : index
    %c0_199 = arith.constant 0 : index
    %c0_200 = arith.constant 0 : index
    %418 = vector.load %arg11[%c1_198, %c0_199, %c0_200] : memref<4x32x8xbf16, #tpu.memory_space<vmem>>, vector<1x32x8xbf16>
    %419 = vector.shape_cast %418 : vector<1x32x8xbf16> to vector<32x8xbf16>
    %cst_201 = arith.constant dense<0.000000e+00> : vector<16x8xf32>
    %420 = tpu.matmul %376, %419, %cst_201 {dimension_numbers = #tpu.dot_dimension_numbers<[1], [0], [0], [1], [0, 0, 1, 1], [], []>} : vector<16x32xbf16>, vector<32x8xbf16>, vector<16x8xf32> -> vector<16x8xf32>
    %421 = vector.shape_cast %414 : vector<16x8xf32> to vector<2x8x8xf32>
    %422 = arith.truncf %421 : vector<2x8x8xf32> to vector<2x8x8xbf16>
    %423 = vector.shape_cast %417 : vector<16x8xf32> to vector<2x8x8xf32>
    %424 = arith.truncf %423 : vector<2x8x8xf32> to vector<2x8x8xbf16>
    %425 = vector.shape_cast %420 : vector<16x8xf32> to vector<2x8x8xf32>
    %426 = arith.truncf %425 : vector<2x8x8xf32> to vector<2x8x8xbf16>
    "tpu.trace_start"() <{level = 10 : i32, message = "bqd,bkd->bqk"}> : () -> ()
    %cst_202 = arith.constant dense<0.000000e+00> : vector<2x8x8xf32>
    %427 = tpu.matmul %422, %424, %cst_202 {dimension_numbers = #tpu.dot_dimension_numbers<[2], [2], [1], [1], [0, 0, 0, 1, 1, 1], [0], [0]>} : vector<2x8x8xbf16>, vector<2x8x8xbf16>, vector<2x8x8xf32> -> vector<2x8x8xf32>
    "tpu.trace_stop"() : () -> ()
    %cst_203 = arith.constant dense<0xFF800000> : vector<2x8xf32>
    %428 = vector.multi_reduction <maximumf>, %427, %cst_203 [2] : vector<2x8x8xf32> to vector<2x8xf32>
    %429 = vector.shape_cast %428 : vector<2x8xf32> to vector<2x8x1xf32>
    %430 = vector.broadcast %429 : vector<2x8x1xf32> to vector<2x8x8xf32>
    %431 = arith.subf %427, %430 : vector<2x8x8xf32>
    %432 = math.exp %431 : vector<2x8x8xf32>
    %cst_204 = arith.constant dense<0.000000e+00> : vector<2x8xf32>
    %433 = vector.multi_reduction <add>, %432, %cst_204 [2] : vector<2x8x8xf32> to vector<2x8xf32>
    %434 = vector.shape_cast %433 : vector<2x8xf32> to vector<2x8x1xf32>
    %435 = tpu.reciprocal %434 {approx = true} : vector<2x8x1xf32> -> vector<2x8x1xf32>
    %436 = vector.broadcast %435 : vector<2x8x1xf32> to vector<2x8x8xf32>
    %437 = arith.mulf %432, %436 : vector<2x8x8xf32>
    %438 = arith.truncf %437 : vector<2x8x8xf32> to vector<2x8x8xbf16>
    "tpu.trace_start"() <{level = 10 : i32, message = "bqk,bkd->bqd"}> : () -> ()
    %cst_205 = arith.constant dense<0.000000e+00> : vector<2x8x8xf32>
    %439 = tpu.matmul %438, %426, %cst_205 {dimension_numbers = #tpu.dot_dimension_numbers<[2], [1], [1], [2], [0, 0, 0, 1, 1, 2], [0], [0]>} : vector<2x8x8xbf16>, vector<2x8x8xbf16>, vector<2x8x8xf32> -> vector<2x8x8xf32>
    "tpu.trace_stop"() : () -> ()
    %440 = vector.shape_cast %439 : vector<2x8x8xf32> to vector<16x8xf32>
    %441 = arith.truncf %440 : vector<16x8xf32> to vector<16x8xbf16>
    %c1_206 = arith.constant 1 : index
    %c0_207 = arith.constant 0 : index
    %c0_208 = arith.constant 0 : index
    %442 = vector.load %arg12[%c1_206, %c0_207, %c0_208] : memref<4x8x32xbf16, #tpu.memory_space<vmem>>, vector<1x8x32xbf16>
    %443 = vector.shape_cast %442 : vector<1x8x32xbf16> to vector<8x32xbf16>
    %cst_209 = arith.constant dense<0.000000e+00> : vector<16x32xf32>
    %444 = tpu.matmul %441, %443, %cst_209 {dimension_numbers = #tpu.dot_dimension_numbers<[1], [0], [0], [1], [0, 0, 1, 1], [], []>} : vector<16x8xbf16>, vector<8x32xbf16>, vector<16x32xf32> -> vector<16x32xf32>
    %445 = arith.addf %411, %444 : vector<16x32xf32>
    %c2_210 = arith.constant 2 : index
    %c0_211 = arith.constant 0 : index
    %c0_212 = arith.constant 0 : index
    %446 = vector.load %arg9[%c2_210, %c0_211, %c0_212] : memref<4x32x8xbf16, #tpu.memory_space<vmem>>, vector<1x32x8xbf16>
    %447 = vector.shape_cast %446 : vector<1x32x8xbf16> to vector<32x8xbf16>
    %cst_213 = arith.constant dense<0.000000e+00> : vector<16x8xf32>
    %448 = tpu.matmul %376, %447, %cst_213 {dimension_numbers = #tpu.dot_dimension_numbers<[1], [0], [0], [1], [0, 0, 1, 1], [], []>} : vector<16x32xbf16>, vector<32x8xbf16>, vector<16x8xf32> -> vector<16x8xf32>
    %c2_214 = arith.constant 2 : index
    %c0_215 = arith.constant 0 : index
    %c0_216 = arith.constant 0 : index
    %449 = vector.load %arg10[%c2_214, %c0_215, %c0_216] : memref<4x32x8xbf16, #tpu.memory_space<vmem>>, vector<1x32x8xbf16>
    %450 = vector.shape_cast %449 : vector<1x32x8xbf16> to vector<32x8xbf16>
    %cst_217 = arith.constant dense<0.000000e+00> : vector<16x8xf32>
    %451 = tpu.matmul %376, %450, %cst_217 {dimension_numbers = #tpu.dot_dimension_numbers<[1], [0], [0], [1], [0, 0, 1, 1], [], []>} : vector<16x32xbf16>, vector<32x8xbf16>, vector<16x8xf32> -> vector<16x8xf32>
    %c2_218 = arith.constant 2 : index
    %c0_219 = arith.constant 0 : index
    %c0_220 = arith.constant 0 : index
    %452 = vector.load %arg11[%c2_218, %c0_219, %c0_220] : memref<4x32x8xbf16, #tpu.memory_space<vmem>>, vector<1x32x8xbf16>
    %453 = vector.shape_cast %452 : vector<1x32x8xbf16> to vector<32x8xbf16>
    %cst_221 = arith.constant dense<0.000000e+00> : vector<16x8xf32>
    %454 = tpu.matmul %376, %453, %cst_221 {dimension_numbers = #tpu.dot_dimension_numbers<[1], [0], [0], [1], [0, 0, 1, 1], [], []>} : vector<16x32xbf16>, vector<32x8xbf16>, vector<16x8xf32> -> vector<16x8xf32>
    %455 = vector.shape_cast %448 : vector<16x8xf32> to vector<2x8x8xf32>
    %456 = arith.truncf %455 : vector<2x8x8xf32> to vector<2x8x8xbf16>
    %457 = vector.shape_cast %451 : vector<16x8xf32> to vector<2x8x8xf32>
    %458 = arith.truncf %457 : vector<2x8x8xf32> to vector<2x8x8xbf16>
    %459 = vector.shape_cast %454 : vector<16x8xf32> to vector<2x8x8xf32>
    %460 = arith.truncf %459 : vector<2x8x8xf32> to vector<2x8x8xbf16>
    "tpu.trace_start"() <{level = 10 : i32, message = "bqd,bkd->bqk"}> : () -> ()
    %cst_222 = arith.constant dense<0.000000e+00> : vector<2x8x8xf32>
    %461 = tpu.matmul %456, %458, %cst_222 {dimension_numbers = #tpu.dot_dimension_numbers<[2], [2], [1], [1], [0, 0, 0, 1, 1, 1], [0], [0]>} : vector<2x8x8xbf16>, vector<2x8x8xbf16>, vector<2x8x8xf32> -> vector<2x8x8xf32>
    "tpu.trace_stop"() : () -> ()
    %cst_223 = arith.constant dense<0xFF800000> : vector<2x8xf32>
    %462 = vector.multi_reduction <maximumf>, %461, %cst_223 [2] : vector<2x8x8xf32> to vector<2x8xf32>
    %463 = vector.shape_cast %462 : vector<2x8xf32> to vector<2x8x1xf32>
    %464 = vector.broadcast %463 : vector<2x8x1xf32> to vector<2x8x8xf32>
    %465 = arith.subf %461, %464 : vector<2x8x8xf32>
    %466 = math.exp %465 : vector<2x8x8xf32>
    %cst_224 = arith.constant dense<0.000000e+00> : vector<2x8xf32>
    %467 = vector.multi_reduction <add>, %466, %cst_224 [2] : vector<2x8x8xf32> to vector<2x8xf32>
    %468 = vector.shape_cast %467 : vector<2x8xf32> to vector<2x8x1xf32>
    %469 = tpu.reciprocal %468 {approx = true} : vector<2x8x1xf32> -> vector<2x8x1xf32>
    %470 = vector.broadcast %469 : vector<2x8x1xf32> to vector<2x8x8xf32>
    %471 = arith.mulf %466, %470 : vector<2x8x8xf32>
    %472 = arith.truncf %471 : vector<2x8x8xf32> to vector<2x8x8xbf16>
    "tpu.trace_start"() <{level = 10 : i32, message = "bqk,bkd->bqd"}> : () -> ()
    %cst_225 = arith.constant dense<0.000000e+00> : vector<2x8x8xf32>
    %473 = tpu.matmul %472, %460, %cst_225 {dimension_numbers = #tpu.dot_dimension_numbers<[2], [1], [1], [2], [0, 0, 0, 1, 1, 2], [0], [0]>} : vector<2x8x8xbf16>, vector<2x8x8xbf16>, vector<2x8x8xf32> -> vector<2x8x8xf32>
    "tpu.trace_stop"() : () -> ()
    %474 = vector.shape_cast %473 : vector<2x8x8xf32> to vector<16x8xf32>
    %475 = arith.truncf %474 : vector<16x8xf32> to vector<16x8xbf16>
    %c2_226 = arith.constant 2 : index
    %c0_227 = arith.constant 0 : index
    %c0_228 = arith.constant 0 : index
    %476 = vector.load %arg12[%c2_226, %c0_227, %c0_228] : memref<4x8x32xbf16, #tpu.memory_space<vmem>>, vector<1x8x32xbf16>
    %477 = vector.shape_cast %476 : vector<1x8x32xbf16> to vector<8x32xbf16>
    %cst_229 = arith.constant dense<0.000000e+00> : vector<16x32xf32>
    %478 = tpu.matmul %475, %477, %cst_229 {dimension_numbers = #tpu.dot_dimension_numbers<[1], [0], [0], [1], [0, 0, 1, 1], [], []>} : vector<16x8xbf16>, vector<8x32xbf16>, vector<16x32xf32> -> vector<16x32xf32>
    %479 = arith.addf %445, %478 : vector<16x32xf32>
    %c3_230 = arith.constant 3 : index
    %c0_231 = arith.constant 0 : index
    %c0_232 = arith.constant 0 : index
    %480 = vector.load %arg9[%c3_230, %c0_231, %c0_232] : memref<4x32x8xbf16, #tpu.memory_space<vmem>>, vector<1x32x8xbf16>
    %481 = vector.shape_cast %480 : vector<1x32x8xbf16> to vector<32x8xbf16>
    %cst_233 = arith.constant dense<0.000000e+00> : vector<16x8xf32>
    %482 = tpu.matmul %376, %481, %cst_233 {dimension_numbers = #tpu.dot_dimension_numbers<[1], [0], [0], [1], [0, 0, 1, 1], [], []>} : vector<16x32xbf16>, vector<32x8xbf16>, vector<16x8xf32> -> vector<16x8xf32>
    %c3_234 = arith.constant 3 : index
    %c0_235 = arith.constant 0 : index
    %c0_236 = arith.constant 0 : index
    %483 = vector.load %arg10[%c3_234, %c0_235, %c0_236] : memref<4x32x8xbf16, #tpu.memory_space<vmem>>, vector<1x32x8xbf16>
    %484 = vector.shape_cast %483 : vector<1x32x8xbf16> to vector<32x8xbf16>
    %cst_237 = arith.constant dense<0.000000e+00> : vector<16x8xf32>
    %485 = tpu.matmul %376, %484, %cst_237 {dimension_numbers = #tpu.dot_dimension_numbers<[1], [0], [0], [1], [0, 0, 1, 1], [], []>} : vector<16x32xbf16>, vector<32x8xbf16>, vector<16x8xf32> -> vector<16x8xf32>
    %c3_238 = arith.constant 3 : index
    %c0_239 = arith.constant 0 : index
    %c0_240 = arith.constant 0 : index
    %486 = vector.load %arg11[%c3_238, %c0_239, %c0_240] : memref<4x32x8xbf16, #tpu.memory_space<vmem>>, vector<1x32x8xbf16>
    %487 = vector.shape_cast %486 : vector<1x32x8xbf16> to vector<32x8xbf16>
    %cst_241 = arith.constant dense<0.000000e+00> : vector<16x8xf32>
    %488 = tpu.matmul %376, %487, %cst_241 {dimension_numbers = #tpu.dot_dimension_numbers<[1], [0], [0], [1], [0, 0, 1, 1], [], []>} : vector<16x32xbf16>, vector<32x8xbf16>, vector<16x8xf32> -> vector<16x8xf32>
    %489 = vector.shape_cast %482 : vector<16x8xf32> to vector<2x8x8xf32>
    %490 = arith.truncf %489 : vector<2x8x8xf32> to vector<2x8x8xbf16>
    %491 = vector.shape_cast %485 : vector<16x8xf32> to vector<2x8x8xf32>
    %492 = arith.truncf %491 : vector<2x8x8xf32> to vector<2x8x8xbf16>
    %493 = vector.shape_cast %488 : vector<16x8xf32> to vector<2x8x8xf32>
    %494 = arith.truncf %493 : vector<2x8x8xf32> to vector<2x8x8xbf16>
    "tpu.trace_start"() <{level = 10 : i32, message = "bqd,bkd->bqk"}> : () -> ()
    %cst_242 = arith.constant dense<0.000000e+00> : vector<2x8x8xf32>
    %495 = tpu.matmul %490, %492, %cst_242 {dimension_numbers = #tpu.dot_dimension_numbers<[2], [2], [1], [1], [0, 0, 0, 1, 1, 1], [0], [0]>} : vector<2x8x8xbf16>, vector<2x8x8xbf16>, vector<2x8x8xf32> -> vector<2x8x8xf32>
    "tpu.trace_stop"() : () -> ()
    %cst_243 = arith.constant dense<0xFF800000> : vector<2x8xf32>
    %496 = vector.multi_reduction <maximumf>, %495, %cst_243 [2] : vector<2x8x8xf32> to vector<2x8xf32>
    %497 = vector.shape_cast %496 : vector<2x8xf32> to vector<2x8x1xf32>
    %498 = vector.broadcast %497 : vector<2x8x1xf32> to vector<2x8x8xf32>
    %499 = arith.subf %495, %498 : vector<2x8x8xf32>
    %500 = math.exp %499 : vector<2x8x8xf32>
    %cst_244 = arith.constant dense<0.000000e+00> : vector<2x8xf32>
    %501 = vector.multi_reduction <add>, %500, %cst_244 [2] : vector<2x8x8xf32> to vector<2x8xf32>
    %502 = vector.shape_cast %501 : vector<2x8xf32> to vector<2x8x1xf32>
    %503 = tpu.reciprocal %502 {approx = true} : vector<2x8x1xf32> -> vector<2x8x1xf32>
    %504 = vector.broadcast %503 : vector<2x8x1xf32> to vector<2x8x8xf32>
    %505 = arith.mulf %500, %504 : vector<2x8x8xf32>
    %506 = arith.truncf %505 : vector<2x8x8xf32> to vector<2x8x8xbf16>
    "tpu.trace_start"() <{level = 10 : i32, message = "bqk,bkd->bqd"}> : () -> ()
    %cst_245 = arith.constant dense<0.000000e+00> : vector<2x8x8xf32>
    %507 = tpu.matmul %506, %494, %cst_245 {dimension_numbers = #tpu.dot_dimension_numbers<[2], [1], [1], [2], [0, 0, 0, 1, 1, 2], [0], [0]>} : vector<2x8x8xbf16>, vector<2x8x8xbf16>, vector<2x8x8xf32> -> vector<2x8x8xf32>
    "tpu.trace_stop"() : () -> ()
    %508 = vector.shape_cast %507 : vector<2x8x8xf32> to vector<16x8xf32>
    %509 = arith.truncf %508 : vector<16x8xf32> to vector<16x8xbf16>
    %c3_246 = arith.constant 3 : index
    %c0_247 = arith.constant 0 : index
    %c0_248 = arith.constant 0 : index
    %510 = vector.load %arg12[%c3_246, %c0_247, %c0_248] : memref<4x8x32xbf16, #tpu.memory_space<vmem>>, vector<1x8x32xbf16>
    %511 = vector.shape_cast %510 : vector<1x8x32xbf16> to vector<8x32xbf16>
    %cst_249 = arith.constant dense<0.000000e+00> : vector<16x32xf32>
    %512 = tpu.matmul %509, %511, %cst_249 {dimension_numbers = #tpu.dot_dimension_numbers<[1], [0], [0], [1], [0, 0, 1, 1], [], []>} : vector<16x8xbf16>, vector<8x32xbf16>, vector<16x32xf32> -> vector<16x32xf32>
    %513 = arith.addf %479, %512 : vector<16x32xf32>
    %514 = arith.addf %310, %513 : vector<16x32xf32>
    %cst_250 = arith.constant dense<0.000000e+00> : vector<16xf32>
    %515 = vector.multi_reduction <add>, %514, %cst_250 [1] : vector<16x32xf32> to vector<16xf32>
    %516 = vector.shape_cast %515 : vector<16xf32> to vector<16x1xf32>
    %cst_251 = arith.constant 3.200000e+01 : f32
    %517 = vector.broadcast %cst_251 : f32 to vector<16x1xf32>
    %518 = arith.divf %516, %517 : vector<16x1xf32>
    %519 = vector.broadcast %518 : vector<16x1xf32> to vector<16x32xf32>
    %520 = arith.subf %514, %519 : vector<16x32xf32>
    %521 = arith.mulf %520, %520 : vector<16x32xf32>
    %cst_252 = arith.constant dense<0.000000e+00> : vector<16xf32>
    %522 = vector.multi_reduction <add>, %521, %cst_252 [1] : vector<16x32xf32> to vector<16xf32>
    %523 = vector.shape_cast %522 : vector<16xf32> to vector<16x1xf32>
    %cst_253 = arith.constant 3.100000e+01 : f32
    %524 = vector.broadcast %cst_253 : f32 to vector<16x1xf32>
    %525 = arith.divf %523, %524 : vector<16x1xf32>
    %526 = math.sqrt %525 : vector<16x1xf32>
    %cst_254 = arith.constant 9.99999997E-7 : f32
    %527 = vector.broadcast %cst_254 : f32 to vector<16x1xf32>
    %528 = arith.addf %526, %527 : vector<16x1xf32>
    %529 = tpu.reciprocal %528 {approx = true} : vector<16x1xf32> -> vector<16x1xf32>
    %530 = vector.broadcast %518 : vector<16x1xf32> to vector<16x32xf32>
    %531 = arith.subf %514, %530 : vector<16x32xf32>
    %532 = vector.broadcast %10 : vector<1x32xf32> to vector<16x32xf32>
    %533 = arith.mulf %532, %531 : vector<16x32xf32>
    %534 = vector.broadcast %529 : vector<16x1xf32> to vector<16x32xf32>
    %535 = arith.mulf %533, %534 : vector<16x32xf32>
    %536 = vector.broadcast %11 : vector<1x32xf32> to vector<16x32xf32>
    %537 = arith.addf %535, %536 : vector<16x32xf32>
    %c1_i32_255 = arith.constant 1 : i32
    %538 = tpu.dynamic_rotate %537 by %c1_i32_255 dim 0 : vector<16x32xf32>, i32 -> vector<16x32xf32>
    %539 = vector.broadcast %14 : vector<16x1xf32> to vector<16x32xf32>
    %540 = arith.mulf %538, %539 : vector<16x32xf32>
    %c15_i32_256 = arith.constant 15 : i32
    %541 = tpu.dynamic_rotate %537 by %c15_i32_256 dim 0 : vector<16x32xf32>, i32 -> vector<16x32xf32>
    %542 = vector.broadcast %15 : vector<16x1xf32> to vector<16x32xf32>
    %543 = arith.mulf %541, %542 : vector<16x32xf32>
    %544 = arith.truncf %537 : vector<16x32xf32> to vector<16x32xbf16>
    %c1_257 = arith.constant 1 : index
    %c0_258 = arith.constant 0 : index
    %c0_259 = arith.constant 0 : index
    %545 = vector.load %arg15[%c1_257, %c0_258, %c0_259] : memref<3x32x64xbf16, #tpu.memory_space<vmem>>, vector<1x32x64xbf16>
    %546 = vector.shape_cast %545 : vector<1x32x64xbf16> to vector<32x64xbf16>
    %cst_260 = arith.constant dense<0.000000e+00> : vector<16x64xf32>
    %547 = tpu.matmul %544, %546, %cst_260 {dimension_numbers = #tpu.dot_dimension_numbers<[1], [0], [0], [1], [0, 0, 1, 1], [], []>} : vector<16x32xbf16>, vector<32x64xbf16>, vector<16x64xf32> -> vector<16x64xf32>
    %548 = arith.truncf %540 : vector<16x32xf32> to vector<16x32xbf16>
    %c0_261 = arith.constant 0 : index
    %c0_262 = arith.constant 0 : index
    %c0_263 = arith.constant 0 : index
    %549 = vector.load %arg15[%c0_261, %c0_262, %c0_263] : memref<3x32x64xbf16, #tpu.memory_space<vmem>>, vector<1x32x64xbf16>
    %550 = vector.shape_cast %549 : vector<1x32x64xbf16> to vector<32x64xbf16>
    %cst_264 = arith.constant dense<0.000000e+00> : vector<16x64xf32>
    %551 = tpu.matmul %548, %550, %cst_264 {dimension_numbers = #tpu.dot_dimension_numbers<[1], [0], [0], [1], [0, 0, 1, 1], [], []>} : vector<16x32xbf16>, vector<32x64xbf16>, vector<16x64xf32> -> vector<16x64xf32>
    %552 = arith.addf %547, %551 : vector<16x64xf32>
    %553 = arith.truncf %543 : vector<16x32xf32> to vector<16x32xbf16>
    %c2_265 = arith.constant 2 : index
    %c0_266 = arith.constant 0 : index
    %c0_267 = arith.constant 0 : index
    %554 = vector.load %arg15[%c2_265, %c0_266, %c0_267] : memref<3x32x64xbf16, #tpu.memory_space<vmem>>, vector<1x32x64xbf16>
    %555 = vector.shape_cast %554 : vector<1x32x64xbf16> to vector<32x64xbf16>
    %cst_268 = arith.constant dense<0.000000e+00> : vector<16x64xf32>
    %556 = tpu.matmul %553, %555, %cst_268 {dimension_numbers = #tpu.dot_dimension_numbers<[1], [0], [0], [1], [0, 0, 1, 1], [], []>} : vector<16x32xbf16>, vector<32x64xbf16>, vector<16x64xf32> -> vector<16x64xf32>
    %557 = arith.addf %552, %556 : vector<16x64xf32>
    %558 = vector.broadcast %12 : vector<1x64xf32> to vector<16x64xf32>
    %559 = arith.addf %557, %558 : vector<16x64xf32>
    %cst_269 = arith.constant 0.000000e+00 : f32
    %560 = vector.broadcast %cst_269 : f32 to vector<16x64xf32>
    %561 = arith.maximumf %559, %560 : vector<16x64xf32>
    %c1_i32_270 = arith.constant 1 : i32
    %562 = tpu.dynamic_rotate %561 by %c1_i32_270 dim 0 : vector<16x64xf32>, i32 -> vector<16x64xf32>
    %563 = vector.broadcast %14 : vector<16x1xf32> to vector<16x64xf32>
    %564 = arith.mulf %562, %563 : vector<16x64xf32>
    %c15_i32_271 = arith.constant 15 : i32
    %565 = tpu.dynamic_rotate %561 by %c15_i32_271 dim 0 : vector<16x64xf32>, i32 -> vector<16x64xf32>
    %566 = vector.broadcast %15 : vector<16x1xf32> to vector<16x64xf32>
    %567 = arith.mulf %565, %566 : vector<16x64xf32>
    %568 = arith.truncf %561 : vector<16x64xf32> to vector<16x64xbf16>
    %c1_272 = arith.constant 1 : index
    %c0_273 = arith.constant 0 : index
    %c0_274 = arith.constant 0 : index
    %569 = vector.load %arg17[%c1_272, %c0_273, %c0_274] : memref<3x64x32xbf16, #tpu.memory_space<vmem>>, vector<1x64x32xbf16>
    %570 = vector.shape_cast %569 : vector<1x64x32xbf16> to vector<64x32xbf16>
    %cst_275 = arith.constant dense<0.000000e+00> : vector<16x32xf32>
    %571 = tpu.matmul %568, %570, %cst_275 {dimension_numbers = #tpu.dot_dimension_numbers<[1], [0], [0], [1], [0, 0, 1, 1], [], []>} : vector<16x64xbf16>, vector<64x32xbf16>, vector<16x32xf32> -> vector<16x32xf32>
    %572 = arith.truncf %564 : vector<16x64xf32> to vector<16x64xbf16>
    %c0_276 = arith.constant 0 : index
    %c0_277 = arith.constant 0 : index
    %c0_278 = arith.constant 0 : index
    %573 = vector.load %arg17[%c0_276, %c0_277, %c0_278] : memref<3x64x32xbf16, #tpu.memory_space<vmem>>, vector<1x64x32xbf16>
    %574 = vector.shape_cast %573 : vector<1x64x32xbf16> to vector<64x32xbf16>
    %cst_279 = arith.constant dense<0.000000e+00> : vector<16x32xf32>
    %575 = tpu.matmul %572, %574, %cst_279 {dimension_numbers = #tpu.dot_dimension_numbers<[1], [0], [0], [1], [0, 0, 1, 1], [], []>} : vector<16x64xbf16>, vector<64x32xbf16>, vector<16x32xf32> -> vector<16x32xf32>
    %576 = arith.addf %571, %575 : vector<16x32xf32>
    %577 = arith.truncf %567 : vector<16x64xf32> to vector<16x64xbf16>
    %c2_280 = arith.constant 2 : index
    %c0_281 = arith.constant 0 : index
    %c0_282 = arith.constant 0 : index
    %578 = vector.load %arg17[%c2_280, %c0_281, %c0_282] : memref<3x64x32xbf16, #tpu.memory_space<vmem>>, vector<1x64x32xbf16>
    %579 = vector.shape_cast %578 : vector<1x64x32xbf16> to vector<64x32xbf16>
    %cst_283 = arith.constant dense<0.000000e+00> : vector<16x32xf32>
    %580 = tpu.matmul %577, %579, %cst_283 {dimension_numbers = #tpu.dot_dimension_numbers<[1], [0], [0], [1], [0, 0, 1, 1], [], []>} : vector<16x64xbf16>, vector<64x32xbf16>, vector<16x32xf32> -> vector<16x32xf32>
    %581 = arith.addf %576, %580 : vector<16x32xf32>
    %582 = vector.broadcast %13 : vector<1x32xf32> to vector<16x32xf32>
    %583 = arith.addf %581, %582 : vector<16x32xf32>
    %cst_284 = arith.constant 0.000000e+00 : f32
    %584 = vector.broadcast %cst_284 : f32 to vector<16x32xf32>
    %585 = arith.maximumf %583, %584 : vector<16x32xf32>
    %586 = arith.addf %514, %585 : vector<16x32xf32>
    %587 = vector.broadcast %352 : vector<16x1xf32> to vector<16x32xf32>
    %588 = arith.mulf %586, %587 : vector<16x32xf32>
    %cst_285 = arith.constant 1.000000e+00 : f32
    %589 = vector.broadcast %cst_285 : f32 to vector<16x1xf32>
    %590 = arith.subf %589, %352 : vector<16x1xf32>
    %591 = vector.broadcast %590 : vector<16x1xf32> to vector<16x32xf32>
    %592 = arith.mulf %305, %591 : vector<16x32xf32>
    %593 = arith.addf %588, %592 : vector<16x32xf32>
    %c2_i32 = arith.constant 2 : i32
    %c0_286 = arith.constant 0 : index
    %c0_287 = arith.constant 0 : index
    %594 = vector.load %arg21[%c0_286, %c0_287] : memref<1x32xf32, #tpu.memory_space<vmem>>, vector<1x32xf32>
    %c0_288 = arith.constant 0 : index
    %c0_289 = arith.constant 0 : index
    %595 = vector.load %arg22[%c0_288, %c0_289] : memref<1x32xf32, #tpu.memory_space<vmem>>, vector<1x32xf32>
    %cst_290 = arith.constant dense<0.000000e+00> : vector<16xf32>
    %596 = vector.multi_reduction <add>, %593, %cst_290 [1] : vector<16x32xf32> to vector<16xf32>
    %597 = vector.shape_cast %596 : vector<16xf32> to vector<16x1xf32>
    %cst_291 = arith.constant 3.200000e+01 : f32
    %598 = vector.broadcast %cst_291 : f32 to vector<16x1xf32>
    %599 = arith.divf %597, %598 : vector<16x1xf32>
    %600 = vector.broadcast %599 : vector<16x1xf32> to vector<16x32xf32>
    %601 = arith.subf %593, %600 : vector<16x32xf32>
    %602 = arith.mulf %601, %601 : vector<16x32xf32>
    %cst_292 = arith.constant dense<0.000000e+00> : vector<16xf32>
    %603 = vector.multi_reduction <add>, %602, %cst_292 [1] : vector<16x32xf32> to vector<16xf32>
    %604 = vector.shape_cast %603 : vector<16xf32> to vector<16x1xf32>
    %cst_293 = arith.constant 3.100000e+01 : f32
    %605 = vector.broadcast %cst_293 : f32 to vector<16x1xf32>
    %606 = arith.divf %604, %605 : vector<16x1xf32>
    %607 = math.sqrt %606 : vector<16x1xf32>
    %cst_294 = arith.constant 9.99999997E-7 : f32
    %608 = vector.broadcast %cst_294 : f32 to vector<16x1xf32>
    %609 = arith.addf %607, %608 : vector<16x1xf32>
    %610 = tpu.reciprocal %609 {approx = true} : vector<16x1xf32> -> vector<16x1xf32>
    %611 = vector.broadcast %599 : vector<16x1xf32> to vector<16x32xf32>
    %612 = arith.subf %593, %611 : vector<16x32xf32>
    %613 = vector.broadcast %594 : vector<1x32xf32> to vector<16x32xf32>
    %614 = arith.mulf %613, %612 : vector<16x32xf32>
    %615 = vector.broadcast %610 : vector<16x1xf32> to vector<16x32xf32>
    %616 = arith.mulf %614, %615 : vector<16x32xf32>
    %617 = vector.broadcast %595 : vector<1x32xf32> to vector<16x32xf32>
    %618 = arith.addf %616, %617 : vector<16x32xf32>
    %619 = vector.shape_cast %618 : vector<16x32xf32> to vector<2x8x32xf32>
    %c0_295 = arith.constant 0 : index
    %c0_296 = arith.constant 0 : index
    %c0_297 = arith.constant 0 : index
    %620 = vector.load %arg23[%c0_295, %c0_296, %c0_297] : memref<2x8x32xf32, #tpu.memory_space<vmem>>, vector<2x8x32xf32>
    tpu.vector_store %arg23[%c0_295, %c0_296, %c0_297], %619 {strides = array<i32>} : memref<2x8x32xf32, #tpu.memory_space<vmem>>, vector<2x8x32xf32>,
    %621 = vector.shape_cast %345 : vector<16x1xf32> to vector<2x8x1xf32>
    %c0_298 = arith.constant 0 : index
    %c0_299 = arith.constant 0 : index
    %c0_300 = arith.constant 0 : index
    %622 = vector.load %arg24[%c0_298, %c0_299, %c0_300] : memref<2x8x2xf32, #tpu.memory_space<vmem>>, vector<2x8x1xf32>
    tpu.vector_store %arg24[%c0_298, %c0_299, %c0_300], %621 {strides = array<i32>} : memref<2x8x2xf32, #tpu.memory_space<vmem>>, vector<2x8x1xf32>,
    %623 = vector.shape_cast %349 : vector<16x1xf32> to vector<2x8x1xf32>
    %c0_301 = arith.constant 0 : index
    %c0_302 = arith.constant 0 : index
    %c1_303 = arith.constant 1 : index
    %624 = vector.load %arg24[%c0_301, %c0_302, %c1_303] : memref<2x8x2xf32, #tpu.memory_space<vmem>>, vector<2x8x1xf32>
    tpu.vector_store %arg24[%c0_301, %c0_302, %c1_303], %623 {strides = array<i32>} : memref<2x8x2xf32, #tpu.memory_space<vmem>>, vector<2x8x1xf32>,
    return
  }
  func.func @transform_0(%arg0: i32) -> (i32, i32, i32) {
    %c0_i32 = arith.constant 0 : i32
    %c0_i32_0 = arith.constant 0 : i32
    %c0_i32_1 = arith.constant 0 : i32
    return %arg0, %c0_i32, %c0_i32_0 : i32, i32, i32
  }
  func.func @transform_1(%arg0: i32) -> (i32, i32) {
    %c0_i32 = arith.constant 0 : i32
    %c0_i32_0 = arith.constant 0 : i32
    %c0_i32_1 = arith.constant 0 : i32
    return %c0_i32, %c0_i32_0 : i32, i32
  }
  func.func @transform_2(%arg0: i32) -> (i32, i32) {
    %c0_i32 = arith.constant 0 : i32
    %c0_i32_0 = arith.constant 0 : i32
    %c0_i32_1 = arith.constant 0 : i32
    return %c0_i32, %c0_i32_0 : i32, i32
  }
  func.func @transform_3(%arg0: i32) -> (i32, i32) {
    %c0_i32 = arith.constant 0 : i32
    %c0_i32_0 = arith.constant 0 : i32
    %c0_i32_1 = arith.constant 0 : i32
    return %c0_i32, %c0_i32_0 : i32, i32
  }
  func.func @transform_4(%arg0: i32) -> (i32, i32) {
    %c0_i32 = arith.constant 0 : i32
    %c0_i32_0 = arith.constant 0 : i32
    %c0_i32_1 = arith.constant 0 : i32
    return %c0_i32, %c0_i32_0 : i32, i32
  }
  func.func @transform_5(%arg0: i32) -> (i32, i32) {
    %c0_i32 = arith.constant 0 : i32
    %c0_i32_0 = arith.constant 0 : i32
    %c0_i32_1 = arith.constant 0 : i32
    return %c0_i32, %c0_i32_0 : i32, i32
  }
  func.func @transform_6(%arg0: i32) -> (i32, i32) {
    %c0_i32 = arith.constant 0 : i32
    %c0_i32_0 = arith.constant 0 : i32
    %c0_i32_1 = arith.constant 0 : i32
    return %c0_i32, %c0_i32_0 : i32, i32
  }
  func.func @transform_7(%arg0: i32) -> (i32, i32) {
    %c0_i32 = arith.constant 0 : i32
    %c0_i32_0 = arith.constant 0 : i32
    %c0_i32_1 = arith.constant 0 : i32
    return %c0_i32, %c0_i32_0 : i32, i32
  }
  func.func @transform_8(%arg0: i32) -> (i32, i32, i32) {
    %c0_i32 = arith.constant 0 : i32
    %c0_i32_0 = arith.constant 0 : i32
    %c0_i32_1 = arith.constant 0 : i32
    %c0_i32_2 = arith.constant 0 : i32
    return %c0_i32, %c0_i32_0, %c0_i32_1 : i32, i32, i32
  }
  func.func @transform_9(%arg0: i32) -> (i32, i32, i32) {
    %c0_i32 = arith.constant 0 : i32
    %c0_i32_0 = arith.constant 0 : i32
    %c0_i32_1 = arith.constant 0 : i32
    %c0_i32_2 = arith.constant 0 : i32
    return %c0_i32, %c0_i32_0, %c0_i32_1 : i32, i32, i32
  }
  func.func @transform_10(%arg0: i32) -> (i32, i32, i32) {
    %c0_i32 = arith.constant 0 : i32
    %c0_i32_0 = arith.constant 0 : i32
    %c0_i32_1 = arith.constant 0 : i32
    %c0_i32_2 = arith.constant 0 : i32
    return %c0_i32, %c0_i32_0, %c0_i32_1 : i32, i32, i32
  }
  func.func @transform_11(%arg0: i32) -> (i32, i32, i32) {
    %c0_i32 = arith.constant 0 : i32
    %c0_i32_0 = arith.constant 0 : i32
    %c0_i32_1 = arith.constant 0 : i32
    %c0_i32_2 = arith.constant 0 : i32
    return %c0_i32, %c0_i32_0, %c0_i32_1 : i32, i32, i32
  }
  func.func @transform_12(%arg0: i32) -> (i32, i32) {
    %c0_i32 = arith.constant 0 : i32
    %c0_i32_0 = arith.constant 0 : i32
    %c0_i32_1 = arith.constant 0 : i32
    return %c0_i32, %c0_i32_0 : i32, i32
  }
  func.func @transform_13(%arg0: i32) -> (i32, i32) {
    %c0_i32 = arith.constant 0 : i32
    %c0_i32_0 = arith.constant 0 : i32
    %c0_i32_1 = arith.constant 0 : i32
    return %c0_i32, %c0_i32_0 : i32, i32
  }
  func.func @transform_14(%arg0: i32) -> (i32, i32, i32) {
    %c0_i32 = arith.constant 0 : i32
    %c0_i32_0 = arith.constant 0 : i32
    %c0_i32_1 = arith.constant 0 : i32
    %c0_i32_2 = arith.constant 0 : i32
    return %c0_i32, %c0_i32_0, %c0_i32_1 : i32, i32, i32
  }
  func.func @transform_15(%arg0: i32) -> (i32, i32) {
    %c0_i32 = arith.constant 0 : i32
    %c0_i32_0 = arith.constant 0 : i32
    %c0_i32_1 = arith.constant 0 : i32
    return %c0_i32, %c0_i32_0 : i32, i32
  }
  func.func @transform_16(%arg0: i32) -> (i32, i32, i32) {
    %c0_i32 = arith.constant 0 : i32
    %c0_i32_0 = arith.constant 0 : i32
    %c0_i32_1 = arith.constant 0 : i32
    %c0_i32_2 = arith.constant 0 : i32
    return %c0_i32, %c0_i32_0, %c0_i32_1 : i32, i32, i32
  }
  func.func @transform_17(%arg0: i32) -> (i32, i32) {
    %c0_i32 = arith.constant 0 : i32
    %c0_i32_0 = arith.constant 0 : i32
    %c0_i32_1 = arith.constant 0 : i32
    return %c0_i32, %c0_i32_0 : i32, i32
  }
  func.func @transform_18(%arg0: i32) -> (i32, i32) {
    %c0_i32 = arith.constant 0 : i32
    %c0_i32_0 = arith.constant 0 : i32
    %c0_i32_1 = arith.constant 0 : i32
    return %c0_i32, %c0_i32_0 : i32, i32
  }
  func.func @transform_19(%arg0: i32) -> (i32, i32) {
    %c0_i32 = arith.constant 0 : i32
    %c0_i32_0 = arith.constant 0 : i32
    %c0_i32_1 = arith.constant 0 : i32
    return %c0_i32, %c0_i32_0 : i32, i32
  }
  func.func @transform_20(%arg0: i32) -> (i32, i32) {
    %c0_i32 = arith.constant 0 : i32
    %c0_i32_0 = arith.constant 0 : i32
    %c0_i32_1 = arith.constant 0 : i32
    return %c0_i32, %c0_i32_0 : i32, i32
  }
  func.func @transform_21(%arg0: i32) -> (i32, i32) {
    %c0_i32 = arith.constant 0 : i32
    %c0_i32_0 = arith.constant 0 : i32
    %c0_i32_1 = arith.constant 0 : i32
    return %c0_i32, %c0_i32_0 : i32, i32
  }
  func.func @transform_22(%arg0: i32) -> (i32, i32, i32) {
    %c0_i32 = arith.constant 0 : i32
    %c0_i32_0 = arith.constant 0 : i32
    %c0_i32_1 = arith.constant 0 : i32
    return %arg0, %c0_i32, %c0_i32_0 : i32, i32, i32
  }
  func.func @transform_23(%arg0: i32) -> (i32, i32, i32) {
    %c0_i32 = arith.constant 0 : i32
    %c0_i32_0 = arith.constant 0 : i32
    %c0_i32_1 = arith.constant 0 : i32
    return %arg0, %c0_i32, %c0_i32_0 : i32, i32, i32
  }
}

</mosaic_0001>

<llo_original>
// kernel: tpu_custom_call.1
$region0: #{tpu_custom_call.1}
  #allocation0 [shape = 'u32[]', space=smem, size = 0x4, offset = 0x4, fixed_abs, tag = 'smem constant byte address 0x4 - core index']
  #allocation1 [shape = 'u32[144,128]{1,0:T(1,128)}', space=vmem, size = 0x12000, scoped, tag = 'internal scratch']
  #allocation2 [shape = 'f32[1,1]{1,0:T(1,128)S(1)}', space=vmem, size = 0x200, scoped, tag = 'scoped memory for tpu_custom_call.1']
  %s0 = inlined_call_operand.vmem [shape: f32[4,8,32], index: 0, kind: input, shape index: {}]
  %s1 = inlined_call_operand.vmem [shape: bf16[32,32], index: 1, kind: input, shape index: {}]
  %s2 = inlined_call_operand.vmem [shape: f32[16,32], index: 2, kind: input, shape index: {}]
  %s3 = inlined_call_operand.vmem [shape: f32[2,32], index: 3, kind: input, shape index: {}]
  %s4 = inlined_call_operand.vmem [shape: f32[1,32], index: 4, kind: input, shape index: {}]
  %s5 = inlined_call_operand.<no memory space> [shape: f32[1,1], index: 5, kind: input, shape index: {}]
  %s6 = inlined_call_operand.vmem [shape: f32[1,32], index: 6, kind: input, shape index: {}]
  %s7 = inlined_call_operand.vmem [shape: f32[1,32], index: 7, kind: input, shape index: {}]
  %s8 = inlined_call_operand.vmem [shape: bf16[4,32,8], index: 8, kind: input, shape index: {}]
  %s9 = inlined_call_operand.vmem [shape: bf16[4,32,8], index: 9, kind: input, shape index: {}]
  %s10 = inlined_call_operand.vmem [shape: bf16[4,32,8], index: 10, kind: input, shape index: {}]
  %s11 = inlined_call_operand.vmem [shape: bf16[4,8,32], index: 11, kind: input, shape index: {}]
  %s12 = inlined_call_operand.vmem [shape: f32[1,32], index: 12, kind: input, shape index: {}]
  %s13 = inlined_call_operand.vmem [shape: f32[1,32], index: 13, kind: input, shape index: {}]
  %s14 = inlined_call_operand.vmem [shape: bf16[3,32,64], index: 14, kind: input, shape index: {}]
  %s15 = inlined_call_operand.vmem [shape: f32[1,64], index: 15, kind: input, shape index: {}]
  %s16 = inlined_call_operand.vmem [shape: bf16[3,64,32], index: 16, kind: input, shape index: {}]
  %s17 = inlined_call_operand.vmem [shape: f32[1,32], index: 17, kind: input, shape index: {}]
  %s18 = inlined_call_operand.vmem [shape: f32[16,1], index: 18, kind: input, shape index: {}]
  %s19 = inlined_call_operand.vmem [shape: f32[16,1], index: 19, kind: input, shape index: {}]
  %s20 = inlined_call_operand.vmem [shape: f32[1,32], index: 20, kind: input, shape index: {}]
  %s21 = inlined_call_operand.vmem [shape: f32[1,32], index: 21, kind: input, shape index: {}]
  %s22 = inlined_call_operand.hbm [shape: f32[4,8,32], index: 22, kind: output, shape index: {0}]
  %s23 = inlined_call_operand.vmem [shape: f32[4,8,2], index: 23, kind: output, shape index: {1}]
  %24 = xla_tuple %s22, %s23
  %s25 = sld [smem:[#allocation0]]
  $region129: #{tpu_custom_call.1} parent=0
    _
  %s27 = ssub.s32 1, %s25
  %s28 = scalar_select 0, %s27, %s25
  %v29 = vstv %s5
  %30 = vst [vmem:[#allocation2] sm:$0x1] %v29
  $region1: #{tpu_custom_call.1} parent=0
    #allocation3 [shape = 'u8[16384]{0}', space=vmem, size = 0x4000, scoped, tag = 'output window, operand 0']
    #allocation4 [shape = 's32[2]{0}', space=sflag, size = 0x8, scoped, tag = 'scoped memory for tpu_custom_call.1']
    %31 = vsyncpa [#allocation4], 0
    %s32 = scalar_lea.sflag [#allocation4], 1
    %33 = vsyncpa %s32, 0
    loop: start=0, step=1, limit=4
    $region2: #{tpu_custom_call.1} parent=1 // loop_pre_header
      _
    $region3: #{tpu_custom_call.1} parent=1 // loop_header
      %s35 = sphi 0, %s39
      %p36 = scmp.ge.s32.totalorder %s35, 4
      %s45 = sphi 0, %s47
      %s48 = sphi 0, %s45
      %s49 = sphi 0, %s48
      %s65 = sphi 0, %s49
      %s69 = sphi 0, %s69
      %s71 = sphi 0, %s69
      %s72 = sphi 0, %s71
      %s86 = sphi 0, %s72
      %s90 = sphi 0, %s90
      %s92 = sphi 0, %s90
      %s93 = sphi 0, %s92
      %s107 = sphi 0, %s93
      %s111 = sphi 0, %s111
      %s113 = sphi 0, %s111
      %s114 = sphi 0, %s113
      %s128 = sphi 0, %s114
      %s132 = sphi 0, %s132
      %s134 = sphi 0, %s132
      %s135 = sphi 0, %s134
      %s149 = sphi 0, %s135
      %s153 = sphi 0, %s153
      %s155 = sphi 0, %s153
      %s156 = sphi 0, %s155
      %s170 = sphi 0, %s156
      %s174 = sphi 0, %s174
      %s176 = sphi 0, %s174
      %s177 = sphi 0, %s176
      %s191 = sphi 0, %s177
      %s195 = sphi 0, %s195
      %s197 = sphi 0, %s195
      %s198 = sphi 0, %s197
      %s212 = sphi 0, %s198
      %s216 = sphi 0, %s216
      %s218 = sphi 0, %s216
      %s219 = sphi 0, %s218
      %s233 = sphi 0, %s219
      %s237 = sphi 0, %s237
      %s239 = sphi 0, %s237
      %s240 = sphi 0, %s239
      %s254 = sphi 0, %s240
      %s258 = sphi 0, %s258
      %s260 = sphi 0, %s258
      %s261 = sphi 0, %s260
      %s275 = sphi 0, %s261
      %s279 = sphi 0, %s279
      %s281 = sphi 0, %s279
      %s282 = sphi 0, %s281
      %s296 = sphi 0, %s282
      %s300 = sphi 0, %s300
      %s302 = sphi 0, %s300
      %s303 = sphi 0, %s302
      %s317 = sphi 0, %s303
      %s321 = sphi 0, %s321
      %s323 = sphi 0, %s321
      %s324 = sphi 0, %s323
      %s338 = sphi 0, %s324
      %s342 = sphi 0, %s342
      %s344 = sphi 0, %s342
      %s345 = sphi 0, %s344
      %s359 = sphi 0, %s345
      %s363 = sphi 0, %s363
      %s365 = sphi 0, %s363
      %s366 = sphi 0, %s365
      %s380 = sphi 0, %s366
      %s384 = sphi 0, %s384
      %s386 = sphi 0, %s384
      %s387 = sphi 0, %s386
      %s401 = sphi 0, %s387
      %s405 = sphi 0, %s405
      %s407 = sphi 0, %s405
      %s408 = sphi 0, %s407
      %s422 = sphi 0, %s408
      %s426 = sphi 0, %s426
      %s428 = sphi 0, %s426
      %s429 = sphi 0, %s428
      %s443 = sphi 0, %s429
      %s447 = sphi 0, %s447
      %s449 = sphi 0, %s447
      %s450 = sphi 0, %s449
      %s464 = sphi 0, %s450
      %s468 = sphi 0, %s468
      %s470 = sphi 0, %s468
      %s471 = sphi 0, %s470
      %s485 = sphi 0, %s471
      %s489 = sphi 0, %s489
      %s491 = sphi 0, %s489
      %s492 = sphi 0, %s491
      %s506 = sphi 0, %s492
      %s512 = sphi 0, %s514
      %s515 = sphi 0, %s512
      %s516 = sphi 0, %s515
      %s532 = sphi 0, %s516
      %s538 = sphi 0, %s540
      %s541 = sphi 0, %s538
      %s542 = sphi 0, %s541
      %s558 = sphi 0, %s542
    $region4: #{tpu_custom_call.1} parent=1 // loop_header_branch
      %38 = sbr.rel (%p36) target = $region8
    $region5: #{tpu_custom_call.1} parent=1 // loop_body
      %s40 = ssub.s32 %s35, 1
      %s41 = ssub.s32 %s35, 2
      %s42 = sadd.s32 %s35, 1
      %s43 = ssub.s32 %s35, %s42
      %p44 = scmp.eq.s32.totalorder %s43, 0
      %s46 = sadd.s32 %s45, 1
      %s47 = scalar_select %p44, %s45, %s46
      %p50 = pneg %p44
      %p51 = scmp.eq.s32.totalorder %s35, 1
      %p52 = por %p50, %p51
      %p53 = scmp.ne.s32.totalorder %s45, %s48
      %p54 = scmp.eq.s32.totalorder %s35, 0
      %p55 = por %p53, %p54
      %p56 = scmp.ne.s32.totalorder %s45, %s48
      %p57 = scmp.eq.s32.totalorder %s40, 1
      %p58 = por %p56, %p57
      %p59 = scmp.ne.s32.totalorder %s48, %s49
      %p60 = scmp.eq.s32.totalorder %s40, 0
      %p61 = por %p59, %p60
      %p62 = scmp.ne.s32.totalorder %s48, %s49
      %p63 = scmp.eq.s32.totalorder %s41, 1
      %p64 = por %p62, %p63
      %p66 = scmp.ne.s32.totalorder %s49, %s65
      %p67 = scmp.eq.s32.totalorder %s41, 0
      %p68 = por %p66, %p67
      %s70 = sadd.s32 %s69, 1
      %p73 = scmp.eq.s32.totalorder %s35, 1
      %p74 = scmp.ne.s32.totalorder %s69, %s71
      %p75 = scmp.eq.s32.totalorder %s35, 0
      %p76 = por %p74, %p75
      %p77 = scmp.ne.s32.totalorder %s69, %s71
      %p78 = scmp.eq.s32.totalorder %s40, 1
      %p79 = por %p77, %p78
      %p80 = scmp.ne.s32.totalorder %s71, %s72
      %p81 = scmp.eq.s32.totalorder %s40, 0
      %p82 = por %p80, %p81
      %p83 = scmp.ne.s32.totalorder %s71, %s72
      %p84 = scmp.eq.s32.totalorder %s41, 1
      %p85 = por %p83, %p84
      %p87 = scmp.ne.s32.totalorder %s72, %s86
      %p88 = scmp.eq.s32.totalorder %s41, 0
      %p89 = por %p87, %p88
      %s91 = sadd.s32 %s90, 1
      %p94 = scmp.eq.s32.totalorder %s35, 1
      %p95 = scmp.ne.s32.totalorder %s90, %s92
      %p96 = scmp.eq.s32.totalorder %s35, 0
      %p97 = por %p95, %p96
      %p98 = scmp.ne.s32.totalorder %s90, %s92
      %p99 = scmp.eq.s32.totalorder %s40, 1
      %p100 = por %p98, %p99
      %p101 = scmp.ne.s32.totalorder %s92, %s93
      %p102 = scmp.eq.s32.totalorder %s40, 0
      %p103 = por %p101, %p102
      %p104 = scmp.ne.s32.totalorder %s92, %s93
      %p105 = scmp.eq.s32.totalorder %s41, 1
      %p106 = por %p104, %p105
      %p108 = scmp.ne.s32.totalorder %s93, %s107
      %p109 = scmp.eq.s32.totalorder %s41, 0
      %p110 = por %p108, %p109
      %s112 = sadd.s32 %s111, 1
      %p115 = scmp.eq.s32.totalorder %s35, 1
      %p116 = scmp.ne.s32.totalorder %s111, %s113
      %p117 = scmp.eq.s32.totalorder %s35, 0
      %p118 = por %p116, %p117
      %p119 = scmp.ne.s32.totalorder %s111, %s113
      %p120 = scmp.eq.s32.totalorder %s40, 1
      %p121 = por %p119, %p120
      %p122 = scmp.ne.s32.totalorder %s113, %s114
      %p123 = scmp.eq.s32.totalorder %s40, 0
      %p124 = por %p122, %p123
      %p125 = scmp.ne.s32.totalorder %s113, %s114
      %p126 = scmp.eq.s32.totalorder %s41, 1
      %p127 = por %p125, %p126
      %p129 = scmp.ne.s32.totalorder %s114, %s128
      %p130 = scmp.eq.s32.totalorder %s41, 0
      %p131 = por %p129, %p130
      %s133 = sadd.s32 %s132, 1
      %p136 = scmp.eq.s32.totalorder %s35, 1
      %p137 = scmp.ne.s32.totalorder %s132, %s134
      %p138 = scmp.eq.s32.totalorder %s35, 0
      %p139 = por %p137, %p138
      %p140 = scmp.ne.s32.totalorder %s132, %s134
      %p141 = scmp.eq.s32.totalorder %s40, 1
      %p142 = por %p140, %p141
      %p143 = scmp.ne.s32.totalorder %s134, %s135
      %p144 = scmp.eq.s32.totalorder %s40, 0
      %p145 = por %p143, %p144
      %p146 = scmp.ne.s32.totalorder %s134, %s135
      %p147 = scmp.eq.s32.totalorder %s41, 1
      %p148 = por %p146, %p147
      %p150 = scmp.ne.s32.totalorder %s135, %s149
      %p151 = scmp.eq.s32.totalorder %s41, 0
      %p152 = por %p150, %p151
      %s154 = sadd.s32 %s153, 1
      %p157 = scmp.eq.s32.totalorder %s35, 1
      %p158 = scmp.ne.s32.totalorder %s153, %s155
      %p159 = scmp.eq.s32.totalorder %s35, 0
      %p160 = por %p158, %p159
      %p161 = scmp.ne.s32.totalorder %s153, %s155
      %p162 = scmp.eq.s32.totalorder %s40, 1
      %p163 = por %p161, %p162
      %p164 = scmp.ne.s32.totalorder %s155, %s156
      %p165 = scmp.eq.s32.totalorder %s40, 0
      %p166 = por %p164, %p165
      %p167 = scmp.ne.s32.totalorder %s155, %s156
      %p168 = scmp.eq.s32.totalorder %s41, 1
      %p169 = por %p167, %p168
      %p171 = scmp.ne.s32.totalorder %s156, %s170
      %p172 = scmp.eq.s32.totalorder %s41, 0
      %p173 = por %p171, %p172
      %s175 = sadd.s32 %s174, 1
      %p178 = scmp.eq.s32.totalorder %s35, 1
      %p179 = scmp.ne.s32.totalorder %s174, %s176
      %p180 = scmp.eq.s32.totalorder %s35, 0
      %p181 = por %p179, %p180
      %p182 = scmp.ne.s32.totalorder %s174, %s176
      %p183 = scmp.eq.s32.totalorder %s40, 1
      %p184 = por %p182, %p183
      %p185 = scmp.ne.s32.totalorder %s176, %s177
      %p186 = scmp.eq.s32.totalorder %s40, 0
      %p187 = por %p185, %p186
      %p188 = scmp.ne.s32.totalorder %s176, %s177
      %p189 = scmp.eq.s32.totalorder %s41, 1
      %p190 = por %p188, %p189
      %p192 = scmp.ne.s32.totalorder %s177, %s191
      %p193 = scmp.eq.s32.totalorder %s41, 0
      %p194 = por %p192, %p193
      %s196 = sadd.s32 %s195, 1
      %p199 = scmp.eq.s32.totalorder %s35, 1
      %p200 = scmp.ne.s32.totalorder %s195, %s197
      %p201 = scmp.eq.s32.totalorder %s35, 0
      %p202 = por %p200, %p201
      %p203 = scmp.ne.s32.totalorder %s195, %s197
      %p204 = scmp.eq.s32.totalorder %s40, 1
      %p205 = por %p203, %p204
      %p206 = scmp.ne.s32.totalorder %s197, %s198
      %p207 = scmp.eq.s32.totalorder %s40, 0
      %p208 = por %p206, %p207
      %p209 = scmp.ne.s32.totalorder %s197, %s198
      %p210 = scmp.eq.s32.totalorder %s41, 1
      %p211 = por %p209, %p210
      %p213 = scmp.ne.s32.totalorder %s198, %s212
      %p214 = scmp.eq.s32.totalorder %s41, 0
      %p215 = por %p213, %p214
      %s217 = sadd.s32 %s216, 1
      %p220 = scmp.eq.s32.totalorder %s35, 1
      %p221 = scmp.ne.s32.totalorder %s216, %s218
      %p222 = scmp.eq.s32.totalorder %s35, 0
      %p223 = por %p221, %p222
      %p224 = scmp.ne.s32.totalorder %s216, %s218
      %p225 = scmp.eq.s32.totalorder %s40, 1
      %p226 = por %p224, %p225
      %p227 = scmp.ne.s32.totalorder %s218, %s219
      %p228 = scmp.eq.s32.totalorder %s40, 0
      %p229 = por %p227, %p228
      %p230 = scmp.ne.s32.totalorder %s218, %s219
      %p231 = scmp.eq.s32.totalorder %s41, 1
      %p232 = por %p230, %p231
      %p234 = scmp.ne.s32.totalorder %s219, %s233
      %p235 = scmp.eq.s32.totalorder %s41, 0
      %p236 = por %p234, %p235
      %s238 = sadd.s32 %s237, 1
      %p241 = scmp.eq.s32.totalorder %s35, 1
      %p242 = scmp.ne.s32.totalorder %s237, %s239
      %p243 = scmp.eq.s32.totalorder %s35, 0
      %p244 = por %p242, %p243
      %p245 = scmp.ne.s32.totalorder %s237, %s239
      %p246 = scmp.eq.s32.totalorder %s40, 1
      %p247 = por %p245, %p246
      %p248 = scmp.ne.s32.totalorder %s239, %s240
      %p249 = scmp.eq.s32.totalorder %s40, 0
      %p250 = por %p248, %p249
      %p251 = scmp.ne.s32.totalorder %s239, %s240
      %p252 = scmp.eq.s32.totalorder %s41, 1
      %p253 = por %p251, %p252
      %p255 = scmp.ne.s32.totalorder %s240, %s254
      %p256 = scmp.eq.s32.totalorder %s41, 0
      %p257 = por %p255, %p256
      %s259 = sadd.s32 %s258, 1
      %p262 = scmp.eq.s32.totalorder %s35, 1
      %p263 = scmp.ne.s32.totalorder %s258, %s260
      %p264 = scmp.eq.s32.totalorder %s35, 0
      %p265 = por %p263, %p264
      %p266 = scmp.ne.s32.totalorder %s258, %s260
      %p267 = scmp.eq.s32.totalorder %s40, 1
      %p268 = por %p266, %p267
      %p269 = scmp.ne.s32.totalorder %s260, %s261
      %p270 = scmp.eq.s32.totalorder %s40, 0
      %p271 = por %p269, %p270
      %p272 = scmp.ne.s32.totalorder %s260, %s261
      %p273 = scmp.eq.s32.totalorder %s41, 1
      %p274 = por %p272, %p273
      %p276 = scmp.ne.s32.totalorder %s261, %s275
      %p277 = scmp.eq.s32.totalorder %s41, 0
      %p278 = por %p276, %p277
      %s280 = sadd.s32 %s279, 1
      %p283 = scmp.eq.s32.totalorder %s35, 1
      %p284 = scmp.ne.s32.totalorder %s279, %s281
      %p285 = scmp.eq.s32.totalorder %s35, 0
      %p286 = por %p284, %p285
      %p287 = scmp.ne.s32.totalorder %s279, %s281
      %p288 = scmp.eq.s32.totalorder %s40, 1
      %p289 = por %p287, %p288
      %p290 = scmp.ne.s32.totalorder %s281, %s282
      %p291 = scmp.eq.s32.totalorder %s40, 0
      %p292 = por %p290, %p291
      %p293 = scmp.ne.s32.totalorder %s281, %s282
      %p294 = scmp.eq.s32.totalorder %s41, 1
      %p295 = por %p293, %p294
      %p297 = scmp.ne.s32.totalorder %s282, %s296
      %p298 = scmp.eq.s32.totalorder %s41, 0
      %p299 = por %p297, %p298
      %s301 = sadd.s32 %s300, 1
      %p304 = scmp.eq.s32.totalorder %s35, 1
      %p305 = scmp.ne.s32.totalorder %s300, %s302
      %p306 = scmp.eq.s32.totalorder %s35, 0
      %p307 = por %p305, %p306
      %p308 = scmp.ne.s32.totalorder %s300, %s302
      %p309 = scmp.eq.s32.totalorder %s40, 1
      %p310 = por %p308, %p309
      %p311 = scmp.ne.s32.totalorder %s302, %s303
      %p312 = scmp.eq.s32.totalorder %s40, 0
      %p313 = por %p311, %p312
      %p314 = scmp.ne.s32.totalorder %s302, %s303
      %p315 = scmp.eq.s32.totalorder %s41, 1
      %p316 = por %p314, %p315
      %p318 = scmp.ne.s32.totalorder %s303, %s317
      %p319 = scmp.eq.s32.totalorder %s41, 0
      %p320 = por %p318, %p319
      %s322 = sadd.s32 %s321, 1
      %p325 = scmp.eq.s32.totalorder %s35, 1
      %p326 = scmp.ne.s32.totalorder %s321, %s323
      %p327 = scmp.eq.s32.totalorder %s35, 0
      %p328 = por %p326, %p327
      %p329 = scmp.ne.s32.totalorder %s321, %s323
      %p330 = scmp.eq.s32.totalorder %s40, 1
      %p331 = por %p329, %p330
      %p332 = scmp.ne.s32.totalorder %s323, %s324
      %p333 = scmp.eq.s32.totalorder %s40, 0
      %p334 = por %p332, %p333
      %p335 = scmp.ne.s32.totalorder %s323, %s324
      %p336 = scmp.eq.s32.totalorder %s41, 1
      %p337 = por %p335, %p336
      %p339 = scmp.ne.s32.totalorder %s324, %s338
      %p340 = scmp.eq.s32.totalorder %s41, 0
      %p341 = por %p339, %p340
      %s343 = sadd.s32 %s342, 1
      %p346 = scmp.eq.s32.totalorder %s35, 1
      %p347 = scmp.ne.s32.totalorder %s342, %s344
      %p348 = scmp.eq.s32.totalorder %s35, 0
      %p349 = por %p347, %p348
      %p350 = scmp.ne.s32.totalorder %s342, %s344
      %p351 = scmp.eq.s32.totalorder %s40, 1
      %p352 = por %p350, %p351
      %p353 = scmp.ne.s32.totalorder %s344, %s345
      %p354 = scmp.eq.s32.totalorder %s40, 0
      %p355 = por %p353, %p354
      %p356 = scmp.ne.s32.totalorder %s344, %s345
      %p357 = scmp.eq.s32.totalorder %s41, 1
      %p358 = por %p356, %p357
      %p360 = scmp.ne.s32.totalorder %s345, %s359
      %p361 = scmp.eq.s32.totalorder %s41, 0
      %p362 = por %p360, %p361
      %s364 = sadd.s32 %s363, 1
      %p367 = scmp.eq.s32.totalorder %s35, 1
      %p368 = scmp.ne.s32.totalorder %s363, %s365
      %p369 = scmp.eq.s32.totalorder %s35, 0
      %p370 = por %p368, %p369
      %p371 = scmp.ne.s32.totalorder %s363, %s365
      %p372 = scmp.eq.s32.totalorder %s40, 1
      %p373 = por %p371, %p372
      %p374 = scmp.ne.s32.totalorder %s365, %s366
      %p375 = scmp.eq.s32.totalorder %s40, 0
      %p376 = por %p374, %p375
      %p377 = scmp.ne.s32.totalorder %s365, %s366
      %p378 = scmp.eq.s32.totalorder %s41, 1
      %p379 = por %p377, %p378
      %p381 = scmp.ne.s32.totalorder %s366, %s380
      %p382 = scmp.eq.s32.totalorder %s41, 0
      %p383 = por %p381, %p382
      %s385 = sadd.s32 %s384, 1
      %p388 = scmp.eq.s32.totalorder %s35, 1
      %p389 = scmp.ne.s32.totalorder %s384, %s386
      %p390 = scmp.eq.s32.totalorder %s35, 0
      %p391 = por %p389, %p390
      %p392 = scmp.ne.s32.totalorder %s384, %s386
      %p393 = scmp.eq.s32.totalorder %s40, 1
      %p394 = por %p392, %p393
      %p395 = scmp.ne.s32.totalorder %s386, %s387
      %p396 = scmp.eq.s32.totalorder %s40, 0
      %p397 = por %p395, %p396
      %p398 = scmp.ne.s32.totalorder %s386, %s387
      %p399 = scmp.eq.s32.totalorder %s41, 1
      %p400 = por %p398, %p399
      %p402 = scmp.ne.s32.totalorder %s387, %s401
      %p403 = scmp.eq.s32.totalorder %s41, 0
      %p404 = por %p402, %p403
      %s406 = sadd.s32 %s405, 1
      %p409 = scmp.eq.s32.totalorder %s35, 1
      %p410 = scmp.ne.s32.totalorder %s405, %s407
      %p411 = scmp.eq.s32.totalorder %s35, 0
      %p412 = por %p410, %p411
      %p413 = scmp.ne.s32.totalorder %s405, %s407
      %p414 = scmp.eq.s32.totalorder %s40, 1
      %p415 = por %p413, %p414
      %p416 = scmp.ne.s32.totalorder %s407, %s408
      %p417 = scmp.eq.s32.totalorder %s40, 0
      %p418 = por %p416, %p417
      %p419 = scmp.ne.s32.totalorder %s407, %s408
      %p420 = scmp.eq.s32.totalorder %s41, 1
      %p421 = por %p419, %p420
      %p423 = scmp.ne.s32.totalorder %s408, %s422
      %p424 = scmp.eq.s32.totalorder %s41, 0
      %p425 = por %p423, %p424
      %s427 = sadd.s32 %s426, 1
      %p430 = scmp.eq.s32.totalorder %s35, 1
      %p431 = scmp.ne.s32.totalorder %s426, %s428
      %p432 = scmp.eq.s32.totalorder %s35, 0
      %p433 = por %p431, %p432
      %p434 = scmp.ne.s32.totalorder %s426, %s428
      %p435 = scmp.eq.s32.totalorder %s40, 1
      %p436 = por %p434, %p435
      %p437 = scmp.ne.s32.totalorder %s428, %s429
      %p438 = scmp.eq.s32.totalorder %s40, 0
      %p439 = por %p437, %p438
      %p440 = scmp.ne.s32.totalorder %s428, %s429
      %p441 = scmp.eq.s32.totalorder %s41, 1
      %p442 = por %p440, %p441
      %p444 = scmp.ne.s32.totalorder %s429, %s443
      %p445 = scmp.eq.s32.totalorder %s41, 0
      %p446 = por %p444, %p445
      %s448 = sadd.s32 %s447, 1
      %p451 = scmp.eq.s32.totalorder %s35, 1
      %p452 = scmp.ne.s32.totalorder %s447, %s449
      %p453 = scmp.eq.s32.totalorder %s35, 0
      %p454 = por %p452, %p453
      %p455 = scmp.ne.s32.totalorder %s447, %s449
      %p456 = scmp.eq.s32.totalorder %s40, 1
      %p457 = por %p455, %p456
      %p458 = scmp.ne.s32.totalorder %s449, %s450
      %p459 = scmp.eq.s32.totalorder %s40, 0
      %p460 = por %p458, %p459
      %p461 = scmp.ne.s32.totalorder %s449, %s450
      %p462 = scmp.eq.s32.totalorder %s41, 1
      %p463 = por %p461, %p462
      %p465 = scmp.ne.s32.totalorder %s450, %s464
      %p466 = scmp.eq.s32.totalorder %s41, 0
      %p467 = por %p465, %p466
      %s469 = sadd.s32 %s468, 1
      %p472 = scmp.eq.s32.totalorder %s35, 1
      %p473 = scmp.ne.s32.totalorder %s468, %s470
      %p474 = scmp.eq.s32.totalorder %s35, 0
      %p475 = por %p473, %p474
      %p476 = scmp.ne.s32.totalorder %s468, %s470
      %p477 = scmp.eq.s32.totalorder %s40, 1
      %p478 = por %p476, %p477
      %p479 = scmp.ne.s32.totalorder %s470, %s471
      %p480 = scmp.eq.s32.totalorder %s40, 0
      %p481 = por %p479, %p480
      %p482 = scmp.ne.s32.totalorder %s470, %s471
      %p483 = scmp.eq.s32.totalorder %s41, 1
      %p484 = por %p482, %p483
      %p486 = scmp.ne.s32.totalorder %s471, %s485
      %p487 = scmp.eq.s32.totalorder %s41, 0
      %p488 = por %p486, %p487
      %s490 = sadd.s32 %s489, 1
      %p493 = scmp.eq.s32.totalorder %s35, 1
      %p494 = scmp.ne.s32.totalorder %s489, %s491
      %p495 = scmp.eq.s32.totalorder %s35, 0
      %p496 = por %p494, %p495
      %p497 = scmp.ne.s32.totalorder %s489, %s491
      %p498 = scmp.eq.s32.totalorder %s40, 1
      %p499 = por %p497, %p498
      %p500 = scmp.ne.s32.totalorder %s491, %s492
      %p501 = scmp.eq.s32.totalorder %s40, 0
      %p502 = por %p500, %p501
      %p503 = scmp.ne.s32.totalorder %s491, %s492
      %p504 = scmp.eq.s32.totalorder %s41, 1
      %p505 = por %p503, %p504
      %p507 = scmp.ne.s32.totalorder %s492, %s506
      %p508 = scmp.eq.s32.totalorder %s41, 0
      %p509 = por %p507, %p508
      %s510 = ssub.s32 %s35, %s42
      %p511 = scmp.eq.s32.totalorder %s510, 0
      %s513 = sadd.s32 %s512, 1
      %s514 = scalar_select %p511, %s512, %s513
      %p517 = pneg %p511
      %p518 = scmp.eq.s32.totalorder %s35, 1
      %p519 = por %p517, %p518
      %p520 = scmp.ne.s32.totalorder %s512, %s515
      %p521 = scmp.eq.s32.totalorder %s35, 0
      %p522 = por %p520, %p521
      %p523 = scmp.ne.s32.totalorder %s512, %s515
      %p524 = scmp.eq.s32.totalorder %s40, 1
      %p525 = por %p523, %p524
      %p526 = scmp.ne.s32.totalorder %s515, %s516
      %p527 = scmp.eq.s32.totalorder %s40, 0
      %p528 = por %p526, %p527
      %p529 = scmp.ne.s32.totalorder %s515, %s516
      %p530 = scmp.eq.s32.totalorder %s41, 1
      %p531 = por %p529, %p530
      %p533 = scmp.ne.s32.totalorder %s516, %s532
      %p534 = scmp.eq.s32.totalorder %s41, 0
      %p535 = por %p533, %p534
      %s536 = ssub.s32 %s35, %s42
      %p537 = scmp.eq.s32.totalorder %s536, 0
      %s539 = sadd.s32 %s538, 1
      %s540 = scalar_select %p537, %s538, %s539
      %p543 = pneg %p537
      %p544 = scmp.eq.s32.totalorder %s35, 1
      %p545 = por %p543, %p544
      %p546 = scmp.ne.s32.totalorder %s538, %s541
      %p547 = scmp.eq.s32.totalorder %s35, 0
      %p548 = por %p546, %p547
      %p549 = scmp.ne.s32.totalorder %s538, %s541
      %p550 = scmp.eq.s32.totalorder %s40, 1
      %p551 = por %p549, %p550
      %p552 = scmp.ne.s32.totalorder %s541, %s542
      %p553 = scmp.eq.s32.totalorder %s40, 0
      %p554 = por %p552, %p553
      %p555 = scmp.ne.s32.totalorder %s541, %s542
      %p556 = scmp.eq.s32.totalorder %s41, 1
      %p557 = por %p555, %p556
      %p559 = scmp.ne.s32.totalorder %s542, %s558
      %p560 = scmp.eq.s32.totalorder %s41, 0
      %p561 = por %p559, %p560
      %p562 = scmp.le.s32.totalorder 1, %s35
      %p563 = scmp.lt.s32.totalorder %s35, 3
      %p564 = pnand %p562, %p563
      %p565 = pneg %p564
      // Predicated region
      $region9: #{tpu_custom_call.1} parent=5 // pred_check
        _
      $region10: #{tpu_custom_call.1} parent=5 // pred_check_branch
        %567 = sbr.rel (%p564) target = $region12
      $region11: #{tpu_custom_call.1} parent=5 // pred_region
        %s568 = ssub.s32 %s35, 1
        // Predicated region
        $region13: #{tpu_custom_call.1} parent=11 // pred_check
          %p569 = pneg %p82
        $region14: #{tpu_custom_call.1} parent=11 // pred_check_branch
          %571 = sbr.rel (%p569) target = $region16
        $region15: #{tpu_custom_call.1} parent=11 // pred_region
          _
        $region16: #{tpu_custom_call.1} parent=11 // pred_fallthru
          _
        // Predicated region
        $region17: #{tpu_custom_call.1} parent=11 // pred_check
          %p572 = pneg %p103
        $region18: #{tpu_custom_call.1} parent=11 // pred_check_branch
          %574 = sbr.rel (%p572) target = $region20
        $region19: #{tpu_custom_call.1} parent=11 // pred_region
          _
        $region20: #{tpu_custom_call.1} parent=11 // pred_fallthru
          _
        // Predicated region
        $region21: #{tpu_custom_call.1} parent=11 // pred_check
          %p575 = pneg %p124
        $region22: #{tpu_custom_call.1} parent=11 // pred_check_branch
          %577 = sbr.rel (%p575) target = $region24
        $region23: #{tpu_custom_call.1} parent=11 // pred_region
          _
        $region24: #{tpu_custom_call.1} parent=11 // pred_fallthru
          _
        // Predicated region
        $region25: #{tpu_custom_call.1} parent=11 // pred_check
          %p578 = pneg %p145
        $region26: #{tpu_custom_call.1} parent=11 // pred_check_branch
          %580 = sbr.rel (%p578) target = $region28
        $region27: #{tpu_custom_call.1} parent=11 // pred_region
          _
        $region28: #{tpu_custom_call.1} parent=11 // pred_fallthru
          _
        // Predicated region
        $region29: #{tpu_custom_call.1} parent=11 // pred_check
          %p581 = pneg %p166
        $region30: #{tpu_custom_call.1} parent=11 // pred_check_branch
          %583 = sbr.rel (%p581) target = $region32
        $region31: #{tpu_custom_call.1} parent=11 // pred_region
          _
        $region32: #{tpu_custom_call.1} parent=11 // pred_fallthru
          _
        // Predicated region
        $region33: #{tpu_custom_call.1} parent=11 // pred_check
          %p584 = pneg %p187
        $region34: #{tpu_custom_call.1} parent=11 // pred_check_branch
          %586 = sbr.rel (%p584) target = $region36
        $region35: #{tpu_custom_call.1} parent=11 // pred_region
          _
        $region36: #{tpu_custom_call.1} parent=11 // pred_fallthru
          _
        // Predicated region
        $region37: #{tpu_custom_call.1} parent=11 // pred_check
          %p587 = pneg %p208
        $region38: #{tpu_custom_call.1} parent=11 // pred_check_branch
          %589 = sbr.rel (%p587) target = $region40
        $region39: #{tpu_custom_call.1} parent=11 // pred_region
          _
        $region40: #{tpu_custom_call.1} parent=11 // pred_fallthru
          _
        // Predicated region
        $region41: #{tpu_custom_call.1} parent=11 // pred_check
          %p590 = pneg %p229
        $region42: #{tpu_custom_call.1} parent=11 // pred_check_branch
          %592 = sbr.rel (%p590) target = $region44
        $region43: #{tpu_custom_call.1} parent=11 // pred_region
          _
        $region44: #{tpu_custom_call.1} parent=11 // pred_fallthru
          _
        // Predicated region
        $region45: #{tpu_custom_call.1} parent=11 // pred_check
          %p593 = pneg %p250
        $region46: #{tpu_custom_call.1} parent=11 // pred_check_branch
          %595 = sbr.rel (%p593) target = $region48
        $region47: #{tpu_custom_call.1} parent=11 // pred_region
          _
        $region48: #{tpu_custom_call.1} parent=11 // pred_fallthru
          _
        // Predicated region
        $region49: #{tpu_custom_call.1} parent=11 // pred_check
          %p596 = pneg %p271
        $region50: #{tpu_custom_call.1} parent=11 // pred_check_branch
          %598 = sbr.rel (%p596) target = $region52
        $region51: #{tpu_custom_call.1} parent=11 // pred_region
          _
        $region52: #{tpu_custom_call.1} parent=11 // pred_fallthru
          _
        // Predicated region
        $region53: #{tpu_custom_call.1} parent=11 // pred_check
          %p599 = pneg %p292
        $region54: #{tpu_custom_call.1} parent=11 // pred_check_branch
          %601 = sbr.rel (%p599) target = $region56
        $region55: #{tpu_custom_call.1} parent=11 // pred_region
          _
        $region56: #{tpu_custom_call.1} parent=11 // pred_fallthru
          _
        // Predicated region
        $region57: #{tpu_custom_call.1} parent=11 // pred_check
          %p602 = pneg %p313
        $region58: #{tpu_custom_call.1} parent=11 // pred_check_branch
          %604 = sbr.rel (%p602) target = $region60
        $region59: #{tpu_custom_call.1} parent=11 // pred_region
          _
        $region60: #{tpu_custom_call.1} parent=11 // pred_fallthru
          _
        // Predicated region
        $region61: #{tpu_custom_call.1} parent=11 // pred_check
          %p605 = pneg %p334
        $region62: #{tpu_custom_call.1} parent=11 // pred_check_branch
          %607 = sbr.rel (%p605) target = $region64
        $region63: #{tpu_custom_call.1} parent=11 // pred_region
          _
        $region64: #{tpu_custom_call.1} parent=11 // pred_fallthru
          _
        // Predicated region
        $region65: #{tpu_custom_call.1} parent=11 // pred_check
          %p608 = pneg %p355
        $region66: #{tpu_custom_call.1} parent=11 // pred_check_branch
          %610 = sbr.rel (%p608) target = $region68
        $region67: #{tpu_custom_call.1} parent=11 // pred_region
          _
        $region68: #{tpu_custom_call.1} parent=11 // pred_fallthru
          _
        // Predicated region
        $region69: #{tpu_custom_call.1} parent=11 // pred_check
          %p611 = pneg %p376
        $region70: #{tpu_custom_call.1} parent=11 // pred_check_branch
          %613 = sbr.rel (%p611) target = $region72
        $region71: #{tpu_custom_call.1} parent=11 // pred_region
          _
        $region72: #{tpu_custom_call.1} parent=11 // pred_fallthru
          _
        // Predicated region
        $region73: #{tpu_custom_call.1} parent=11 // pred_check
          %p614 = pneg %p397
        $region74: #{tpu_custom_call.1} parent=11 // pred_check_branch
          %616 = sbr.rel (%p614) target = $region76
        $region75: #{tpu_custom_call.1} parent=11 // pred_region
          _
        $region76: #{tpu_custom_call.1} parent=11 // pred_fallthru
          _
        // Predicated region
        $region77: #{tpu_custom_call.1} parent=11 // pred_check
          %p617 = pneg %p418
        $region78: #{tpu_custom_call.1} parent=11 // pred_check_branch
          %619 = sbr.rel (%p617) target = $region80
        $region79: #{tpu_custom_call.1} parent=11 // pred_region
          _
        $region80: #{tpu_custom_call.1} parent=11 // pred_fallthru
          _
        // Predicated region
        $region81: #{tpu_custom_call.1} parent=11 // pred_check
          %p620 = pneg %p439
        $region82: #{tpu_custom_call.1} parent=11 // pred_check_branch
          %622 = sbr.rel (%p620) target = $region84
        $region83: #{tpu_custom_call.1} parent=11 // pred_region
          _
        $region84: #{tpu_custom_call.1} parent=11 // pred_fallthru
          _
        // Predicated region
        $region85: #{tpu_custom_call.1} parent=11 // pred_check
          %p623 = pneg %p460
        $region86: #{tpu_custom_call.1} parent=11 // pred_check_branch
          %625 = sbr.rel (%p623) target = $region88
        $region87: #{tpu_custom_call.1} parent=11 // pred_region
          _
        $region88: #{tpu_custom_call.1} parent=11 // pred_fallthru
          _
        // Predicated region
        $region89: #{tpu_custom_call.1} parent=11 // pred_check
          %p626 = pneg %p481
        $region90: #{tpu_custom_call.1} parent=11 // pred_check_branch
          %628 = sbr.rel (%p626) target = $region92
        $region91: #{tpu_custom_call.1} parent=11 // pred_region
          _
        $region92: #{tpu_custom_call.1} parent=11 // pred_fallthru
          _
        // Predicated region
        $region93: #{tpu_custom_call.1} parent=11 // pred_check
          %p629 = pneg %p502
        $region94: #{tpu_custom_call.1} parent=11 // pred_check_branch
          %631 = sbr.rel (%p629) target = $region96
        $region95: #{tpu_custom_call.1} parent=11 // pred_region
          _
        $region96: #{tpu_custom_call.1} parent=11 // pred_fallthru
          _
      $region12: #{tpu_custom_call.1} parent=5 // pred_fallthru
        _
      %p632 = scmp.lt.s32.totalorder %s35, 2
      // Predicated region
      $region97: #{tpu_custom_call.1} parent=5 // pred_check
        %p633 = pneg %p632
      $region98: #{tpu_custom_call.1} parent=5 // pred_check_branch
        %635 = sbr.rel (%p633) target = $region100
      $region99: #{tpu_custom_call.1} parent=5 // pred_region
        // Predicated region
        $region101: #{tpu_custom_call.1} parent=99 // pred_check
          %p636 = pneg %p55
        $region102: #{tpu_custom_call.1} parent=99 // pred_check_branch
          %638 = sbr.rel (%p636) target = $region104
        $region103: #{tpu_custom_call.1} parent=99 // pred_region
          %s639 = smul.u32 2, %s35
          %p640 = scmp.lt.s32.totalorder %s639, 3
          %s641 = scalar_select %p640, %s639, 3
          %s642 = smul.addr %s641, 8
          %s643 = scalar_lea.vmem %s0, %s642
          %s644 = smul.u32 2, %s35
        $region104: #{tpu_custom_call.1} parent=99 // pred_fallthru
          _
      $region100: #{tpu_custom_call.1} parent=5 // pred_fallthru
        _
      %p645 = scmp.le.s32.totalorder 1, %s35
      %p646 = scmp.lt.s32.totalorder %s35, 3
      %p647 = pnand %p645, %p646
      %p648 = pneg %p647
      // Predicated region
      $region105: #{tpu_custom_call.1} parent=5 // pred_check
        _
      $region106: #{tpu_custom_call.1} parent=5 // pred_check_branch
        %650 = sbr.rel (%p647) target = $region108
      $region107: #{tpu_custom_call.1} parent=5 // pred_region
        %s651 = ssub.s32 %s35, 1
        %s652 = smul.u32 2, %s40
        %p653 = scmp.lt.s32.totalorder %s652, 3
        %s654 = scalar_select %p653, %s652, 3
        %s655 = smul.addr %s654, 8
        %s656 = scalar_lea.vmem %s0, %s655
        %p657 = pneg %p61
        %p658 = pneg %p58
        %p659 = pneg %p82
        %p660 = pneg %p79
        %p661 = pneg %p103
        %p662 = pneg %p100
        %p663 = pneg %p124
        %p664 = pneg %p121
        %p665 = pneg %p145
        %p666 = pneg %p142
        %p667 = pneg %p166
        %p668 = pneg %p163
        %p669 = pneg %p187
        %p670 = pneg %p184
        %p671 = pneg %p208
        %p672 = pneg %p205
        %p673 = pneg %p229
        %p674 = pneg %p226
        %p675 = pneg %p250
        %p676 = pneg %p247
        %p677 = pneg %p271
        %p678 = pneg %p268
        %p679 = pneg %p292
        %p680 = pneg %p289
        %p681 = pneg %p313
        %p682 = pneg %p310
        %p683 = pneg %p334
        %p684 = pneg %p331
        %p685 = pneg %p355
        %p686 = pneg %p352
        %p687 = pneg %p376
        %p688 = pneg %p373
        %p689 = pneg %p397
        %p690 = pneg %p394
        %p691 = pneg %p418
        %p692 = pneg %p415
        %p693 = pneg %p439
        %p694 = pneg %p436
        %p695 = pneg %p460
        %p696 = pneg %p457
        %p697 = pneg %p481
        %p698 = pneg %p478
        %p699 = pneg %p502
        %p700 = pneg %p499
        %p701 = pneg %p528
        %p702 = pneg %p525
        %s703 = sand.u32 %s515, 1
        %s704 = scalar_lea.sflag [#allocation4], %s703
        %s705 = sand.u32 %s515, 1
        %s706 = smul.addr %s705, 16
        %s707 = scalar_lea.vmem [#allocation3], %s706
        %p708 = pneg %p554
        %p709 = pneg %p551
        %s710 = smul.u32 2, %s40
        %p711 = scmp.lt.s32.totalorder %s710, 3
        %s712 = scalar_select %p711, %s710, 3
        %s713 = smul.addr %s712, 8
        %s714 = scalar_lea.vmem %s23, %s713
        %s715 = smul.u32 2, %s40
        %p716 = scmp.lt.s32.totalorder %s715, 3
        %s717 = scalar_select %p716, %s715, 3
        %s718 = smul.addr %s717, 8
        %s719 = scalar_lea.vmem %s0, %s718
        %s720 = smul.u32 2, %s40
        %s721 = smul.u32 2, %s40
        %s722 = smul.u32 2, %s40
        %p723 = scmp.lt.s32.totalorder %s722, 3
        %s724 = scalar_select %p723, %s722, 3
        %s725 = smul.addr %s724, 8
        %s726 = scalar_lea.vmem %s23, %s725
        %s727 = smul.u32 2, %s40
        %v729 = vld [vmem:[%s719] sm:$0xff]
        %v730 = vld [vmem:[%s719 + $0x8] sm:$0xff]
        %v731 = vpack.c.bf16 %v730, %v729
        %v732 = vld [vmem:[%s1] sm:$0xf]
        %v733 = vld [vmem:[%s1 + $0x4] sm:$0xf]
        %v734 = vld [vmem:[%s1 + $0x8] sm:$0xf]
        %v735 = vld [vmem:[%s1 + $0xc] sm:$0xf]
        %v736 = vld [vmem:[%s2] sm:$0xff]
        %v737 = vld [vmem:[%s2 + $0x8] sm:$0xff]
        %v738 = vld [vmem:[%s4] sm:$0x1]
        %v739 = vld [vmem:[#allocation2] sm:$0x1]
        %v740 = vld [vmem:[%s6] sm:$0x1]
        %v741 = vld [vmem:[%s7] sm:$0x1]
        %v742 = vld [vmem:[%s12] sm:$0x1]
        %v743 = vld [vmem:[%s13] sm:$0x1]
        %v744 = vld [vmem:[%s15] sm:$0x1]
        %v745 = vld [vmem:[%s17] sm:$0x1]
        %v746 = vld [vmem:[%s18] sm:$0xff]
        %v747 = vld [vmem:[%s18 + $0x8] sm:$0xff]
        %v748 = vld [vmem:[%s19] sm:$0xff]
        %v749 = vld [vmem:[%s19 + $0x8] sm:$0xff]
        %v754 = vunpack.c.l.b16 %v732
        %v755 = vunpack.c.l.b16 %v733
        %v756 = vunpack.c.l.b16 %v734
        %v757 = vunpack.c.l.b16 %v735
        %v758 = vpack.c.b16 %v755, %v754
        %v759 = vpack.c.b16 %v757, %v756
        %vm762 = vcmask 261120
        %v764 = vsel %vm762, %v731, 0
        %766 = vmatprep.subr.bf16.mxu0 0
        %767 = vmatpush1.bf16.msra.mxu0 %v758
        %768 = vmatprep.subr.bf16.mxu0 0
        %769 = vmatpush1.bf16.msra.mxu0 %v759
        %770 = vmatprep.subr.bf16.mxu0 0
        %771 = vmatpush1.bf16.msra.mxu0 0
        %772 = vmatprep.subr.bf16.mxu0 0
        %773 = vmatpush1.bf16.msra.mxu0 0
        %774 = vmatprep.subr.bf16.mxu0 0
        %775 = vmatpush1.bf16.msra.mxu0 0
        %776 = vmatprep.subr.bf16.mxu0 0
        %777 = vmatpush1.bf16.msra.mxu0 0
        %778 = vmatprep.subr.bf16.mxu0 0
        %779 = vmatpush1.bf16.msra.mxu0 0
        %780 = vmatprep.subr.bf16.mxu0 0
        %781 = vmatpush1.bf16.msra.mxu0 0
        %782 = vmatprep.subr.bf16.mxu0 0
        %783 = vmatpush1.bf16.msra.mxu0 0
        %784 = vmatprep.subr.bf16.mxu0 0
        %785 = vmatpush1.bf16.msra.mxu0 0
        %786 = vmatprep.subr.bf16.mxu0 0
        %787 = vmatpush1.bf16.msra.mxu0 0
        %788 = vmatprep.subr.bf16.mxu0 0
        %789 = vmatpush1.bf16.msra.mxu0 0
        %790 = vmatprep.subr.bf16.mxu0 0
        %791 = vmatpush1.bf16.msra.mxu0 0
        %792 = vmatprep.subr.bf16.mxu0 0
        %793 = vmatpush1.bf16.msra.mxu0 0
        %794 = vmatprep.subr.bf16.mxu0 0
        %795 = vmatpush1.bf16.msra.mxu0 0
        %796 = vmatprep.subr.bf16.mxu0 0
        %797 = vmatpush1.bf16.msra.mxu0 0
        %798 = vmatprep.mubr.bf16.mxu0 0
        %799 = vmatmul.mubr.bf16.gmra.mrb[0].mxu0 %v764
        %v800 = vpop.f32.mrb[0].mxu0
        %v801 = vadd.f32 %v736, %v800
        %v802 = vpop.f32.mrb[0].mxu0
        %v803 = vpop.f32.mrb[0].mxu0
        %v804 = vadd.f32 %v737, %v803
        %v805 = vpop.f32.mrb[0].mxu0
        %806 = vdwg.mxu0
        %v807 = vld [vmem:[%s3] sm:$0x1]
        %v808 = vlaneseq
        %v809 = vshrl.u32 %v808, 7
        %v810 = vsub.s32 0, %v809
        %v811 = vrot.slane %v807, %v810
        %v812 = vadd.f32 %v801, %v811
        %v813 = vadd.f32 %v804, %v811
        %v815 = vlaneseq
        %v816 = vshrl.u32 %v815, 7
        %v817 = vsub.s32 0, %v816
        %v818 = vrot.slane %v738, %v817
        %v820 = vmul.f32 %v812, %v818
        %v821 = vmul.f32 %v813, %v818
        %v822 = vsel %vm762, %v820, 0.0
        %823 = vadd.xlane.f32.xlu0 %v822
        %v824 = vpop.xlane.xlu0 %823
        %v825 = vsel %vm762, %v821, 0.0
        %826 = vadd.xlane.f32.xlu0 %v825
        %v827 = vpop.xlane.xlu0 %826
        %v829 = vlaneseq
        %v830 = vshrl.u32 %v829, 7
        %v831 = vsub.s32 0, %v830
        %v832 = vrot.slane %v739, %v831
        %v834 = vadd.f32 %v824, %v832
        %v835 = vadd.f32 %v827, %v832
        %v836 = vsub.f32 0.0, %v834
        %v837 = vsub.f32 0.0, %v835
        %v838 = vmul.f32 %v836, 1.442695
        %v839 = vpow.pop %v838
        %v840 = vmul.f32 %v837, 1.442695
        %v841 = vpow.pop %v840
        %v842 = vadd.f32 %v839, 1.0
        %v843 = vadd.f32 %v841, 1.0
        %v844 = vrcp.pop %v842
        %v845 = vmul.f32 1.0, %v844
        %v846 = vrcp.pop %v843
        %v847 = vmul.f32 1.0, %v846
        %vm848 = vcmp.lt.f32.partialorder 0.0, 1.0
        %v849 = vsel %vm848, 1, 0
        %v850 = vcvt.s32.f32 %v849
        %v851 = vmul.f32 %v845, %v850
        %v852 = vmul.f32 %v847, %v850
        %v853 = vadd.f32 %v851, 0.0
        %v854 = vadd.f32 %v852, 0.0
        %vm855 = vcmp.gt.f32.partialorder %v853, 0.9
        %vm856 = vcmp.gt.f32.partialorder %v854, 0.9
        %v857 = vsel %vm855, 1, 0
        %v858 = vsel %vm856, 1, 0
        %v859 = vcvt.s32.f32 %v857
        %v860 = vcvt.s32.f32 %v858
        %v861 = vmul.f32 %v859, %v850
        %v862 = vmul.f32 %v860, %v850
        %vm863 = vcmp.le.f32.partialorder %v853, 0.9
        %vm864 = vcmp.le.f32.partialorder %v854, 0.9
        %v865 = vsel %vm863, 1, 0
        %v866 = vsel %vm864, 1, 0
        %v867 = vcvt.s32.f32 %v865
        %v868 = vcvt.s32.f32 %v866
        %v869 = vmul.f32 %v867, %v850
        %v870 = vmul.f32 %v868, %v850
        %v871 = vmul.f32 %v845, %v869
        %v872 = vmul.f32 %v847, %v870
        %v873 = vadd.f32 %v871, 0.0
        %v874 = vadd.f32 %v872, 0.0
        %v875 = vsub.f32 1.0, %v873
        %v876 = vsub.f32 1.0, %v874
        %v877 = vmul.f32 %v861, %v875
        %v878 = vmul.f32 %v862, %v876
        %v879 = vadd.f32 %v877, 0.0
        %v880 = vadd.f32 %v878, 0.0
        %v881 = vmul.f32 %v861, %v879
        %v882 = vmul.f32 %v862, %v880
        %v883 = vadd.f32 %v873, %v881
        %v884 = vadd.f32 %v874, %v882
        %v885 = vadd.f32 %v869, 0.0
        %v886 = vadd.f32 %v870, 0.0
        %v887 = vadd.f32 %v885, %v861
        %v888 = vadd.f32 %v886, %v862
        %v889 = vadd.f32 %v871, %v881
        %v890 = vadd.f32 %v872, %v882
        %v891 = vsel %vm762, %v812, 0.0
        %892 = vadd.xlane.f32.xlu0 %v891
        %v893 = vpop.xlane.xlu0 %892
        %v894 = vsel %vm762, %v813, 0.0
        %895 = vadd.xlane.f32.xlu0 %v894
        %v896 = vpop.xlane.xlu0 %895
        %v897 = vrcp.pop 32.0
        %v898 = vmul.f32 %v893, %v897
        %v899 = vmul.f32 %v896, %v897
        %v900 = vsub.f32 %v812, %v898
        %v901 = vsub.f32 %v813, %v899
        %v902 = vmul.f32 %v900, %v900
        %v903 = vmul.f32 %v901, %v901
        %v904 = vsel %vm762, %v902, 0.0
        %905 = vadd.xlane.f32.xlu0 %v904
        %v906 = vpop.xlane.xlu0 %905
        %v907 = vsel %vm762, %v903, 0.0
        %908 = vadd.xlane.f32.xlu0 %v907
        %v909 = vpop.xlane.xlu0 %908
        %v910 = vrcp.pop 31.0
        %v911 = vmul.f32 %v906, %v910
        %v912 = vmul.f32 %v909, %v910
        %v913 = vrsqrt.pop %v911
        %v914 = vmul.f32 %v911, %v913
        %vm915 = vcmp.eq.f32.partialorder %v911, inf
        %v916 = vsel %vm915, %v911, %v914
        %vm917 = vcmp.eq.f32.partialorder %v911, 0.0
        %v918 = vand.u32 %v911, 2147483648
        %v919 = vsel %vm917, %v918, %v916
        %v920 = vrsqrt.pop %v912
        %v921 = vmul.f32 %v912, %v920
        %vm922 = vcmp.eq.f32.partialorder %v912, inf
        %v923 = vsel %vm922, %v912, %v921
        %vm924 = vcmp.eq.f32.partialorder %v912, 0.0
        %v925 = vand.u32 %v912, 2147483648
        %v926 = vsel %vm924, %v925, %v923
        %v927 = vadd.f32 %v919, 1e-06
        %v928 = vadd.f32 %v926, 1e-06
        %v929 = vrcp.pop %v927
        %v930 = vrcp.pop %v928
        %v932 = vlaneseq
        %v933 = vshrl.u32 %v932, 7
        %v934 = vsub.s32 0, %v933
        %v935 = vrot.slane %v740, %v934
        %v937 = vmul.f32 %v935, %v900
        %v938 = vmul.f32 %v935, %v901
        %v939 = vmul.f32 %v937, %v929
        %v940 = vmul.f32 %v938, %v930
        %v942 = vlaneseq
        %v943 = vshrl.u32 %v942, 7
        %v944 = vsub.s32 0, %v943
        %v945 = vrot.slane %v741, %v944
        %v947 = vadd.f32 %v939, %v945
        %v948 = vadd.f32 %v940, %v945
        %v949 = vpack.c.bf16 %v948, %v947
        %v950 = vld [vmem:[%s8] sm:$0xf]
        %v951 = vld [vmem:[%s8 + $0x4] sm:$0xf]
        %v952 = vld [vmem:[%s8 + $0x8] sm:$0xf]
        %v953 = vld [vmem:[%s8 + $0xc] sm:$0xf]
        %v958 = vunpack.c.l.b16 %v950
        %v959 = vunpack.c.l.b16 %v951
        %v960 = vunpack.c.l.b16 %v952
        %v961 = vunpack.c.l.b16 %v953
        %v962 = vpack.c.b16 %v959, %v958
        %v963 = vpack.c.b16 %v961, %v960
        %v967 = vsel %vm762, %v949, 0
        %969 = vmatprep.subr.bf16.mxu0 0
        %970 = vmatpush1.bf16.msra.mxu0 %v962
        %971 = vmatprep.subr.bf16.mxu0 0
        %972 = vmatpush1.bf16.msra.mxu0 %v963
        %973 = vmatprep.subr.bf16.mxu0 0
        %974 = vmatpush1.bf16.msra.mxu0 0
        %975 = vmatprep.subr.bf16.mxu0 0
        %976 = vmatpush1.bf16.msra.mxu0 0
        %977 = vmatprep.subr.bf16.mxu0 0
        %978 = vmatpush1.bf16.msra.mxu0 0
        %979 = vmatprep.subr.bf16.mxu0 0
        %980 = vmatpush1.bf16.msra.mxu0 0
        %981 = vmatprep.subr.bf16.mxu0 0
        %982 = vmatpush1.bf16.msra.mxu0 0
        %983 = vmatprep.subr.bf16.mxu0 0
        %984 = vmatpush1.bf16.msra.mxu0 0
        %985 = vmatprep.subr.bf16.mxu0 0
        %986 = vmatpush1.bf16.msra.mxu0 0
        %987 = vmatprep.subr.bf16.mxu0 0
        %988 = vmatpush1.bf16.msra.mxu0 0
        %989 = vmatprep.subr.bf16.mxu0 0
        %990 = vmatpush1.bf16.msra.mxu0 0
        %991 = vmatprep.subr.bf16.mxu0 0
        %992 = vmatpush1.bf16.msra.mxu0 0
        %993 = vmatprep.subr.bf16.mxu0 0
        %994 = vmatpush1.bf16.msra.mxu0 0
        %995 = vmatprep.subr.bf16.mxu0 0
        %996 = vmatpush1.bf16.msra.mxu0 0
        %997 = vmatprep.subr.bf16.mxu0 0
        %998 = vmatpush1.bf16.msra.mxu0 0
        %999 = vmatprep.subr.bf16.mxu0 0
        %1000 = vmatpush1.bf16.msra.mxu0 0
        %1001 = vmatprep.mubr.bf16.mxu0 0
        %1002 = vmatmul.mubr.bf16.gmra.mrb[0].mxu0 %v967
        %v1003 = vpop.f32.mrb[0].mxu0
        %v1004 = vadd.f32 0.0, %v1003
        %v1005 = vpop.f32.mrb[0].mxu0
        %v1006 = vpop.f32.mrb[0].mxu0
        %v1007 = vadd.f32 0.0, %v1006
        %v1008 = vpop.f32.mrb[0].mxu0
        %1009 = vdwg.mxu0
        %v1010 = vld [vmem:[%s9] sm:$0xf]
        %v1011 = vld [vmem:[%s9 + $0x4] sm:$0xf]
        %v1012 = vld [vmem:[%s9 + $0x8] sm:$0xf]
        %v1013 = vld [vmem:[%s9 + $0xc] sm:$0xf]
        %v1018 = vunpack.c.l.b16 %v1010
        %v1019 = vunpack.c.l.b16 %v1011
        %v1020 = vunpack.c.l.b16 %v1012
        %v1021 = vunpack.c.l.b16 %v1013
        %v1022 = vpack.c.b16 %v1019, %v1018
        %v1023 = vpack.c.b16 %v1021, %v1020
        %1026 = vmatprep.subr.bf16.mxu0 0
        %1027 = vmatpush1.bf16.msra.mxu0 %v1022
        %1028 = vmatprep.subr.bf16.mxu0 0
        %1029 = vmatpush1.bf16.msra.mxu0 %v1023
        %1030 = vmatprep.subr.bf16.mxu0 0
        %1031 = vmatpush1.bf16.msra.mxu0 0
        %1032 = vmatprep.subr.bf16.mxu0 0
        %1033 = vmatpush1.bf16.msra.mxu0 0
        %1034 = vmatprep.subr.bf16.mxu0 0
        %1035 = vmatpush1.bf16.msra.mxu0 0
        %1036 = vmatprep.subr.bf16.mxu0 0
        %1037 = vmatpush1.bf16.msra.mxu0 0
        %1038 = vmatprep.subr.bf16.mxu0 0
        %1039 = vmatpush1.bf16.msra.mxu0 0
        %1040 = vmatprep.subr.bf16.mxu0 0
        %1041 = vmatpush1.bf16.msra.mxu0 0
        %1042 = vmatprep.subr.bf16.mxu0 0
        %1043 = vmatpush1.bf16.msra.mxu0 0
        %1044 = vmatprep.subr.bf16.mxu0 0
        %1045 = vmatpush1.bf16.msra.mxu0 0
        %1046 = vmatprep.subr.bf16.mxu0 0
        %1047 = vmatpush1.bf16.msra.mxu0 0
        %1048 = vmatprep.subr.bf16.mxu0 0
        %1049 = vmatpush1.bf16.msra.mxu0 0
        %1050 = vmatprep.subr.bf16.mxu0 0
        %1051 = vmatpush1.bf16.msra.mxu0 0
        %1052 = vmatprep.subr.bf16.mxu0 0
        %1053 = vmatpush1.bf16.msra.mxu0 0
        %1054 = vmatprep.subr.bf16.mxu0 0
        %1055 = vmatpush1.bf16.msra.mxu0 0
        %1056 = vmatprep.subr.bf16.mxu0 0
        %1057 = vmatpush1.bf16.msra.mxu0 0
        %1058 = vmatprep.mubr.bf16.mxu0 0
        %1059 = vmatmul.mubr.bf16.gmra.mrb[0].mxu0 %v967
        %v1060 = vpop.f32.mrb[0].mxu0
        %v1061 = vadd.f32 0.0, %v1060
        %v1062 = vpop.f32.mrb[0].mxu0
        %v1063 = vpop.f32.mrb[0].mxu0
        %v1064 = vadd.f32 0.0, %v1063
        %v1065 = vpop.f32.mrb[0].mxu0
        %1066 = vdwg.mxu0
        %v1067 = vld [vmem:[%s10] sm:$0xf]
        %v1068 = vld [vmem:[%s10 + $0x4] sm:$0xf]
        %v1069 = vld [vmem:[%s10 + $0x8] sm:$0xf]
        %v1070 = vld [vmem:[%s10 + $0xc] sm:$0xf]
        %v1075 = vunpack.c.l.b16 %v1067
        %v1076 = vunpack.c.l.b16 %v1068
        %v1077 = vunpack.c.l.b16 %v1069
        %v1078 = vunpack.c.l.b16 %v1070
        %v1079 = vpack.c.b16 %v1076, %v1075
        %v1080 = vpack.c.b16 %v1078, %v1077
        %1083 = vmatprep.subr.bf16.mxu0 0
        %1084 = vmatpush1.bf16.msra.mxu0 %v1079
        %1085 = vmatprep.subr.bf16.mxu0 0
        %1086 = vmatpush1.bf16.msra.mxu0 %v1080
        %1087 = vmatprep.subr.bf16.mxu0 0
        %1088 = vmatpush1.bf16.msra.mxu0 0
        %1089 = vmatprep.subr.bf16.mxu0 0
        %1090 = vmatpush1.bf16.msra.mxu0 0
        %1091 = vmatprep.subr.bf16.mxu0 0
        %1092 = vmatpush1.bf16.msra.mxu0 0
        %1093 = vmatprep.subr.bf16.mxu0 0
        %1094 = vmatpush1.bf16.msra.mxu0 0
        %1095 = vmatprep.subr.bf16.mxu0 0
        %1096 = vmatpush1.bf16.msra.mxu0 0
        %1097 = vmatprep.subr.bf16.mxu0 0
        %1098 = vmatpush1.bf16.msra.mxu0 0
        %1099 = vmatprep.subr.bf16.mxu0 0
        %1100 = vmatpush1.bf16.msra.mxu0 0
        %1101 = vmatprep.subr.bf16.mxu0 0
        %1102 = vmatpush1.bf16.msra.mxu0 0
        %1103 = vmatprep.subr.bf16.mxu0 0
        %1104 = vmatpush1.bf16.msra.mxu0 0
        %1105 = vmatprep.subr.bf16.mxu0 0
        %1106 = vmatpush1.bf16.msra.mxu0 0
        %1107 = vmatprep.subr.bf16.mxu0 0
        %1108 = vmatpush1.bf16.msra.mxu0 0
        %1109 = vmatprep.subr.bf16.mxu0 0
        %1110 = vmatpush1.bf16.msra.mxu0 0
        %1111 = vmatprep.subr.bf16.mxu0 0
        %1112 = vmatpush1.bf16.msra.mxu0 0
        %1113 = vmatprep.subr.bf16.mxu0 0
        %1114 = vmatpush1.bf16.msra.mxu0 0
        %1115 = vmatprep.mubr.bf16.mxu0 0
        %1116 = vmatmul.mubr.bf16.gmra.mrb[0].mxu0 %v967
        %v1117 = vpop.f32.mrb[0].mxu0
        %v1118 = vadd.f32 0.0, %v1117
        %v1119 = vpop.f32.mrb[0].mxu0
        %v1120 = vpop.f32.mrb[0].mxu0
        %v1121 = vadd.f32 0.0, %v1120
        %v1122 = vpop.f32.mrb[0].mxu0
        %1123 = vdwg.mxu0
        %v1124 = vpack.c.bf16 %v1004, %v1004
        %v1125 = vpack.c.bf16 %v1007, %v1007
        %v1126 = vpack.c.bf16 %v1061, %v1061
        %v1127 = vpack.c.bf16 %v1064, %v1064
        %v1128 = vpack.c.bf16 %v1118, %v1118
        %v1129 = vpack.c.bf16 %v1121, %v1121
        %vm1130 = vcmask 64512
        %v1132 = vsel %vm1130, %v1124, 0
        %v1135 = vsel %vm1130, %v1126, 0
        %1137 = vmatprep.subr.bf16.mxu0 0
        %1138 = vmatpush1.bf16.xpose.msra.mxu0 %v1135
        %1139 = vmatprep.subr.bf16.mxu0 0
        %1140 = vmatpush1.bf16.xpose.msra.mxu0 0
        %1141 = vmatprep.subr.bf16.mxu0 0
        %1142 = vmatpush1.bf16.xpose.msra.mxu0 0
        %1143 = vmatprep.subr.bf16.mxu0 0
        %1144 = vmatpush1.bf16.xpose.msra.mxu0 0
        %1145 = vmatprep.subr.bf16.mxu0 0
        %1146 = vmatpush1.bf16.xpose.msra.mxu0 0
        %1147 = vmatprep.subr.bf16.mxu0 0
        %1148 = vmatpush1.bf16.xpose.msra.mxu0 0
        %1149 = vmatprep.subr.bf16.mxu0 0
        %1150 = vmatpush1.bf16.xpose.msra.mxu0 0
        %1151 = vmatprep.subr.bf16.mxu0 0
        %1152 = vmatpush1.bf16.xpose.msra.mxu0 0
        %1153 = vmatprep.subr.bf16.mxu0 0
        %1154 = vmatpush1.bf16.xpose.msra.mxu0 0
        %1155 = vmatprep.subr.bf16.mxu0 0
        %1156 = vmatpush1.bf16.xpose.msra.mxu0 0
        %1157 = vmatprep.subr.bf16.mxu0 0
        %1158 = vmatpush1.bf16.xpose.msra.mxu0 0
        %1159 = vmatprep.subr.bf16.mxu0 0
        %1160 = vmatpush1.bf16.xpose.msra.mxu0 0
        %1161 = vmatprep.subr.bf16.mxu0 0
        %1162 = vmatpush1.bf16.xpose.msra.mxu0 0
        %1163 = vmatprep.subr.bf16.mxu0 0
        %1164 = vmatpush1.bf16.xpose.msra.mxu0 0
        %1165 = vmatprep.subr.bf16.mxu0 0
        %1166 = vmatpush1.bf16.xpose.msra.mxu0 0
        %1167 = vmatprep.subr.bf16.mxu0 0
        %1168 = vmatpush1.bf16.xpose.msra.mxu0 0
        %1169 = vmatprep.mubr.bf16.mxu0 0
        %1170 = vmatmul.mubr.bf16.gmra.mrb[0].mxu0 %v1132
        %v1171 = vpop.f32.mrb[0].mxu0
        %v1172 = vadd.f32 0.0, %v1171
        %v1173 = vpop.f32.mrb[0].mxu0
        %v1174 = vpop.f32.mrb[0].mxu0
        %v1175 = vpop.f32.mrb[0].mxu0
        %1176 = vdwg.mxu0
        %v1178 = vsel %vm1130, %v1125, 0
        %v1181 = vsel %vm1130, %v1127, 0
        %1183 = vmatprep.subr.bf16.mxu0 0
        %1184 = vmatpush1.bf16.xpose.msra.mxu0 %v1181
        %1185 = vmatprep.subr.bf16.mxu0 0
        %1186 = vmatpush1.bf16.xpose.msra.mxu0 0
        %1187 = vmatprep.subr.bf16.mxu0 0
        %1188 = vmatpush1.bf16.xpose.msra.mxu0 0
        %1189 = vmatprep.subr.bf16.mxu0 0
        %1190 = vmatpush1.bf16.xpose.msra.mxu0 0
        %1191 = vmatprep.subr.bf16.mxu0 0
        %1192 = vmatpush1.bf16.xpose.msra.mxu0 0
        %1193 = vmatprep.subr.bf16.mxu0 0
        %1194 = vmatpush1.bf16.xpose.msra.mxu0 0
        %1195 = vmatprep.subr.bf16.mxu0 0
        %1196 = vmatpush1.bf16.xpose.msra.mxu0 0
        %1197 = vmatprep.subr.bf16.mxu0 0
        %1198 = vmatpush1.bf16.xpose.msra.mxu0 0
        %1199 = vmatprep.subr.bf16.mxu0 0
        %1200 = vmatpush1.bf16.xpose.msra.mxu0 0
        %1201 = vmatprep.subr.bf16.mxu0 0
        %1202 = vmatpush1.bf16.xpose.msra.mxu0 0
        %1203 = vmatprep.subr.bf16.mxu0 0
        %1204 = vmatpush1.bf16.xpose.msra.mxu0 0
        %1205 = vmatprep.subr.bf16.mxu0 0
        %1206 = vmatpush1.bf16.xpose.msra.mxu0 0
        %1207 = vmatprep.subr.bf16.mxu0 0
        %1208 = vmatpush1.bf16.xpose.msra.mxu0 0
        %1209 = vmatprep.subr.bf16.mxu0 0
        %1210 = vmatpush1.bf16.xpose.msra.mxu0 0
        %1211 = vmatprep.subr.bf16.mxu0 0
        %1212 = vmatpush1.bf16.xpose.msra.mxu0 0
        %1213 = vmatprep.subr.bf16.mxu0 0
        %1214 = vmatpush1.bf16.xpose.msra.mxu0 0
        %1215 = vmatprep.mubr.bf16.mxu0 0
        %1216 = vmatmul.mubr.bf16.gmra.mrb[0].mxu0 %v1178
        %v1217 = vpop.f32.mrb[0].mxu0
        %v1218 = vadd.f32 0.0, %v1217
        %v1219 = vpop.f32.mrb[0].mxu0
        %v1220 = vpop.f32.mrb[0].mxu0
        %v1221 = vpop.f32.mrb[0].mxu0
        %1222 = vdwg.mxu0
        %v1223 = vsel %vm1130, %v1172, -inf
        %1224 = vmax.xlane.f32.xlu0 %v1223
        %v1225 = vpop.xlane.xlu0 %1224
        %v1226 = vsel %vm1130, %v1218, -inf
        %1227 = vmax.xlane.f32.xlu0 %v1226
        %v1228 = vpop.xlane.xlu0 %1227
        %v1229 = vsub.f32 %v1172, %v1225
        %v1230 = vsub.f32 %v1218, %v1228
        %v1231 = vmul.f32 %v1229, 1.442695
        %v1232 = vpow.pop %v1231
        %v1233 = vmul.f32 %v1230, 1.442695
        %v1234 = vpow.pop %v1233
        %v1235 = vsel %vm1130, %v1232, 0.0
        %1236 = vadd.xlane.f32.xlu0 %v1235
        %v1237 = vpop.xlane.xlu0 %1236
        %v1238 = vsel %vm1130, %v1234, 0.0
        %1239 = vadd.xlane.f32.xlu0 %v1238
        %v1240 = vpop.xlane.xlu0 %1239
        %v1241 = vrcp.pop %v1237
        %v1242 = vrcp.pop %v1240
        %v1243 = vmul.f32 %v1232, %v1241
        %v1244 = vmul.f32 %v1234, %v1242
        %v1245 = vpack.c.bf16 %v1243, %v1243
        %v1246 = vpack.c.bf16 %v1244, %v1244
        %v1248 = vsel %vm1130, %v1245, 0
        %vm1250 = vcmask 1043456
        %v1252 = vsel %vm1250, %v1128, 0
        %1254 = vmatprep.subr.bf16.mxu0 0
        %1255 = vmatpush1.bf16.msra.mxu0 %v1252
        %1256 = vmatprep.subr.bf16.mxu0 0
        %1257 = vmatpush1.bf16.msra.mxu0 0
        %1258 = vmatprep.subr.bf16.mxu0 0
        %1259 = vmatpush1.bf16.msra.mxu0 0
        %1260 = vmatprep.subr.bf16.mxu0 0
        %1261 = vmatpush1.bf16.msra.mxu0 0
        %1262 = vmatprep.subr.bf16.mxu0 0
        %1263 = vmatpush1.bf16.msra.mxu0 0
        %1264 = vmatprep.subr.bf16.mxu0 0
        %1265 = vmatpush1.bf16.msra.mxu0 0
        %1266 = vmatprep.subr.bf16.mxu0 0
        %1267 = vmatpush1.bf16.msra.mxu0 0
        %1268 = vmatprep.subr.bf16.mxu0 0
        %1269 = vmatpush1.bf16.msra.mxu0 0
        %1270 = vmatprep.subr.bf16.mxu0 0
        %1271 = vmatpush1.bf16.msra.mxu0 0
        %1272 = vmatprep.subr.bf16.mxu0 0
        %1273 = vmatpush1.bf16.msra.mxu0 0
        %1274 = vmatprep.subr.bf16.mxu0 0
        %1275 = vmatpush1.bf16.msra.mxu0 0
        %1276 = vmatprep.subr.bf16.mxu0 0
        %1277 = vmatpush1.bf16.msra.mxu0 0
        %1278 = vmatprep.subr.bf16.mxu0 0
        %1279 = vmatpush1.bf16.msra.mxu0 0
        %1280 = vmatprep.subr.bf16.mxu0 0
        %1281 = vmatpush1.bf16.msra.mxu0 0
        %1282 = vmatprep.subr.bf16.mxu0 0
        %1283 = vmatpush1.bf16.msra.mxu0 0
        %1284 = vmatprep.subr.bf16.mxu0 0
        %1285 = vmatpush1.bf16.msra.mxu0 0
        %1286 = vmatprep.mubr.bf16.mxu0 0
        %1287 = vmatmul.mubr.bf16.gmra.mrb[0].mxu0 %v1248
        %v1288 = vpop.f32.mrb[0].mxu0
        %v1289 = vadd.f32 0.0, %v1288
        %v1290 = vpop.f32.mrb[0].mxu0
        %v1291 = vpop.f32.mrb[0].mxu0
        %v1292 = vpop.f32.mrb[0].mxu0
        %1293 = vdwg.mxu0
        %v1295 = vsel %vm1130, %v1246, 0
        %v1298 = vsel %vm1250, %v1129, 0
        %1300 = vmatprep.subr.bf16.mxu0 0
        %1301 = vmatpush1.bf16.msra.mxu0 %v1298
        %1302 = vmatprep.subr.bf16.mxu0 0
        %1303 = vmatpush1.bf16.msra.mxu0 0
        %1304 = vmatprep.subr.bf16.mxu0 0
        %1305 = vmatpush1.bf16.msra.mxu0 0
        %1306 = vmatprep.subr.bf16.mxu0 0
        %1307 = vmatpush1.bf16.msra.mxu0 0
        %1308 = vmatprep.subr.bf16.mxu0 0
        %1309 = vmatpush1.bf16.msra.mxu0 0
        %1310 = vmatprep.subr.bf16.mxu0 0
        %1311 = vmatpush1.bf16.msra.mxu0 0
        %1312 = vmatprep.subr.bf16.mxu0 0
        %1313 = vmatpush1.bf16.msra.mxu0 0
        %1314 = vmatprep.subr.bf16.mxu0 0
        %1315 = vmatpush1.bf16.msra.mxu0 0
        %1316 = vmatprep.subr.bf16.mxu0 0
        %1317 = vmatpush1.bf16.msra.mxu0 0
        %1318 = vmatprep.subr.bf16.mxu0 0
        %1319 = vmatpush1.bf16.msra.mxu0 0
        %1320 = vmatprep.subr.bf16.mxu0 0
        %1321 = vmatpush1.bf16.msra.mxu0 0
        %1322 = vmatprep.subr.bf16.mxu0 0
        %1323 = vmatpush1.bf16.msra.mxu0 0
        %1324 = vmatprep.subr.bf16.mxu0 0
        %1325 = vmatpush1.bf16.msra.mxu0 0
        %1326 = vmatprep.subr.bf16.mxu0 0
        %1327 = vmatpush1.bf16.msra.mxu0 0
        %1328 = vmatprep.subr.bf16.mxu0 0
        %1329 = vmatpush1.bf16.msra.mxu0 0
        %1330 = vmatprep.subr.bf16.mxu0 0
        %1331 = vmatpush1.bf16.msra.mxu0 0
        %1332 = vmatprep.mubr.bf16.mxu0 0
        %1333 = vmatmul.mubr.bf16.gmra.mrb[0].mxu0 %v1295
        %v1334 = vpop.f32.mrb[0].mxu0
        %v1335 = vadd.f32 0.0, %v1334
        %v1336 = vpop.f32.mrb[0].mxu0
        %v1337 = vpop.f32.mrb[0].mxu0
        %v1338 = vpop.f32.mrb[0].mxu0
        %1339 = vdwg.mxu0
        %v1340 = vpack.c.bf16 %v1335, %v1289
        %v1341 = vld [vmem:[%s11] sm:$0xf]
        %s1342 = scalar_lea.vmem %s8, 16
        %v1343 = vld [vmem:[%s1342] sm:$0xf]
        %v1344 = vld [vmem:[%s1342 + $0x4] sm:$0xf]
        %v1345 = vld [vmem:[%s1342 + $0x8] sm:$0xf]
        %v1346 = vld [vmem:[%s1342 + $0xc] sm:$0xf]
        %v1351 = vunpack.c.l.b16 %v1343
        %v1352 = vunpack.c.l.b16 %v1344
        %v1353 = vunpack.c.l.b16 %v1345
        %v1354 = vunpack.c.l.b16 %v1346
        %v1355 = vpack.c.b16 %v1352, %v1351
        %v1356 = vpack.c.b16 %v1354, %v1353
        %1359 = vmatprep.subr.bf16.mxu0 0
        %1360 = vmatpush1.bf16.msra.mxu0 %v1355
        %1361 = vmatprep.subr.bf16.mxu0 0
        %1362 = vmatpush1.bf16.msra.mxu0 %v1356
        %1363 = vmatprep.subr.bf16.mxu0 0
        %1364 = vmatpush1.bf16.msra.mxu0 0
        %1365 = vmatprep.subr.bf16.mxu0 0
        %1366 = vmatpush1.bf16.msra.mxu0 0
        %1367 = vmatprep.subr.bf16.mxu0 0
        %1368 = vmatpush1.bf16.msra.mxu0 0
        %1369 = vmatprep.subr.bf16.mxu0 0
        %1370 = vmatpush1.bf16.msra.mxu0 0
        %1371 = vmatprep.subr.bf16.mxu0 0
        %1372 = vmatpush1.bf16.msra.mxu0 0
        %1373 = vmatprep.subr.bf16.mxu0 0
        %1374 = vmatpush1.bf16.msra.mxu0 0
        %1375 = vmatprep.subr.bf16.mxu0 0
        %1376 = vmatpush1.bf16.msra.mxu0 0
        %1377 = vmatprep.subr.bf16.mxu0 0
        %1378 = vmatpush1.bf16.msra.mxu0 0
        %1379 = vmatprep.subr.bf16.mxu0 0
        %1380 = vmatpush1.bf16.msra.mxu0 0
        %1381 = vmatprep.subr.bf16.mxu0 0
        %1382 = vmatpush1.bf16.msra.mxu0 0
        %1383 = vmatprep.subr.bf16.mxu0 0
        %1384 = vmatpush1.bf16.msra.mxu0 0
        %1385 = vmatprep.subr.bf16.mxu0 0
        %1386 = vmatpush1.bf16.msra.mxu0 0
        %1387 = vmatprep.subr.bf16.mxu0 0
        %1388 = vmatpush1.bf16.msra.mxu0 0
        %1389 = vmatprep.subr.bf16.mxu0 0
        %1390 = vmatpush1.bf16.msra.mxu0 0
        %1391 = vmatprep.mubr.bf16.mxu0 0
        %1392 = vmatmul.mubr.bf16.gmra.mrb[0].mxu0 %v967
        %v1393 = vpop.f32.mrb[0].mxu0
        %v1394 = vadd.f32 0.0, %v1393
        %v1395 = vpop.f32.mrb[0].mxu0
        %v1396 = vpop.f32.mrb[0].mxu0
        %v1397 = vadd.f32 0.0, %v1396
        %v1398 = vpop.f32.mrb[0].mxu0
        %1399 = vdwg.mxu0
        %s1400 = scalar_lea.vmem %s9, 16
        %v1401 = vld [vmem:[%s1400] sm:$0xf]
        %v1402 = vld [vmem:[%s1400 + $0x4] sm:$0xf]
        %v1403 = vld [vmem:[%s1400 + $0x8] sm:$0xf]
        %v1404 = vld [vmem:[%s1400 + $0xc] sm:$0xf]
        %v1409 = vunpack.c.l.b16 %v1401
        %v1410 = vunpack.c.l.b16 %v1402
        %v1411 = vunpack.c.l.b16 %v1403
        %v1412 = vunpack.c.l.b16 %v1404
        %v1413 = vpack.c.b16 %v1410, %v1409
        %v1414 = vpack.c.b16 %v1412, %v1411
        %1417 = vmatprep.subr.bf16.mxu0 0
        %1418 = vmatpush1.bf16.msra.mxu0 %v1413
        %1419 = vmatprep.subr.bf16.mxu0 0
        %1420 = vmatpush1.bf16.msra.mxu0 %v1414
        %1421 = vmatprep.subr.bf16.mxu0 0
        %1422 = vmatpush1.bf16.msra.mxu0 0
        %1423 = vmatprep.subr.bf16.mxu0 0
        %1424 = vmatpush1.bf16.msra.mxu0 0
        %1425 = vmatprep.subr.bf16.mxu0 0
        %1426 = vmatpush1.bf16.msra.mxu0 0
        %1427 = vmatprep.subr.bf16.mxu0 0
        %1428 = vmatpush1.bf16.msra.mxu0 0
        %1429 = vmatprep.subr.bf16.mxu0 0
        %1430 = vmatpush1.bf16.msra.mxu0 0
        %1431 = vmatprep.subr.bf16.mxu0 0
        %1432 = vmatpush1.bf16.msra.mxu0 0
        %1433 = vmatprep.subr.bf16.mxu0 0
        %1434 = vmatpush1.bf16.msra.mxu0 0
        %1435 = vmatprep.subr.bf16.mxu0 0
        %1436 = vmatpush1.bf16.msra.mxu0 0
        %1437 = vmatprep.subr.bf16.mxu0 0
        %1438 = vmatpush1.bf16.msra.mxu0 0
        %1439 = vmatprep.subr.bf16.mxu0 0
        %1440 = vmatpush1.bf16.msra.mxu0 0
        %1441 = vmatprep.subr.bf16.mxu0 0
        %1442 = vmatpush1.bf16.msra.mxu0 0
        %1443 = vmatprep.subr.bf16.mxu0 0
        %1444 = vmatpush1.bf16.msra.mxu0 0
        %1445 = vmatprep.subr.bf16.mxu0 0
        %1446 = vmatpush1.bf16.msra.mxu0 0
        %1447 = vmatprep.subr.bf16.mxu0 0
        %1448 = vmatpush1.bf16.msra.mxu0 0
        %1449 = vmatprep.mubr.bf16.mxu0 0
        %1450 = vmatmul.mubr.bf16.gmra.mrb[0].mxu0 %v967
        %v1451 = vpop.f32.mrb[0].mxu0
        %v1452 = vadd.f32 0.0, %v1451
        %v1453 = vpop.f32.mrb[0].mxu0
        %v1454 = vpop.f32.mrb[0].mxu0
        %v1455 = vadd.f32 0.0, %v1454
        %v1456 = vpop.f32.mrb[0].mxu0
        %1457 = vdwg.mxu0
        %s1458 = scalar_lea.vmem %s10, 16
        %v1459 = vld [vmem:[%s1458] sm:$0xf]
        %v1460 = vld [vmem:[%s1458 + $0x4] sm:$0xf]
        %v1461 = vld [vmem:[%s1458 + $0x8] sm:$0xf]
        %v1462 = vld [vmem:[%s1458 + $0xc] sm:$0xf]
        %v1467 = vunpack.c.l.b16 %v1459
        %v1468 = vunpack.c.l.b16 %v1460
        %v1469 = vunpack.c.l.b16 %v1461
        %v1470 = vunpack.c.l.b16 %v1462
        %v1471 = vpack.c.b16 %v1468, %v1467
        %v1472 = vpack.c.b16 %v1470, %v1469
        %1475 = vmatprep.subr.bf16.mxu0 0
        %1476 = vmatpush1.bf16.msra.mxu0 %v1471
        %1477 = vmatprep.subr.bf16.mxu0 0
        %1478 = vmatpush1.bf16.msra.mxu0 %v1472
        %1479 = vmatprep.subr.bf16.mxu0 0
        %1480 = vmatpush1.bf16.msra.mxu0 0
        %1481 = vmatprep.subr.bf16.mxu0 0
        %1482 = vmatpush1.bf16.msra.mxu0 0
        %1483 = vmatprep.subr.bf16.mxu0 0
        %1484 = vmatpush1.bf16.msra.mxu0 0
        %1485 = vmatprep.subr.bf16.mxu0 0
        %1486 = vmatpush1.bf16.msra.mxu0 0
        %1487 = vmatprep.subr.bf16.mxu0 0
        %1488 = vmatpush1.bf16.msra.mxu0 0
        %1489 = vmatprep.subr.bf16.mxu0 0
        %1490 = vmatpush1.bf16.msra.mxu0 0
        %1491 = vmatprep.subr.bf16.mxu0 0
        %1492 = vmatpush1.bf16.msra.mxu0 0
        %1493 = vmatprep.subr.bf16.mxu0 0
        %1494 = vmatpush1.bf16.msra.mxu0 0
        %1495 = vmatprep.subr.bf16.mxu0 0
        %1496 = vmatpush1.bf16.msra.mxu0 0
        %1497 = vmatprep.subr.bf16.mxu0 0
        %1498 = vmatpush1.bf16.msra.mxu0 0
        %1499 = vmatprep.subr.bf16.mxu0 0
        %1500 = vmatpush1.bf16.msra.mxu0 0
        %1501 = vmatprep.subr.bf16.mxu0 0
        %1502 = vmatpush1.bf16.msra.mxu0 0
        %1503 = vmatprep.subr.bf16.mxu0 0
        %1504 = vmatpush1.bf16.msra.mxu0 0
        %1505 = vmatprep.subr.bf16.mxu0 0
        %1506 = vmatpush1.bf16.msra.mxu0 0
        %1507 = vmatprep.mubr.bf16.mxu0 0
        %1508 = vmatmul.mubr.bf16.gmra.mrb[0].mxu0 %v967
        %v1509 = vpop.f32.mrb[0].mxu0
        %v1510 = vadd.f32 0.0, %v1509
        %v1511 = vpop.f32.mrb[0].mxu0
        %v1512 = vpop.f32.mrb[0].mxu0
        %v1513 = vadd.f32 0.0, %v1512
        %v1514 = vpop.f32.mrb[0].mxu0
        %1515 = vdwg.mxu0
        %v1516 = vpack.c.bf16 %v1394, %v1394
        %v1517 = vpack.c.bf16 %v1397, %v1397
        %v1518 = vpack.c.bf16 %v1452, %v1452
        %v1519 = vpack.c.bf16 %v1455, %v1455
        %v1520 = vpack.c.bf16 %v1510, %v1510
        %v1521 = vpack.c.bf16 %v1513, %v1513
        %v1523 = vsel %vm1130, %v1516, 0
        %v1526 = vsel %vm1130, %v1518, 0
        %1528 = vmatprep.subr.bf16.mxu0 0
        %1529 = vmatpush1.bf16.xpose.msra.mxu0 %v1526
        %1530 = vmatprep.subr.bf16.mxu0 0
        %1531 = vmatpush1.bf16.xpose.msra.mxu0 0
        %1532 = vmatprep.subr.bf16.mxu0 0
        %1533 = vmatpush1.bf16.xpose.msra.mxu0 0
        %1534 = vmatprep.subr.bf16.mxu0 0
        %1535 = vmatpush1.bf16.xpose.msra.mxu0 0
        %1536 = vmatprep.subr.bf16.mxu0 0
        %1537 = vmatpush1.bf16.xpose.msra.mxu0 0
        %1538 = vmatprep.subr.bf16.mxu0 0
        %1539 = vmatpush1.bf16.xpose.msra.mxu0 0
        %1540 = vmatprep.subr.bf16.mxu0 0
        %1541 = vmatpush1.bf16.xpose.msra.mxu0 0
        %1542 = vmatprep.subr.bf16.mxu0 0
        %1543 = vmatpush1.bf16.xpose.msra.mxu0 0
        %1544 = vmatprep.subr.bf16.mxu0 0
        %1545 = vmatpush1.bf16.xpose.msra.mxu0 0
        %1546 = vmatprep.subr.bf16.mxu0 0
        %1547 = vmatpush1.bf16.xpose.msra.mxu0 0
        %1548 = vmatprep.subr.bf16.mxu0 0
        %1549 = vmatpush1.bf16.xpose.msra.mxu0 0
        %1550 = vmatprep.subr.bf16.mxu0 0
        %1551 = vmatpush1.bf16.xpose.msra.mxu0 0
        %1552 = vmatprep.subr.bf16.mxu0 0
        %1553 = vmatpush1.bf16.xpose.msra.mxu0 0
        %1554 = vmatprep.subr.bf16.mxu0 0
        %1555 = vmatpush1.bf16.xpose.msra.mxu0 0
        %1556 = vmatprep.subr.bf16.mxu0 0
        %1557 = vmatpush1.bf16.xpose.msra.mxu0 0
        %1558 = vmatprep.subr.bf16.mxu0 0
        %1559 = vmatpush1.bf16.xpose.msra.mxu0 0
        %1560 = vmatprep.mubr.bf16.mxu0 0
        %1561 = vmatmul.mubr.bf16.gmra.mrb[0].mxu0 %v1523
        %v1562 = vpop.f32.mrb[0].mxu0
        %v1563 = vadd.f32 0.0, %v1562
        %v1564 = vpop.f32.mrb[0].mxu0
        %v1565 = vpop.f32.mrb[0].mxu0
        %v1566 = vpop.f32.mrb[0].mxu0
        %1567 = vdwg.mxu0
        %v1569 = vsel %vm1130, %v1517, 0
        %v1572 = vsel %vm1130, %v1519, 0
        %1574 = vmatprep.subr.bf16.mxu0 0
        %1575 = vmatpush1.bf16.xpose.msra.mxu0 %v1572
        %1576 = vmatprep.subr.bf16.mxu0 0
        %1577 = vmatpush1.bf16.xpose.msra.mxu0 0
        %1578 = vmatprep.subr.bf16.mxu0 0
        %1579 = vmatpush1.bf16.xpose.msra.mxu0 0
        %1580 = vmatprep.subr.bf16.mxu0 0
        %1581 = vmatpush1.bf16.xpose.msra.mxu0 0
        %1582 = vmatprep.subr.bf16.mxu0 0
        %1583 = vmatpush1.bf16.xpose.msra.mxu0 0
        %1584 = vmatprep.subr.bf16.mxu0 0
        %1585 = vmatpush1.bf16.xpose.msra.mxu0 0
        %1586 = vmatprep.subr.bf16.mxu0 0
        %1587 = vmatpush1.bf16.xpose.msra.mxu0 0
        %1588 = vmatprep.subr.bf16.mxu0 0
        %1589 = vmatpush1.bf16.xpose.msra.mxu0 0
        %1590 = vmatprep.subr.bf16.mxu0 0
        %1591 = vmatpush1.bf16.xpose.msra.mxu0 0
        %1592 = vmatprep.subr.bf16.mxu0 0
        %1593 = vmatpush1.bf16.xpose.msra.mxu0 0
        %1594 = vmatprep.subr.bf16.mxu0 0
        %1595 = vmatpush1.bf16.xpose.msra.mxu0 0
        %1596 = vmatprep.subr.bf16.mxu0 0
        %1597 = vmatpush1.bf16.xpose.msra.mxu0 0
        %1598 = vmatprep.subr.bf16.mxu0 0
        %1599 = vmatpush1.bf16.xpose.msra.mxu0 0
        %1600 = vmatprep.subr.bf16.mxu0 0
        %1601 = vmatpush1.bf16.xpose.msra.mxu0 0
        %1602 = vmatprep.subr.bf16.mxu0 0
        %1603 = vmatpush1.bf16.xpose.msra.mxu0 0
        %1604 = vmatprep.subr.bf16.mxu0 0
        %1605 = vmatpush1.bf16.xpose.msra.mxu0 0
        %1606 = vmatprep.mubr.bf16.mxu0 0
        %1607 = vmatmul.mubr.bf16.gmra.mrb[0].mxu0 %v1569
        %v1608 = vpop.f32.mrb[0].mxu0
        %v1609 = vadd.f32 0.0, %v1608
        %v1610 = vpop.f32.mrb[0].mxu0
        %v1611 = vpop.f32.mrb[0].mxu0
        %v1612 = vpop.f32.mrb[0].mxu0
        %1613 = vdwg.mxu0
        %v1614 = vsel %vm1130, %v1563, -inf
        %1615 = vmax.xlane.f32.xlu0 %v1614
        %v1616 = vpop.xlane.xlu0 %1615
        %v1617 = vsel %vm1130, %v1609, -inf
        %1618 = vmax.xlane.f32.xlu0 %v1617
        %v1619 = vpop.xlane.xlu0 %1618
        %v1620 = vsub.f32 %v1563, %v1616
        %v1621 = vsub.f32 %v1609, %v1619
        %v1622 = vmul.f32 %v1620, 1.442695
        %v1623 = vpow.pop %v1622
        %v1624 = vmul.f32 %v1621, 1.442695
        %v1625 = vpow.pop %v1624
        %v1626 = vsel %vm1130, %v1623, 0.0
        %1627 = vadd.xlane.f32.xlu0 %v1626
        %v1628 = vpop.xlane.xlu0 %1627
        %v1629 = vsel %vm1130, %v1625, 0.0
        %1630 = vadd.xlane.f32.xlu0 %v1629
        %v1631 = vpop.xlane.xlu0 %1630
        %v1632 = vrcp.pop %v1628
        %v1633 = vrcp.pop %v1631
        %v1634 = vmul.f32 %v1623, %v1632
        %v1635 = vmul.f32 %v1625, %v1633
        %v1636 = vpack.c.bf16 %v1634, %v1634
        %v1637 = vpack.c.bf16 %v1635, %v1635
        %v1639 = vsel %vm1130, %v1636, 0
        %v1642 = vsel %vm1250, %v1520, 0
        %1644 = vmatprep.subr.bf16.mxu0 0
        %1645 = vmatpush1.bf16.msra.mxu0 %v1642
        %1646 = vmatprep.subr.bf16.mxu0 0
        %1647 = vmatpush1.bf16.msra.mxu0 0
        %1648 = vmatprep.subr.bf16.mxu0 0
        %1649 = vmatpush1.bf16.msra.mxu0 0
        %1650 = vmatprep.subr.bf16.mxu0 0
        %1651 = vmatpush1.bf16.msra.mxu0 0
        %1652 = vmatprep.subr.bf16.mxu0 0
        %1653 = vmatpush1.bf16.msra.mxu0 0
        %1654 = vmatprep.subr.bf16.mxu0 0
        %1655 = vmatpush1.bf16.msra.mxu0 0
        %1656 = vmatprep.subr.bf16.mxu0 0
        %1657 = vmatpush1.bf16.msra.mxu0 0
        %1658 = vmatprep.subr.bf16.mxu0 0
        %1659 = vmatpush1.bf16.msra.mxu0 0
        %1660 = vmatprep.subr.bf16.mxu0 0
        %1661 = vmatpush1.bf16.msra.mxu0 0
        %1662 = vmatprep.subr.bf16.mxu0 0
        %1663 = vmatpush1.bf16.msra.mxu0 0
        %1664 = vmatprep.subr.bf16.mxu0 0
        %1665 = vmatpush1.bf16.msra.mxu0 0
        %1666 = vmatprep.subr.bf16.mxu0 0
        %1667 = vmatpush1.bf16.msra.mxu0 0
        %1668 = vmatprep.subr.bf16.mxu0 0
        %1669 = vmatpush1.bf16.msra.mxu0 0
        %1670 = vmatprep.subr.bf16.mxu0 0
        %1671 = vmatpush1.bf16.msra.mxu0 0
        %1672 = vmatprep.subr.bf16.mxu0 0
        %1673 = vmatpush1.bf16.msra.mxu0 0
        %1674 = vmatprep.subr.bf16.mxu0 0
        %1675 = vmatpush1.bf16.msra.mxu0 0
        %1676 = vmatprep.mubr.bf16.mxu0 0
        %1677 = vmatmul.mubr.bf16.gmra.mrb[0].mxu0 %v1639
        %v1678 = vpop.f32.mrb[0].mxu0
        %v1679 = vadd.f32 0.0, %v1678
        %v1680 = vpop.f32.mrb[0].mxu0
        %v1681 = vpop.f32.mrb[0].mxu0
        %v1682 = vpop.f32.mrb[0].mxu0
        %1683 = vdwg.mxu0
        %v1685 = vsel %vm1130, %v1637, 0
        %v1688 = vsel %vm1250, %v1521, 0
        %1690 = vmatprep.subr.bf16.mxu0 0
        %1691 = vmatpush1.bf16.msra.mxu0 %v1688
        %1692 = vmatprep.subr.bf16.mxu0 0
        %1693 = vmatpush1.bf16.msra.mxu0 0
        %1694 = vmatprep.subr.bf16.mxu0 0
        %1695 = vmatpush1.bf16.msra.mxu0 0
        %1696 = vmatprep.subr.bf16.mxu0 0
        %1697 = vmatpush1.bf16.msra.mxu0 0
        %1698 = vmatprep.subr.bf16.mxu0 0
        %1699 = vmatpush1.bf16.msra.mxu0 0
        %1700 = vmatprep.subr.bf16.mxu0 0
        %1701 = vmatpush1.bf16.msra.mxu0 0
        %1702 = vmatprep.subr.bf16.mxu0 0
        %1703 = vmatpush1.bf16.msra.mxu0 0
        %1704 = vmatprep.subr.bf16.mxu0 0
        %1705 = vmatpush1.bf16.msra.mxu0 0
        %1706 = vmatprep.subr.bf16.mxu0 0
        %1707 = vmatpush1.bf16.msra.mxu0 0
        %1708 = vmatprep.subr.bf16.mxu0 0
        %1709 = vmatpush1.bf16.msra.mxu0 0
        %1710 = vmatprep.subr.bf16.mxu0 0
        %1711 = vmatpush1.bf16.msra.mxu0 0
        %1712 = vmatprep.subr.bf16.mxu0 0
        %1713 = vmatpush1.bf16.msra.mxu0 0
        %1714 = vmatprep.subr.bf16.mxu0 0
        %1715 = vmatpush1.bf16.msra.mxu0 0
        %1716 = vmatprep.subr.bf16.mxu0 0
        %1717 = vmatpush1.bf16.msra.mxu0 0
        %1718 = vmatprep.subr.bf16.mxu0 0
        %1719 = vmatpush1.bf16.msra.mxu0 0
        %1720 = vmatprep.subr.bf16.mxu0 0
        %1721 = vmatpush1.bf16.msra.mxu0 0
        %1722 = vmatprep.mubr.bf16.mxu0 0
        %1723 = vmatmul.mubr.bf16.gmra.mrb[0].mxu0 %v1685
        %v1724 = vpop.f32.mrb[0].mxu0
        %v1725 = vadd.f32 0.0, %v1724
        %v1726 = vpop.f32.mrb[0].mxu0
        %v1727 = vpop.f32.mrb[0].mxu0
        %v1728 = vpop.f32.mrb[0].mxu0
        %1729 = vdwg.mxu0
        %v1730 = vpack.c.bf16 %v1725, %v1679
        %s1731 = scalar_lea.vmem %s11, 4
        %v1732 = vld [vmem:[%s1731] sm:$0xf]
        %v1734 = vsel %vm1130, %v1730, 0
        %v1737 = vsel %vm1250, %v1732, 0
        %1739 = vmatprep.subr.bf16.mxu0 0
        %1740 = vmatpush1.bf16.msra.mxu0 %v1737
        %1741 = vmatprep.subr.bf16.mxu0 0
        %1742 = vmatpush1.bf16.msra.mxu0 0
        %1743 = vmatprep.subr.bf16.mxu0 0
        %1744 = vmatpush1.bf16.msra.mxu0 0
        %1745 = vmatprep.subr.bf16.mxu0 0
        %1746 = vmatpush1.bf16.msra.mxu0 0
        %1747 = vmatprep.subr.bf16.mxu0 0
        %1748 = vmatpush1.bf16.msra.mxu0 0
        %1749 = vmatprep.subr.bf16.mxu0 0
        %1750 = vmatpush1.bf16.msra.mxu0 0
        %1751 = vmatprep.subr.bf16.mxu0 0
        %1752 = vmatpush1.bf16.msra.mxu0 0
        %1753 = vmatprep.subr.bf16.mxu0 0
        %1754 = vmatpush1.bf16.msra.mxu0 0
        %1755 = vmatprep.subr.bf16.mxu0 0
        %1756 = vmatpush1.bf16.msra.mxu0 0
        %1757 = vmatprep.subr.bf16.mxu0 0
        %1758 = vmatpush1.bf16.msra.mxu0 0
        %1759 = vmatprep.subr.bf16.mxu0 0
        %1760 = vmatpush1.bf16.msra.mxu0 0
        %1761 = vmatprep.subr.bf16.mxu0 0
        %1762 = vmatpush1.bf16.msra.mxu0 0
        %1763 = vmatprep.subr.bf16.mxu0 0
        %1764 = vmatpush1.bf16.msra.mxu0 0
        %1765 = vmatprep.subr.bf16.mxu0 0
        %1766 = vmatpush1.bf16.msra.mxu0 0
        %1767 = vmatprep.subr.bf16.mxu0 0
        %1768 = vmatpush1.bf16.msra.mxu0 0
        %1769 = vmatprep.subr.bf16.mxu0 0
        %1770 = vmatpush1.bf16.msra.mxu0 0
        %1771 = vmatprep.mubr.bf16.mxu0 0
        %1772 = vmatmul.mubr.bf16.gmra.mrb[0].mxu0 %v1734
        %v1773 = vpop.f32.mrb[0].mxu0
        %v1774 = vadd.f32 0.0, %v1773
        %v1775 = vpop.f32.mrb[0].mxu0
        %v1776 = vpop.f32.mrb[0].mxu0
        %v1777 = vadd.f32 0.0, %v1776
        %v1778 = vpop.f32.mrb[0].mxu0
        %1779 = vdwg.mxu0
        %v1781 = vsel %vm1130, %v1340, 0
        %v1784 = vsel %vm1250, %v1341, 0
        %1786 = vmatprep.subr.bf16.mxu0 0
        %1787 = vmatpush1.bf16.msra.mxu0 %v1784
        %1788 = vmatprep.subr.bf16.mxu0 0
        %1789 = vmatpush1.bf16.msra.mxu0 0
        %1790 = vmatprep.subr.bf16.mxu0 0
        %1791 = vmatpush1.bf16.msra.mxu0 0
        %1792 = vmatprep.subr.bf16.mxu0 0
        %1793 = vmatpush1.bf16.msra.mxu0 0
        %1794 = vmatprep.subr.bf16.mxu0 0
        %1795 = vmatpush1.bf16.msra.mxu0 0
        %1796 = vmatprep.subr.bf16.mxu0 0
        %1797 = vmatpush1.bf16.msra.mxu0 0
        %1798 = vmatprep.subr.bf16.mxu0 0
        %1799 = vmatpush1.bf16.msra.mxu0 0
        %1800 = vmatprep.subr.bf16.mxu0 0
        %1801 = vmatpush1.bf16.msra.mxu0 0
        %1802 = vmatprep.subr.bf16.mxu0 0
        %1803 = vmatpush1.bf16.msra.mxu0 0
        %1804 = vmatprep.subr.bf16.mxu0 0
        %1805 = vmatpush1.bf16.msra.mxu0 0
        %1806 = vmatprep.subr.bf16.mxu0 0
        %1807 = vmatpush1.bf16.msra.mxu0 0
        %1808 = vmatprep.subr.bf16.mxu0 0
        %1809 = vmatpush1.bf16.msra.mxu0 0
        %1810 = vmatprep.subr.bf16.mxu0 0
        %1811 = vmatpush1.bf16.msra.mxu0 0
        %1812 = vmatprep.subr.bf16.mxu0 0
        %1813 = vmatpush1.bf16.msra.mxu0 0
        %1814 = vmatprep.subr.bf16.mxu0 0
        %1815 = vmatpush1.bf16.msra.mxu0 0
        %1816 = vmatprep.subr.bf16.mxu0 0
        %1817 = vmatpush1.bf16.msra.mxu0 0
        %1818 = vmatprep.mubr.bf16.mxu0 0
        %1819 = vmatmul.mubr.bf16.gmra.mrb[0].mxu0 %v1781
        %v1820 = vpop.f32.mrb[0].mxu0
        %v1821 = vadd.f32 %v1774, %v1820
        %v1822 = vpop.f32.mrb[0].mxu0
        %v1823 = vpop.f32.mrb[0].mxu0
        %v1824 = vadd.f32 %v1777, %v1823
        %v1825 = vpop.f32.mrb[0].mxu0
        %1826 = vdwg.mxu0
        %s1827 = scalar_lea.vmem %s8, 32
        %v1828 = vld [vmem:[%s1827] sm:$0xf]
        %v1829 = vld [vmem:[%s1827 + $0x4] sm:$0xf]
        %v1830 = vld [vmem:[%s1827 + $0x8] sm:$0xf]
        %v1831 = vld [vmem:[%s1827 + $0xc] sm:$0xf]
        %v1836 = vunpack.c.l.b16 %v1828
        %v1837 = vunpack.c.l.b16 %v1829
        %v1838 = vunpack.c.l.b16 %v1830
        %v1839 = vunpack.c.l.b16 %v1831
        %v1840 = vpack.c.b16 %v1837, %v1836
        %v1841 = vpack.c.b16 %v1839, %v1838
        %1844 = vmatprep.subr.bf16.mxu0 0
        %1845 = vmatpush1.bf16.msra.mxu0 %v1840
        %1846 = vmatprep.subr.bf16.mxu0 0
        %1847 = vmatpush1.bf16.msra.mxu0 %v1841
        %1848 = vmatprep.subr.bf16.mxu0 0
        %1849 = vmatpush1.bf16.msra.mxu0 0
        %1850 = vmatprep.subr.bf16.mxu0 0
        %1851 = vmatpush1.bf16.msra.mxu0 0
        %1852 = vmatprep.subr.bf16.mxu0 0
        %1853 = vmatpush1.bf16.msra.mxu0 0
        %1854 = vmatprep.subr.bf16.mxu0 0
        %1855 = vmatpush1.bf16.msra.mxu0 0
        %1856 = vmatprep.subr.bf16.mxu0 0
        %1857 = vmatpush1.bf16.msra.mxu0 0
        %1858 = vmatprep.subr.bf16.mxu0 0
        %1859 = vmatpush1.bf16.msra.mxu0 0
        %1860 = vmatprep.subr.bf16.mxu0 0
        %1861 = vmatpush1.bf16.msra.mxu0 0
        %1862 = vmatprep.subr.bf16.mxu0 0
        %1863 = vmatpush1.bf16.msra.mxu0 0
        %1864 = vmatprep.subr.bf16.mxu0 0
        %1865 = vmatpush1.bf16.msra.mxu0 0
        %1866 = vmatprep.subr.bf16.mxu0 0
        %1867 = vmatpush1.bf16.msra.mxu0 0
        %1868 = vmatprep.subr.bf16.mxu0 0
        %1869 = vmatpush1.bf16.msra.mxu0 0
        %1870 = vmatprep.subr.bf16.mxu0 0
        %1871 = vmatpush1.bf16.msra.mxu0 0
        %1872 = vmatprep.subr.bf16.mxu0 0
        %1873 = vmatpush1.bf16.msra.mxu0 0
        %1874 = vmatprep.subr.bf16.mxu0 0
        %1875 = vmatpush1.bf16.msra.mxu0 0
        %1876 = vmatprep.mubr.bf16.mxu0 0
        %1877 = vmatmul.mubr.bf16.gmra.mrb[0].mxu0 %v967
        %v1878 = vpop.f32.mrb[0].mxu0
        %v1879 = vadd.f32 0.0, %v1878
        %v1880 = vpop.f32.mrb[0].mxu0
        %v1881 = vpop.f32.mrb[0].mxu0
        %v1882 = vadd.f32 0.0, %v1881
        %v1883 = vpop.f32.mrb[0].mxu0
        %1884 = vdwg.mxu0
        %s1885 = scalar_lea.vmem %s9, 32
        %v1886 = vld [vmem:[%s1885] sm:$0xf]
        %v1887 = vld [vmem:[%s1885 + $0x4] sm:$0xf]
        %v1888 = vld [vmem:[%s1885 + $0x8] sm:$0xf]
        %v1889 = vld [vmem:[%s1885 + $0xc] sm:$0xf]
        %v1894 = vunpack.c.l.b16 %v1886
        %v1895 = vunpack.c.l.b16 %v1887
        %v1896 = vunpack.c.l.b16 %v1888
        %v1897 = vunpack.c.l.b16 %v1889
        %v1898 = vpack.c.b16 %v1895, %v1894
        %v1899 = vpack.c.b16 %v1897, %v1896
        %1902 = vmatprep.subr.bf16.mxu0 0
        %1903 = vmatpush1.bf16.msra.mxu0 %v1898
        %1904 = vmatprep.subr.bf16.mxu0 0
        %1905 = vmatpush1.bf16.msra.mxu0 %v1899
        %1906 = vmatprep.subr.bf16.mxu0 0
        %1907 = vmatpush1.bf16.msra.mxu0 0
        %1908 = vmatprep.subr.bf16.mxu0 0
        %1909 = vmatpush1.bf16.msra.mxu0 0
        %1910 = vmatprep.subr.bf16.mxu0 0
        %1911 = vmatpush1.bf16.msra.mxu0 0
        %1912 = vmatprep.subr.bf16.mxu0 0
        %1913 = vmatpush1.bf16.msra.mxu0 0
        %1914 = vmatprep.subr.bf16.mxu0 0
        %1915 = vmatpush1.bf16.msra.mxu0 0
        %1916 = vmatprep.subr.bf16.mxu0 0
        %1917 = vmatpush1.bf16.msra.mxu0 0
        %1918 = vmatprep.subr.bf16.mxu0 0
        %1919 = vmatpush1.bf16.msra.mxu0 0
        %1920 = vmatprep.subr.bf16.mxu0 0
        %1921 = vmatpush1.bf16.msra.mxu0 0
        %1922 = vmatprep.subr.bf16.mxu0 0
        %1923 = vmatpush1.bf16.msra.mxu0 0
        %1924 = vmatprep.subr.bf16.mxu0 0
        %1925 = vmatpush1.bf16.msra.mxu0 0
        %1926 = vmatprep.subr.bf16.mxu0 0
        %1927 = vmatpush1.bf16.msra.mxu0 0
        %1928 = vmatprep.subr.bf16.mxu0 0
        %1929 = vmatpush1.bf16.msra.mxu0 0
        %1930 = vmatprep.subr.bf16.mxu0 0
        %1931 = vmatpush1.bf16.msra.mxu0 0
        %1932 = vmatprep.subr.bf16.mxu0 0
        %1933 = vmatpush1.bf16.msra.mxu0 0
        %1934 = vmatprep.mubr.bf16.mxu0 0
        %1935 = vmatmul.mubr.bf16.gmra.mrb[0].mxu0 %v967
        %v1936 = vpop.f32.mrb[0].mxu0
        %v1937 = vadd.f32 0.0, %v1936
        %v1938 = vpop.f32.mrb[0].mxu0
        %v1939 = vpop.f32.mrb[0].mxu0
        %v1940 = vadd.f32 0.0, %v1939
        %v1941 = vpop.f32.mrb[0].mxu0
        %1942 = vdwg.mxu0
        %s1943 = scalar_lea.vmem %s10, 32
        %v1944 = vld [vmem:[%s1943] sm:$0xf]
        %v1945 = vld [vmem:[%s1943 + $0x4] sm:$0xf]
        %v1946 = vld [vmem:[%s1943 + $0x8] sm:$0xf]
        %v1947 = vld [vmem:[%s1943 + $0xc] sm:$0xf]
        %v1952 = vunpack.c.l.b16 %v1944
        %v1953 = vunpack.c.l.b16 %v1945
        %v1954 = vunpack.c.l.b16 %v1946
        %v1955 = vunpack.c.l.b16 %v1947
        %v1956 = vpack.c.b16 %v1953, %v1952
        %v1957 = vpack.c.b16 %v1955, %v1954
        %1960 = vmatprep.subr.bf16.mxu0 0
        %1961 = vmatpush1.bf16.msra.mxu0 %v1956
        %1962 = vmatprep.subr.bf16.mxu0 0
        %1963 = vmatpush1.bf16.msra.mxu0 %v1957
        %1964 = vmatprep.subr.bf16.mxu0 0
        %1965 = vmatpush1.bf16.msra.mxu0 0
        %1966 = vmatprep.subr.bf16.mxu0 0
        %1967 = vmatpush1.bf16.msra.mxu0 0
        %1968 = vmatprep.subr.bf16.mxu0 0
        %1969 = vmatpush1.bf16.msra.mxu0 0
        %1970 = vmatprep.subr.bf16.mxu0 0
        %1971 = vmatpush1.bf16.msra.mxu0 0
        %1972 = vmatprep.subr.bf16.mxu0 0
        %1973 = vmatpush1.bf16.msra.mxu0 0
        %1974 = vmatprep.subr.bf16.mxu0 0
        %1975 = vmatpush1.bf16.msra.mxu0 0
        %1976 = vmatprep.subr.bf16.mxu0 0
        %1977 = vmatpush1.bf16.msra.mxu0 0
        %1978 = vmatprep.subr.bf16.mxu0 0
        %1979 = vmatpush1.bf16.msra.mxu0 0
        %1980 = vmatprep.subr.bf16.mxu0 0
        %1981 = vmatpush1.bf16.msra.mxu0 0
        %1982 = vmatprep.subr.bf16.mxu0 0
        %1983 = vmatpush1.bf16.msra.mxu0 0
        %1984 = vmatprep.subr.bf16.mxu0 0
        %1985 = vmatpush1.bf16.msra.mxu0 0
        %1986 = vmatprep.subr.bf16.mxu0 0
        %1987 = vmatpush1.bf16.msra.mxu0 0
        %1988 = vmatprep.subr.bf16.mxu0 0
        %1989 = vmatpush1.bf16.msra.mxu0 0
        %1990 = vmatprep.subr.bf16.mxu0 0
        %1991 = vmatpush1.bf16.msra.mxu0 0
        %1992 = vmatprep.mubr.bf16.mxu0 0
        %1993 = vmatmul.mubr.bf16.gmra.mrb[0].mxu0 %v967
        %v1994 = vpop.f32.mrb[0].mxu0
        %v1995 = vadd.f32 0.0, %v1994
        %v1996 = vpop.f32.mrb[0].mxu0
        %v1997 = vpop.f32.mrb[0].mxu0
        %v1998 = vadd.f32 0.0, %v1997
        %v1999 = vpop.f32.mrb[0].mxu0
        %2000 = vdwg.mxu0
        %v2001 = vpack.c.bf16 %v1879, %v1879
        %v2002 = vpack.c.bf16 %v1882, %v1882
        %v2003 = vpack.c.bf16 %v1937, %v1937
        %v2004 = vpack.c.bf16 %v1940, %v1940
        %v2005 = vpack.c.bf16 %v1995, %v1995
        %v2006 = vpack.c.bf16 %v1998, %v1998
        %v2008 = vsel %vm1130, %v2001, 0
        %v2011 = vsel %vm1130, %v2003, 0
        %2013 = vmatprep.subr.bf16.mxu0 0
        %2014 = vmatpush1.bf16.xpose.msra.mxu0 %v2011
        %2015 = vmatprep.subr.bf16.mxu0 0
        %2016 = vmatpush1.bf16.xpose.msra.mxu0 0
        %2017 = vmatprep.subr.bf16.mxu0 0
        %2018 = vmatpush1.bf16.xpose.msra.mxu0 0
        %2019 = vmatprep.subr.bf16.mxu0 0
        %2020 = vmatpush1.bf16.xpose.msra.mxu0 0
        %2021 = vmatprep.subr.bf16.mxu0 0
        %2022 = vmatpush1.bf16.xpose.msra.mxu0 0
        %2023 = vmatprep.subr.bf16.mxu0 0
        %2024 = vmatpush1.bf16.xpose.msra.mxu0 0
        %2025 = vmatprep.subr.bf16.mxu0 0
        %2026 = vmatpush1.bf16.xpose.msra.mxu0 0
        %2027 = vmatprep.subr.bf16.mxu0 0
        %2028 = vmatpush1.bf16.xpose.msra.mxu0 0
        %2029 = vmatprep.subr.bf16.mxu0 0
        %2030 = vmatpush1.bf16.xpose.msra.mxu0 0
        %2031 = vmatprep.subr.bf16.mxu0 0
        %2032 = vmatpush1.bf16.xpose.msra.mxu0 0
        %2033 = vmatprep.subr.bf16.mxu0 0
        %2034 = vmatpush1.bf16.xpose.msra.mxu0 0
        %2035 = vmatprep.subr.bf16.mxu0 0
        %2036 = vmatpush1.bf16.xpose.msra.mxu0 0
        %2037 = vmatprep.subr.bf16.mxu0 0
        %2038 = vmatpush1.bf16.xpose.msra.mxu0 0
        %2039 = vmatprep.subr.bf16.mxu0 0
        %2040 = vmatpush1.bf16.xpose.msra.mxu0 0
        %2041 = vmatprep.subr.bf16.mxu0 0
        %2042 = vmatpush1.bf16.xpose.msra.mxu0 0
        %2043 = vmatprep.subr.bf16.mxu0 0
        %2044 = vmatpush1.bf16.xpose.msra.mxu0 0
        %2045 = vmatprep.mubr.bf16.mxu0 0
        %2046 = vmatmul.mubr.bf16.gmra.mrb[0].mxu0 %v2008
        %v2047 = vpop.f32.mrb[0].mxu0
        %v2048 = vadd.f32 0.0, %v2047
        %v2049 = vpop.f32.mrb[0].mxu0
        %v2050 = vpop.f32.mrb[0].mxu0
        %v2051 = vpop.f32.mrb[0].mxu0
        %2052 = vdwg.mxu0
        %v2054 = vsel %vm1130, %v2002, 0
        %v2057 = vsel %vm1130, %v2004, 0
        %2059 = vmatprep.subr.bf16.mxu0 0
        %2060 = vmatpush1.bf16.xpose.msra.mxu0 %v2057
        %2061 = vmatprep.subr.bf16.mxu0 0
        %2062 = vmatpush1.bf16.xpose.msra.mxu0 0
        %2063 = vmatprep.subr.bf16.mxu0 0
        %2064 = vmatpush1.bf16.xpose.msra.mxu0 0
        %2065 = vmatprep.subr.bf16.mxu0 0
        %2066 = vmatpush1.bf16.xpose.msra.mxu0 0
        %2067 = vmatprep.subr.bf16.mxu0 0
        %2068 = vmatpush1.bf16.xpose.msra.mxu0 0
        %2069 = vmatprep.subr.bf16.mxu0 0
        %2070 = vmatpush1.bf16.xpose.msra.mxu0 0
        %2071 = vmatprep.subr.bf16.mxu0 0
        %2072 = vmatpush1.bf16.xpose.msra.mxu0 0
        %2073 = vmatprep.subr.bf16.mxu0 0
        %2074 = vmatpush1.bf16.xpose.msra.mxu0 0
        %2075 = vmatprep.subr.bf16.mxu0 0
        %2076 = vmatpush1.bf16.xpose.msra.mxu0 0
        %2077 = vmatprep.subr.bf16.mxu0 0
        %2078 = vmatpush1.bf16.xpose.msra.mxu0 0
        %2079 = vmatprep.subr.bf16.mxu0 0
        %2080 = vmatpush1.bf16.xpose.msra.mxu0 0
        %2081 = vmatprep.subr.bf16.mxu0 0
        %2082 = vmatpush1.bf16.xpose.msra.mxu0 0
        %2083 = vmatprep.subr.bf16.mxu0 0
        %2084 = vmatpush1.bf16.xpose.msra.mxu0 0
        %2085 = vmatprep.subr.bf16.mxu0 0
        %2086 = vmatpush1.bf16.xpose.msra.mxu0 0
        %2087 = vmatprep.subr.bf16.mxu0 0
        %2088 = vmatpush1.bf16.xpose.msra.mxu0 0
        %2089 = vmatprep.subr.bf16.mxu0 0
        %2090 = vmatpush1.bf16.xpose.msra.mxu0 0
        %2091 = vmatprep.mubr.bf16.mxu0 0
        %2092 = vmatmul.mubr.bf16.gmra.mrb[0].mxu0 %v2054
        %v2093 = vpop.f32.mrb[0].mxu0
        %v2094 = vadd.f32 0.0, %v2093
        %v2095 = vpop.f32.mrb[0].mxu0
        %v2096 = vpop.f32.mrb[0].mxu0
        %v2097 = vpop.f32.mrb[0].mxu0
        %2098 = vdwg.mxu0
        %v2099 = vsel %vm1130, %v2048, -inf
        %2100 = vmax.xlane.f32.xlu0 %v2099
        %v2101 = vpop.xlane.xlu0 %2100
        %v2102 = vsel %vm1130, %v2094, -inf
        %2103 = vmax.xlane.f32.xlu0 %v2102
        %v2104 = vpop.xlane.xlu0 %2103
        %v2105 = vsub.f32 %v2048, %v2101
        %v2106 = vsub.f32 %v2094, %v2104
        %v2107 = vmul.f32 %v2105, 1.442695
        %v2108 = vpow.pop %v2107
        %v2109 = vmul.f32 %v2106, 1.442695
        %v2110 = vpow.pop %v2109
        %v2111 = vsel %vm1130, %v2108, 0.0
        %2112 = vadd.xlane.f32.xlu0 %v2111
        %v2113 = vpop.xlane.xlu0 %2112
        %v2114 = vsel %vm1130, %v2110, 0.0
        %2115 = vadd.xlane.f32.xlu0 %v2114
        %v2116 = vpop.xlane.xlu0 %2115
        %v2117 = vrcp.pop %v2113
        %v2118 = vrcp.pop %v2116
        %v2119 = vmul.f32 %v2108, %v2117
        %v2120 = vmul.f32 %v2110, %v2118
        %v2121 = vpack.c.bf16 %v2119, %v2119
        %v2122 = vpack.c.bf16 %v2120, %v2120
        %v2124 = vsel %vm1130, %v2121, 0
        %v2127 = vsel %vm1250, %v2005, 0
        %2129 = vmatprep.subr.bf16.mxu0 0
        %2130 = vmatpush1.bf16.msra.mxu0 %v2127
        %2131 = vmatprep.subr.bf16.mxu0 0
        %2132 = vmatpush1.bf16.msra.mxu0 0
        %2133 = vmatprep.subr.bf16.mxu0 0
        %2134 = vmatpush1.bf16.msra.mxu0 0
        %2135 = vmatprep.subr.bf16.mxu0 0
        %2136 = vmatpush1.bf16.msra.mxu0 0
        %2137 = vmatprep.subr.bf16.mxu0 0
        %2138 = vmatpush1.bf16.msra.mxu0 0
        %2139 = vmatprep.subr.bf16.mxu0 0
        %2140 = vmatpush1.bf16.msra.mxu0 0
        %2141 = vmatprep.subr.bf16.mxu0 0
        %2142 = vmatpush1.bf16.msra.mxu0 0
        %2143 = vmatprep.subr.bf16.mxu0 0
        %2144 = vmatpush1.bf16.msra.mxu0 0
        %2145 = vmatprep.subr.bf16.mxu0 0
        %2146 = vmatpush1.bf16.msra.mxu0 0
        %2147 = vmatprep.subr.bf16.mxu0 0
        %2148 = vmatpush1.bf16.msra.mxu0 0
        %2149 = vmatprep.subr.bf16.mxu0 0
        %2150 = vmatpush1.bf16.msra.mxu0 0
        %2151 = vmatprep.subr.bf16.mxu0 0
        %2152 = vmatpush1.bf16.msra.mxu0 0
        %2153 = vmatprep.subr.bf16.mxu0 0
        %2154 = vmatpush1.bf16.msra.mxu0 0
        %2155 = vmatprep.subr.bf16.mxu0 0
        %2156 = vmatpush1.bf16.msra.mxu0 0
        %2157 = vmatprep.subr.bf16.mxu0 0
        %2158 = vmatpush1.bf16.msra.mxu0 0
        %2159 = vmatprep.subr.bf16.mxu0 0
        %2160 = vmatpush1.bf16.msra.mxu0 0
        %2161 = vmatprep.mubr.bf16.mxu0 0
        %2162 = vmatmul.mubr.bf16.gmra.mrb[0].mxu0 %v2124
        %v2163 = vpop.f32.mrb[0].mxu0
        %v2164 = vadd.f32 0.0, %v2163
        %v2165 = vpop.f32.mrb[0].mxu0
        %v2166 = vpop.f32.mrb[0].mxu0
        %v2167 = vpop.f32.mrb[0].mxu0
        %2168 = vdwg.mxu0
        %v2170 = vsel %vm1130, %v2122, 0
        %v2173 = vsel %vm1250, %v2006, 0
        %2175 = vmatprep.subr.bf16.mxu0 0
        %2176 = vmatpush1.bf16.msra.mxu0 %v2173
        %2177 = vmatprep.subr.bf16.mxu0 0
        %2178 = vmatpush1.bf16.msra.mxu0 0
        %2179 = vmatprep.subr.bf16.mxu0 0
        %2180 = vmatpush1.bf16.msra.mxu0 0
        %2181 = vmatprep.subr.bf16.mxu0 0
        %2182 = vmatpush1.bf16.msra.mxu0 0
        %2183 = vmatprep.subr.bf16.mxu0 0
        %2184 = vmatpush1.bf16.msra.mxu0 0
        %2185 = vmatprep.subr.bf16.mxu0 0
        %2186 = vmatpush1.bf16.msra.mxu0 0
        %2187 = vmatprep.subr.bf16.mxu0 0
        %2188 = vmatpush1.bf16.msra.mxu0 0
        %2189 = vmatprep.subr.bf16.mxu0 0
        %2190 = vmatpush1.bf16.msra.mxu0 0
        %2191 = vmatprep.subr.bf16.mxu0 0
        %2192 = vmatpush1.bf16.msra.mxu0 0
        %2193 = vmatprep.subr.bf16.mxu0 0
        %2194 = vmatpush1.bf16.msra.mxu0 0
        %2195 = vmatprep.subr.bf16.mxu0 0
        %2196 = vmatpush1.bf16.msra.mxu0 0
        %2197 = vmatprep.subr.bf16.mxu0 0
        %2198 = vmatpush1.bf16.msra.mxu0 0
        %2199 = vmatprep.subr.bf16.mxu0 0
        %2200 = vmatpush1.bf16.msra.mxu0 0
        %2201 = vmatprep.subr.bf16.mxu0 0
        %2202 = vmatpush1.bf16.msra.mxu0 0
        %2203 = vmatprep.subr.bf16.mxu0 0
        %2204 = vmatpush1.bf16.msra.mxu0 0
        %2205 = vmatprep.subr.bf16.mxu0 0
        %2206 = vmatpush1.bf16.msra.mxu0 0
        %2207 = vmatprep.mubr.bf16.mxu0 0
        %2208 = vmatmul.mubr.bf16.gmra.mrb[0].mxu0 %v2170
        %v2209 = vpop.f32.mrb[0].mxu0
        %v2210 = vadd.f32 0.0, %v2209
        %v2211 = vpop.f32.mrb[0].mxu0
        %v2212 = vpop.f32.mrb[0].mxu0
        %v2213 = vpop.f32.mrb[0].mxu0
        %2214 = vdwg.mxu0
        %v2215 = vpack.c.bf16 %v2210, %v2164
        %s2216 = scalar_lea.vmem %s11, 8
        %v2217 = vld [vmem:[%s2216] sm:$0xf]
        %v2219 = vsel %vm1130, %v2215, 0
        %v2222 = vsel %vm1250, %v2217, 0
        %2224 = vmatprep.subr.bf16.mxu0 0
        %2225 = vmatpush1.bf16.msra.mxu0 %v2222
        %2226 = vmatprep.subr.bf16.mxu0 0
        %2227 = vmatpush1.bf16.msra.mxu0 0
        %2228 = vmatprep.subr.bf16.mxu0 0
        %2229 = vmatpush1.bf16.msra.mxu0 0
        %2230 = vmatprep.subr.bf16.mxu0 0
        %2231 = vmatpush1.bf16.msra.mxu0 0
        %2232 = vmatprep.subr.bf16.mxu0 0
        %2233 = vmatpush1.bf16.msra.mxu0 0
        %2234 = vmatprep.subr.bf16.mxu0 0
        %2235 = vmatpush1.bf16.msra.mxu0 0
        %2236 = vmatprep.subr.bf16.mxu0 0
        %2237 = vmatpush1.bf16.msra.mxu0 0
        %2238 = vmatprep.subr.bf16.mxu0 0
        %2239 = vmatpush1.bf16.msra.mxu0 0
        %2240 = vmatprep.subr.bf16.mxu0 0
        %2241 = vmatpush1.bf16.msra.mxu0 0
        %2242 = vmatprep.subr.bf16.mxu0 0
        %2243 = vmatpush1.bf16.msra.mxu0 0
        %2244 = vmatprep.subr.bf16.mxu0 0
        %2245 = vmatpush1.bf16.msra.mxu0 0
        %2246 = vmatprep.subr.bf16.mxu0 0
        %2247 = vmatpush1.bf16.msra.mxu0 0
        %2248 = vmatprep.subr.bf16.mxu0 0
        %2249 = vmatpush1.bf16.msra.mxu0 0
        %2250 = vmatprep.subr.bf16.mxu0 0
        %2251 = vmatpush1.bf16.msra.mxu0 0
        %2252 = vmatprep.subr.bf16.mxu0 0
        %2253 = vmatpush1.bf16.msra.mxu0 0
        %2254 = vmatprep.subr.bf16.mxu0 0
        %2255 = vmatpush1.bf16.msra.mxu0 0
        %2256 = vmatprep.mubr.bf16.mxu0 0
        %2257 = vmatmul.mubr.bf16.gmra.mrb[0].mxu0 %v2219
        %v2258 = vpop.f32.mrb[0].mxu0
        %v2259 = vadd.f32 0.0, %v2258
        %v2260 = vpop.f32.mrb[0].mxu0
        %v2261 = vpop.f32.mrb[0].mxu0
        %v2262 = vadd.f32 0.0, %v2261
        %v2263 = vpop.f32.mrb[0].mxu0
        %2264 = vdwg.mxu0
        %v2265 = vadd.f32 %v1821, %v2259
        %v2266 = vadd.f32 %v1824, %v2262
        %s2267 = scalar_lea.vmem %s8, 48
        %v2268 = vld [vmem:[%s2267] sm:$0xf]
        %v2269 = vld [vmem:[%s2267 + $0x4] sm:$0xf]
        %v2270 = vld [vmem:[%s2267 + $0x8] sm:$0xf]
        %v2271 = vld [vmem:[%s2267 + $0xc] sm:$0xf]
        %v2276 = vunpack.c.l.b16 %v2268
        %v2277 = vunpack.c.l.b16 %v2269
        %v2278 = vunpack.c.l.b16 %v2270
        %v2279 = vunpack.c.l.b16 %v2271
        %v2280 = vpack.c.b16 %v2277, %v2276
        %v2281 = vpack.c.b16 %v2279, %v2278
        %2284 = vmatprep.subr.bf16.mxu0 0
        %2285 = vmatpush1.bf16.msra.mxu0 %v2280
        %2286 = vmatprep.subr.bf16.mxu0 0
        %2287 = vmatpush1.bf16.msra.mxu0 %v2281
        %2288 = vmatprep.subr.bf16.mxu0 0
        %2289 = vmatpush1.bf16.msra.mxu0 0
        %2290 = vmatprep.subr.bf16.mxu0 0
        %2291 = vmatpush1.bf16.msra.mxu0 0
        %2292 = vmatprep.subr.bf16.mxu0 0
        %2293 = vmatpush1.bf16.msra.mxu0 0
        %2294 = vmatprep.subr.bf16.mxu0 0
        %2295 = vmatpush1.bf16.msra.mxu0 0
        %2296 = vmatprep.subr.bf16.mxu0 0
        %2297 = vmatpush1.bf16.msra.mxu0 0
        %2298 = vmatprep.subr.bf16.mxu0 0
        %2299 = vmatpush1.bf16.msra.mxu0 0
        %2300 = vmatprep.subr.bf16.mxu0 0
        %2301 = vmatpush1.bf16.msra.mxu0 0
        %2302 = vmatprep.subr.bf16.mxu0 0
        %2303 = vmatpush1.bf16.msra.mxu0 0
        %2304 = vmatprep.subr.bf16.mxu0 0
        %2305 = vmatpush1.bf16.msra.mxu0 0
        %2306 = vmatprep.subr.bf16.mxu0 0
        %2307 = vmatpush1.bf16.msra.mxu0 0
        %2308 = vmatprep.subr.bf16.mxu0 0
        %2309 = vmatpush1.bf16.msra.mxu0 0
        %2310 = vmatprep.subr.bf16.mxu0 0
        %2311 = vmatpush1.bf16.msra.mxu0 0
        %2312 = vmatprep.subr.bf16.mxu0 0
        %2313 = vmatpush1.bf16.msra.mxu0 0
        %2314 = vmatprep.subr.bf16.mxu0 0
        %2315 = vmatpush1.bf16.msra.mxu0 0
        %2316 = vmatprep.mubr.bf16.mxu0 0
        %2317 = vmatmul.mubr.bf16.gmra.mrb[0].mxu0 %v967
        %v2318 = vpop.f32.mrb[0].mxu0
        %v2319 = vadd.f32 0.0, %v2318
        %v2320 = vpop.f32.mrb[0].mxu0
        %v2321 = vpop.f32.mrb[0].mxu0
        %v2322 = vadd.f32 0.0, %v2321
        %v2323 = vpop.f32.mrb[0].mxu0
        %2324 = vdwg.mxu0
        %s2325 = scalar_lea.vmem %s9, 48
        %v2326 = vld [vmem:[%s2325] sm:$0xf]
        %v2327 = vld [vmem:[%s2325 + $0x4] sm:$0xf]
        %v2328 = vld [vmem:[%s2325 + $0x8] sm:$0xf]
        %v2329 = vld [vmem:[%s2325 + $0xc] sm:$0xf]
        %v2334 = vunpack.c.l.b16 %v2326
        %v2335 = vunpack.c.l.b16 %v2327
        %v2336 = vunpack.c.l.b16 %v2328
        %v2337 = vunpack.c.l.b16 %v2329
        %v2338 = vpack.c.b16 %v2335, %v2334
        %v2339 = vpack.c.b16 %v2337, %v2336
        %2342 = vmatprep.subr.bf16.mxu0 0
        %2343 = vmatpush1.bf16.msra.mxu0 %v2338
        %2344 = vmatprep.subr.bf16.mxu0 0
        %2345 = vmatpush1.bf16.msra.mxu0 %v2339
        %2346 = vmatprep.subr.bf16.mxu0 0
        %2347 = vmatpush1.bf16.msra.mxu0 0
        %2348 = vmatprep.subr.bf16.mxu0 0
        %2349 = vmatpush1.bf16.msra.mxu0 0
        %2350 = vmatprep.subr.bf16.mxu0 0
        %2351 = vmatpush1.bf16.msra.mxu0 0
        %2352 = vmatprep.subr.bf16.mxu0 0
        %2353 = vmatpush1.bf16.msra.mxu0 0
        %2354 = vmatprep.subr.bf16.mxu0 0
        %2355 = vmatpush1.bf16.msra.mxu0 0
        %2356 = vmatprep.subr.bf16.mxu0 0
        %2357 = vmatpush1.bf16.msra.mxu0 0
        %2358 = vmatprep.subr.bf16.mxu0 0
        %2359 = vmatpush1.bf16.msra.mxu0 0
        %2360 = vmatprep.subr.bf16.mxu0 0
        %2361 = vmatpush1.bf16.msra.mxu0 0
        %2362 = vmatprep.subr.bf16.mxu0 0
        %2363 = vmatpush1.bf16.msra.mxu0 0
        %2364 = vmatprep.subr.bf16.mxu0 0
        %2365 = vmatpush1.bf16.msra.mxu0 0
        %2366 = vmatprep.subr.bf16.mxu0 0
        %2367 = vmatpush1.bf16.msra.mxu0 0
        %2368 = vmatprep.subr.bf16.mxu0 0
        %2369 = vmatpush1.bf16.msra.mxu0 0
        %2370 = vmatprep.subr.bf16.mxu0 0
        %2371 = vmatpush1.bf16.msra.mxu0 0
        %2372 = vmatprep.subr.bf16.mxu0 0
        %2373 = vmatpush1.bf16.msra.mxu0 0
        %2374 = vmatprep.mubr.bf16.mxu0 0
        %2375 = vmatmul.mubr.bf16.gmra.mrb[0].mxu0 %v967
        %v2376 = vpop.f32.mrb[0].mxu0
        %v2377 = vadd.f32 0.0, %v2376
        %v2378 = vpop.f32.mrb[0].mxu0
        %v2379 = vpop.f32.mrb[0].mxu0
        %v2380 = vadd.f32 0.0, %v2379
        %v2381 = vpop.f32.mrb[0].mxu0
        %2382 = vdwg.mxu0
        %s2383 = scalar_lea.vmem %s10, 48
        %v2384 = vld [vmem:[%s2383] sm:$0xf]
        %v2385 = vld [vmem:[%s2383 + $0x4] sm:$0xf]
        %v2386 = vld [vmem:[%s2383 + $0x8] sm:$0xf]
        %v2387 = vld [vmem:[%s2383 + $0xc] sm:$0xf]
        %v2392 = vunpack.c.l.b16 %v2384
        %v2393 = vunpack.c.l.b16 %v2385
        %v2394 = vunpack.c.l.b16 %v2386
        %v2395 = vunpack.c.l.b16 %v2387
        %v2396 = vpack.c.b16 %v2393, %v2392
        %v2397 = vpack.c.b16 %v2395, %v2394
        %2400 = vmatprep.subr.bf16.mxu0 0
        %2401 = vmatpush1.bf16.msra.mxu0 %v2396
        %2402 = vmatprep.subr.bf16.mxu0 0
        %2403 = vmatpush1.bf16.msra.mxu0 %v2397
        %2404 = vmatprep.subr.bf16.mxu0 0
        %2405 = vmatpush1.bf16.msra.mxu0 0
        %2406 = vmatprep.subr.bf16.mxu0 0
        %2407 = vmatpush1.bf16.msra.mxu0 0
        %2408 = vmatprep.subr.bf16.mxu0 0
        %2409 = vmatpush1.bf16.msra.mxu0 0
        %2410 = vmatprep.subr.bf16.mxu0 0
        %2411 = vmatpush1.bf16.msra.mxu0 0
        %2412 = vmatprep.subr.bf16.mxu0 0
        %2413 = vmatpush1.bf16.msra.mxu0 0
        %2414 = vmatprep.subr.bf16.mxu0 0
        %2415 = vmatpush1.bf16.msra.mxu0 0
        %2416 = vmatprep.subr.bf16.mxu0 0
        %2417 = vmatpush1.bf16.msra.mxu0 0
        %2418 = vmatprep.subr.bf16.mxu0 0
        %2419 = vmatpush1.bf16.msra.mxu0 0
        %2420 = vmatprep.subr.bf16.mxu0 0
        %2421 = vmatpush1.bf16.msra.mxu0 0
        %2422 = vmatprep.subr.bf16.mxu0 0
        %2423 = vmatpush1.bf16.msra.mxu0 0
        %2424 = vmatprep.subr.bf16.mxu0 0
        %2425 = vmatpush1.bf16.msra.mxu0 0
        %2426 = vmatprep.subr.bf16.mxu0 0
        %2427 = vmatpush1.bf16.msra.mxu0 0
        %2428 = vmatprep.subr.bf16.mxu0 0
        %2429 = vmatpush1.bf16.msra.mxu0 0
        %2430 = vmatprep.subr.bf16.mxu0 0
        %2431 = vmatpush1.bf16.msra.mxu0 0
        %2432 = vmatprep.mubr.bf16.mxu0 0
        %2433 = vmatmul.mubr.bf16.gmra.mrb[0].mxu0 %v967
        %v2434 = vpop.f32.mrb[0].mxu0
        %v2435 = vadd.f32 0.0, %v2434
        %v2436 = vpop.f32.mrb[0].mxu0
        %v2437 = vpop.f32.mrb[0].mxu0
        %v2438 = vadd.f32 0.0, %v2437
        %v2439 = vpop.f32.mrb[0].mxu0
        %2440 = vdwg.mxu0
        %v2441 = vpack.c.bf16 %v2319, %v2319
        %v2442 = vpack.c.bf16 %v2322, %v2322
        %v2443 = vpack.c.bf16 %v2377, %v2377
        %v2444 = vpack.c.bf16 %v2380, %v2380
        %v2445 = vpack.c.bf16 %v2435, %v2435
        %v2446 = vpack.c.bf16 %v2438, %v2438
        %v2448 = vsel %vm1130, %v2441, 0
        %v2451 = vsel %vm1130, %v2443, 0
        %2453 = vmatprep.subr.bf16.mxu0 0
        %2454 = vmatpush1.bf16.xpose.msra.mxu0 %v2451
        %2455 = vmatprep.subr.bf16.mxu0 0
        %2456 = vmatpush1.bf16.xpose.msra.mxu0 0
        %2457 = vmatprep.subr.bf16.mxu0 0
        %2458 = vmatpush1.bf16.xpose.msra.mxu0 0
        %2459 = vmatprep.subr.bf16.mxu0 0
        %2460 = vmatpush1.bf16.xpose.msra.mxu0 0
        %2461 = vmatprep.subr.bf16.mxu0 0
        %2462 = vmatpush1.bf16.xpose.msra.mxu0 0
        %2463 = vmatprep.subr.bf16.mxu0 0
        %2464 = vmatpush1.bf16.xpose.msra.mxu0 0
        %2465 = vmatprep.subr.bf16.mxu0 0
        %2466 = vmatpush1.bf16.xpose.msra.mxu0 0
        %2467 = vmatprep.subr.bf16.mxu0 0
        %2468 = vmatpush1.bf16.xpose.msra.mxu0 0
        %2469 = vmatprep.subr.bf16.mxu0 0
        %2470 = vmatpush1.bf16.xpose.msra.mxu0 0
        %2471 = vmatprep.subr.bf16.mxu0 0
        %2472 = vmatpush1.bf16.xpose.msra.mxu0 0
        %2473 = vmatprep.subr.bf16.mxu0 0
        %2474 = vmatpush1.bf16.xpose.msra.mxu0 0
        %2475 = vmatprep.subr.bf16.mxu0 0
        %2476 = vmatpush1.bf16.xpose.msra.mxu0 0
        %2477 = vmatprep.subr.bf16.mxu0 0
        %2478 = vmatpush1.bf16.xpose.msra.mxu0 0
        %2479 = vmatprep.subr.bf16.mxu0 0
        %2480 = vmatpush1.bf16.xpose.msra.mxu0 0
        %2481 = vmatprep.subr.bf16.mxu0 0
        %2482 = vmatpush1.bf16.xpose.msra.mxu0 0
        %2483 = vmatprep.subr.bf16.mxu0 0
        %2484 = vmatpush1.bf16.xpose.msra.mxu0 0
        %2485 = vmatprep.mubr.bf16.mxu0 0
        %2486 = vmatmul.mubr.bf16.gmra.mrb[0].mxu0 %v2448
        %v2487 = vpop.f32.mrb[0].mxu0
        %v2488 = vadd.f32 0.0, %v2487
        %v2489 = vpop.f32.mrb[0].mxu0
        %v2490 = vpop.f32.mrb[0].mxu0
        %v2491 = vpop.f32.mrb[0].mxu0
        %2492 = vdwg.mxu0
        %v2494 = vsel %vm1130, %v2442, 0
        %v2497 = vsel %vm1130, %v2444, 0
        %2499 = vmatprep.subr.bf16.mxu0 0
        %2500 = vmatpush1.bf16.xpose.msra.mxu0 %v2497
        %2501 = vmatprep.subr.bf16.mxu0 0
        %2502 = vmatpush1.bf16.xpose.msra.mxu0 0
        %2503 = vmatprep.subr.bf16.mxu0 0
        %2504 = vmatpush1.bf16.xpose.msra.mxu0 0
        %2505 = vmatprep.subr.bf16.mxu0 0
        %2506 = vmatpush1.bf16.xpose.msra.mxu0 0
        %2507 = vmatprep.subr.bf16.mxu0 0
        %2508 = vmatpush1.bf16.xpose.msra.mxu0 0
        %2509 = vmatprep.subr.bf16.mxu0 0
        %2510 = vmatpush1.bf16.xpose.msra.mxu0 0
        %2511 = vmatprep.subr.bf16.mxu0 0
        %2512 = vmatpush1.bf16.xpose.msra.mxu0 0
        %2513 = vmatprep.subr.bf16.mxu0 0
        %2514 = vmatpush1.bf16.xpose.msra.mxu0 0
        %2515 = vmatprep.subr.bf16.mxu0 0
        %2516 = vmatpush1.bf16.xpose.msra.mxu0 0
        %2517 = vmatprep.subr.bf16.mxu0 0
        %2518 = vmatpush1.bf16.xpose.msra.mxu0 0
        %2519 = vmatprep.subr.bf16.mxu0 0
        %2520 = vmatpush1.bf16.xpose.msra.mxu0 0
        %2521 = vmatprep.subr.bf16.mxu0 0
        %2522 = vmatpush1.bf16.xpose.msra.mxu0 0
        %2523 = vmatprep.subr.bf16.mxu0 0
        %2524 = vmatpush1.bf16.xpose.msra.mxu0 0
        %2525 = vmatprep.subr.bf16.mxu0 0
        %2526 = vmatpush1.bf16.xpose.msra.mxu0 0
        %2527 = vmatprep.subr.bf16.mxu0 0
        %2528 = vmatpush1.bf16.xpose.msra.mxu0 0
        %2529 = vmatprep.subr.bf16.mxu0 0
        %2530 = vmatpush1.bf16.xpose.msra.mxu0 0
        %2531 = vmatprep.mubr.bf16.mxu0 0
        %2532 = vmatmul.mubr.bf16.gmra.mrb[0].mxu0 %v2494
        %v2533 = vpop.f32.mrb[0].mxu0
        %v2534 = vadd.f32 0.0, %v2533
        %v2535 = vpop.f32.mrb[0].mxu0
        %v2536 = vpop.f32.mrb[0].mxu0
        %v2537 = vpop.f32.mrb[0].mxu0
        %2538 = vdwg.mxu0
        %v2539 = vsel %vm1130, %v2488, -inf
        %2540 = vmax.xlane.f32.xlu0 %v2539
        %v2541 = vpop.xlane.xlu0 %2540
        %v2542 = vsel %vm1130, %v2534, -inf
        %2543 = vmax.xlane.f32.xlu0 %v2542
        %v2544 = vpop.xlane.xlu0 %2543
        %v2545 = vsub.f32 %v2488, %v2541
        %v2546 = vsub.f32 %v2534, %v2544
        %v2547 = vmul.f32 %v2545, 1.442695
        %v2548 = vpow.pop %v2547
        %v2549 = vmul.f32 %v2546, 1.442695
        %v2550 = vpow.pop %v2549
        %v2551 = vsel %vm1130, %v2548, 0.0
        %2552 = vadd.xlane.f32.xlu0 %v2551
        %v2553 = vpop.xlane.xlu0 %2552
        %v2554 = vsel %vm1130, %v2550, 0.0
        %2555 = vadd.xlane.f32.xlu0 %v2554
        %v2556 = vpop.xlane.xlu0 %2555
        %v2557 = vrcp.pop %v2553
        %v2558 = vrcp.pop %v2556
        %v2559 = vmul.f32 %v2548, %v2557
        %v2560 = vmul.f32 %v2550, %v2558
        %v2561 = vpack.c.bf16 %v2559, %v2559
        %v2562 = vpack.c.bf16 %v2560, %v2560
        %v2564 = vsel %vm1130, %v2561, 0
        %v2567 = vsel %vm1250, %v2445, 0
        %2569 = vmatprep.subr.bf16.mxu0 0
        %2570 = vmatpush1.bf16.msra.mxu0 %v2567
        %2571 = vmatprep.subr.bf16.mxu0 0
        %2572 = vmatpush1.bf16.msra.mxu0 0
        %2573 = vmatprep.subr.bf16.mxu0 0
        %2574 = vmatpush1.bf16.msra.mxu0 0
        %2575 = vmatprep.subr.bf16.mxu0 0
        %2576 = vmatpush1.bf16.msra.mxu0 0
        %2577 = vmatprep.subr.bf16.mxu0 0
        %2578 = vmatpush1.bf16.msra.mxu0 0
        %2579 = vmatprep.subr.bf16.mxu0 0
        %2580 = vmatpush1.bf16.msra.mxu0 0
        %2581 = vmatprep.subr.bf16.mxu0 0
        %2582 = vmatpush1.bf16.msra.mxu0 0
        %2583 = vmatprep.subr.bf16.mxu0 0
        %2584 = vmatpush1.bf16.msra.mxu0 0
        %2585 = vmatprep.subr.bf16.mxu0 0
        %2586 = vmatpush1.bf16.msra.mxu0 0
        %2587 = vmatprep.subr.bf16.mxu0 0
        %2588 = vmatpush1.bf16.msra.mxu0 0
        %2589 = vmatprep.subr.bf16.mxu0 0
        %2590 = vmatpush1.bf16.msra.mxu0 0
        %2591 = vmatprep.subr.bf16.mxu0 0
        %2592 = vmatpush1.bf16.msra.mxu0 0
        %2593 = vmatprep.subr.bf16.mxu0 0
        %2594 = vmatpush1.bf16.msra.mxu0 0
        %2595 = vmatprep.subr.bf16.mxu0 0
        %2596 = vmatpush1.bf16.msra.mxu0 0
        %2597 = vmatprep.subr.bf16.mxu0 0
        %2598 = vmatpush1.bf16.msra.mxu0 0
        %2599 = vmatprep.subr.bf16.mxu0 0
        %2600 = vmatpush1.bf16.msra.mxu0 0
        %2601 = vmatprep.mubr.bf16.mxu0 0
        %2602 = vmatmul.mubr.bf16.gmra.mrb[0].mxu0 %v2564
        %v2603 = vpop.f32.mrb[0].mxu0
        %v2604 = vadd.f32 0.0, %v2603
        %v2605 = vpop.f32.mrb[0].mxu0
        %v2606 = vpop.f32.mrb[0].mxu0
        %v2607 = vpop.f32.mrb[0].mxu0
        %2608 = vdwg.mxu0
        %v2610 = vsel %vm1130, %v2562, 0
        %v2613 = vsel %vm1250, %v2446, 0
        %2615 = vmatprep.subr.bf16.mxu0 0
        %2616 = vmatpush1.bf16.msra.mxu0 %v2613
        %2617 = vmatprep.subr.bf16.mxu0 0
        %2618 = vmatpush1.bf16.msra.mxu0 0
        %2619 = vmatprep.subr.bf16.mxu0 0
        %2620 = vmatpush1.bf16.msra.mxu0 0
        %2621 = vmatprep.subr.bf16.mxu0 0
        %2622 = vmatpush1.bf16.msra.mxu0 0
        %2623 = vmatprep.subr.bf16.mxu0 0
        %2624 = vmatpush1.bf16.msra.mxu0 0
        %2625 = vmatprep.subr.bf16.mxu0 0
        %2626 = vmatpush1.bf16.msra.mxu0 0
        %2627 = vmatprep.subr.bf16.mxu0 0
        %2628 = vmatpush1.bf16.msra.mxu0 0
        %2629 = vmatprep.subr.bf16.mxu0 0
        %2630 = vmatpush1.bf16.msra.mxu0 0
        %2631 = vmatprep.subr.bf16.mxu0 0
        %2632 = vmatpush1.bf16.msra.mxu0 0
        %2633 = vmatprep.subr.bf16.mxu0 0
        %2634 = vmatpush1.bf16.msra.mxu0 0
        %2635 = vmatprep.subr.bf16.mxu0 0
        %2636 = vmatpush1.bf16.msra.mxu0 0
        %2637 = vmatprep.subr.bf16.mxu0 0
        %2638 = vmatpush1.bf16.msra.mxu0 0
        %2639 = vmatprep.subr.bf16.mxu0 0
        %2640 = vmatpush1.bf16.msra.mxu0 0
        %2641 = vmatprep.subr.bf16.mxu0 0
        %2642 = vmatpush1.bf16.msra.mxu0 0
        %2643 = vmatprep.subr.bf16.mxu0 0
        %2644 = vmatpush1.bf16.msra.mxu0 0
        %2645 = vmatprep.subr.bf16.mxu0 0
        %2646 = vmatpush1.bf16.msra.mxu0 0
        %2647 = vmatprep.mubr.bf16.mxu0 0
        %2648 = vmatmul.mubr.bf16.gmra.mrb[0].mxu0 %v2610
        %v2649 = vpop.f32.mrb[0].mxu0
        %v2650 = vadd.f32 0.0, %v2649
        %v2651 = vpop.f32.mrb[0].mxu0
        %v2652 = vpop.f32.mrb[0].mxu0
        %v2653 = vpop.f32.mrb[0].mxu0
        %2654 = vdwg.mxu0
        %v2655 = vpack.c.bf16 %v2650, %v2604
        %s2656 = scalar_lea.vmem %s11, 12
        %v2657 = vld [vmem:[%s2656] sm:$0xf]
        %v2659 = vsel %vm1130, %v2655, 0
        %v2662 = vsel %vm1250, %v2657, 0
        %2664 = vmatprep.subr.bf16.mxu0 0
        %2665 = vmatpush1.bf16.msra.mxu0 %v2662
        %2666 = vmatprep.subr.bf16.mxu0 0
        %2667 = vmatpush1.bf16.msra.mxu0 0
        %2668 = vmatprep.subr.bf16.mxu0 0
        %2669 = vmatpush1.bf16.msra.mxu0 0
        %2670 = vmatprep.subr.bf16.mxu0 0
        %2671 = vmatpush1.bf16.msra.mxu0 0
        %2672 = vmatprep.subr.bf16.mxu0 0
        %2673 = vmatpush1.bf16.msra.mxu0 0
        %2674 = vmatprep.subr.bf16.mxu0 0
        %2675 = vmatpush1.bf16.msra.mxu0 0
        %2676 = vmatprep.subr.bf16.mxu0 0
        %2677 = vmatpush1.bf16.msra.mxu0 0
        %2678 = vmatprep.subr.bf16.mxu0 0
        %2679 = vmatpush1.bf16.msra.mxu0 0
        %2680 = vmatprep.subr.bf16.mxu0 0
        %2681 = vmatpush1.bf16.msra.mxu0 0
        %2682 = vmatprep.subr.bf16.mxu0 0
        %2683 = vmatpush1.bf16.msra.mxu0 0
        %2684 = vmatprep.subr.bf16.mxu0 0
        %2685 = vmatpush1.bf16.msra.mxu0 0
        %2686 = vmatprep.subr.bf16.mxu0 0
        %2687 = vmatpush1.bf16.msra.mxu0 0
        %2688 = vmatprep.subr.bf16.mxu0 0
        %2689 = vmatpush1.bf16.msra.mxu0 0
        %2690 = vmatprep.subr.bf16.mxu0 0
        %2691 = vmatpush1.bf16.msra.mxu0 0
        %2692 = vmatprep.subr.bf16.mxu0 0
        %2693 = vmatpush1.bf16.msra.mxu0 0
        %2694 = vmatprep.subr.bf16.mxu0 0
        %2695 = vmatpush1.bf16.msra.mxu0 0
        %2696 = vmatprep.mubr.bf16.mxu0 0
        %2697 = vmatmul.mubr.bf16.gmra.mrb[0].mxu0 %v2659
        %v2698 = vpop.f32.mrb[0].mxu0
        %v2699 = vadd.f32 0.0, %v2698
        %v2700 = vpop.f32.mrb[0].mxu0
        %v2701 = vpop.f32.mrb[0].mxu0
        %v2702 = vadd.f32 0.0, %v2701
        %v2703 = vpop.f32.mrb[0].mxu0
        %2704 = vdwg.mxu0
        %v2705 = vadd.f32 %v2265, %v2699
        %v2706 = vadd.f32 %v2266, %v2702
        %v2707 = vadd.f32 %v812, %v2705
        %v2708 = vadd.f32 %v813, %v2706
        %v2709 = vsel %vm762, %v2707, 0.0
        %2710 = vadd.xlane.f32.xlu0 %v2709
        %v2711 = vpop.xlane.xlu0 %2710
        %v2712 = vsel %vm762, %v2708, 0.0
        %2713 = vadd.xlane.f32.xlu0 %v2712
        %v2714 = vpop.xlane.xlu0 %2713
        %v2715 = vmul.f32 %v2711, %v897
        %v2716 = vmul.f32 %v2714, %v897
        %v2717 = vsub.f32 %v2707, %v2715
        %v2718 = vsub.f32 %v2708, %v2716
        %v2719 = vmul.f32 %v2717, %v2717
        %v2720 = vmul.f32 %v2718, %v2718
        %v2721 = vsel %vm762, %v2719, 0.0
        %2722 = vadd.xlane.f32.xlu0 %v2721
        %v2723 = vpop.xlane.xlu0 %2722
        %v2724 = vsel %vm762, %v2720, 0.0
        %2725 = vadd.xlane.f32.xlu0 %v2724
        %v2726 = vpop.xlane.xlu0 %2725
        %v2727 = vmul.f32 %v2723, %v910
        %v2728 = vmul.f32 %v2726, %v910
        %v2729 = vrsqrt.pop %v2727
        %v2730 = vmul.f32 %v2727, %v2729
        %vm2731 = vcmp.eq.f32.partialorder %v2727, inf
        %v2732 = vsel %vm2731, %v2727, %v2730
        %vm2733 = vcmp.eq.f32.partialorder %v2727, 0.0
        %v2734 = vand.u32 %v2727, 2147483648
        %v2735 = vsel %vm2733, %v2734, %v2732
        %v2736 = vrsqrt.pop %v2728
        %v2737 = vmul.f32 %v2728, %v2736
        %vm2738 = vcmp.eq.f32.partialorder %v2728, inf
        %v2739 = vsel %vm2738, %v2728, %v2737
        %vm2740 = vcmp.eq.f32.partialorder %v2728, 0.0
        %v2741 = vand.u32 %v2728, 2147483648
        %v2742 = vsel %vm2740, %v2741, %v2739
        %v2743 = vadd.f32 %v2735, 1e-06
        %v2744 = vadd.f32 %v2742, 1e-06
        %v2745 = vrcp.pop %v2743
        %v2746 = vrcp.pop %v2744
        %v2748 = vlaneseq
        %v2749 = vshrl.u32 %v2748, 7
        %v2750 = vsub.s32 0, %v2749
        %v2751 = vrot.slane %v742, %v2750
        %v2753 = vmul.f32 %v2751, %v2717
        %v2754 = vmul.f32 %v2751, %v2718
        %v2755 = vmul.f32 %v2753, %v2745
        %v2756 = vmul.f32 %v2754, %v2746
        %v2758 = vlaneseq
        %v2759 = vshrl.u32 %v2758, 7
        %v2760 = vsub.s32 0, %v2759
        %v2761 = vrot.slane %v743, %v2760
        %v2763 = vadd.f32 %v2755, %v2761
        %v2764 = vadd.f32 %v2756, %v2761
        %v2765 = vrot.slane %v2763, 7
        %v2766 = vrot.slane %v2764, 7
        %v2767 = vlaneseq
        %v2768 = vshrl.u32 %v2767, 7
        %vm2769 = vcmp.lt.s32.totalorder %v2768, 1
        %v2770 = vsel %vm2769, %v2765, %v2766
        %v2771 = vsel %vm2769, %v2766, %v2765
        %2773 = vset.pattern.permute.xlu0 0
        %2774 = vperm.xlu0 %2773, %v746
        %v2775 = vpop.permute.xlu0 %2774
        %2778 = vset.pattern.permute.xlu0 0
        %2779 = vperm.xlu0 %2778, %v747
        %v2780 = vpop.permute.xlu0 %2779
        %v2782 = vmul.f32 %v2771, %v2775
        %v2783 = vmul.f32 %v2770, %v2780
        %v2784 = vrot.slane %v2763, 1
        %v2785 = vrot.slane %v2764, 1
        %vm2786 = vcmp.lt.s32.totalorder %v2768, 7
        %v2787 = vsel %vm2786, %v2784, %v2785
        %v2788 = vsel %vm2786, %v2785, %v2784
        %2790 = vset.pattern.permute.xlu0 0
        %2791 = vperm.xlu0 %2790, %v748
        %v2792 = vpop.permute.xlu0 %2791
        %2795 = vset.pattern.permute.xlu0 0
        %2796 = vperm.xlu0 %2795, %v749
        %v2797 = vpop.permute.xlu0 %2796
        %v2799 = vmul.f32 %v2787, %v2792
        %v2800 = vmul.f32 %v2788, %v2797
        %v2801 = vpack.c.bf16 %v2764, %v2763
        %s2802 = scalar_lea.vmem %s14, 16
        %v2803 = vld [vmem:[%s2802] sm:$0xf]
        %v2804 = vld [vmem:[%s2802 + $0x4] sm:$0xf]
        %v2805 = vld [vmem:[%s2802 + $0x8] sm:$0xf]
        %v2806 = vld [vmem:[%s2802 + $0xc] sm:$0xf]
        %v2807 = vpack.c.bf16 %v2783, %v2782
        %v2808 = vld [vmem:[%s14] sm:$0xf]
        %v2809 = vld [vmem:[%s14 + $0x4] sm:$0xf]
        %v2810 = vld [vmem:[%s14 + $0x8] sm:$0xf]
        %v2811 = vld [vmem:[%s14 + $0xc] sm:$0xf]
        %v2816 = vunpack.c.l.b16 %v2808
        %v2817 = vunpack.c.l.b16 %v2809
        %v2818 = vunpack.c.l.b16 %v2810
        %v2819 = vunpack.c.l.b16 %v2811
        %v2820 = vpack.c.b16 %v2817, %v2816
        %v2821 = vpack.c.b16 %v2819, %v2818
        %v2825 = vsel %vm762, %v2807, 0
        %2827 = vmatprep.subr.bf16.mxu0 0
        %2828 = vmatpush1.bf16.msra.mxu0 %v2820
        %2829 = vmatprep.subr.bf16.mxu0 0
        %2830 = vmatpush1.bf16.msra.mxu0 %v2821
        %2831 = vmatprep.subr.bf16.mxu0 0
        %2832 = vmatpush1.bf16.msra.mxu0 0
        %2833 = vmatprep.subr.bf16.mxu0 0
        %2834 = vmatpush1.bf16.msra.mxu0 0
        %2835 = vmatprep.subr.bf16.mxu0 0
        %2836 = vmatpush1.bf16.msra.mxu0 0
        %2837 = vmatprep.subr.bf16.mxu0 0
        %2838 = vmatpush1.bf16.msra.mxu0 0
        %2839 = vmatprep.subr.bf16.mxu0 0
        %2840 = vmatpush1.bf16.msra.mxu0 0
        %2841 = vmatprep.subr.bf16.mxu0 0
        %2842 = vmatpush1.bf16.msra.mxu0 0
        %2843 = vmatprep.subr.bf16.mxu0 0
        %2844 = vmatpush1.bf16.msra.mxu0 0
        %2845 = vmatprep.subr.bf16.mxu0 0
        %2846 = vmatpush1.bf16.msra.mxu0 0
        %2847 = vmatprep.subr.bf16.mxu0 0
        %2848 = vmatpush1.bf16.msra.mxu0 0
        %2849 = vmatprep.subr.bf16.mxu0 0
        %2850 = vmatpush1.bf16.msra.mxu0 0
        %2851 = vmatprep.subr.bf16.mxu0 0
        %2852 = vmatpush1.bf16.msra.mxu0 0
        %2853 = vmatprep.subr.bf16.mxu0 0
        %2854 = vmatpush1.bf16.msra.mxu0 0
        %2855 = vmatprep.subr.bf16.mxu0 0
        %2856 = vmatpush1.bf16.msra.mxu0 0
        %2857 = vmatprep.subr.bf16.mxu0 0
        %2858 = vmatpush1.bf16.msra.mxu0 0
        %2859 = vmatprep.mubr.bf16.mxu0 0
        %2860 = vmatmul.mubr.bf16.gmra.mrb[0].mxu0 %v2825
        %v2861 = vpop.f32.mrb[0].mxu0
        %v2862 = vadd.f32 0.0, %v2861
        %v2863 = vpop.f32.mrb[0].mxu0
        %v2864 = vpop.f32.mrb[0].mxu0
        %v2865 = vadd.f32 0.0, %v2864
        %v2866 = vpop.f32.mrb[0].mxu0
        %2867 = vdwg.mxu0
        %v2872 = vunpack.c.l.b16 %v2803
        %v2873 = vunpack.c.l.b16 %v2804
        %v2874 = vunpack.c.l.b16 %v2805
        %v2875 = vunpack.c.l.b16 %v2806
        %v2876 = vpack.c.b16 %v2873, %v2872
        %v2877 = vpack.c.b16 %v2875, %v2874
        %v2881 = vsel %vm762, %v2801, 0
        %2883 = vmatprep.subr.bf16.mxu0 0
        %2884 = vmatpush1.bf16.msra.mxu0 %v2876
        %2885 = vmatprep.subr.bf16.mxu0 0
        %2886 = vmatpush1.bf16.msra.mxu0 %v2877
        %2887 = vmatprep.subr.bf16.mxu0 0
        %2888 = vmatpush1.bf16.msra.mxu0 0
        %2889 = vmatprep.subr.bf16.mxu0 0
        %2890 = vmatpush1.bf16.msra.mxu0 0
        %2891 = vmatprep.subr.bf16.mxu0 0
        %2892 = vmatpush1.bf16.msra.mxu0 0
        %2893 = vmatprep.subr.bf16.mxu0 0
        %2894 = vmatpush1.bf16.msra.mxu0 0
        %2895 = vmatprep.subr.bf16.mxu0 0
        %2896 = vmatpush1.bf16.msra.mxu0 0
        %2897 = vmatprep.subr.bf16.mxu0 0
        %2898 = vmatpush1.bf16.msra.mxu0 0
        %2899 = vmatprep.subr.bf16.mxu0 0
        %2900 = vmatpush1.bf16.msra.mxu0 0
        %2901 = vmatprep.subr.bf16.mxu0 0
        %2902 = vmatpush1.bf16.msra.mxu0 0
        %2903 = vmatprep.subr.bf16.mxu0 0
        %2904 = vmatpush1.bf16.msra.mxu0 0
        %2905 = vmatprep.subr.bf16.mxu0 0
        %2906 = vmatpush1.bf16.msra.mxu0 0
        %2907 = vmatprep.subr.bf16.mxu0 0
        %2908 = vmatpush1.bf16.msra.mxu0 0
        %2909 = vmatprep.subr.bf16.mxu0 0
        %2910 = vmatpush1.bf16.msra.mxu0 0
        %2911 = vmatprep.subr.bf16.mxu0 0
        %2912 = vmatpush1.bf16.msra.mxu0 0
        %2913 = vmatprep.subr.bf16.mxu0 0
        %2914 = vmatpush1.bf16.msra.mxu0 0
        %2915 = vmatprep.mubr.bf16.mxu0 0
        %2916 = vmatmul.mubr.bf16.gmra.mrb[0].mxu0 %v2881
        %v2917 = vpop.f32.mrb[0].mxu0
        %v2918 = vadd.f32 %v2862, %v2917
        %v2919 = vpop.f32.mrb[0].mxu0
        %v2920 = vpop.f32.mrb[0].mxu0
        %v2921 = vadd.f32 %v2865, %v2920
        %v2922 = vpop.f32.mrb[0].mxu0
        %2923 = vdwg.mxu0
        %v2924 = vpack.c.bf16 %v2800, %v2799
        %s2925 = scalar_lea.vmem %s14, 32
        %v2926 = vld [vmem:[%s2925] sm:$0xf]
        %v2927 = vld [vmem:[%s2925 + $0x4] sm:$0xf]
        %v2928 = vld [vmem:[%s2925 + $0x8] sm:$0xf]
        %v2929 = vld [vmem:[%s2925 + $0xc] sm:$0xf]
        %v2934 = vunpack.c.l.b16 %v2926
        %v2935 = vunpack.c.l.b16 %v2927
        %v2936 = vunpack.c.l.b16 %v2928
        %v2937 = vunpack.c.l.b16 %v2929
        %v2938 = vpack.c.b16 %v2935, %v2934
        %v2939 = vpack.c.b16 %v2937, %v2936
        %v2943 = vsel %vm762, %v2924, 0
        %2945 = vmatprep.subr.bf16.mxu0 0
        %2946 = vmatpush1.bf16.msra.mxu0 %v2938
        %2947 = vmatprep.subr.bf16.mxu0 0
        %2948 = vmatpush1.bf16.msra.mxu0 %v2939
        %2949 = vmatprep.subr.bf16.mxu0 0
        %2950 = vmatpush1.bf16.msra.mxu0 0
        %2951 = vmatprep.subr.bf16.mxu0 0
        %2952 = vmatpush1.bf16.msra.mxu0 0
        %2953 = vmatprep.subr.bf16.mxu0 0
        %2954 = vmatpush1.bf16.msra.mxu0 0
        %2955 = vmatprep.subr.bf16.mxu0 0
        %2956 = vmatpush1.bf16.msra.mxu0 0
        %2957 = vmatprep.subr.bf16.mxu0 0
        %2958 = vmatpush1.bf16.msra.mxu0 0
        %2959 = vmatprep.subr.bf16.mxu0 0
        %2960 = vmatpush1.bf16.msra.mxu0 0
        %2961 = vmatprep.subr.bf16.mxu0 0
        %2962 = vmatpush1.bf16.msra.mxu0 0
        %2963 = vmatprep.subr.bf16.mxu0 0
        %2964 = vmatpush1.bf16.msra.mxu0 0
        %2965 = vmatprep.subr.bf16.mxu0 0
        %2966 = vmatpush1.bf16.msra.mxu0 0
        %2967 = vmatprep.subr.bf16.mxu0 0
        %2968 = vmatpush1.bf16.msra.mxu0 0
        %2969 = vmatprep.subr.bf16.mxu0 0
        %2970 = vmatpush1.bf16.msra.mxu0 0
        %2971 = vmatprep.subr.bf16.mxu0 0
        %2972 = vmatpush1.bf16.msra.mxu0 0
        %2973 = vmatprep.subr.bf16.mxu0 0
        %2974 = vmatpush1.bf16.msra.mxu0 0
        %2975 = vmatprep.subr.bf16.mxu0 0
        %2976 = vmatpush1.bf16.msra.mxu0 0
        %2977 = vmatprep.mubr.bf16.mxu0 0
        %2978 = vmatmul.mubr.bf16.gmra.mrb[0].mxu0 %v2943
        %v2979 = vpop.f32.mrb[0].mxu0
        %v2980 = vadd.f32 0.0, %v2979
        %v2981 = vpop.f32.mrb[0].mxu0
        %v2982 = vpop.f32.mrb[0].mxu0
        %v2983 = vadd.f32 0.0, %v2982
        %v2984 = vpop.f32.mrb[0].mxu0
        %2985 = vdwg.mxu0
        %v2986 = vadd.f32 %v2918, %v2980
        %v2987 = vadd.f32 %v2921, %v2983
        %v2989 = vlaneseq
        %v2990 = vshrl.u32 %v2989, 7
        %v2991 = vsub.s32 0, %v2990
        %v2992 = vrot.slane %v744, %v2991
        %v2994 = vadd.f32 %v2986, %v2992
        %v2995 = vadd.f32 %v2987, %v2992
        %v2996 = vmax.f32 %v2994, 0.0
        %v2997 = vmax.f32 %v2995, 0.0
        %v2998 = vrot.slane %v2996, 7
        %v2999 = vrot.slane %v2997, 7
        %v3000 = vsel %vm2769, %v2998, %v2999
        %v3001 = vsel %vm2769, %v2999, %v2998
        %v3002 = vmul.f32 %v3001, %v2775
        %v3003 = vmul.f32 %v3000, %v2780
        %v3004 = vrot.slane %v2996, 1
        %v3005 = vrot.slane %v2997, 1
        %v3006 = vsel %vm2786, %v3004, %v3005
        %v3007 = vsel %vm2786, %v3005, %v3004
        %v3008 = vmul.f32 %v3006, %v2792
        %v3009 = vmul.f32 %v3007, %v2797
        %v3010 = vpack.c.bf16 %v2997, %v2996
        %s3011 = scalar_lea.vmem %s16, 32
        %v3012 = vld [vmem:[%s3011] sm:$0xf]
        %v3013 = vld [vmem:[%s3011 + $0x4] sm:$0xf]
        %v3014 = vld [vmem:[%s3011 + $0x8] sm:$0xf]
        %v3015 = vld [vmem:[%s3011 + $0xc] sm:$0xf]
        %v3016 = vld [vmem:[%s3011 + $0x10] sm:$0xf]
        %v3017 = vld [vmem:[%s3011 + $0x14] sm:$0xf]
        %v3018 = vld [vmem:[%s3011 + $0x18] sm:$0xf]
        %v3019 = vld [vmem:[%s3011 + $0x1c] sm:$0xf]
        %v3020 = vpack.c.bf16 %v3003, %v3002
        %v3021 = vld [vmem:[%s16] sm:$0xf]
        %v3022 = vld [vmem:[%s16 + $0x4] sm:$0xf]
        %v3023 = vld [vmem:[%s16 + $0x8] sm:$0xf]
        %v3024 = vld [vmem:[%s16 + $0xc] sm:$0xf]
        %v3025 = vld [vmem:[%s16 + $0x10] sm:$0xf]
        %v3026 = vld [vmem:[%s16 + $0x14] sm:$0xf]
        %v3027 = vld [vmem:[%s16 + $0x18] sm:$0xf]
        %v3028 = vld [vmem:[%s16 + $0x1c] sm:$0xf]
        %v3037 = vunpack.c.l.b16 %v3021
        %v3038 = vunpack.c.l.b16 %v3022
        %v3039 = vunpack.c.l.b16 %v3023
        %v3040 = vunpack.c.l.b16 %v3024
        %v3041 = vunpack.c.l.b16 %v3025
        %v3042 = vunpack.c.l.b16 %v3026
        %v3043 = vunpack.c.l.b16 %v3027
        %v3044 = vunpack.c.l.b16 %v3028
        %v3045 = vpack.c.b16 %v3038, %v3037
        %v3046 = vpack.c.b16 %v3040, %v3039
        %v3047 = vpack.c.b16 %v3042, %v3041
        %v3048 = vpack.c.b16 %v3044, %v3043
        %vm3053 = vcmask 523264
        %v3055 = vsel %vm3053, %v3020, 0
        %3057 = vmatprep.subr.bf16.mxu0 0
        %3058 = vmatpush1.bf16.msra.mxu0 %v3045
        %3059 = vmatprep.subr.bf16.mxu0 0
        %3060 = vmatpush1.bf16.msra.mxu0 %v3046
        %3061 = vmatprep.subr.bf16.mxu0 0
        %3062 = vmatpush1.bf16.msra.mxu0 %v3047
        %3063 = vmatprep.subr.bf16.mxu0 0
        %3064 = vmatpush1.bf16.msra.mxu0 %v3048
        %3065 = vmatprep.subr.bf16.mxu0 0
        %3066 = vmatpush1.bf16.msra.mxu0 0
        %3067 = vmatprep.subr.bf16.mxu0 0
        %3068 = vmatpush1.bf16.msra.mxu0 0
        %3069 = vmatprep.subr.bf16.mxu0 0
        %3070 = vmatpush1.bf16.msra.mxu0 0
        %3071 = vmatprep.subr.bf16.mxu0 0
        %3072 = vmatpush1.bf16.msra.mxu0 0
        %3073 = vmatprep.subr.bf16.mxu0 0
        %3074 = vmatpush1.bf16.msra.mxu0 0
        %3075 = vmatprep.subr.bf16.mxu0 0
        %3076 = vmatpush1.bf16.msra.mxu0 0
        %3077 = vmatprep.subr.bf16.mxu0 0
        %3078 = vmatpush1.bf16.msra.mxu0 0
        %3079 = vmatprep.subr.bf16.mxu0 0
        %3080 = vmatpush1.bf16.msra.mxu0 0
        %3081 = vmatprep.subr.bf16.mxu0 0
        %3082 = vmatpush1.bf16.msra.mxu0 0
        %3083 = vmatprep.subr.bf16.mxu0 0
        %3084 = vmatpush1.bf16.msra.mxu0 0
        %3085 = vmatprep.subr.bf16.mxu0 0
        %3086 = vmatpush1.bf16.msra.mxu0 0
        %3087 = vmatprep.subr.bf16.mxu0 0
        %3088 = vmatpush1.bf16.msra.mxu0 0
        %3089 = vmatprep.mubr.bf16.mxu0 0
        %3090 = vmatmul.mubr.bf16.gmra.mrb[0].mxu0 %v3055
        %v3091 = vpop.f32.mrb[0].mxu0
        %v3092 = vadd.f32 0.0, %v3091
        %v3093 = vpop.f32.mrb[0].mxu0
        %v3094 = vpop.f32.mrb[0].mxu0
        %v3095 = vadd.f32 0.0, %v3094
        %v3096 = vpop.f32.mrb[0].mxu0
        %3097 = vdwg.mxu0
        %v3106 = vunpack.c.l.b16 %v3012
        %v3107 = vunpack.c.l.b16 %v3013
        %v3108 = vunpack.c.l.b16 %v3014
        %v3109 = vunpack.c.l.b16 %v3015
        %v3110 = vunpack.c.l.b16 %v3016
        %v3111 = vunpack.c.l.b16 %v3017
        %v3112 = vunpack.c.l.b16 %v3018
        %v3113 = vunpack.c.l.b16 %v3019
        %v3114 = vpack.c.b16 %v3107, %v3106
        %v3115 = vpack.c.b16 %v3109, %v3108
        %v3116 = vpack.c.b16 %v3111, %v3110
        %v3117 = vpack.c.b16 %v3113, %v3112
        %v3123 = vsel %vm3053, %v3010, 0
        %3125 = vmatprep.subr.bf16.mxu0 0
        %3126 = vmatpush1.bf16.msra.mxu0 %v3114
        %3127 = vmatprep.subr.bf16.mxu0 0
        %3128 = vmatpush1.bf16.msra.mxu0 %v3115
        %3129 = vmatprep.subr.bf16.mxu0 0
        %3130 = vmatpush1.bf16.msra.mxu0 %v3116
        %3131 = vmatprep.subr.bf16.mxu0 0
        %3132 = vmatpush1.bf16.msra.mxu0 %v3117
        %3133 = vmatprep.subr.bf16.mxu0 0
        %3134 = vmatpush1.bf16.msra.mxu0 0
        %3135 = vmatprep.subr.bf16.mxu0 0
        %3136 = vmatpush1.bf16.msra.mxu0 0
        %3137 = vmatprep.subr.bf16.mxu0 0
        %3138 = vmatpush1.bf16.msra.mxu0 0
        %3139 = vmatprep.subr.bf16.mxu0 0
        %3140 = vmatpush1.bf16.msra.mxu0 0
        %3141 = vmatprep.subr.bf16.mxu0 0
        %3142 = vmatpush1.bf16.msra.mxu0 0
        %3143 = vmatprep.subr.bf16.mxu0 0
        %3144 = vmatpush1.bf16.msra.mxu0 0
        %3145 = vmatprep.subr.bf16.mxu0 0
        %3146 = vmatpush1.bf16.msra.mxu0 0
        %3147 = vmatprep.subr.bf16.mxu0 0
        %3148 = vmatpush1.bf16.msra.mxu0 0
        %3149 = vmatprep.subr.bf16.mxu0 0
        %3150 = vmatpush1.bf16.msra.mxu0 0
        %3151 = vmatprep.subr.bf16.mxu0 0
        %3152 = vmatpush1.bf16.msra.mxu0 0
        %3153 = vmatprep.subr.bf16.mxu0 0
        %3154 = vmatpush1.bf16.msra.mxu0 0
        %3155 = vmatprep.subr.bf16.mxu0 0
        %3156 = vmatpush1.bf16.msra.mxu0 0
        %3157 = vmatprep.mubr.bf16.mxu0 0
        %3158 = vmatmul.mubr.bf16.gmra.mrb[0].mxu0 %v3123
        %v3159 = vpop.f32.mrb[0].mxu0
        %v3160 = vadd.f32 %v3092, %v3159
        %v3161 = vpop.f32.mrb[0].mxu0
        %v3162 = vpop.f32.mrb[0].mxu0
        %v3163 = vadd.f32 %v3095, %v3162
        %v3164 = vpop.f32.mrb[0].mxu0
        %3165 = vdwg.mxu0
        %v3166 = vpack.c.bf16 %v3009, %v3008
        %s3167 = scalar_lea.vmem %s16, 64
        %v3168 = vld [vmem:[%s3167] sm:$0xf]
        %v3169 = vld [vmem:[%s3167 + $0x4] sm:$0xf]
        %v3170 = vld [vmem:[%s3167 + $0x8] sm:$0xf]
        %v3171 = vld [vmem:[%s3167 + $0xc] sm:$0xf]
        %v3172 = vld [vmem:[%s3167 + $0x10] sm:$0xf]
        %v3173 = vld [vmem:[%s3167 + $0x14] sm:$0xf]
        %v3174 = vld [vmem:[%s3167 + $0x18] sm:$0xf]
        %v3175 = vld [vmem:[%s3167 + $0x1c] sm:$0xf]
        %v3184 = vunpack.c.l.b16 %v3168
        %v3185 = vunpack.c.l.b16 %v3169
        %v3186 = vunpack.c.l.b16 %v3170
        %v3187 = vunpack.c.l.b16 %v3171
        %v3188 = vunpack.c.l.b16 %v3172
        %v3189 = vunpack.c.l.b16 %v3173
        %v3190 = vunpack.c.l.b16 %v3174
        %v3191 = vunpack.c.l.b16 %v3175
        %v3192 = vpack.c.b16 %v3185, %v3184
        %v3193 = vpack.c.b16 %v3187, %v3186
        %v3194 = vpack.c.b16 %v3189, %v3188
        %v3195 = vpack.c.b16 %v3191, %v3190
        %v3201 = vsel %vm3053, %v3166, 0
        %3203 = vmatprep.subr.bf16.mxu0 0
        %3204 = vmatpush1.bf16.msra.mxu0 %v3192
        %3205 = vmatprep.subr.bf16.mxu0 0
        %3206 = vmatpush1.bf16.msra.mxu0 %v3193
        %3207 = vmatprep.subr.bf16.mxu0 0
        %3208 = vmatpush1.bf16.msra.mxu0 %v3194
        %3209 = vmatprep.subr.bf16.mxu0 0
        %3210 = vmatpush1.bf16.msra.mxu0 %v3195
        %3211 = vmatprep.subr.bf16.mxu0 0
        %3212 = vmatpush1.bf16.msra.mxu0 0
        %3213 = vmatprep.subr.bf16.mxu0 0
        %3214 = vmatpush1.bf16.msra.mxu0 0
        %3215 = vmatprep.subr.bf16.mxu0 0
        %3216 = vmatpush1.bf16.msra.mxu0 0
        %3217 = vmatprep.subr.bf16.mxu0 0
        %3218 = vmatpush1.bf16.msra.mxu0 0
        %3219 = vmatprep.subr.bf16.mxu0 0
        %3220 = vmatpush1.bf16.msra.mxu0 0
        %3221 = vmatprep.subr.bf16.mxu0 0
        %3222 = vmatpush1.bf16.msra.mxu0 0
        %3223 = vmatprep.subr.bf16.mxu0 0
        %3224 = vmatpush1.bf16.msra.mxu0 0
        %3225 = vmatprep.subr.bf16.mxu0 0
        %3226 = vmatpush1.bf16.msra.mxu0 0
        %3227 = vmatprep.subr.bf16.mxu0 0
        %3228 = vmatpush1.bf16.msra.mxu0 0
        %3229 = vmatprep.subr.bf16.mxu0 0
        %3230 = vmatpush1.bf16.msra.mxu0 0
        %3231 = vmatprep.subr.bf16.mxu0 0
        %3232 = vmatpush1.bf16.msra.mxu0 0
        %3233 = vmatprep.subr.bf16.mxu0 0
        %3234 = vmatpush1.bf16.msra.mxu0 0
        %3235 = vmatprep.mubr.bf16.mxu0 0
        %3236 = vmatmul.mubr.bf16.gmra.mrb[0].mxu0 %v3201
        %v3237 = vpop.f32.mrb[0].mxu0
        %v3238 = vadd.f32 0.0, %v3237
        %v3239 = vpop.f32.mrb[0].mxu0
        %v3240 = vpop.f32.mrb[0].mxu0
        %v3241 = vadd.f32 0.0, %v3240
        %v3242 = vpop.f32.mrb[0].mxu0
        %3243 = vdwg.mxu0
        %v3244 = vadd.f32 %v3160, %v3238
        %v3245 = vadd.f32 %v3163, %v3241
        %v3247 = vlaneseq
        %v3248 = vshrl.u32 %v3247, 7
        %v3249 = vsub.s32 0, %v3248
        %v3250 = vrot.slane %v745, %v3249
        %v3252 = vadd.f32 %v3244, %v3250
        %v3253 = vadd.f32 %v3245, %v3250
        %v3254 = vmax.f32 %v3252, 0.0
        %v3255 = vmax.f32 %v3253, 0.0
        %v3256 = vadd.f32 %v2707, %v3254
        %v3257 = vadd.f32 %v2708, %v3255
        %3259 = vset.pattern.permute.xlu0 0
        %3260 = vperm.xlu0 %3259, %v889
        %v3261 = vpop.permute.xlu0 %3260
        %3264 = vset.pattern.permute.xlu0 0
        %3265 = vperm.xlu0 %3264, %v890
        %v3266 = vpop.permute.xlu0 %3265
        %v3268 = vmul.f32 %v3256, %v3261
        %v3269 = vmul.f32 %v3257, %v3266
        %v3270 = vsub.f32 1.0, %v889
        %v3271 = vsub.f32 1.0, %v890
        %3273 = vset.pattern.permute.xlu0 0
        %3274 = vperm.xlu0 %3273, %v3270
        %v3275 = vpop.permute.xlu0 %3274
        %3278 = vset.pattern.permute.xlu0 0
        %3279 = vperm.xlu0 %3278, %v3271
        %v3280 = vpop.permute.xlu0 %3279
        %v3282 = vmul.f32 %v3275, 0.0
        %v3283 = vmul.f32 %v3280, 0.0
        %v3284 = vadd.f32 %v3268, %v3282
        %v3285 = vadd.f32 %v3269, %v3283
        %v3286 = vadd.f32 %v3256, %v736
        %v3287 = vadd.f32 %v3257, %v737
        %v3288 = vld [vmem:[%s3 + $0x1] sm:$0x1]
        %v3289 = vlaneseq
        %v3290 = vshrl.u32 %v3289, 7
        %v3291 = vsub.s32 0, %v3290
        %v3292 = vrot.slane %v3288, %v3291
        %v3293 = vadd.f32 %v3286, %v3292
        %v3294 = vadd.f32 %v3287, %v3292
        %v3295 = vmul.f32 %v3293, %v818
        %v3296 = vmul.f32 %v3294, %v818
        %v3297 = vsel %vm762, %v3295, 0.0
        %3298 = vadd.xlane.f32.xlu0 %v3297
        %v3299 = vpop.xlane.xlu0 %3298
        %v3300 = vsel %vm762, %v3296, 0.0
        %3301 = vadd.xlane.f32.xlu0 %v3300
        %v3302 = vpop.xlane.xlu0 %3301
        %v3303 = vadd.f32 %v3299, %v832
        %v3304 = vadd.f32 %v3302, %v832
        %v3305 = vsub.f32 0.0, %v3303
        %v3306 = vsub.f32 0.0, %v3304
        %v3307 = vmul.f32 %v3305, 1.442695
        %v3308 = vpow.pop %v3307
        %v3309 = vmul.f32 %v3306, 1.442695
        %v3310 = vpow.pop %v3309
        %v3311 = vadd.f32 %v3308, 1.0
        %v3312 = vadd.f32 %v3310, 1.0
        %v3313 = vrcp.pop %v3311
        %v3314 = vmul.f32 1.0, %v3313
        %v3315 = vrcp.pop %v3312
        %v3316 = vmul.f32 1.0, %v3315
        %vm3317 = vcmp.lt.f32.partialorder %v883, 1.0
        %vm3318 = vcmp.lt.f32.partialorder %v884, 1.0
        %v3319 = vsel %vm3317, 1, 0
        %v3320 = vsel %vm3318, 1, 0
        %v3321 = vcvt.s32.f32 %v3319
        %v3322 = vcvt.s32.f32 %v3320
        %v3323 = vmul.f32 %v3314, %v3321
        %v3324 = vmul.f32 %v3316, %v3322
        %v3325 = vadd.f32 %v883, %v3323
        %v3326 = vadd.f32 %v884, %v3324
        %vm3327 = vcmp.gt.f32.partialorder %v3325, 0.9
        %vm3328 = vcmp.gt.f32.partialorder %v3326, 0.9
        %v3329 = vsel %vm3327, 1, 0
        %v3330 = vsel %vm3328, 1, 0
        %v3331 = vcvt.s32.f32 %v3329
        %v3332 = vcvt.s32.f32 %v3330
        %v3333 = vmul.f32 %v3331, %v3321
        %v3334 = vmul.f32 %v3332, %v3322
        %vm3335 = vcmp.le.f32.partialorder %v3325, 0.9
        %vm3336 = vcmp.le.f32.partialorder %v3326, 0.9
        %v3337 = vsel %vm3335, 1, 0
        %v3338 = vsel %vm3336, 1, 0
        %v3339 = vcvt.s32.f32 %v3337
        %v3340 = vcvt.s32.f32 %v3338
        %v3341 = vmul.f32 %v3339, %v3321
        %v3342 = vmul.f32 %v3340, %v3322
        %v3343 = vmul.f32 %v3314, %v3341
        %v3344 = vmul.f32 %v3316, %v3342
        %v3345 = vadd.f32 %v883, %v3343
        %v3346 = vadd.f32 %v884, %v3344
        %v3347 = vsub.f32 1.0, %v3345
        %v3348 = vsub.f32 1.0, %v3346
        %v3349 = vmul.f32 %v3333, %v3347
        %v3350 = vmul.f32 %v3334, %v3348
        %v3351 = vadd.f32 %v879, %v3349
        %v3352 = vadd.f32 %v880, %v3350
        %v3353 = vadd.f32 %v887, %v3341
        %v3354 = vadd.f32 %v888, %v3342
        %v3355 = vadd.f32 %v3353, %v3333
        %v3356 = vadd.f32 %v3354, %v3334
        %v3357 = vmul.f32 %v3333, %v3351
        %v3358 = vmul.f32 %v3334, %v3352
        %v3359 = vadd.f32 %v3343, %v3357
        %v3360 = vadd.f32 %v3344, %v3358
        %v3361 = vsel %vm762, %v3293, 0.0
        %3362 = vadd.xlane.f32.xlu0 %v3361
        %v3363 = vpop.xlane.xlu0 %3362
        %v3364 = vsel %vm762, %v3294, 0.0
        %3365 = vadd.xlane.f32.xlu0 %v3364
        %v3366 = vpop.xlane.xlu0 %3365
        %v3367 = vmul.f32 %v3363, %v897
        %v3368 = vmul.f32 %v3366, %v897
        %v3369 = vsub.f32 %v3293, %v3367
        %v3370 = vsub.f32 %v3294, %v3368
        %v3371 = vmul.f32 %v3369, %v3369
        %v3372 = vmul.f32 %v3370, %v3370
        %v3373 = vsel %vm762, %v3371, 0.0
        %3374 = vadd.xlane.f32.xlu0 %v3373
        %v3375 = vpop.xlane.xlu0 %3374
        %v3376 = vsel %vm762, %v3372, 0.0
        %3377 = vadd.xlane.f32.xlu0 %v3376
        %v3378 = vpop.xlane.xlu0 %3377
        %v3379 = vmul.f32 %v3375, %v910
        %v3380 = vmul.f32 %v3378, %v910
        %v3381 = vrsqrt.pop %v3379
        %v3382 = vmul.f32 %v3379, %v3381
        %vm3383 = vcmp.eq.f32.partialorder %v3379, inf
        %v3384 = vsel %vm3383, %v3379, %v3382
        %vm3385 = vcmp.eq.f32.partialorder %v3379, 0.0
        %v3386 = vand.u32 %v3379, 2147483648
        %v3387 = vsel %vm3385, %v3386, %v3384
        %v3388 = vrsqrt.pop %v3380
        %v3389 = vmul.f32 %v3380, %v3388
        %vm3390 = vcmp.eq.f32.partialorder %v3380, inf
        %v3391 = vsel %vm3390, %v3380, %v3389
        %vm3392 = vcmp.eq.f32.partialorder %v3380, 0.0
        %v3393 = vand.u32 %v3380, 2147483648
        %v3394 = vsel %vm3392, %v3393, %v3391
        %v3395 = vadd.f32 %v3387, 1e-06
        %v3396 = vadd.f32 %v3394, 1e-06
        %v3397 = vrcp.pop %v3395
        %v3398 = vrcp.pop %v3396
        %v3399 = vmul.f32 %v935, %v3369
        %v3400 = vmul.f32 %v935, %v3370
        %v3401 = vmul.f32 %v3399, %v3397
        %v3402 = vmul.f32 %v3400, %v3398
        %v3403 = vadd.f32 %v3401, %v945
        %v3404 = vadd.f32 %v3402, %v945
        %v3405 = vpack.c.bf16 %v3404, %v3403
        %v3406 = vld [vmem:[%s8] sm:$0xf]
        %v3407 = vld [vmem:[%s8 + $0x4] sm:$0xf]
        %v3408 = vld [vmem:[%s8 + $0x8] sm:$0xf]
        %v3409 = vld [vmem:[%s8 + $0xc] sm:$0xf]
        %v3414 = vunpack.c.l.b16 %v3406
        %v3415 = vunpack.c.l.b16 %v3407
        %v3416 = vunpack.c.l.b16 %v3408
        %v3417 = vunpack.c.l.b16 %v3409
        %v3418 = vpack.c.b16 %v3415, %v3414
        %v3419 = vpack.c.b16 %v3417, %v3416
        %v3423 = vsel %vm762, %v3405, 0
        %3425 = vmatprep.subr.bf16.mxu0 0
        %3426 = vmatpush1.bf16.msra.mxu0 %v3418
        %3427 = vmatprep.subr.bf16.mxu0 0
        %3428 = vmatpush1.bf16.msra.mxu0 %v3419
        %3429 = vmatprep.subr.bf16.mxu0 0
        %3430 = vmatpush1.bf16.msra.mxu0 0
        %3431 = vmatprep.subr.bf16.mxu0 0
        %3432 = vmatpush1.bf16.msra.mxu0 0
        %3433 = vmatprep.subr.bf16.mxu0 0
        %3434 = vmatpush1.bf16.msra.mxu0 0
        %3435 = vmatprep.subr.bf16.mxu0 0
        %3436 = vmatpush1.bf16.msra.mxu0 0
        %3437 = vmatprep.subr.bf16.mxu0 0
        %3438 = vmatpush1.bf16.msra.mxu0 0
        %3439 = vmatprep.subr.bf16.mxu0 0
        %3440 = vmatpush1.bf16.msra.mxu0 0
        %3441 = vmatprep.subr.bf16.mxu0 0
        %3442 = vmatpush1.bf16.msra.mxu0 0
        %3443 = vmatprep.subr.bf16.mxu0 0
        %3444 = vmatpush1.bf16.msra.mxu0 0
        %3445 = vmatprep.subr.bf16.mxu0 0
        %3446 = vmatpush1.bf16.msra.mxu0 0
        %3447 = vmatprep.subr.bf16.mxu0 0
        %3448 = vmatpush1.bf16.msra.mxu0 0
        %3449 = vmatprep.subr.bf16.mxu0 0
        %3450 = vmatpush1.bf16.msra.mxu0 0
        %3451 = vmatprep.subr.bf16.mxu0 0
        %3452 = vmatpush1.bf16.msra.mxu0 0
        %3453 = vmatprep.subr.bf16.mxu0 0
        %3454 = vmatpush1.bf16.msra.mxu0 0
        %3455 = vmatprep.subr.bf16.mxu0 0
        %3456 = vmatpush1.bf16.msra.mxu0 0
        %3457 = vmatprep.mubr.bf16.mxu0 0
        %3458 = vmatmul.mubr.bf16.gmra.mrb[0].mxu0 %v3423
        %v3459 = vpop.f32.mrb[0].mxu0
        %v3460 = vadd.f32 0.0, %v3459
        %v3461 = vpop.f32.mrb[0].mxu0
        %v3462 = vpop.f32.mrb[0].mxu0
        %v3463 = vadd.f32 0.0, %v3462
        %v3464 = vpop.f32.mrb[0].mxu0
        %3465 = vdwg.mxu0
        %v3466 = vld [vmem:[%s9] sm:$0xf]
        %v3467 = vld [vmem:[%s9 + $0x4] sm:$0xf]
        %v3468 = vld [vmem:[%s9 + $0x8] sm:$0xf]
        %v3469 = vld [vmem:[%s9 + $0xc] sm:$0xf]
        %v3474 = vunpack.c.l.b16 %v3466
        %v3475 = vunpack.c.l.b16 %v3467
        %v3476 = vunpack.c.l.b16 %v3468
        %v3477 = vunpack.c.l.b16 %v3469
        %v3478 = vpack.c.b16 %v3475, %v3474
        %v3479 = vpack.c.b16 %v3477, %v3476
        %3482 = vmatprep.subr.bf16.mxu0 0
        %3483 = vmatpush1.bf16.msra.mxu0 %v3478
        %3484 = vmatprep.subr.bf16.mxu0 0
        %3485 = vmatpush1.bf16.msra.mxu0 %v3479
        %3486 = vmatprep.subr.bf16.mxu0 0
        %3487 = vmatpush1.bf16.msra.mxu0 0
        %3488 = vmatprep.subr.bf16.mxu0 0
        %3489 = vmatpush1.bf16.msra.mxu0 0
        %3490 = vmatprep.subr.bf16.mxu0 0
        %3491 = vmatpush1.bf16.msra.mxu0 0
        %3492 = vmatprep.subr.bf16.mxu0 0
        %3493 = vmatpush1.bf16.msra.mxu0 0
        %3494 = vmatprep.subr.bf16.mxu0 0
        %3495 = vmatpush1.bf16.msra.mxu0 0
        %3496 = vmatprep.subr.bf16.mxu0 0
        %3497 = vmatpush1.bf16.msra.mxu0 0
        %3498 = vmatprep.subr.bf16.mxu0 0
        %3499 = vmatpush1.bf16.msra.mxu0 0
        %3500 = vmatprep.subr.bf16.mxu0 0
        %3501 = vmatpush1.bf16.msra.mxu0 0
        %3502 = vmatprep.subr.bf16.mxu0 0
        %3503 = vmatpush1.bf16.msra.mxu0 0
        %3504 = vmatprep.subr.bf16.mxu0 0
        %3505 = vmatpush1.bf16.msra.mxu0 0
        %3506 = vmatprep.subr.bf16.mxu0 0
        %3507 = vmatpush1.bf16.msra.mxu0 0
        %3508 = vmatprep.subr.bf16.mxu0 0
        %3509 = vmatpush1.bf16.msra.mxu0 0
        %3510 = vmatprep.subr.bf16.mxu0 0
        %3511 = vmatpush1.bf16.msra.mxu0 0
        %3512 = vmatprep.subr.bf16.mxu0 0
        %3513 = vmatpush1.bf16.msra.mxu0 0
        %3514 = vmatprep.mubr.bf16.mxu0 0
        %3515 = vmatmul.mubr.bf16.gmra.mrb[0].mxu0 %v3423
        %v3516 = vpop.f32.mrb[0].mxu0
        %v3517 = vadd.f32 0.0, %v3516
        %v3518 = vpop.f32.mrb[0].mxu0
        %v3519 = vpop.f32.mrb[0].mxu0
        %v3520 = vadd.f32 0.0, %v3519
        %v3521 = vpop.f32.mrb[0].mxu0
        %3522 = vdwg.mxu0
        %v3523 = vld [vmem:[%s10] sm:$0xf]
        %v3524 = vld [vmem:[%s10 + $0x4] sm:$0xf]
        %v3525 = vld [vmem:[%s10 + $0x8] sm:$0xf]
        %v3526 = vld [vmem:[%s10 + $0xc] sm:$0xf]
        %v3531 = vunpack.c.l.b16 %v3523
        %v3532 = vunpack.c.l.b16 %v3524
        %v3533 = vunpack.c.l.b16 %v3525
        %v3534 = vunpack.c.l.b16 %v3526
        %v3535 = vpack.c.b16 %v3532, %v3531
        %v3536 = vpack.c.b16 %v3534, %v3533
        %3539 = vmatprep.subr.bf16.mxu0 0
        %3540 = vmatpush1.bf16.msra.mxu0 %v3535
        %3541 = vmatprep.subr.bf16.mxu0 0
        %3542 = vmatpush1.bf16.msra.mxu0 %v3536
        %3543 = vmatprep.subr.bf16.mxu0 0
        %3544 = vmatpush1.bf16.msra.mxu0 0
        %3545 = vmatprep.subr.bf16.mxu0 0
        %3546 = vmatpush1.bf16.msra.mxu0 0
        %3547 = vmatprep.subr.bf16.mxu0 0
        %3548 = vmatpush1.bf16.msra.mxu0 0
        %3549 = vmatprep.subr.bf16.mxu0 0
        %3550 = vmatpush1.bf16.msra.mxu0 0
        %3551 = vmatprep.subr.bf16.mxu0 0
        %3552 = vmatpush1.bf16.msra.mxu0 0
        %3553 = vmatprep.subr.bf16.mxu0 0
        %3554 = vmatpush1.bf16.msra.mxu0 0
        %3555 = vmatprep.subr.bf16.mxu0 0
        %3556 = vmatpush1.bf16.msra.mxu0 0
        %3557 = vmatprep.subr.bf16.mxu0 0
        %3558 = vmatpush1.bf16.msra.mxu0 0
        %3559 = vmatprep.subr.bf16.mxu0 0
        %3560 = vmatpush1.bf16.msra.mxu0 0
        %3561 = vmatprep.subr.bf16.mxu0 0
        %3562 = vmatpush1.bf16.msra.mxu0 0
        %3563 = vmatprep.subr.bf16.mxu0 0
        %3564 = vmatpush1.bf16.msra.mxu0 0
        %3565 = vmatprep.subr.bf16.mxu0 0
        %3566 = vmatpush1.bf16.msra.mxu0 0
        %3567 = vmatprep.subr.bf16.mxu0 0
        %3568 = vmatpush1.bf16.msra.mxu0 0
        %3569 = vmatprep.subr.bf16.mxu0 0
        %3570 = vmatpush1.bf16.msra.mxu0 0
        %3571 = vmatprep.mubr.bf16.mxu0 0
        %3572 = vmatmul.mubr.bf16.gmra.mrb[0].mxu0 %v3423
        %v3573 = vpop.f32.mrb[0].mxu0
        %v3574 = vadd.f32 0.0, %v3573
        %v3575 = vpop.f32.mrb[0].mxu0
        %v3576 = vpop.f32.mrb[0].mxu0
        %v3577 = vadd.f32 0.0, %v3576
        %v3578 = vpop.f32.mrb[0].mxu0
        %3579 = vdwg.mxu0
        %v3580 = vpack.c.bf16 %v3460, %v3460
        %v3581 = vpack.c.bf16 %v3463, %v3463
        %v3582 = vpack.c.bf16 %v3517, %v3517
        %v3583 = vpack.c.bf16 %v3520, %v3520
        %v3584 = vpack.c.bf16 %v3574, %v3574
        %v3585 = vpack.c.bf16 %v3577, %v3577
        %v3587 = vsel %vm1130, %v3580, 0
        %v3590 = vsel %vm1130, %v3582, 0
        %3592 = vmatprep.subr.bf16.mxu0 0
        %3593 = vmatpush1.bf16.xpose.msra.mxu0 %v3590
        %3594 = vmatprep.subr.bf16.mxu0 0
        %3595 = vmatpush1.bf16.xpose.msra.mxu0 0
        %3596 = vmatprep.subr.bf16.mxu0 0
        %3597 = vmatpush1.bf16.xpose.msra.mxu0 0
        %3598 = vmatprep.subr.bf16.mxu0 0
        %3599 = vmatpush1.bf16.xpose.msra.mxu0 0
        %3600 = vmatprep.subr.bf16.mxu0 0
        %3601 = vmatpush1.bf16.xpose.msra.mxu0 0
        %3602 = vmatprep.subr.bf16.mxu0 0
        %3603 = vmatpush1.bf16.xpose.msra.mxu0 0
        %3604 = vmatprep.subr.bf16.mxu0 0
        %3605 = vmatpush1.bf16.xpose.msra.mxu0 0
        %3606 = vmatprep.subr.bf16.mxu0 0
        %3607 = vmatpush1.bf16.xpose.msra.mxu0 0
        %3608 = vmatprep.subr.bf16.mxu0 0
        %3609 = vmatpush1.bf16.xpose.msra.mxu0 0
        %3610 = vmatprep.subr.bf16.mxu0 0
        %3611 = vmatpush1.bf16.xpose.msra.mxu0 0
        %3612 = vmatprep.subr.bf16.mxu0 0
        %3613 = vmatpush1.bf16.xpose.msra.mxu0 0
        %3614 = vmatprep.subr.bf16.mxu0 0
        %3615 = vmatpush1.bf16.xpose.msra.mxu0 0
        %3616 = vmatprep.subr.bf16.mxu0 0
        %3617 = vmatpush1.bf16.xpose.msra.mxu0 0
        %3618 = vmatprep.subr.bf16.mxu0 0
        %3619 = vmatpush1.bf16.xpose.msra.mxu0 0
        %3620 = vmatprep.subr.bf16.mxu0 0
        %3621 = vmatpush1.bf16.xpose.msra.mxu0 0
        %3622 = vmatprep.subr.bf16.mxu0 0
        %3623 = vmatpush1.bf16.xpose.msra.mxu0 0
        %3624 = vmatprep.mubr.bf16.mxu0 0
        %3625 = vmatmul.mubr.bf16.gmra.mrb[0].mxu0 %v3587
        %v3626 = vpop.f32.mrb[0].mxu0
        %v3627 = vadd.f32 0.0, %v3626
        %v3628 = vpop.f32.mrb[0].mxu0
        %v3629 = vpop.f32.mrb[0].mxu0
        %v3630 = vpop.f32.mrb[0].mxu0
        %3631 = vdwg.mxu0
        %v3633 = vsel %vm1130, %v3581, 0
        %v3636 = vsel %vm1130, %v3583, 0
        %3638 = vmatprep.subr.bf16.mxu0 0
        %3639 = vmatpush1.bf16.xpose.msra.mxu0 %v3636
        %3640 = vmatprep.subr.bf16.mxu0 0
        %3641 = vmatpush1.bf16.xpose.msra.mxu0 0
        %3642 = vmatprep.subr.bf16.mxu0 0
        %3643 = vmatpush1.bf16.xpose.msra.mxu0 0
        %3644 = vmatprep.subr.bf16.mxu0 0
        %3645 = vmatpush1.bf16.xpose.msra.mxu0 0
        %3646 = vmatprep.subr.bf16.mxu0 0
        %3647 = vmatpush1.bf16.xpose.msra.mxu0 0
        %3648 = vmatprep.subr.bf16.mxu0 0
        %3649 = vmatpush1.bf16.xpose.msra.mxu0 0
        %3650 = vmatprep.subr.bf16.mxu0 0
        %3651 = vmatpush1.bf16.xpose.msra.mxu0 0
        %3652 = vmatprep.subr.bf16.mxu0 0
        %3653 = vmatpush1.bf16.xpose.msra.mxu0 0
        %3654 = vmatprep.subr.bf16.mxu0 0
        %3655 = vmatpush1.bf16.xpose.msra.mxu0 0
        %3656 = vmatprep.subr.bf16.mxu0 0
        %3657 = vmatpush1.bf16.xpose.msra.mxu0 0
        %3658 = vmatprep.subr.bf16.mxu0 0
        %3659 = vmatpush1.bf16.xpose.msra.mxu0 0
        %3660 = vmatprep.subr.bf16.mxu0 0
        %3661 = vmatpush1.bf16.xpose.msra.mxu0 0
        %3662 = vmatprep.subr.bf16.mxu0 0
        %3663 = vmatpush1.bf16.xpose.msra.mxu0 0
        %3664 = vmatprep.subr.bf16.mxu0 0
        %3665 = vmatpush1.bf16.xpose.msra.mxu0 0
        %3666 = vmatprep.subr.bf16.mxu0 0
        %3667 = vmatpush1.bf16.xpose.msra.mxu0 0
        %3668 = vmatprep.subr.bf16.mxu0 0
        %3669 = vmatpush1.bf16.xpose.msra.mxu0 0
        %3670 = vmatprep.mubr.bf16.mxu0 0
        %3671 = vmatmul.mubr.bf16.gmra.mrb[0].mxu0 %v3633
        %v3672 = vpop.f32.mrb[0].mxu0
        %v3673 = vadd.f32 0.0, %v3672
        %v3674 = vpop.f32.mrb[0].mxu0
        %v3675 = vpop.f32.mrb[0].mxu0
        %v3676 = vpop.f32.mrb[0].mxu0
        %3677 = vdwg.mxu0
        %v3678 = vsel %vm1130, %v3627, -inf
        %3679 = vmax.xlane.f32.xlu0 %v3678
        %v3680 = vpop.xlane.xlu0 %3679
        %v3681 = vsel %vm1130, %v3673, -inf
        %3682 = vmax.xlane.f32.xlu0 %v3681
        %v3683 = vpop.xlane.xlu0 %3682
        %v3684 = vsub.f32 %v3627, %v3680
        %v3685 = vsub.f32 %v3673, %v3683
        %v3686 = vmul.f32 %v3684, 1.442695
        %v3687 = vpow.pop %v3686
        %v3688 = vmul.f32 %v3685, 1.442695
        %v3689 = vpow.pop %v3688
        %v3690 = vsel %vm1130, %v3687, 0.0
        %3691 = vadd.xlane.f32.xlu0 %v3690
        %v3692 = vpop.xlane.xlu0 %3691
        %v3693 = vsel %vm1130, %v3689, 0.0
        %3694 = vadd.xlane.f32.xlu0 %v3693
        %v3695 = vpop.xlane.xlu0 %3694
        %v3696 = vrcp.pop %v3692
        %v3697 = vrcp.pop %v3695
        %v3698 = vmul.f32 %v3687, %v3696
        %v3699 = vmul.f32 %v3689, %v3697
        %v3700 = vpack.c.bf16 %v3698, %v3698
        %v3701 = vpack.c.bf16 %v3699, %v3699
        %v3703 = vsel %vm1130, %v3700, 0
        %v3706 = vsel %vm1250, %v3584, 0
        %3708 = vmatprep.subr.bf16.mxu0 0
        %3709 = vmatpush1.bf16.msra.mxu0 %v3706
        %3710 = vmatprep.subr.bf16.mxu0 0
        %3711 = vmatpush1.bf16.msra.mxu0 0
        %3712 = vmatprep.subr.bf16.mxu0 0
        %3713 = vmatpush1.bf16.msra.mxu0 0
        %3714 = vmatprep.subr.bf16.mxu0 0
        %3715 = vmatpush1.bf16.msra.mxu0 0
        %3716 = vmatprep.subr.bf16.mxu0 0
        %3717 = vmatpush1.bf16.msra.mxu0 0
        %3718 = vmatprep.subr.bf16.mxu0 0
        %3719 = vmatpush1.bf16.msra.mxu0 0
        %3720 = vmatprep.subr.bf16.mxu0 0
        %3721 = vmatpush1.bf16.msra.mxu0 0
        %3722 = vmatprep.subr.bf16.mxu0 0
        %3723 = vmatpush1.bf16.msra.mxu0 0
        %3724 = vmatprep.subr.bf16.mxu0 0
        %3725 = vmatpush1.bf16.msra.mxu0 0
        %3726 = vmatprep.subr.bf16.mxu0 0
        %3727 = vmatpush1.bf16.msra.mxu0 0
        %3728 = vmatprep.subr.bf16.mxu0 0
        %3729 = vmatpush1.bf16.msra.mxu0 0
        %3730 = vmatprep.subr.bf16.mxu0 0
        %3731 = vmatpush1.bf16.msra.mxu0 0
        %3732 = vmatprep.subr.bf16.mxu0 0
        %3733 = vmatpush1.bf16.msra.mxu0 0
        %3734 = vmatprep.subr.bf16.mxu0 0
        %3735 = vmatpush1.bf16.msra.mxu0 0
        %3736 = vmatprep.subr.bf16.mxu0 0
        %3737 = vmatpush1.bf16.msra.mxu0 0
        %3738 = vmatprep.subr.bf16.mxu0 0
        %3739 = vmatpush1.bf16.msra.mxu0 0
        %3740 = vmatprep.mubr.bf16.mxu0 0
        %3741 = vmatmul.mubr.bf16.gmra.mrb[0].mxu0 %v3703
        %v3742 = vpop.f32.mrb[0].mxu0
        %v3743 = vadd.f32 0.0, %v3742
        %v3744 = vpop.f32.mrb[0].mxu0
        %v3745 = vpop.f32.mrb[0].mxu0
        %v3746 = vpop.f32.mrb[0].mxu0
        %3747 = vdwg.mxu0
        %v3749 = vsel %vm1130, %v3701, 0
        %v3752 = vsel %vm1250, %v3585, 0
        %3754 = vmatprep.subr.bf16.mxu0 0
        %3755 = vmatpush1.bf16.msra.mxu0 %v3752
        %3756 = vmatprep.subr.bf16.mxu0 0
        %3757 = vmatpush1.bf16.msra.mxu0 0
        %3758 = vmatprep.subr.bf16.mxu0 0
        %3759 = vmatpush1.bf16.msra.mxu0 0
        %3760 = vmatprep.subr.bf16.mxu0 0
        %3761 = vmatpush1.bf16.msra.mxu0 0
        %3762 = vmatprep.subr.bf16.mxu0 0
        %3763 = vmatpush1.bf16.msra.mxu0 0
        %3764 = vmatprep.subr.bf16.mxu0 0
        %3765 = vmatpush1.bf16.msra.mxu0 0
        %3766 = vmatprep.subr.bf16.mxu0 0
        %3767 = vmatpush1.bf16.msra.mxu0 0
        %3768 = vmatprep.subr.bf16.mxu0 0
        %3769 = vmatpush1.bf16.msra.mxu0 0
        %3770 = vmatprep.subr.bf16.mxu0 0
        %3771 = vmatpush1.bf16.msra.mxu0 0
        %3772 = vmatprep.subr.bf16.mxu0 0
        %3773 = vmatpush1.bf16.msra.mxu0 0
        %3774 = vmatprep.subr.bf16.mxu0 0
        %3775 = vmatpush1.bf16.msra.mxu0 0
        %3776 = vmatprep.subr.bf16.mxu0 0
        %3777 = vmatpush1.bf16.msra.mxu0 0
        %3778 = vmatprep.subr.bf16.mxu0 0
        %3779 = vmatpush1.bf16.msra.mxu0 0
        %3780 = vmatprep.subr.bf16.mxu0 0
        %3781 = vmatpush1.bf16.msra.mxu0 0
        %3782 = vmatprep.subr.bf16.mxu0 0
        %3783 = vmatpush1.bf16.msra.mxu0 0
        %3784 = vmatprep.subr.bf16.mxu0 0
        %3785 = vmatpush1.bf16.msra.mxu0 0
        %3786 = vmatprep.mubr.bf16.mxu0 0
        %3787 = vmatmul.mubr.bf16.gmra.mrb[0].mxu0 %v3749
        %v3788 = vpop.f32.mrb[0].mxu0
        %v3789 = vadd.f32 0.0, %v3788
        %v3790 = vpop.f32.mrb[0].mxu0
        %v3791 = vpop.f32.mrb[0].mxu0
        %v3792 = vpop.f32.mrb[0].mxu0
        %3793 = vdwg.mxu0
        %v3794 = vpack.c.bf16 %v3789, %v3743
        %v3795 = vld [vmem:[%s11] sm:$0xf]
        %v3796 = vld [vmem:[%s1342] sm:$0xf]
        %v3797 = vld [vmem:[%s1342 + $0x4] sm:$0xf]
        %v3798 = vld [vmem:[%s1342 + $0x8] sm:$0xf]
        %v3799 = vld [vmem:[%s1342 + $0xc] sm:$0xf]
        %v3804 = vunpack.c.l.b16 %v3796
        %v3805 = vunpack.c.l.b16 %v3797
        %v3806 = vunpack.c.l.b16 %v3798
        %v3807 = vunpack.c.l.b16 %v3799
        %v3808 = vpack.c.b16 %v3805, %v3804
        %v3809 = vpack.c.b16 %v3807, %v3806
        %3812 = vmatprep.subr.bf16.mxu0 0
        %3813 = vmatpush1.bf16.msra.mxu0 %v3808
        %3814 = vmatprep.subr.bf16.mxu0 0
        %3815 = vmatpush1.bf16.msra.mxu0 %v3809
        %3816 = vmatprep.subr.bf16.mxu0 0
        %3817 = vmatpush1.bf16.msra.mxu0 0
        %3818 = vmatprep.subr.bf16.mxu0 0
        %3819 = vmatpush1.bf16.msra.mxu0 0
        %3820 = vmatprep.subr.bf16.mxu0 0
        %3821 = vmatpush1.bf16.msra.mxu0 0
        %3822 = vmatprep.subr.bf16.mxu0 0
        %3823 = vmatpush1.bf16.msra.mxu0 0
        %3824 = vmatprep.subr.bf16.mxu0 0
        %3825 = vmatpush1.bf16.msra.mxu0 0
        %3826 = vmatprep.subr.bf16.mxu0 0
        %3827 = vmatpush1.bf16.msra.mxu0 0
        %3828 = vmatprep.subr.bf16.mxu0 0
        %3829 = vmatpush1.bf16.msra.mxu0 0
        %3830 = vmatprep.subr.bf16.mxu0 0
        %3831 = vmatpush1.bf16.msra.mxu0 0
        %3832 = vmatprep.subr.bf16.mxu0 0
        %3833 = vmatpush1.bf16.msra.mxu0 0
        %3834 = vmatprep.subr.bf16.mxu0 0
        %3835 = vmatpush1.bf16.msra.mxu0 0
        %3836 = vmatprep.subr.bf16.mxu0 0
        %3837 = vmatpush1.bf16.msra.mxu0 0
        %3838 = vmatprep.subr.bf16.mxu0 0
        %3839 = vmatpush1.bf16.msra.mxu0 0
        %3840 = vmatprep.subr.bf16.mxu0 0
        %3841 = vmatpush1.bf16.msra.mxu0 0
        %3842 = vmatprep.subr.bf16.mxu0 0
        %3843 = vmatpush1.bf16.msra.mxu0 0
        %3844 = vmatprep.mubr.bf16.mxu0 0
        %3845 = vmatmul.mubr.bf16.gmra.mrb[0].mxu0 %v3423
        %v3846 = vpop.f32.mrb[0].mxu0
        %v3847 = vadd.f32 0.0, %v3846
        %v3848 = vpop.f32.mrb[0].mxu0
        %v3849 = vpop.f32.mrb[0].mxu0
        %v3850 = vadd.f32 0.0, %v3849
        %v3851 = vpop.f32.mrb[0].mxu0
        %3852 = vdwg.mxu0
        %v3853 = vld [vmem:[%s1400] sm:$0xf]
        %v3854 = vld [vmem:[%s1400 + $0x4] sm:$0xf]
        %v3855 = vld [vmem:[%s1400 + $0x8] sm:$0xf]
        %v3856 = vld [vmem:[%s1400 + $0xc] sm:$0xf]
        %v3861 = vunpack.c.l.b16 %v3853
        %v3862 = vunpack.c.l.b16 %v3854
        %v3863 = vunpack.c.l.b16 %v3855
        %v3864 = vunpack.c.l.b16 %v3856
        %v3865 = vpack.c.b16 %v3862, %v3861
        %v3866 = vpack.c.b16 %v3864, %v3863
        %3869 = vmatprep.subr.bf16.mxu0 0
        %3870 = vmatpush1.bf16.msra.mxu0 %v3865
        %3871 = vmatprep.subr.bf16.mxu0 0
        %3872 = vmatpush1.bf16.msra.mxu0 %v3866
        %3873 = vmatprep.subr.bf16.mxu0 0
        %3874 = vmatpush1.bf16.msra.mxu0 0
        %3875 = vmatprep.subr.bf16.mxu0 0
        %3876 = vmatpush1.bf16.msra.mxu0 0
        %3877 = vmatprep.subr.bf16.mxu0 0
        %3878 = vmatpush1.bf16.msra.mxu0 0
        %3879 = vmatprep.subr.bf16.mxu0 0
        %3880 = vmatpush1.bf16.msra.mxu0 0
        %3881 = vmatprep.subr.bf16.mxu0 0
        %3882 = vmatpush1.bf16.msra.mxu0 0
        %3883 = vmatprep.subr.bf16.mxu0 0
        %3884 = vmatpush1.bf16.msra.mxu0 0
        %3885 = vmatprep.subr.bf16.mxu0 0
        %3886 = vmatpush1.bf16.msra.mxu0 0
        %3887 = vmatprep.subr.bf16.mxu0 0
        %3888 = vmatpush1.bf16.msra.mxu0 0
        %3889 = vmatprep.subr.bf16.mxu0 0
        %3890 = vmatpush1.bf16.msra.mxu0 0
        %3891 = vmatprep.subr.bf16.mxu0 0
        %3892 = vmatpush1.bf16.msra.mxu0 0
        %3893 = vmatprep.subr.bf16.mxu0 0
        %3894 = vmatpush1.bf16.msra.mxu0 0
        %3895 = vmatprep.subr.bf16.mxu0 0
        %3896 = vmatpush1.bf16.msra.mxu0 0
        %3897 = vmatprep.subr.bf16.mxu0 0
        %3898 = vmatpush1.bf16.msra.mxu0 0
        %3899 = vmatprep.subr.bf16.mxu0 0
        %3900 = vmatpush1.bf16.msra.mxu0 0
        %3901 = vmatprep.mubr.bf16.mxu0 0
        %3902 = vmatmul.mubr.bf16.gmra.mrb[0].mxu0 %v3423
        %v3903 = vpop.f32.mrb[0].mxu0
        %v3904 = vadd.f32 0.0, %v3903
        %v3905 = vpop.f32.mrb[0].mxu0
        %v3906 = vpop.f32.mrb[0].mxu0
        %v3907 = vadd.f32 0.0, %v3906
        %v3908 = vpop.f32.mrb[0].mxu0
        %3909 = vdwg.mxu0
        %v3910 = vld [vmem:[%s1458] sm:$0xf]
        %v3911 = vld [vmem:[%s1458 + $0x4] sm:$0xf]
        %v3912 = vld [vmem:[%s1458 + $0x8] sm:$0xf]
        %v3913 = vld [vmem:[%s1458 + $0xc] sm:$0xf]
        %v3918 = vunpack.c.l.b16 %v3910
        %v3919 = vunpack.c.l.b16 %v3911
        %v3920 = vunpack.c.l.b16 %v3912
        %v3921 = vunpack.c.l.b16 %v3913
        %v3922 = vpack.c.b16 %v3919, %v3918
        %v3923 = vpack.c.b16 %v3921, %v3920
        %3926 = vmatprep.subr.bf16.mxu0 0
        %3927 = vmatpush1.bf16.msra.mxu0 %v3922
        %3928 = vmatprep.subr.bf16.mxu0 0
        %3929 = vmatpush1.bf16.msra.mxu0 %v3923
        %3930 = vmatprep.subr.bf16.mxu0 0
        %3931 = vmatpush1.bf16.msra.mxu0 0
        %3932 = vmatprep.subr.bf16.mxu0 0
        %3933 = vmatpush1.bf16.msra.mxu0 0
        %3934 = vmatprep.subr.bf16.mxu0 0
        %3935 = vmatpush1.bf16.msra.mxu0 0
        %3936 = vmatprep.subr.bf16.mxu0 0
        %3937 = vmatpush1.bf16.msra.mxu0 0
        %3938 = vmatprep.subr.bf16.mxu0 0
        %3939 = vmatpush1.bf16.msra.mxu0 0
        %3940 = vmatprep.subr.bf16.mxu0 0
        %3941 = vmatpush1.bf16.msra.mxu0 0
        %3942 = vmatprep.subr.bf16.mxu0 0
        %3943 = vmatpush1.bf16.msra.mxu0 0
        %3944 = vmatprep.subr.bf16.mxu0 0
        %3945 = vmatpush1.bf16.msra.mxu0 0
        %3946 = vmatprep.subr.bf16.mxu0 0
        %3947 = vmatpush1.bf16.msra.mxu0 0
        %3948 = vmatprep.subr.bf16.mxu0 0
        %3949 = vmatpush1.bf16.msra.mxu0 0
        %3950 = vmatprep.subr.bf16.mxu0 0
        %3951 = vmatpush1.bf16.msra.mxu0 0
        %3952 = vmatprep.subr.bf16.mxu0 0
        %3953 = vmatpush1.bf16.msra.mxu0 0
        %3954 = vmatprep.subr.bf16.mxu0 0
        %3955 = vmatpush1.bf16.msra.mxu0 0
        %3956 = vmatprep.subr.bf16.mxu0 0
        %3957 = vmatpush1.bf16.msra.mxu0 0
        %3958 = vmatprep.mubr.bf16.mxu0 0
        %3959 = vmatmul.mubr.bf16.gmra.mrb[0].mxu0 %v3423
        %v3960 = vpop.f32.mrb[0].mxu0
        %v3961 = vadd.f32 0.0, %v3960
        %v3962 = vpop.f32.mrb[0].mxu0
        %v3963 = vpop.f32.mrb[0].mxu0
        %v3964 = vadd.f32 0.0, %v3963
        %v3965 = vpop.f32.mrb[0].mxu0
        %3966 = vdwg.mxu0
        %v3967 = vpack.c.bf16 %v3847, %v3847
        %v3968 = vpack.c.bf16 %v3850, %v3850
        %v3969 = vpack.c.bf16 %v3904, %v3904
        %v3970 = vpack.c.bf16 %v3907, %v3907
        %v3971 = vpack.c.bf16 %v3961, %v3961
        %v3972 = vpack.c.bf16 %v3964, %v3964
        %v3974 = vsel %vm1130, %v3967, 0
        %v3977 = vsel %vm1130, %v3969, 0
        %3979 = vmatprep.subr.bf16.mxu0 0
        %3980 = vmatpush1.bf16.xpose.msra.mxu0 %v3977
        %3981 = vmatprep.subr.bf16.mxu0 0
        %3982 = vmatpush1.bf16.xpose.msra.mxu0 0
        %3983 = vmatprep.subr.bf16.mxu0 0
        %3984 = vmatpush1.bf16.xpose.msra.mxu0 0
        %3985 = vmatprep.subr.bf16.mxu0 0
        %3986 = vmatpush1.bf16.xpose.msra.mxu0 0
        %3987 = vmatprep.subr.bf16.mxu0 0
        %3988 = vmatpush1.bf16.xpose.msra.mxu0 0
        %3989 = vmatprep.subr.bf16.mxu0 0
        %3990 = vmatpush1.bf16.xpose.msra.mxu0 0
        %3991 = vmatprep.subr.bf16.mxu0 0
        %3992 = vmatpush1.bf16.xpose.msra.mxu0 0
        %3993 = vmatprep.subr.bf16.mxu0 0
        %3994 = vmatpush1.bf16.xpose.msra.mxu0 0
        %3995 = vmatprep.subr.bf16.mxu0 0
        %3996 = vmatpush1.bf16.xpose.msra.mxu0 0
        %3997 = vmatprep.subr.bf16.mxu0 0
        %3998 = vmatpush1.bf16.xpose.msra.mxu0 0
        %3999 = vmatprep.subr.bf16.mxu0 0
        %4000 = vmatpush1.bf16.xpose.msra.mxu0 0
        %4001 = vmatprep.subr.bf16.mxu0 0
        %4002 = vmatpush1.bf16.xpose.msra.mxu0 0
        %4003 = vmatprep.subr.bf16.mxu0 0
        %4004 = vmatpush1.bf16.xpose.msra.mxu0 0
        %4005 = vmatprep.subr.bf16.mxu0 0
        %4006 = vmatpush1.bf16.xpose.msra.mxu0 0
        %4007 = vmatprep.subr.bf16.mxu0 0
        %4008 = vmatpush1.bf16.xpose.msra.mxu0 0
        %4009 = vmatprep.subr.bf16.mxu0 0
        %4010 = vmatpush1.bf16.xpose.msra.mxu0 0
        %4011 = vmatprep.mubr.bf16.mxu0 0
        %4012 = vmatmul.mubr.bf16.gmra.mrb[0].mxu0 %v3974
        %v4013 = vpop.f32.mrb[0].mxu0
        %v4014 = vadd.f32 0.0, %v4013
        %v4015 = vpop.f32.mrb[0].mxu0
        %v4016 = vpop.f32.mrb[0].mxu0
        %v4017 = vpop.f32.mrb[0].mxu0
        %4018 = vdwg.mxu0
        %v4020 = vsel %vm1130, %v3968, 0
        %v4023 = vsel %vm1130, %v3970, 0
        %4025 = vmatprep.subr.bf16.mxu0 0
        %4026 = vmatpush1.bf16.xpose.msra.mxu0 %v4023
        %4027 = vmatprep.subr.bf16.mxu0 0
        %4028 = vmatpush1.bf16.xpose.msra.mxu0 0
        %4029 = vmatprep.subr.bf16.mxu0 0
        %4030 = vmatpush1.bf16.xpose.msra.mxu0 0
        %4031 = vmatprep.subr.bf16.mxu0 0
        %4032 = vmatpush1.bf16.xpose.msra.mxu0 0
        %4033 = vmatprep.subr.bf16.mxu0 0
        %4034 = vmatpush1.bf16.xpose.msra.mxu0 0
        %4035 = vmatprep.subr.bf16.mxu0 0
        %4036 = vmatpush1.bf16.xpose.msra.mxu0 0
        %4037 = vmatprep.subr.bf16.mxu0 0
        %4038 = vmatpush1.bf16.xpose.msra.mxu0 0
        %4039 = vmatprep.subr.bf16.mxu0 0
        %4040 = vmatpush1.bf16.xpose.msra.mxu0 0
        %4041 = vmatprep.subr.bf16.mxu0 0
        %4042 = vmatpush1.bf16.xpose.msra.mxu0 0
        %4043 = vmatprep.subr.bf16.mxu0 0
        %4044 = vmatpush1.bf16.xpose.msra.mxu0 0
        %4045 = vmatprep.subr.bf16.mxu0 0
        %4046 = vmatpush1.bf16.xpose.msra.mxu0 0
        %4047 = vmatprep.subr.bf16.mxu0 0
        %4048 = vmatpush1.bf16.xpose.msra.mxu0 0
        %4049 = vmatprep.subr.bf16.mxu0 0
        %4050 = vmatpush1.bf16.xpose.msra.mxu0 0
        %4051 = vmatprep.subr.bf16.mxu0 0
        %4052 = vmatpush1.bf16.xpose.msra.mxu0 0
        %4053 = vmatprep.subr.bf16.mxu0 0
        %4054 = vmatpush1.bf16.xpose.msra.mxu0 0
        %4055 = vmatprep.subr.bf16.mxu0 0
        %4056 = vmatpush1.bf16.xpose.msra.mxu0 0
        %4057 = vmatprep.mubr.bf16.mxu0 0
        %4058 = vmatmul.mubr.bf16.gmra.mrb[0].mxu0 %v4020
        %v4059 = vpop.f32.mrb[0].mxu0
        %v4060 = vadd.f32 0.0, %v4059
        %v4061 = vpop.f32.mrb[0].mxu0
        %v4062 = vpop.f32.mrb[0].mxu0
        %v4063 = vpop.f32.mrb[0].mxu0
        %4064 = vdwg.mxu0
        %v4065 = vsel %vm1130, %v4014, -inf
        %4066 = vmax.xlane.f32.xlu0 %v4065
        %v4067 = vpop.xlane.xlu0 %4066
        %v4068 = vsel %vm1130, %v4060, -inf
        %4069 = vmax.xlane.f32.xlu0 %v4068
        %v4070 = vpop.xlane.xlu0 %4069
        %v4071 = vsub.f32 %v4014, %v4067
        %v4072 = vsub.f32 %v4060, %v4070
        %v4073 = vmul.f32 %v4071, 1.442695
        %v4074 = vpow.pop %v4073
        %v4075 = vmul.f32 %v4072, 1.442695
        %v4076 = vpow.pop %v4075
        %v4077 = vsel %vm1130, %v4074, 0.0
        %4078 = vadd.xlane.f32.xlu0 %v4077
        %v4079 = vpop.xlane.xlu0 %4078
        %v4080 = vsel %vm1130, %v4076, 0.0
        %4081 = vadd.xlane.f32.xlu0 %v4080
        %v4082 = vpop.xlane.xlu0 %4081
        %v4083 = vrcp.pop %v4079
        %v4084 = vrcp.pop %v4082
        %v4085 = vmul.f32 %v4074, %v4083
        %v4086 = vmul.f32 %v4076, %v4084
        %v4087 = vpack.c.bf16 %v4085, %v4085
        %v4088 = vpack.c.bf16 %v4086, %v4086
        %v4090 = vsel %vm1130, %v4087, 0
        %v4093 = vsel %vm1250, %v3971, 0
        %4095 = vmatprep.subr.bf16.mxu0 0
        %4096 = vmatpush1.bf16.msra.mxu0 %v4093
        %4097 = vmatprep.subr.bf16.mxu0 0
        %4098 = vmatpush1.bf16.msra.mxu0 0
        %4099 = vmatprep.subr.bf16.mxu0 0
        %4100 = vmatpush1.bf16.msra.mxu0 0
        %4101 = vmatprep.subr.bf16.mxu0 0
        %4102 = vmatpush1.bf16.msra.mxu0 0
        %4103 = vmatprep.subr.bf16.mxu0 0
        %4104 = vmatpush1.bf16.msra.mxu0 0
        %4105 = vmatprep.subr.bf16.mxu0 0
        %4106 = vmatpush1.bf16.msra.mxu0 0
        %4107 = vmatprep.subr.bf16.mxu0 0
        %4108 = vmatpush1.bf16.msra.mxu0 0
        %4109 = vmatprep.subr.bf16.mxu0 0
        %4110 = vmatpush1.bf16.msra.mxu0 0
        %4111 = vmatprep.subr.bf16.mxu0 0
        %4112 = vmatpush1.bf16.msra.mxu0 0
        %4113 = vmatprep.subr.bf16.mxu0 0
        %4114 = vmatpush1.bf16.msra.mxu0 0
        %4115 = vmatprep.subr.bf16.mxu0 0
        %4116 = vmatpush1.bf16.msra.mxu0 0
        %4117 = vmatprep.subr.bf16.mxu0 0
        %4118 = vmatpush1.bf16.msra.mxu0 0
        %4119 = vmatprep.subr.bf16.mxu0 0
        %4120 = vmatpush1.bf16.msra.mxu0 0
        %4121 = vmatprep.subr.bf16.mxu0 0
        %4122 = vmatpush1.bf16.msra.mxu0 0
        %4123 = vmatprep.subr.bf16.mxu0 0
        %4124 = vmatpush1.bf16.msra.mxu0 0
        %4125 = vmatprep.subr.bf16.mxu0 0
        %4126 = vmatpush1.bf16.msra.mxu0 0
        %4127 = vmatprep.mubr.bf16.mxu0 0
        %4128 = vmatmul.mubr.bf16.gmra.mrb[0].mxu0 %v4090
        %v4129 = vpop.f32.mrb[0].mxu0
        %v4130 = vadd.f32 0.0, %v4129
        %v4131 = vpop.f32.mrb[0].mxu0
        %v4132 = vpop.f32.mrb[0].mxu0
        %v4133 = vpop.f32.mrb[0].mxu0
        %4134 = vdwg.mxu0
        %v4136 = vsel %vm1130, %v4088, 0
        %v4139 = vsel %vm1250, %v3972, 0
        %4141 = vmatprep.subr.bf16.mxu0 0
        %4142 = vmatpush1.bf16.msra.mxu0 %v4139
        %4143 = vmatprep.subr.bf16.mxu0 0
        %4144 = vmatpush1.bf16.msra.mxu0 0
        %4145 = vmatprep.subr.bf16.mxu0 0
        %4146 = vmatpush1.bf16.msra.mxu0 0
        %4147 = vmatprep.subr.bf16.mxu0 0
        %4148 = vmatpush1.bf16.msra.mxu0 0
        %4149 = vmatprep.subr.bf16.mxu0 0
        %4150 = vmatpush1.bf16.msra.mxu0 0
        %4151 = vmatprep.subr.bf16.mxu0 0
        %4152 = vmatpush1.bf16.msra.mxu0 0
        %4153 = vmatprep.subr.bf16.mxu0 0
        %4154 = vmatpush1.bf16.msra.mxu0 0
        %4155 = vmatprep.subr.bf16.mxu0 0
        %4156 = vmatpush1.bf16.msra.mxu0 0
        %4157 = vmatprep.subr.bf16.mxu0 0
        %4158 = vmatpush1.bf16.msra.mxu0 0
        %4159 = vmatprep.subr.bf16.mxu0 0
        %4160 = vmatpush1.bf16.msra.mxu0 0
        %4161 = vmatprep.subr.bf16.mxu0 0
        %4162 = vmatpush1.bf16.msra.mxu0 0
        %4163 = vmatprep.subr.bf16.mxu0 0
        %4164 = vmatpush1.bf16.msra.mxu0 0
        %4165 = vmatprep.subr.bf16.mxu0 0
        %4166 = vmatpush1.bf16.msra.mxu0 0
        %4167 = vmatprep.subr.bf16.mxu0 0
        %4168 = vmatpush1.bf16.msra.mxu0 0
        %4169 = vmatprep.subr.bf16.mxu0 0
        %4170 = vmatpush1.bf16.msra.mxu0 0
        %4171 = vmatprep.subr.bf16.mxu0 0
        %4172 = vmatpush1.bf16.msra.mxu0 0
        %4173 = vmatprep.mubr.bf16.mxu0 0
        %4174 = vmatmul.mubr.bf16.gmra.mrb[0].mxu0 %v4136
        %v4175 = vpop.f32.mrb[0].mxu0
        %v4176 = vadd.f32 0.0, %v4175
        %v4177 = vpop.f32.mrb[0].mxu0
        %v4178 = vpop.f32.mrb[0].mxu0
        %v4179 = vpop.f32.mrb[0].mxu0
        %4180 = vdwg.mxu0
        %v4181 = vpack.c.bf16 %v4176, %v4130
        %v4182 = vld [vmem:[%s1731] sm:$0xf]
        %v4184 = vsel %vm1130, %v4181, 0
        %v4187 = vsel %vm1250, %v4182, 0
        %4189 = vmatprep.subr.bf16.mxu0 0
        %4190 = vmatpush1.bf16.msra.mxu0 %v4187
        %4191 = vmatprep.subr.bf16.mxu0 0
        %4192 = vmatpush1.bf16.msra.mxu0 0
        %4193 = vmatprep.subr.bf16.mxu0 0
        %4194 = vmatpush1.bf16.msra.mxu0 0
        %4195 = vmatprep.subr.bf16.mxu0 0
        %4196 = vmatpush1.bf16.msra.mxu0 0
        %4197 = vmatprep.subr.bf16.mxu0 0
        %4198 = vmatpush1.bf16.msra.mxu0 0
        %4199 = vmatprep.subr.bf16.mxu0 0
        %4200 = vmatpush1.bf16.msra.mxu0 0
        %4201 = vmatprep.subr.bf16.mxu0 0
        %4202 = vmatpush1.bf16.msra.mxu0 0
        %4203 = vmatprep.subr.bf16.mxu0 0
        %4204 = vmatpush1.bf16.msra.mxu0 0
        %4205 = vmatprep.subr.bf16.mxu0 0
        %4206 = vmatpush1.bf16.msra.mxu0 0
        %4207 = vmatprep.subr.bf16.mxu0 0
        %4208 = vmatpush1.bf16.msra.mxu0 0
        %4209 = vmatprep.subr.bf16.mxu0 0
        %4210 = vmatpush1.bf16.msra.mxu0 0
        %4211 = vmatprep.subr.bf16.mxu0 0
        %4212 = vmatpush1.bf16.msra.mxu0 0
        %4213 = vmatprep.subr.bf16.mxu0 0
        %4214 = vmatpush1.bf16.msra.mxu0 0
        %4215 = vmatprep.subr.bf16.mxu0 0
        %4216 = vmatpush1.bf16.msra.mxu0 0
        %4217 = vmatprep.subr.bf16.mxu0 0
        %4218 = vmatpush1.bf16.msra.mxu0 0
        %4219 = vmatprep.subr.bf16.mxu0 0
        %4220 = vmatpush1.bf16.msra.mxu0 0
        %4221 = vmatprep.mubr.bf16.mxu0 0
        %4222 = vmatmul.mubr.bf16.gmra.mrb[0].mxu0 %v4184
        %v4223 = vpop.f32.mrb[0].mxu0
        %v4224 = vadd.f32 0.0, %v4223
        %v4225 = vpop.f32.mrb[0].mxu0
        %v4226 = vpop.f32.mrb[0].mxu0
        %v4227 = vadd.f32 0.0, %v4226
        %v4228 = vpop.f32.mrb[0].mxu0
        %4229 = vdwg.mxu0
        %v4231 = vsel %vm1130, %v3794, 0
        %v4234 = vsel %vm1250, %v3795, 0
        %4236 = vmatprep.subr.bf16.mxu0 0
        %4237 = vmatpush1.bf16.msra.mxu0 %v4234
        %4238 = vmatprep.subr.bf16.mxu0 0
        %4239 = vmatpush1.bf16.msra.mxu0 0
        %4240 = vmatprep.subr.bf16.mxu0 0
        %4241 = vmatpush1.bf16.msra.mxu0 0
        %4242 = vmatprep.subr.bf16.mxu0 0
        %4243 = vmatpush1.bf16.msra.mxu0 0
        %4244 = vmatprep.subr.bf16.mxu0 0
        %4245 = vmatpush1.bf16.msra.mxu0 0
        %4246 = vmatprep.subr.bf16.mxu0 0
        %4247 = vmatpush1.bf16.msra.mxu0 0
        %4248 = vmatprep.subr.bf16.mxu0 0
        %4249 = vmatpush1.bf16.msra.mxu0 0
        %4250 = vmatprep.subr.bf16.mxu0 0
        %4251 = vmatpush1.bf16.msra.mxu0 0
        %4252 = vmatprep.subr.bf16.mxu0 0
        %4253 = vmatpush1.bf16.msra.mxu0 0
        %4254 = vmatprep.subr.bf16.mxu0 0
        %4255 = vmatpush1.bf16.msra.mxu0 0
        %4256 = vmatprep.subr.bf16.mxu0 0
        %4257 = vmatpush1.bf16.msra.mxu0 0
        %4258 = vmatprep.subr.bf16.mxu0 0
        %4259 = vmatpush1.bf16.msra.mxu0 0
        %4260 = vmatprep.subr.bf16.mxu0 0
        %4261 = vmatpush1.bf16.msra.mxu0 0
        %4262 = vmatprep.subr.bf16.mxu0 0
        %4263 = vmatpush1.bf16.msra.mxu0 0
        %4264 = vmatprep.subr.bf16.mxu0 0
        %4265 = vmatpush1.bf16.msra.mxu0 0
        %4266 = vmatprep.subr.bf16.mxu0 0
        %4267 = vmatpush1.bf16.msra.mxu0 0
        %4268 = vmatprep.mubr.bf16.mxu0 0
        %4269 = vmatmul.mubr.bf16.gmra.mrb[0].mxu0 %v4231
        %v4270 = vpop.f32.mrb[0].mxu0
        %v4271 = vadd.f32 %v4224, %v4270
        %v4272 = vpop.f32.mrb[0].mxu0
        %v4273 = vpop.f32.mrb[0].mxu0
        %v4274 = vadd.f32 %v4227, %v4273
        %v4275 = vpop.f32.mrb[0].mxu0
        %4276 = vdwg.mxu0
        %v4277 = vld [vmem:[%s1827] sm:$0xf]
        %v4278 = vld [vmem:[%s1827 + $0x4] sm:$0xf]
        %v4279 = vld [vmem:[%s1827 + $0x8] sm:$0xf]
        %v4280 = vld [vmem:[%s1827 + $0xc] sm:$0xf]
        %v4285 = vunpack.c.l.b16 %v4277
        %v4286 = vunpack.c.l.b16 %v4278
        %v4287 = vunpack.c.l.b16 %v4279
        %v4288 = vunpack.c.l.b16 %v4280
        %v4289 = vpack.c.b16 %v4286, %v4285
        %v4290 = vpack.c.b16 %v4288, %v4287
        %4293 = vmatprep.subr.bf16.mxu0 0
        %4294 = vmatpush1.bf16.msra.mxu0 %v4289
        %4295 = vmatprep.subr.bf16.mxu0 0
        %4296 = vmatpush1.bf16.msra.mxu0 %v4290
        %4297 = vmatprep.subr.bf16.mxu0 0
        %4298 = vmatpush1.bf16.msra.mxu0 0
        %4299 = vmatprep.subr.bf16.mxu0 0
        %4300 = vmatpush1.bf16.msra.mxu0 0
        %4301 = vmatprep.subr.bf16.mxu0 0
        %4302 = vmatpush1.bf16.msra.mxu0 0
        %4303 = vmatprep.subr.bf16.mxu0 0
        %4304 = vmatpush1.bf16.msra.mxu0 0
        %4305 = vmatprep.subr.bf16.mxu0 0
        %4306 = vmatpush1.bf16.msra.mxu0 0
        %4307 = vmatprep.subr.bf16.mxu0 0
        %4308 = vmatpush1.bf16.msra.mxu0 0
        %4309 = vmatprep.subr.bf16.mxu0 0
        %4310 = vmatpush1.bf16.msra.mxu0 0
        %4311 = vmatprep.subr.bf16.mxu0 0
        %4312 = vmatpush1.bf16.msra.mxu0 0
        %4313 = vmatprep.subr.bf16.mxu0 0
        %4314 = vmatpush1.bf16.msra.mxu0 0
        %4315 = vmatprep.subr.bf16.mxu0 0
        %4316 = vmatpush1.bf16.msra.mxu0 0
        %4317 = vmatprep.subr.bf16.mxu0 0
        %4318 = vmatpush1.bf16.msra.mxu0 0
        %4319 = vmatprep.subr.bf16.mxu0 0
        %4320 = vmatpush1.bf16.msra.mxu0 0
        %4321 = vmatprep.subr.bf16.mxu0 0
        %4322 = vmatpush1.bf16.msra.mxu0 0
        %4323 = vmatprep.subr.bf16.mxu0 0
        %4324 = vmatpush1.bf16.msra.mxu0 0
        %4325 = vmatprep.mubr.bf16.mxu0 0
        %4326 = vmatmul.mubr.bf16.gmra.mrb[0].mxu0 %v3423
        %v4327 = vpop.f32.mrb[0].mxu0
        %v4328 = vadd.f32 0.0, %v4327
        %v4329 = vpop.f32.mrb[0].mxu0
        %v4330 = vpop.f32.mrb[0].mxu0
        %v4331 = vadd.f32 0.0, %v4330
        %v4332 = vpop.f32.mrb[0].mxu0
        %4333 = vdwg.mxu0
        %v4334 = vld [vmem:[%s1885] sm:$0xf]
        %v4335 = vld [vmem:[%s1885 + $0x4] sm:$0xf]
        %v4336 = vld [vmem:[%s1885 + $0x8] sm:$0xf]
        %v4337 = vld [vmem:[%s1885 + $0xc] sm:$0xf]
        %v4342 = vunpack.c.l.b16 %v4334
        %v4343 = vunpack.c.l.b16 %v4335
        %v4344 = vunpack.c.l.b16 %v4336
        %v4345 = vunpack.c.l.b16 %v4337
        %v4346 = vpack.c.b16 %v4343, %v4342
        %v4347 = vpack.c.b16 %v4345, %v4344
        %4350 = vmatprep.subr.bf16.mxu0 0
        %4351 = vmatpush1.bf16.msra.mxu0 %v4346
        %4352 = vmatprep.subr.bf16.mxu0 0
        %4353 = vmatpush1.bf16.msra.mxu0 %v4347
        %4354 = vmatprep.subr.bf16.mxu0 0
        %4355 = vmatpush1.bf16.msra.mxu0 0
        %4356 = vmatprep.subr.bf16.mxu0 0
        %4357 = vmatpush1.bf16.msra.mxu0 0
        %4358 = vmatprep.subr.bf16.mxu0 0
        %4359 = vmatpush1.bf16.msra.mxu0 0
        %4360 = vmatprep.subr.bf16.mxu0 0
        %4361 = vmatpush1.bf16.msra.mxu0 0
        %4362 = vmatprep.subr.bf16.mxu0 0
        %4363 = vmatpush1.bf16.msra.mxu0 0
        %4364 = vmatprep.subr.bf16.mxu0 0
        %4365 = vmatpush1.bf16.msra.mxu0 0
        %4366 = vmatprep.subr.bf16.mxu0 0
        %4367 = vmatpush1.bf16.msra.mxu0 0
        %4368 = vmatprep.subr.bf16.mxu0 0
        %4369 = vmatpush1.bf16.msra.mxu0 0
        %4370 = vmatprep.subr.bf16.mxu0 0
        %4371 = vmatpush1.bf16.msra.mxu0 0
        %4372 = vmatprep.subr.bf16.mxu0 0
        %4373 = vmatpush1.bf16.msra.mxu0 0
        %4374 = vmatprep.subr.bf16.mxu0 0
        %4375 = vmatpush1.bf16.msra.mxu0 0
        %4376 = vmatprep.subr.bf16.mxu0 0
        %4377 = vmatpush1.bf16.msra.mxu0 0
        %4378 = vmatprep.subr.bf16.mxu0 0
        %4379 = vmatpush1.bf16.msra.mxu0 0
        %4380 = vmatprep.subr.bf16.mxu0 0
        %4381 = vmatpush1.bf16.msra.mxu0 0
        %4382 = vmatprep.mubr.bf16.mxu0 0
        %4383 = vmatmul.mubr.bf16.gmra.mrb[0].mxu0 %v3423
        %v4384 = vpop.f32.mrb[0].mxu0
        %v4385 = vadd.f32 0.0, %v4384
        %v4386 = vpop.f32.mrb[0].mxu0
        %v4387 = vpop.f32.mrb[0].mxu0
        %v4388 = vadd.f32 0.0, %v4387
        %v4389 = vpop.f32.mrb[0].mxu0
        %4390 = vdwg.mxu0
        %v4391 = vld [vmem:[%s1943] sm:$0xf]
        %v4392 = vld [vmem:[%s1943 + $0x4] sm:$0xf]
        %v4393 = vld [vmem:[%s1943 + $0x8] sm:$0xf]
        %v4394 = vld [vmem:[%s1943 + $0xc] sm:$0xf]
        %v4399 = vunpack.c.l.b16 %v4391
        %v4400 = vunpack.c.l.b16 %v4392
        %v4401 = vunpack.c.l.b16 %v4393
        %v4402 = vunpack.c.l.b16 %v4394
        %v4403 = vpack.c.b16 %v4400, %v4399
        %v4404 = vpack.c.b16 %v4402, %v4401
        %4407 = vmatprep.subr.bf16.mxu0 0
        %4408 = vmatpush1.bf16.msra.mxu0 %v4403
        %4409 = vmatprep.subr.bf16.mxu0 0
        %4410 = vmatpush1.bf16.msra.mxu0 %v4404
        %4411 = vmatprep.subr.bf16.mxu0 0
        %4412 = vmatpush1.bf16.msra.mxu0 0
        %4413 = vmatprep.subr.bf16.mxu0 0
        %4414 = vmatpush1.bf16.msra.mxu0 0
        %4415 = vmatprep.subr.bf16.mxu0 0
        %4416 = vmatpush1.bf16.msra.mxu0 0
        %4417 = vmatprep.subr.bf16.mxu0 0
        %4418 = vmatpush1.bf16.msra.mxu0 0
        %4419 = vmatprep.subr.bf16.mxu0 0
        %4420 = vmatpush1.bf16.msra.mxu0 0
        %4421 = vmatprep.subr.bf16.mxu0 0
        %4422 = vmatpush1.bf16.msra.mxu0 0
        %4423 = vmatprep.subr.bf16.mxu0 0
        %4424 = vmatpush1.bf16.msra.mxu0 0
        %4425 = vmatprep.subr.bf16.mxu0 0
        %4426 = vmatpush1.bf16.msra.mxu0 0
        %4427 = vmatprep.subr.bf16.mxu0 0
        %4428 = vmatpush1.bf16.msra.mxu0 0
        %4429 = vmatprep.subr.bf16.mxu0 0
        %4430 = vmatpush1.bf16.msra.mxu0 0
        %4431 = vmatprep.subr.bf16.mxu0 0
        %4432 = vmatpush1.bf16.msra.mxu0 0
        %4433 = vmatprep.subr.bf16.mxu0 0
        %4434 = vmatpush1.bf16.msra.mxu0 0
        %4435 = vmatprep.subr.bf16.mxu0 0
        %4436 = vmatpush1.bf16.msra.mxu0 0
        %4437 = vmatprep.subr.bf16.mxu0 0
        %4438 = vmatpush1.bf16.msra.mxu0 0
        %4439 = vmatprep.mubr.bf16.mxu0 0
        %4440 = vmatmul.mubr.bf16.gmra.mrb[0].mxu0 %v3423
        %v4441 = vpop.f32.mrb[0].mxu0
        %v4442 = vadd.f32 0.0, %v4441
        %v4443 = vpop.f32.mrb[0].mxu0
        %v4444 = vpop.f32.mrb[0].mxu0
        %v4445 = vadd.f32 0.0, %v4444
        %v4446 = vpop.f32.mrb[0].mxu0
        %4447 = vdwg.mxu0
        %v4448 = vpack.c.bf16 %v4328, %v4328
        %v4449 = vpack.c.bf16 %v4331, %v4331
        %v4450 = vpack.c.bf16 %v4385, %v4385
        %v4451 = vpack.c.bf16 %v4388, %v4388
        %v4452 = vpack.c.bf16 %v4442, %v4442
        %v4453 = vpack.c.bf16 %v4445, %v4445
        %v4455 = vsel %vm1130, %v4448, 0
        %v4458 = vsel %vm1130, %v4450, 0
        %4460 = vmatprep.subr.bf16.mxu0 0
        %4461 = vmatpush1.bf16.xpose.msra.mxu0 %v4458
        %4462 = vmatprep.subr.bf16.mxu0 0
        %4463 = vmatpush1.bf16.xpose.msra.mxu0 0
        %4464 = vmatprep.subr.bf16.mxu0 0
        %4465 = vmatpush1.bf16.xpose.msra.mxu0 0
        %4466 = vmatprep.subr.bf16.mxu0 0
        %4467 = vmatpush1.bf16.xpose.msra.mxu0 0
        %4468 = vmatprep.subr.bf16.mxu0 0
        %4469 = vmatpush1.bf16.xpose.msra.mxu0 0
        %4470 = vmatprep.subr.bf16.mxu0 0
        %4471 = vmatpush1.bf16.xpose.msra.mxu0 0
        %4472 = vmatprep.subr.bf16.mxu0 0
        %4473 = vmatpush1.bf16.xpose.msra.mxu0 0
        %4474 = vmatprep.subr.bf16.mxu0 0
        %4475 = vmatpush1.bf16.xpose.msra.mxu0 0
        %4476 = vmatprep.subr.bf16.mxu0 0
        %4477 = vmatpush1.bf16.xpose.msra.mxu0 0
        %4478 = vmatprep.subr.bf16.mxu0 0
        %4479 = vmatpush1.bf16.xpose.msra.mxu0 0
        %4480 = vmatprep.subr.bf16.mxu0 0
        %4481 = vmatpush1.bf16.xpose.msra.mxu0 0
        %4482 = vmatprep.subr.bf16.mxu0 0
        %4483 = vmatpush1.bf16.xpose.msra.mxu0 0
        %4484 = vmatprep.subr.bf16.mxu0 0
        %4485 = vmatpush1.bf16.xpose.msra.mxu0 0
        %4486 = vmatprep.subr.bf16.mxu0 0
        %4487 = vmatpush1.bf16.xpose.msra.mxu0 0
        %4488 = vmatprep.subr.bf16.mxu0 0
        %4489 = vmatpush1.bf16.xpose.msra.mxu0 0
        %4490 = vmatprep.subr.bf16.mxu0 0
        %4491 = vmatpush1.bf16.xpose.msra.mxu0 0
        %4492 = vmatprep.mubr.bf16.mxu0 0
        %4493 = vmatmul.mubr.bf16.gmra.mrb[0].mxu0 %v4455
        %v4494 = vpop.f32.mrb[0].mxu0
        %v4495 = vadd.f32 0.0, %v4494
        %v4496 = vpop.f32.mrb[0].mxu0
        %v4497 = vpop.f32.mrb[0].mxu0
        %v4498 = vpop.f32.mrb[0].mxu0
        %4499 = vdwg.mxu0
        %v4501 = vsel %vm1130, %v4449, 0
        %v4504 = vsel %vm1130, %v4451, 0
        %4506 = vmatprep.subr.bf16.mxu0 0
        %4507 = vmatpush1.bf16.xpose.msra.mxu0 %v4504
        %4508 = vmatprep.subr.bf16.mxu0 0
        %4509 = vmatpush1.bf16.xpose.msra.mxu0 0
        %4510 = vmatprep.subr.bf16.mxu0 0
        %4511 = vmatpush1.bf16.xpose.msra.mxu0 0
        %4512 = vmatprep.subr.bf16.mxu0 0
        %4513 = vmatpush1.bf16.xpose.msra.mxu0 0
        %4514 = vmatprep.subr.bf16.mxu0 0
        %4515 = vmatpush1.bf16.xpose.msra.mxu0 0
        %4516 = vmatprep.subr.bf16.mxu0 0
        %4517 = vmatpush1.bf16.xpose.msra.mxu0 0
        %4518 = vmatprep.subr.bf16.mxu0 0
        %4519 = vmatpush1.bf16.xpose.msra.mxu0 0
        %4520 = vmatprep.subr.bf16.mxu0 0
        %4521 = vmatpush1.bf16.xpose.msra.mxu0 0
        %4522 = vmatprep.subr.bf16.mxu0 0
        %4523 = vmatpush1.bf16.xpose.msra.mxu0 0
        %4524 = vmatprep.subr.bf16.mxu0 0
        %4525 = vmatpush1.bf16.xpose.msra.mxu0 0
        %4526 = vmatprep.subr.bf16.mxu0 0
        %4527 = vmatpush1.bf16.xpose.msra.mxu0 0
        %4528 = vmatprep.subr.bf16.mxu0 0
        %4529 = vmatpush1.bf16.xpose.msra.mxu0 0
        %4530 = vmatprep.subr.bf16.mxu0 0
        %4531 = vmatpush1.bf16.xpose.msra.mxu0 0
        %4532 = vmatprep.subr.bf16.mxu0 0
        %4533 = vmatpush1.bf16.xpose.msra.mxu0 0
        %4534 = vmatprep.subr.bf16.mxu0 0
        %4535 = vmatpush1.bf16.xpose.msra.mxu0 0
        %4536 = vmatprep.subr.bf16.mxu0 0
        %4537 = vmatpush1.bf16.xpose.msra.mxu0 0
        %4538 = vmatprep.mubr.bf16.mxu0 0
        %4539 = vmatmul.mubr.bf16.gmra.mrb[0].mxu0 %v4501
        %v4540 = vpop.f32.mrb[0].mxu0
        %v4541 = vadd.f32 0.0, %v4540
        %v4542 = vpop.f32.mrb[0].mxu0
        %v4543 = vpop.f32.mrb[0].mxu0
        %v4544 = vpop.f32.mrb[0].mxu0
        %4545 = vdwg.mxu0
        %v4546 = vsel %vm1130, %v4495, -inf
        %4547 = vmax.xlane.f32.xlu0 %v4546
        %v4548 = vpop.xlane.xlu0 %4547
        %v4549 = vsel %vm1130, %v4541, -inf
        %4550 = vmax.xlane.f32.xlu0 %v4549
        %v4551 = vpop.xlane.xlu0 %4550
        %v4552 = vsub.f32 %v4495, %v4548
        %v4553 = vsub.f32 %v4541, %v4551
        %v4554 = vmul.f32 %v4552, 1.442695
        %v4555 = vpow.pop %v4554
        %v4556 = vmul.f32 %v4553, 1.442695
        %v4557 = vpow.pop %v4556
        %v4558 = vsel %vm1130, %v4555, 0.0
        %4559 = vadd.xlane.f32.xlu0 %v4558
        %v4560 = vpop.xlane.xlu0 %4559
        %v4561 = vsel %vm1130, %v4557, 0.0
        %4562 = vadd.xlane.f32.xlu0 %v4561
        %v4563 = vpop.xlane.xlu0 %4562
        %v4564 = vrcp.pop %v4560
        %v4565 = vrcp.pop %v4563
        %v4566 = vmul.f32 %v4555, %v4564
        %v4567 = vmul.f32 %v4557, %v4565
        %v4568 = vpack.c.bf16 %v4566, %v4566
        %v4569 = vpack.c.bf16 %v4567, %v4567
        %v4571 = vsel %vm1130, %v4568, 0
        %v4574 = vsel %vm1250, %v4452, 0
        %4576 = vmatprep.subr.bf16.mxu0 0
        %4577 = vmatpush1.bf16.msra.mxu0 %v4574
        %4578 = vmatprep.subr.bf16.mxu0 0
        %4579 = vmatpush1.bf16.msra.mxu0 0
        %4580 = vmatprep.subr.bf16.mxu0 0
        %4581 = vmatpush1.bf16.msra.mxu0 0
        %4582 = vmatprep.subr.bf16.mxu0 0
        %4583 = vmatpush1.bf16.msra.mxu0 0
        %4584 = vmatprep.subr.bf16.mxu0 0
        %4585 = vmatpush1.bf16.msra.mxu0 0
        %4586 = vmatprep.subr.bf16.mxu0 0
        %4587 = vmatpush1.bf16.msra.mxu0 0
        %4588 = vmatprep.subr.bf16.mxu0 0
        %4589 = vmatpush1.bf16.msra.mxu0 0
        %4590 = vmatprep.subr.bf16.mxu0 0
        %4591 = vmatpush1.bf16.msra.mxu0 0
        %4592 = vmatprep.subr.bf16.mxu0 0
        %4593 = vmatpush1.bf16.msra.mxu0 0
        %4594 = vmatprep.subr.bf16.mxu0 0
        %4595 = vmatpush1.bf16.msra.mxu0 0
        %4596 = vmatprep.subr.bf16.mxu0 0
        %4597 = vmatpush1.bf16.msra.mxu0 0
        %4598 = vmatprep.subr.bf16.mxu0 0
        %4599 = vmatpush1.bf16.msra.mxu0 0
        %4600 = vmatprep.subr.bf16.mxu0 0
        %4601 = vmatpush1.bf16.msra.mxu0 0
        %4602 = vmatprep.subr.bf16.mxu0 0
        %4603 = vmatpush1.bf16.msra.mxu0 0
        %4604 = vmatprep.subr.bf16.mxu0 0
        %4605 = vmatpush1.bf16.msra.mxu0 0
        %4606 = vmatprep.subr.bf16.mxu0 0
        %4607 = vmatpush1.bf16.msra.mxu0 0
        %4608 = vmatprep.mubr.bf16.mxu0 0
        %4609 = vmatmul.mubr.bf16.gmra.mrb[0].mxu0 %v4571
        %v4610 = vpop.f32.mrb[0].mxu0
        %v4611 = vadd.f32 0.0, %v4610
        %v4612 = vpop.f32.mrb[0].mxu0
        %v4613 = vpop.f32.mrb[0].mxu0
        %v4614 = vpop.f32.mrb[0].mxu0
        %4615 = vdwg.mxu0
        %v4617 = vsel %vm1130, %v4569, 0
        %v4620 = vsel %vm1250, %v4453, 0
        %4622 = vmatprep.subr.bf16.mxu0 0
        %4623 = vmatpush1.bf16.msra.mxu0 %v4620
        %4624 = vmatprep.subr.bf16.mxu0 0
        %4625 = vmatpush1.bf16.msra.mxu0 0
        %4626 = vmatprep.subr.bf16.mxu0 0
        %4627 = vmatpush1.bf16.msra.mxu0 0
        %4628 = vmatprep.subr.bf16.mxu0 0
        %4629 = vmatpush1.bf16.msra.mxu0 0
        %4630 = vmatprep.subr.bf16.mxu0 0
        %4631 = vmatpush1.bf16.msra.mxu0 0
        %4632 = vmatprep.subr.bf16.mxu0 0
        %4633 = vmatpush1.bf16.msra.mxu0 0
        %4634 = vmatprep.subr.bf16.mxu0 0
        %4635 = vmatpush1.bf16.msra.mxu0 0
        %4636 = vmatprep.subr.bf16.mxu0 0
        %4637 = vmatpush1.bf16.msra.mxu0 0
        %4638 = vmatprep.subr.bf16.mxu0 0
        %4639 = vmatpush1.bf16.msra.mxu0 0
        %4640 = vmatprep.subr.bf16.mxu0 0
        %4641 = vmatpush1.bf16.msra.mxu0 0
        %4642 = vmatprep.subr.bf16.mxu0 0
        %4643 = vmatpush1.bf16.msra.mxu0 0
        %4644 = vmatprep.subr.bf16.mxu0 0
        %4645 = vmatpush1.bf16.msra.mxu0 0
        %4646 = vmatprep.subr.bf16.mxu0 0
        %4647 = vmatpush1.bf16.msra.mxu0 0
        %4648 = vmatprep.subr.bf16.mxu0 0
        %4649 = vmatpush1.bf16.msra.mxu0 0
        %4650 = vmatprep.subr.bf16.mxu0 0
        %4651 = vmatpush1.bf16.msra.mxu0 0
        %4652 = vmatprep.subr.bf16.mxu0 0
        %4653 = vmatpush1.bf16.msra.mxu0 0
        %4654 = vmatprep.mubr.bf16.mxu0 0
        %4655 = vmatmul.mubr.bf16.gmra.mrb[0].mxu0 %v4617
        %v4656 = vpop.f32.mrb[0].mxu0
        %v4657 = vadd.f32 0.0, %v4656
        %v4658 = vpop.f32.mrb[0].mxu0
        %v4659 = vpop.f32.mrb[0].mxu0
        %v4660 = vpop.f32.mrb[0].mxu0
        %4661 = vdwg.mxu0
        %v4662 = vpack.c.bf16 %v4657, %v4611
        %v4663 = vld [vmem:[%s2216] sm:$0xf]
        %v4665 = vsel %vm1130, %v4662, 0
        %v4668 = vsel %vm1250, %v4663, 0
        %4670 = vmatprep.subr.bf16.mxu0 0
        %4671 = vmatpush1.bf16.msra.mxu0 %v4668
        %4672 = vmatprep.subr.bf16.mxu0 0
        %4673 = vmatpush1.bf16.msra.mxu0 0
        %4674 = vmatprep.subr.bf16.mxu0 0
        %4675 = vmatpush1.bf16.msra.mxu0 0
        %4676 = vmatprep.subr.bf16.mxu0 0
        %4677 = vmatpush1.bf16.msra.mxu0 0
        %4678 = vmatprep.subr.bf16.mxu0 0
        %4679 = vmatpush1.bf16.msra.mxu0 0
        %4680 = vmatprep.subr.bf16.mxu0 0
        %4681 = vmatpush1.bf16.msra.mxu0 0
        %4682 = vmatprep.subr.bf16.mxu0 0
        %4683 = vmatpush1.bf16.msra.mxu0 0
        %4684 = vmatprep.subr.bf16.mxu0 0
        %4685 = vmatpush1.bf16.msra.mxu0 0
        %4686 = vmatprep.subr.bf16.mxu0 0
        %4687 = vmatpush1.bf16.msra.mxu0 0
        %4688 = vmatprep.subr.bf16.mxu0 0
        %4689 = vmatpush1.bf16.msra.mxu0 0
        %4690 = vmatprep.subr.bf16.mxu0 0
        %4691 = vmatpush1.bf16.msra.mxu0 0
        %4692 = vmatprep.subr.bf16.mxu0 0
        %4693 = vmatpush1.bf16.msra.mxu0 0
        %4694 = vmatprep.subr.bf16.mxu0 0
        %4695 = vmatpush1.bf16.msra.mxu0 0
        %4696 = vmatprep.subr.bf16.mxu0 0
        %4697 = vmatpush1.bf16.msra.mxu0 0
        %4698 = vmatprep.subr.bf16.mxu0 0
        %4699 = vmatpush1.bf16.msra.mxu0 0
        %4700 = vmatprep.subr.bf16.mxu0 0
        %4701 = vmatpush1.bf16.msra.mxu0 0
        %4702 = vmatprep.mubr.bf16.mxu0 0
        %4703 = vmatmul.mubr.bf16.gmra.mrb[0].mxu0 %v4665
        %v4704 = vpop.f32.mrb[0].mxu0
        %v4705 = vadd.f32 0.0, %v4704
        %v4706 = vpop.f32.mrb[0].mxu0
        %v4707 = vpop.f32.mrb[0].mxu0
        %v4708 = vadd.f32 0.0, %v4707
        %v4709 = vpop.f32.mrb[0].mxu0
        %4710 = vdwg.mxu0
        %v4711 = vadd.f32 %v4271, %v4705
        %v4712 = vadd.f32 %v4274, %v4708
        %v4713 = vld [vmem:[%s2267] sm:$0xf]
        %v4714 = vld [vmem:[%s2267 + $0x4] sm:$0xf]
        %v4715 = vld [vmem:[%s2267 + $0x8] sm:$0xf]
        %v4716 = vld [vmem:[%s2267 + $0xc] sm:$0xf]
        %v4721 = vunpack.c.l.b16 %v4713
        %v4722 = vunpack.c.l.b16 %v4714
        %v4723 = vunpack.c.l.b16 %v4715
        %v4724 = vunpack.c.l.b16 %v4716
        %v4725 = vpack.c.b16 %v4722, %v4721
        %v4726 = vpack.c.b16 %v4724, %v4723
        %4729 = vmatprep.subr.bf16.mxu0 0
        %4730 = vmatpush1.bf16.msra.mxu0 %v4725
        %4731 = vmatprep.subr.bf16.mxu0 0
        %4732 = vmatpush1.bf16.msra.mxu0 %v4726
        %4733 = vmatprep.subr.bf16.mxu0 0
        %4734 = vmatpush1.bf16.msra.mxu0 0
        %4735 = vmatprep.subr.bf16.mxu0 0
        %4736 = vmatpush1.bf16.msra.mxu0 0
        %4737 = vmatprep.subr.bf16.mxu0 0
        %4738 = vmatpush1.bf16.msra.mxu0 0
        %4739 = vmatprep.subr.bf16.mxu0 0
        %4740 = vmatpush1.bf16.msra.mxu0 0
        %4741 = vmatprep.subr.bf16.mxu0 0
        %4742 = vmatpush1.bf16.msra.mxu0 0
        %4743 = vmatprep.subr.bf16.mxu0 0
        %4744 = vmatpush1.bf16.msra.mxu0 0
        %4745 = vmatprep.subr.bf16.mxu0 0
        %4746 = vmatpush1.bf16.msra.mxu0 0
        %4747 = vmatprep.subr.bf16.mxu0 0
        %4748 = vmatpush1.bf16.msra.mxu0 0
        %4749 = vmatprep.subr.bf16.mxu0 0
        %4750 = vmatpush1.bf16.msra.mxu0 0
        %4751 = vmatprep.subr.bf16.mxu0 0
        %4752 = vmatpush1.bf16.msra.mxu0 0
        %4753 = vmatprep.subr.bf16.mxu0 0
        %4754 = vmatpush1.bf16.msra.mxu0 0
        %4755 = vmatprep.subr.bf16.mxu0 0
        %4756 = vmatpush1.bf16.msra.mxu0 0
        %4757 = vmatprep.subr.bf16.mxu0 0
        %4758 = vmatpush1.bf16.msra.mxu0 0
        %4759 = vmatprep.subr.bf16.mxu0 0
        %4760 = vmatpush1.bf16.msra.mxu0 0
        %4761 = vmatprep.mubr.bf16.mxu0 0
        %4762 = vmatmul.mubr.bf16.gmra.mrb[0].mxu0 %v3423
        %v4763 = vpop.f32.mrb[0].mxu0
        %v4764 = vadd.f32 0.0, %v4763
        %v4765 = vpop.f32.mrb[0].mxu0
        %v4766 = vpop.f32.mrb[0].mxu0
        %v4767 = vadd.f32 0.0, %v4766
        %v4768 = vpop.f32.mrb[0].mxu0
        %4769 = vdwg.mxu0
        %v4770 = vld [vmem:[%s2325] sm:$0xf]
        %v4771 = vld [vmem:[%s2325 + $0x4] sm:$0xf]
        %v4772 = vld [vmem:[%s2325 + $0x8] sm:$0xf]
        %v4773 = vld [vmem:[%s2325 + $0xc] sm:$0xf]
        %v4778 = vunpack.c.l.b16 %v4770
        %v4779 = vunpack.c.l.b16 %v4771
        %v4780 = vunpack.c.l.b16 %v4772
        %v4781 = vunpack.c.l.b16 %v4773
        %v4782 = vpack.c.b16 %v4779, %v4778
        %v4783 = vpack.c.b16 %v4781, %v4780
        %4786 = vmatprep.subr.bf16.mxu0 0
        %4787 = vmatpush1.bf16.msra.mxu0 %v4782
        %4788 = vmatprep.subr.bf16.mxu0 0
        %4789 = vmatpush1.bf16.msra.mxu0 %v4783
        %4790 = vmatprep.subr.bf16.mxu0 0
        %4791 = vmatpush1.bf16.msra.mxu0 0
        %4792 = vmatprep.subr.bf16.mxu0 0
        %4793 = vmatpush1.bf16.msra.mxu0 0
        %4794 = vmatprep.subr.bf16.mxu0 0
        %4795 = vmatpush1.bf16.msra.mxu0 0
        %4796 = vmatprep.subr.bf16.mxu0 0
        %4797 = vmatpush1.bf16.msra.mxu0 0
        %4798 = vmatprep.subr.bf16.mxu0 0
        %4799 = vmatpush1.bf16.msra.mxu0 0
        %4800 = vmatprep.subr.bf16.mxu0 0
        %4801 = vmatpush1.bf16.msra.mxu0 0
        %4802 = vmatprep.subr.bf16.mxu0 0
        %4803 = vmatpush1.bf16.msra.mxu0 0
        %4804 = vmatprep.subr.bf16.mxu0 0
        %4805 = vmatpush1.bf16.msra.mxu0 0
        %4806 = vmatprep.subr.bf16.mxu0 0
        %4807 = vmatpush1.bf16.msra.mxu0 0
        %4808 = vmatprep.subr.bf16.mxu0 0
        %4809 = vmatpush1.bf16.msra.mxu0 0
        %4810 = vmatprep.subr.bf16.mxu0 0
        %4811 = vmatpush1.bf16.msra.mxu0 0
        %4812 = vmatprep.subr.bf16.mxu0 0
        %4813 = vmatpush1.bf16.msra.mxu0 0
        %4814 = vmatprep.subr.bf16.mxu0 0
        %4815 = vmatpush1.bf16.msra.mxu0 0
        %4816 = vmatprep.subr.bf16.mxu0 0
        %4817 = vmatpush1.bf16.msra.mxu0 0
        %4818 = vmatprep.mubr.bf16.mxu0 0
        %4819 = vmatmul.mubr.bf16.gmra.mrb[0].mxu0 %v3423
        %v4820 = vpop.f32.mrb[0].mxu0
        %v4821 = vadd.f32 0.0, %v4820
        %v4822 = vpop.f32.mrb[0].mxu0
        %v4823 = vpop.f32.mrb[0].mxu0
        %v4824 = vadd.f32 0.0, %v4823
        %v4825 = vpop.f32.mrb[0].mxu0
        %4826 = vdwg.mxu0
        %v4827 = vld [vmem:[%s2383] sm:$0xf]
        %v4828 = vld [vmem:[%s2383 + $0x4] sm:$0xf]
        %v4829 = vld [vmem:[%s2383 + $0x8] sm:$0xf]
        %v4830 = vld [vmem:[%s2383 + $0xc] sm:$0xf]
        %v4835 = vunpack.c.l.b16 %v4827
        %v4836 = vunpack.c.l.b16 %v4828
        %v4837 = vunpack.c.l.b16 %v4829
        %v4838 = vunpack.c.l.b16 %v4830
        %v4839 = vpack.c.b16 %v4836, %v4835
        %v4840 = vpack.c.b16 %v4838, %v4837
        %4843 = vmatprep.subr.bf16.mxu0 0
        %4844 = vmatpush1.bf16.msra.mxu0 %v4839
        %4845 = vmatprep.subr.bf16.mxu0 0
        %4846 = vmatpush1.bf16.msra.mxu0 %v4840
        %4847 = vmatprep.subr.bf16.mxu0 0
        %4848 = vmatpush1.bf16.msra.mxu0 0
        %4849 = vmatprep.subr.bf16.mxu0 0
        %4850 = vmatpush1.bf16.msra.mxu0 0
        %4851 = vmatprep.subr.bf16.mxu0 0
        %4852 = vmatpush1.bf16.msra.mxu0 0
        %4853 = vmatprep.subr.bf16.mxu0 0
        %4854 = vmatpush1.bf16.msra.mxu0 0
        %4855 = vmatprep.subr.bf16.mxu0 0
        %4856 = vmatpush1.bf16.msra.mxu0 0
        %4857 = vmatprep.subr.bf16.mxu0 0
        %4858 = vmatpush1.bf16.msra.mxu0 0
        %4859 = vmatprep.subr.bf16.mxu0 0
        %4860 = vmatpush1.bf16.msra.mxu0 0
        %4861 = vmatprep.subr.bf16.mxu0 0
        %4862 = vmatpush1.bf16.msra.mxu0 0
        %4863 = vmatprep.subr.bf16.mxu0 0
        %4864 = vmatpush1.bf16.msra.mxu0 0
        %4865 = vmatprep.subr.bf16.mxu0 0
        %4866 = vmatpush1.bf16.msra.mxu0 0
        %4867 = vmatprep.subr.bf16.mxu0 0
        %4868 = vmatpush1.bf16.msra.mxu0 0
        %4869 = vmatprep.subr.bf16.mxu0 0
        %4870 = vmatpush1.bf16.msra.mxu0 0
        %4871 = vmatprep.subr.bf16.mxu0 0
        %4872 = vmatpush1.bf16.msra.mxu0 0
        %4873 = vmatprep.subr.bf16.mxu0 0
        %4874 = vmatpush1.bf16.msra.mxu0 0
        %4875 = vmatprep.mubr.bf16.mxu0 0
        %4876 = vmatmul.mubr.bf16.gmra.mrb[0].mxu0 %v3423
        %v4877 = vpop.f32.mrb[0].mxu0
        %v4878 = vadd.f32 0.0, %v4877
        %v4879 = vpop.f32.mrb[0].mxu0
        %v4880 = vpop.f32.mrb[0].mxu0
        %v4881 = vadd.f32 0.0, %v4880
        %v4882 = vpop.f32.mrb[0].mxu0
        %4883 = vdwg.mxu0
        %v4884 = vpack.c.bf16 %v4764, %v4764
        %v4885 = vpack.c.bf16 %v4767, %v4767
        %v4886 = vpack.c.bf16 %v4821, %v4821
        %v4887 = vpack.c.bf16 %v4824, %v4824
        %v4888 = vpack.c.bf16 %v4878, %v4878
        %v4889 = vpack.c.bf16 %v4881, %v4881
        %v4891 = vsel %vm1130, %v4884, 0
        %v4894 = vsel %vm1130, %v4886, 0
        %4896 = vmatprep.subr.bf16.mxu0 0
        %4897 = vmatpush1.bf16.xpose.msra.mxu0 %v4894
        %4898 = vmatprep.subr.bf16.mxu0 0
        %4899 = vmatpush1.bf16.xpose.msra.mxu0 0
        %4900 = vmatprep.subr.bf16.mxu0 0
        %4901 = vmatpush1.bf16.xpose.msra.mxu0 0
        %4902 = vmatprep.subr.bf16.mxu0 0
        %4903 = vmatpush1.bf16.xpose.msra.mxu0 0
        %4904 = vmatprep.subr.bf16.mxu0 0
        %4905 = vmatpush1.bf16.xpose.msra.mxu0 0
        %4906 = vmatprep.subr.bf16.mxu0 0
        %4907 = vmatpush1.bf16.xpose.msra.mxu0 0
        %4908 = vmatprep.subr.bf16.mxu0 0
        %4909 = vmatpush1.bf16.xpose.msra.mxu0 0
        %4910 = vmatprep.subr.bf16.mxu0 0
        %4911 = vmatpush1.bf16.xpose.msra.mxu0 0
        %4912 = vmatprep.subr.bf16.mxu0 0
        %4913 = vmatpush1.bf16.xpose.msra.mxu0 0
        %4914 = vmatprep.subr.bf16.mxu0 0
        %4915 = vmatpush1.bf16.xpose.msra.mxu0 0
        %4916 = vmatprep.subr.bf16.mxu0 0
        %4917 = vmatpush1.bf16.xpose.msra.mxu0 0
        %4918 = vmatprep.subr.bf16.mxu0 0
        %4919 = vmatpush1.bf16.xpose.msra.mxu0 0
        %4920 = vmatprep.subr.bf16.mxu0 0
        %4921 = vmatpush1.bf16.xpose.msra.mxu0 0
        %4922 = vmatprep.subr.bf16.mxu0 0
        %4923 = vmatpush1.bf16.xpose.msra.mxu0 0
        %4924 = vmatprep.subr.bf16.mxu0 0
        %4925 = vmatpush1.bf16.xpose.msra.mxu0 0
        %4926 = vmatprep.subr.bf16.mxu0 0
        %4927 = vmatpush1.bf16.xpose.msra.mxu0 0
        %4928 = vmatprep.mubr.bf16.mxu0 0
        %4929 = vmatmul.mubr.bf16.gmra.mrb[0].mxu0 %v4891
        %v4930 = vpop.f32.mrb[0].mxu0
        %v4931 = vadd.f32 0.0, %v4930
        %v4932 = vpop.f32.mrb[0].mxu0
        %v4933 = vpop.f32.mrb[0].mxu0
        %v4934 = vpop.f32.mrb[0].mxu0
        %4935 = vdwg.mxu0
        %v4937 = vsel %vm1130, %v4885, 0
        %v4940 = vsel %vm1130, %v4887, 0
        %4942 = vmatprep.subr.bf16.mxu0 0
        %4943 = vmatpush1.bf16.xpose.msra.mxu0 %v4940
        %4944 = vmatprep.subr.bf16.mxu0 0
        %4945 = vmatpush1.bf16.xpose.msra.mxu0 0
        %4946 = vmatprep.subr.bf16.mxu0 0
        %4947 = vmatpush1.bf16.xpose.msra.mxu0 0
        %4948 = vmatprep.subr.bf16.mxu0 0
        %4949 = vmatpush1.bf16.xpose.msra.mxu0 0
        %4950 = vmatprep.subr.bf16.mxu0 0
        %4951 = vmatpush1.bf16.xpose.msra.mxu0 0
        %4952 = vmatprep.subr.bf16.mxu0 0
        %4953 = vmatpush1.bf16.xpose.msra.mxu0 0
        %4954 = vmatprep.subr.bf16.mxu0 0
        %4955 = vmatpush1.bf16.xpose.msra.mxu0 0
        %4956 = vmatprep.subr.bf16.mxu0 0
        %4957 = vmatpush1.bf16.xpose.msra.mxu0 0
        %4958 = vmatprep.subr.bf16.mxu0 0
        %4959 = vmatpush1.bf16.xpose.msra.mxu0 0
        %4960 = vmatprep.subr.bf16.mxu0 0
        %4961 = vmatpush1.bf16.xpose.msra.mxu0 0
        %4962 = vmatprep.subr.bf16.mxu0 0
        %4963 = vmatpush1.bf16.xpose.msra.mxu0 0
        %4964 = vmatprep.subr.bf16.mxu0 0
        %4965 = vmatpush1.bf16.xpose.msra.mxu0 0
        %4966 = vmatprep.subr.bf16.mxu0 0
        %4967 = vmatpush1.bf16.xpose.msra.mxu0 0
        %4968 = vmatprep.subr.bf16.mxu0 0
        %4969 = vmatpush1.bf16.xpose.msra.mxu0 0
        %4970 = vmatprep.subr.bf16.mxu0 0
        %4971 = vmatpush1.bf16.xpose.msra.mxu0 0
        %4972 = vmatprep.subr.bf16.mxu0 0
        %4973 = vmatpush1.bf16.xpose.msra.mxu0 0
        %4974 = vmatprep.mubr.bf16.mxu0 0
        %4975 = vmatmul.mubr.bf16.gmra.mrb[0].mxu0 %v4937
        %v4976 = vpop.f32.mrb[0].mxu0
        %v4977 = vadd.f32 0.0, %v4976
        %v4978 = vpop.f32.mrb[0].mxu0
        %v4979 = vpop.f32.mrb[0].mxu0
        %v4980 = vpop.f32.mrb[0].mxu0
        %4981 = vdwg.mxu0
        %v4982 = vsel %vm1130, %v4931, -inf
        %4983 = vmax.xlane.f32.xlu0 %v4982
        %v4984 = vpop.xlane.xlu0 %4983
        %v4985 = vsel %vm1130, %v4977, -inf
        %4986 = vmax.xlane.f32.xlu0 %v4985
        %v4987 = vpop.xlane.xlu0 %4986
        %v4988 = vsub.f32 %v4931, %v4984
        %v4989 = vsub.f32 %v4977, %v4987
        %v4990 = vmul.f32 %v4988, 1.442695
        %v4991 = vpow.pop %v4990
        %v4992 = vmul.f32 %v4989, 1.442695
        %v4993 = vpow.pop %v4992
        %v4994 = vsel %vm1130, %v4991, 0.0
        %4995 = vadd.xlane.f32.xlu0 %v4994
        %v4996 = vpop.xlane.xlu0 %4995
        %v4997 = vsel %vm1130, %v4993, 0.0
        %4998 = vadd.xlane.f32.xlu0 %v4997
        %v4999 = vpop.xlane.xlu0 %4998
        %v5000 = vrcp.pop %v4996
        %v5001 = vrcp.pop %v4999
        %v5002 = vmul.f32 %v4991, %v5000
        %v5003 = vmul.f32 %v4993, %v5001
        %v5004 = vpack.c.bf16 %v5002, %v5002
        %v5005 = vpack.c.bf16 %v5003, %v5003
        %v5007 = vsel %vm1130, %v5004, 0
        %v5010 = vsel %vm1250, %v4888, 0
        %5012 = vmatprep.subr.bf16.mxu0 0
        %5013 = vmatpush1.bf16.msra.mxu0 %v5010
        %5014 = vmatprep.subr.bf16.mxu0 0
        %5015 = vmatpush1.bf16.msra.mxu0 0
        %5016 = vmatprep.subr.bf16.mxu0 0
        %5017 = vmatpush1.bf16.msra.mxu0 0
        %5018 = vmatprep.subr.bf16.mxu0 0
        %5019 = vmatpush1.bf16.msra.mxu0 0
        %5020 = vmatprep.subr.bf16.mxu0 0
        %5021 = vmatpush1.bf16.msra.mxu0 0
        %5022 = vmatprep.subr.bf16.mxu0 0
        %5023 = vmatpush1.bf16.msra.mxu0 0
        %5024 = vmatprep.subr.bf16.mxu0 0
        %5025 = vmatpush1.bf16.msra.mxu0 0
        %5026 = vmatprep.subr.bf16.mxu0 0
        %5027 = vmatpush1.bf16.msra.mxu0 0
        %5028 = vmatprep.subr.bf16.mxu0 0
        %5029 = vmatpush1.bf16.msra.mxu0 0
        %5030 = vmatprep.subr.bf16.mxu0 0
        %5031 = vmatpush1.bf16.msra.mxu0 0
        %5032 = vmatprep.subr.bf16.mxu0 0
        %5033 = vmatpush1.bf16.msra.mxu0 0
        %5034 = vmatprep.subr.bf16.mxu0 0
        %5035 = vmatpush1.bf16.msra.mxu0 0
        %5036 = vmatprep.subr.bf16.mxu0 0
        %5037 = vmatpush1.bf16.msra.mxu0 0
        %5038 = vmatprep.subr.bf16.mxu0 0
        %5039 = vmatpush1.bf16.msra.mxu0 0
        %5040 = vmatprep.subr.bf16.mxu0 0
        %5041 = vmatpush1.bf16.msra.mxu0 0
        %5042 = vmatprep.subr.bf16.mxu0 0
        %5043 = vmatpush1.bf16.msra.mxu0 0
        %5044 = vmatprep.mubr.bf16.mxu0 0
        %5045 = vmatmul.mubr.bf16.gmra.mrb[0].mxu0 %v5007
        %v5046 = vpop.f32.mrb[0].mxu0
        %v5047 = vadd.f32 0.0, %v5046
        %v5048 = vpop.f32.mrb[0].mxu0
        %v5049 = vpop.f32.mrb[0].mxu0
        %v5050 = vpop.f32.mrb[0].mxu0
        %5051 = vdwg.mxu0
        %v5053 = vsel %vm1130, %v5005, 0
        %v5056 = vsel %vm1250, %v4889, 0
        %5058 = vmatprep.subr.bf16.mxu0 0
        %5059 = vmatpush1.bf16.msra.mxu0 %v5056
        %5060 = vmatprep.subr.bf16.mxu0 0
        %5061 = vmatpush1.bf16.msra.mxu0 0
        %5062 = vmatprep.subr.bf16.mxu0 0
        %5063 = vmatpush1.bf16.msra.mxu0 0
        %5064 = vmatprep.subr.bf16.mxu0 0
        %5065 = vmatpush1.bf16.msra.mxu0 0
        %5066 = vmatprep.subr.bf16.mxu0 0
        %5067 = vmatpush1.bf16.msra.mxu0 0
        %5068 = vmatprep.subr.bf16.mxu0 0
        %5069 = vmatpush1.bf16.msra.mxu0 0
        %5070 = vmatprep.subr.bf16.mxu0 0
        %5071 = vmatpush1.bf16.msra.mxu0 0
        %5072 = vmatprep.subr.bf16.mxu0 0
        %5073 = vmatpush1.bf16.msra.mxu0 0
        %5074 = vmatprep.subr.bf16.mxu0 0
        %5075 = vmatpush1.bf16.msra.mxu0 0
        %5076 = vmatprep.subr.bf16.mxu0 0
        %5077 = vmatpush1.bf16.msra.mxu0 0
        %5078 = vmatprep.subr.bf16.mxu0 0
        %5079 = vmatpush1.bf16.msra.mxu0 0
        %5080 = vmatprep.subr.bf16.mxu0 0
        %5081 = vmatpush1.bf16.msra.mxu0 0
        %5082 = vmatprep.subr.bf16.mxu0 0
        %5083 = vmatpush1.bf16.msra.mxu0 0
        %5084 = vmatprep.subr.bf16.mxu0 0
        %5085 = vmatpush1.bf16.msra.mxu0 0
        %5086 = vmatprep.subr.bf16.mxu0 0
        %5087 = vmatpush1.bf16.msra.mxu0 0
        %5088 = vmatprep.subr.bf16.mxu0 0
        %5089 = vmatpush1.bf16.msra.mxu0 0
        %5090 = vmatprep.mubr.bf16.mxu0 0
        %5091 = vmatmul.mubr.bf16.gmra.mrb[0].mxu0 %v5053
        %v5092 = vpop.f32.mrb[0].mxu0
        %v5093 = vadd.f32 0.0, %v5092
        %v5094 = vpop.f32.mrb[0].mxu0
        %v5095 = vpop.f32.mrb[0].mxu0
        %v5096 = vpop.f32.mrb[0].mxu0
        %5097 = vdwg.mxu0
        %v5098 = vpack.c.bf16 %v5093, %v5047
        %v5099 = vld [vmem:[%s2656] sm:$0xf]
        %v5101 = vsel %vm1130, %v5098, 0
        %v5104 = vsel %vm1250, %v5099, 0
        %5106 = vmatprep.subr.bf16.mxu0 0
        %5107 = vmatpush1.bf16.msra.mxu0 %v5104
        %5108 = vmatprep.subr.bf16.mxu0 0
        %5109 = vmatpush1.bf16.msra.mxu0 0
        %5110 = vmatprep.subr.bf16.mxu0 0
        %5111 = vmatpush1.bf16.msra.mxu0 0
        %5112 = vmatprep.subr.bf16.mxu0 0
        %5113 = vmatpush1.bf16.msra.mxu0 0
        %5114 = vmatprep.subr.bf16.mxu0 0
        %5115 = vmatpush1.bf16.msra.mxu0 0
        %5116 = vmatprep.subr.bf16.mxu0 0
        %5117 = vmatpush1.bf16.msra.mxu0 0
        %5118 = vmatprep.subr.bf16.mxu0 0
        %5119 = vmatpush1.bf16.msra.mxu0 0
        %5120 = vmatprep.subr.bf16.mxu0 0
        %5121 = vmatpush1.bf16.msra.mxu0 0
        %5122 = vmatprep.subr.bf16.mxu0 0
        %5123 = vmatpush1.bf16.msra.mxu0 0
        %5124 = vmatprep.subr.bf16.mxu0 0
        %5125 = vmatpush1.bf16.msra.mxu0 0
        %5126 = vmatprep.subr.bf16.mxu0 0
        %5127 = vmatpush1.bf16.msra.mxu0 0
        %5128 = vmatprep.subr.bf16.mxu0 0
        %5129 = vmatpush1.bf16.msra.mxu0 0
        %5130 = vmatprep.subr.bf16.mxu0 0
        %5131 = vmatpush1.bf16.msra.mxu0 0
        %5132 = vmatprep.subr.bf16.mxu0 0
        %5133 = vmatpush1.bf16.msra.mxu0 0
        %5134 = vmatprep.subr.bf16.mxu0 0
        %5135 = vmatpush1.bf16.msra.mxu0 0
        %5136 = vmatprep.subr.bf16.mxu0 0
        %5137 = vmatpush1.bf16.msra.mxu0 0
        %5138 = vmatprep.mubr.bf16.mxu0 0
        %5139 = vmatmul.mubr.bf16.gmra.mrb[0].mxu0 %v5101
        %v5140 = vpop.f32.mrb[0].mxu0
        %v5141 = vadd.f32 0.0, %v5140
        %v5142 = vpop.f32.mrb[0].mxu0
        %v5143 = vpop.f32.mrb[0].mxu0
        %v5144 = vadd.f32 0.0, %v5143
        %v5145 = vpop.f32.mrb[0].mxu0
        %5146 = vdwg.mxu0
        %v5147 = vadd.f32 %v4711, %v5141
        %v5148 = vadd.f32 %v4712, %v5144
        %v5149 = vadd.f32 %v3293, %v5147
        %v5150 = vadd.f32 %v3294, %v5148
        %v5151 = vsel %vm762, %v5149, 0.0
        %5152 = vadd.xlane.f32.xlu0 %v5151
        %v5153 = vpop.xlane.xlu0 %5152
        %v5154 = vsel %vm762, %v5150, 0.0
        %5155 = vadd.xlane.f32.xlu0 %v5154
        %v5156 = vpop.xlane.xlu0 %5155
        %v5157 = vmul.f32 %v5153, %v897
        %v5158 = vmul.f32 %v5156, %v897
        %v5159 = vsub.f32 %v5149, %v5157
        %v5160 = vsub.f32 %v5150, %v5158
        %v5161 = vmul.f32 %v5159, %v5159
        %v5162 = vmul.f32 %v5160, %v5160
        %v5163 = vsel %vm762, %v5161, 0.0
        %5164 = vadd.xlane.f32.xlu0 %v5163
        %v5165 = vpop.xlane.xlu0 %5164
        %v5166 = vsel %vm762, %v5162, 0.0
        %5167 = vadd.xlane.f32.xlu0 %v5166
        %v5168 = vpop.xlane.xlu0 %5167
        %v5169 = vmul.f32 %v5165, %v910
        %v5170 = vmul.f32 %v5168, %v910
        %v5171 = vrsqrt.pop %v5169
        %v5172 = vmul.f32 %v5169, %v5171
        %vm5173 = vcmp.eq.f32.partialorder %v5169, inf
        %v5174 = vsel %vm5173, %v5169, %v5172
        %vm5175 = vcmp.eq.f32.partialorder %v5169, 0.0
        %v5176 = vand.u32 %v5169, 2147483648
        %v5177 = vsel %vm5175, %v5176, %v5174
        %v5178 = vrsqrt.pop %v5170
        %v5179 = vmul.f32 %v5170, %v5178
        %vm5180 = vcmp.eq.f32.partialorder %v5170, inf
        %v5181 = vsel %vm5180, %v5170, %v5179
        %vm5182 = vcmp.eq.f32.partialorder %v5170, 0.0
        %v5183 = vand.u32 %v5170, 2147483648
        %v5184 = vsel %vm5182, %v5183, %v5181
        %v5185 = vadd.f32 %v5177, 1e-06
        %v5186 = vadd.f32 %v5184, 1e-06
        %v5187 = vrcp.pop %v5185
        %v5188 = vrcp.pop %v5186
        %v5189 = vmul.f32 %v2751, %v5159
        %v5190 = vmul.f32 %v2751, %v5160
        %v5191 = vmul.f32 %v5189, %v5187
        %v5192 = vmul.f32 %v5190, %v5188
        %v5193 = vadd.f32 %v5191, %v2761
        %v5194 = vadd.f32 %v5192, %v2761
        %v5195 = vrot.slane %v5193, 7
        %v5196 = vrot.slane %v5194, 7
        %v5197 = vsel %vm2769, %v5195, %v5196
        %v5198 = vsel %vm2769, %v5196, %v5195
        %v5199 = vmul.f32 %v5198, %v2775
        %v5200 = vmul.f32 %v5197, %v2780
        %v5201 = vrot.slane %v5193, 1
        %v5202 = vrot.slane %v5194, 1
        %v5203 = vsel %vm2786, %v5201, %v5202
        %v5204 = vsel %vm2786, %v5202, %v5201
        %v5205 = vmul.f32 %v5203, %v2792
        %v5206 = vmul.f32 %v5204, %v2797
        %v5207 = vpack.c.bf16 %v5194, %v5193
        %v5208 = vld [vmem:[%s2802] sm:$0xf]
        %v5209 = vld [vmem:[%s2802 + $0x4] sm:$0xf]
        %v5210 = vld [vmem:[%s2802 + $0x8] sm:$0xf]
        %v5211 = vld [vmem:[%s2802 + $0xc] sm:$0xf]
        %v5212 = vpack.c.bf16 %v5200, %v5199
        %v5213 = vld [vmem:[%s14] sm:$0xf]
        %v5214 = vld [vmem:[%s14 + $0x4] sm:$0xf]
        %v5215 = vld [vmem:[%s14 + $0x8] sm:$0xf]
        %v5216 = vld [vmem:[%s14 + $0xc] sm:$0xf]
        %v5221 = vunpack.c.l.b16 %v5213
        %v5222 = vunpack.c.l.b16 %v5214
        %v5223 = vunpack.c.l.b16 %v5215
        %v5224 = vunpack.c.l.b16 %v5216
        %v5225 = vpack.c.b16 %v5222, %v5221
        %v5226 = vpack.c.b16 %v5224, %v5223
        %v5230 = vsel %vm762, %v5212, 0
        %5232 = vmatprep.subr.bf16.mxu0 0
        %5233 = vmatpush1.bf16.msra.mxu0 %v5225
        %5234 = vmatprep.subr.bf16.mxu0 0
        %5235 = vmatpush1.bf16.msra.mxu0 %v5226
        %5236 = vmatprep.subr.bf16.mxu0 0
        %5237 = vmatpush1.bf16.msra.mxu0 0
        %5238 = vmatprep.subr.bf16.mxu0 0
        %5239 = vmatpush1.bf16.msra.mxu0 0
        %5240 = vmatprep.subr.bf16.mxu0 0
        %5241 = vmatpush1.bf16.msra.mxu0 0
        %5242 = vmatprep.subr.bf16.mxu0 0
        %5243 = vmatpush1.bf16.msra.mxu0 0
        %5244 = vmatprep.subr.bf16.mxu0 0
        %5245 = vmatpush1.bf16.msra.mxu0 0
        %5246 = vmatprep.subr.bf16.mxu0 0
        %5247 = vmatpush1.bf16.msra.mxu0 0
        %5248 = vmatprep.subr.bf16.mxu0 0
        %5249 = vmatpush1.bf16.msra.mxu0 0
        %5250 = vmatprep.subr.bf16.mxu0 0
        %5251 = vmatpush1.bf16.msra.mxu0 0
        %5252 = vmatprep.subr.bf16.mxu0 0
        %5253 = vmatpush1.bf16.msra.mxu0 0
        %5254 = vmatprep.subr.bf16.mxu0 0
        %5255 = vmatpush1.bf16.msra.mxu0 0
        %5256 = vmatprep.subr.bf16.mxu0 0
        %5257 = vmatpush1.bf16.msra.mxu0 0
        %5258 = vmatprep.subr.bf16.mxu0 0
        %5259 = vmatpush1.bf16.msra.mxu0 0
        %5260 = vmatprep.subr.bf16.mxu0 0
        %5261 = vmatpush1.bf16.msra.mxu0 0
        %5262 = vmatprep.subr.bf16.mxu0 0
        %5263 = vmatpush1.bf16.msra.mxu0 0
        %5264 = vmatprep.mubr.bf16.mxu0 0
        %5265 = vmatmul.mubr.bf16.gmra.mrb[0].mxu0 %v5230
        %v5266 = vpop.f32.mrb[0].mxu0
        %v5267 = vadd.f32 0.0, %v5266
        %v5268 = vpop.f32.mrb[0].mxu0
        %v5269 = vpop.f32.mrb[0].mxu0
        %v5270 = vadd.f32 0.0, %v5269
        %v5271 = vpop.f32.mrb[0].mxu0
        %5272 = vdwg.mxu0
        %v5277 = vunpack.c.l.b16 %v5208
        %v5278 = vunpack.c.l.b16 %v5209
        %v5279 = vunpack.c.l.b16 %v5210
        %v5280 = vunpack.c.l.b16 %v5211
        %v5281 = vpack.c.b16 %v5278, %v5277
        %v5282 = vpack.c.b16 %v5280, %v5279
        %v5286 = vsel %vm762, %v5207, 0
        %5288 = vmatprep.subr.bf16.mxu0 0
        %5289 = vmatpush1.bf16.msra.mxu0 %v5281
        %5290 = vmatprep.subr.bf16.mxu0 0
        %5291 = vmatpush1.bf16.msra.mxu0 %v5282
        %5292 = vmatprep.subr.bf16.mxu0 0
        %5293 = vmatpush1.bf16.msra.mxu0 0
        %5294 = vmatprep.subr.bf16.mxu0 0
        %5295 = vmatpush1.bf16.msra.mxu0 0
        %5296 = vmatprep.subr.bf16.mxu0 0
        %5297 = vmatpush1.bf16.msra.mxu0 0
        %5298 = vmatprep.subr.bf16.mxu0 0
        %5299 = vmatpush1.bf16.msra.mxu0 0
        %5300 = vmatprep.subr.bf16.mxu0 0
        %5301 = vmatpush1.bf16.msra.mxu0 0
        %5302 = vmatprep.subr.bf16.mxu0 0
        %5303 = vmatpush1.bf16.msra.mxu0 0
        %5304 = vmatprep.subr.bf16.mxu0 0
        %5305 = vmatpush1.bf16.msra.mxu0 0
        %5306 = vmatprep.subr.bf16.mxu0 0
        %5307 = vmatpush1.bf16.msra.mxu0 0
        %5308 = vmatprep.subr.bf16.mxu0 0
        %5309 = vmatpush1.bf16.msra.mxu0 0
        %5310 = vmatprep.subr.bf16.mxu0 0
        %5311 = vmatpush1.bf16.msra.mxu0 0
        %5312 = vmatprep.subr.bf16.mxu0 0
        %5313 = vmatpush1.bf16.msra.mxu0 0
        %5314 = vmatprep.subr.bf16.mxu0 0
        %5315 = vmatpush1.bf16.msra.mxu0 0
        %5316 = vmatprep.subr.bf16.mxu0 0
        %5317 = vmatpush1.bf16.msra.mxu0 0
        %5318 = vmatprep.subr.bf16.mxu0 0
        %5319 = vmatpush1.bf16.msra.mxu0 0
        %5320 = vmatprep.mubr.bf16.mxu0 0
        %5321 = vmatmul.mubr.bf16.gmra.mrb[0].mxu0 %v5286
        %v5322 = vpop.f32.mrb[0].mxu0
        %v5323 = vadd.f32 %v5267, %v5322
        %v5324 = vpop.f32.mrb[0].mxu0
        %v5325 = vpop.f32.mrb[0].mxu0
        %v5326 = vadd.f32 %v5270, %v5325
        %v5327 = vpop.f32.mrb[0].mxu0
        %5328 = vdwg.mxu0
        %v5329 = vpack.c.bf16 %v5206, %v5205
        %v5330 = vld [vmem:[%s2925] sm:$0xf]
        %v5331 = vld [vmem:[%s2925 + $0x4] sm:$0xf]
        %v5332 = vld [vmem:[%s2925 + $0x8] sm:$0xf]
        %v5333 = vld [vmem:[%s2925 + $0xc] sm:$0xf]
        %v5338 = vunpack.c.l.b16 %v5330
        %v5339 = vunpack.c.l.b16 %v5331
        %v5340 = vunpack.c.l.b16 %v5332
        %v5341 = vunpack.c.l.b16 %v5333
        %v5342 = vpack.c.b16 %v5339, %v5338
        %v5343 = vpack.c.b16 %v5341, %v5340
        %v5347 = vsel %vm762, %v5329, 0
        %5349 = vmatprep.subr.bf16.mxu0 0
        %5350 = vmatpush1.bf16.msra.mxu0 %v5342
        %5351 = vmatprep.subr.bf16.mxu0 0
        %5352 = vmatpush1.bf16.msra.mxu0 %v5343
        %5353 = vmatprep.subr.bf16.mxu0 0
        %5354 = vmatpush1.bf16.msra.mxu0 0
        %5355 = vmatprep.subr.bf16.mxu0 0
        %5356 = vmatpush1.bf16.msra.mxu0 0
        %5357 = vmatprep.subr.bf16.mxu0 0
        %5358 = vmatpush1.bf16.msra.mxu0 0
        %5359 = vmatprep.subr.bf16.mxu0 0
        %5360 = vmatpush1.bf16.msra.mxu0 0
        %5361 = vmatprep.subr.bf16.mxu0 0
        %5362 = vmatpush1.bf16.msra.mxu0 0
        %5363 = vmatprep.subr.bf16.mxu0 0
        %5364 = vmatpush1.bf16.msra.mxu0 0
        %5365 = vmatprep.subr.bf16.mxu0 0
        %5366 = vmatpush1.bf16.msra.mxu0 0
        %5367 = vmatprep.subr.bf16.mxu0 0
        %5368 = vmatpush1.bf16.msra.mxu0 0
        %5369 = vmatprep.subr.bf16.mxu0 0
        %5370 = vmatpush1.bf16.msra.mxu0 0
        %5371 = vmatprep.subr.bf16.mxu0 0
        %5372 = vmatpush1.bf16.msra.mxu0 0
        %5373 = vmatprep.subr.bf16.mxu0 0
        %5374 = vmatpush1.bf16.msra.mxu0 0
        %5375 = vmatprep.subr.bf16.mxu0 0
        %5376 = vmatpush1.bf16.msra.mxu0 0
        %5377 = vmatprep.subr.bf16.mxu0 0
        %5378 = vmatpush1.bf16.msra.mxu0 0
        %5379 = vmatprep.subr.bf16.mxu0 0
        %5380 = vmatpush1.bf16.msra.mxu0 0
        %5381 = vmatprep.mubr.bf16.mxu0 0
        %5382 = vmatmul.mubr.bf16.gmra.mrb[0].mxu0 %v5347
        %v5383 = vpop.f32.mrb[0].mxu0
        %v5384 = vadd.f32 0.0, %v5383
        %v5385 = vpop.f32.mrb[0].mxu0
        %v5386 = vpop.f32.mrb[0].mxu0
        %v5387 = vadd.f32 0.0, %v5386
        %v5388 = vpop.f32.mrb[0].mxu0
        %5389 = vdwg.mxu0
        %v5390 = vadd.f32 %v5323, %v5384
        %v5391 = vadd.f32 %v5326, %v5387
        %v5392 = vadd.f32 %v5390, %v2992
        %v5393 = vadd.f32 %v5391, %v2992
        %v5394 = vmax.f32 %v5392, 0.0
        %v5395 = vmax.f32 %v5393, 0.0
        %v5396 = vrot.slane %v5394, 7
        %v5397 = vrot.slane %v5395, 7
        %v5398 = vsel %vm2769, %v5396, %v5397
        %v5399 = vsel %vm2769, %v5397, %v5396
        %v5400 = vmul.f32 %v5399, %v2775
        %v5401 = vmul.f32 %v5398, %v2780
        %v5402 = vrot.slane %v5394, 1
        %v5403 = vrot.slane %v5395, 1
        %v5404 = vsel %vm2786, %v5402, %v5403
        %v5405 = vsel %vm2786, %v5403, %v5402
        %v5406 = vmul.f32 %v5404, %v2792
        %v5407 = vmul.f32 %v5405, %v2797
        %v5408 = vpack.c.bf16 %v5395, %v5394
        %v5409 = vld [vmem:[%s3011] sm:$0xf]
        %v5410 = vld [vmem:[%s3011 + $0x4] sm:$0xf]
        %v5411 = vld [vmem:[%s3011 + $0x8] sm:$0xf]
        %v5412 = vld [vmem:[%s3011 + $0xc] sm:$0xf]
        %v5413 = vld [vmem:[%s3011 + $0x10] sm:$0xf]
        %v5414 = vld [vmem:[%s3011 + $0x14] sm:$0xf]
        %v5415 = vld [vmem:[%s3011 + $0x18] sm:$0xf]
        %v5416 = vld [vmem:[%s3011 + $0x1c] sm:$0xf]
        %v5417 = vpack.c.bf16 %v5401, %v5400
        %v5418 = vld [vmem:[%s16] sm:$0xf]
        %v5419 = vld [vmem:[%s16 + $0x4] sm:$0xf]
        %v5420 = vld [vmem:[%s16 + $0x8] sm:$0xf]
        %v5421 = vld [vmem:[%s16 + $0xc] sm:$0xf]
        %v5422 = vld [vmem:[%s16 + $0x10] sm:$0xf]
        %v5423 = vld [vmem:[%s16 + $0x14] sm:$0xf]
        %v5424 = vld [vmem:[%s16 + $0x18] sm:$0xf]
        %v5425 = vld [vmem:[%s16 + $0x1c] sm:$0xf]
        %v5434 = vunpack.c.l.b16 %v5418
        %v5435 = vunpack.c.l.b16 %v5419
        %v5436 = vunpack.c.l.b16 %v5420
        %v5437 = vunpack.c.l.b16 %v5421
        %v5438 = vunpack.c.l.b16 %v5422
        %v5439 = vunpack.c.l.b16 %v5423
        %v5440 = vunpack.c.l.b16 %v5424
        %v5441 = vunpack.c.l.b16 %v5425
        %v5442 = vpack.c.b16 %v5435, %v5434
        %v5443 = vpack.c.b16 %v5437, %v5436
        %v5444 = vpack.c.b16 %v5439, %v5438
        %v5445 = vpack.c.b16 %v5441, %v5440
        %v5451 = vsel %vm3053, %v5417, 0
        %5453 = vmatprep.subr.bf16.mxu0 0
        %5454 = vmatpush1.bf16.msra.mxu0 %v5442
        %5455 = vmatprep.subr.bf16.mxu0 0
        %5456 = vmatpush1.bf16.msra.mxu0 %v5443
        %5457 = vmatprep.subr.bf16.mxu0 0
        %5458 = vmatpush1.bf16.msra.mxu0 %v5444
        %5459 = vmatprep.subr.bf16.mxu0 0
        %5460 = vmatpush1.bf16.msra.mxu0 %v5445
        %5461 = vmatprep.subr.bf16.mxu0 0
        %5462 = vmatpush1.bf16.msra.mxu0 0
        %5463 = vmatprep.subr.bf16.mxu0 0
        %5464 = vmatpush1.bf16.msra.mxu0 0
        %5465 = vmatprep.subr.bf16.mxu0 0
        %5466 = vmatpush1.bf16.msra.mxu0 0
        %5467 = vmatprep.subr.bf16.mxu0 0
        %5468 = vmatpush1.bf16.msra.mxu0 0
        %5469 = vmatprep.subr.bf16.mxu0 0
        %5470 = vmatpush1.bf16.msra.mxu0 0
        %5471 = vmatprep.subr.bf16.mxu0 0
        %5472 = vmatpush1.bf16.msra.mxu0 0
        %5473 = vmatprep.subr.bf16.mxu0 0
        %5474 = vmatpush1.bf16.msra.mxu0 0
        %5475 = vmatprep.subr.bf16.mxu0 0
        %5476 = vmatpush1.bf16.msra.mxu0 0
        %5477 = vmatprep.subr.bf16.mxu0 0
        %5478 = vmatpush1.bf16.msra.mxu0 0
        %5479 = vmatprep.subr.bf16.mxu0 0
        %5480 = vmatpush1.bf16.msra.mxu0 0
        %5481 = vmatprep.subr.bf16.mxu0 0
        %5482 = vmatpush1.bf16.msra.mxu0 0
        %5483 = vmatprep.subr.bf16.mxu0 0
        %5484 = vmatpush1.bf16.msra.mxu0 0
        %5485 = vmatprep.mubr.bf16.mxu0 0
        %5486 = vmatmul.mubr.bf16.gmra.mrb[0].mxu0 %v5451
        %v5487 = vpop.f32.mrb[0].mxu0
        %v5488 = vadd.f32 0.0, %v5487
        %v5489 = vpop.f32.mrb[0].mxu0
        %v5490 = vpop.f32.mrb[0].mxu0
        %v5491 = vadd.f32 0.0, %v5490
        %v5492 = vpop.f32.mrb[0].mxu0
        %5493 = vdwg.mxu0
        %v5502 = vunpack.c.l.b16 %v5409
        %v5503 = vunpack.c.l.b16 %v5410
        %v5504 = vunpack.c.l.b16 %v5411
        %v5505 = vunpack.c.l.b16 %v5412
        %v5506 = vunpack.c.l.b16 %v5413
        %v5507 = vunpack.c.l.b16 %v5414
        %v5508 = vunpack.c.l.b16 %v5415
        %v5509 = vunpack.c.l.b16 %v5416
        %v5510 = vpack.c.b16 %v5503, %v5502
        %v5511 = vpack.c.b16 %v5505, %v5504
        %v5512 = vpack.c.b16 %v5507, %v5506
        %v5513 = vpack.c.b16 %v5509, %v5508
        %v5519 = vsel %vm3053, %v5408, 0
        %5521 = vmatprep.subr.bf16.mxu0 0
        %5522 = vmatpush1.bf16.msra.mxu0 %v5510
        %5523 = vmatprep.subr.bf16.mxu0 0
        %5524 = vmatpush1.bf16.msra.mxu0 %v5511
        %5525 = vmatprep.subr.bf16.mxu0 0
        %5526 = vmatpush1.bf16.msra.mxu0 %v5512
        %5527 = vmatprep.subr.bf16.mxu0 0
        %5528 = vmatpush1.bf16.msra.mxu0 %v5513
        %5529 = vmatprep.subr.bf16.mxu0 0
        %5530 = vmatpush1.bf16.msra.mxu0 0
        %5531 = vmatprep.subr.bf16.mxu0 0
        %5532 = vmatpush1.bf16.msra.mxu0 0
        %5533 = vmatprep.subr.bf16.mxu0 0
        %5534 = vmatpush1.bf16.msra.mxu0 0
        %5535 = vmatprep.subr.bf16.mxu0 0
        %5536 = vmatpush1.bf16.msra.mxu0 0
        %5537 = vmatprep.subr.bf16.mxu0 0
        %5538 = vmatpush1.bf16.msra.mxu0 0
        %5539 = vmatprep.subr.bf16.mxu0 0
        %5540 = vmatpush1.bf16.msra.mxu0 0
        %5541 = vmatprep.subr.bf16.mxu0 0
        %5542 = vmatpush1.bf16.msra.mxu0 0
        %5543 = vmatprep.subr.bf16.mxu0 0
        %5544 = vmatpush1.bf16.msra.mxu0 0
        %5545 = vmatprep.subr.bf16.mxu0 0
        %5546 = vmatpush1.bf16.msra.mxu0 0
        %5547 = vmatprep.subr.bf16.mxu0 0
        %5548 = vmatpush1.bf16.msra.mxu0 0
        %5549 = vmatprep.subr.bf16.mxu0 0
        %5550 = vmatpush1.bf16.msra.mxu0 0
        %5551 = vmatprep.subr.bf16.mxu0 0
        %5552 = vmatpush1.bf16.msra.mxu0 0
        %5553 = vmatprep.mubr.bf16.mxu0 0
        %5554 = vmatmul.mubr.bf16.gmra.mrb[0].mxu0 %v5519
        %v5555 = vpop.f32.mrb[0].mxu0
        %v5556 = vadd.f32 %v5488, %v5555
        %v5557 = vpop.f32.mrb[0].mxu0
        %v5558 = vpop.f32.mrb[0].mxu0
        %v5559 = vadd.f32 %v5491, %v5558
        %v5560 = vpop.f32.mrb[0].mxu0
        %5561 = vdwg.mxu0
        %v5562 = vpack.c.bf16 %v5407, %v5406
        %v5563 = vld [vmem:[%s3167] sm:$0xf]
        %v5564 = vld [vmem:[%s3167 + $0x4] sm:$0xf]
        %v5565 = vld [vmem:[%s3167 + $0x8] sm:$0xf]
        %v5566 = vld [vmem:[%s3167 + $0xc] sm:$0xf]
        %v5567 = vld [vmem:[%s3167 + $0x10] sm:$0xf]
        %v5568 = vld [vmem:[%s3167 + $0x14] sm:$0xf]
        %v5569 = vld [vmem:[%s3167 + $0x18] sm:$0xf]
        %v5570 = vld [vmem:[%s3167 + $0x1c] sm:$0xf]
        %v5579 = vunpack.c.l.b16 %v5563
        %v5580 = vunpack.c.l.b16 %v5564
        %v5581 = vunpack.c.l.b16 %v5565
        %v5582 = vunpack.c.l.b16 %v5566
        %v5583 = vunpack.c.l.b16 %v5567
        %v5584 = vunpack.c.l.b16 %v5568
        %v5585 = vunpack.c.l.b16 %v5569
        %v5586 = vunpack.c.l.b16 %v5570
        %v5587 = vpack.c.b16 %v5580, %v5579
        %v5588 = vpack.c.b16 %v5582, %v5581
        %v5589 = vpack.c.b16 %v5584, %v5583
        %v5590 = vpack.c.b16 %v5586, %v5585
        %v5596 = vsel %vm3053, %v5562, 0
        %5598 = vmatprep.subr.bf16.mxu0 0
        %5599 = vmatpush1.bf16.msra.mxu0 %v5587
        %5600 = vmatprep.subr.bf16.mxu0 0
        %5601 = vmatpush1.bf16.msra.mxu0 %v5588
        %5602 = vmatprep.subr.bf16.mxu0 0
        %5603 = vmatpush1.bf16.msra.mxu0 %v5589
        %5604 = vmatprep.subr.bf16.mxu0 0
        %5605 = vmatpush1.bf16.msra.mxu0 %v5590
        %5606 = vmatprep.subr.bf16.mxu0 0
        %5607 = vmatpush1.bf16.msra.mxu0 0
        %5608 = vmatprep.subr.bf16.mxu0 0
        %5609 = vmatpush1.bf16.msra.mxu0 0
        %5610 = vmatprep.subr.bf16.mxu0 0
        %5611 = vmatpush1.bf16.msra.mxu0 0
        %5612 = vmatprep.subr.bf16.mxu0 0
        %5613 = vmatpush1.bf16.msra.mxu0 0
        %5614 = vmatprep.subr.bf16.mxu0 0
        %5615 = vmatpush1.bf16.msra.mxu0 0
        %5616 = vmatprep.subr.bf16.mxu0 0
        %5617 = vmatpush1.bf16.msra.mxu0 0
        %5618 = vmatprep.subr.bf16.mxu0 0
        %5619 = vmatpush1.bf16.msra.mxu0 0
        %5620 = vmatprep.subr.bf16.mxu0 0
        %5621 = vmatpush1.bf16.msra.mxu0 0
        %5622 = vmatprep.subr.bf16.mxu0 0
        %5623 = vmatpush1.bf16.msra.mxu0 0
        %5624 = vmatprep.subr.bf16.mxu0 0
        %5625 = vmatpush1.bf16.msra.mxu0 0
        %5626 = vmatprep.subr.bf16.mxu0 0
        %5627 = vmatpush1.bf16.msra.mxu0 0
        %5628 = vmatprep.subr.bf16.mxu0 0
        %5629 = vmatpush1.bf16.msra.mxu0 0
        %5630 = vmatprep.mubr.bf16.mxu0 0
        %5631 = vmatmul.mubr.bf16.gmra.mrb[0].mxu0 %v5596
        %v5632 = vpop.f32.mrb[0].mxu0
        %v5633 = vadd.f32 0.0, %v5632
        %v5634 = vpop.f32.mrb[0].mxu0
        %v5635 = vpop.f32.mrb[0].mxu0
        %v5636 = vadd.f32 0.0, %v5635
        %v5637 = vpop.f32.mrb[0].mxu0
        %5638 = vdwg.mxu0
        %v5639 = vadd.f32 %v5556, %v5633
        %v5640 = vadd.f32 %v5559, %v5636
        %v5641 = vadd.f32 %v5639, %v3250
        %v5642 = vadd.f32 %v5640, %v3250
        %v5643 = vmax.f32 %v5641, 0.0
        %v5644 = vmax.f32 %v5642, 0.0
        %v5645 = vadd.f32 %v5149, %v5643
        %v5646 = vadd.f32 %v5150, %v5644
        %5648 = vset.pattern.permute.xlu0 0
        %5649 = vperm.xlu0 %5648, %v3359
        %v5650 = vpop.permute.xlu0 %5649
        %5653 = vset.pattern.permute.xlu0 0
        %5654 = vperm.xlu0 %5653, %v3360
        %v5655 = vpop.permute.xlu0 %5654
        %v5657 = vmul.f32 %v5645, %v5650
        %v5658 = vmul.f32 %v5646, %v5655
        %v5659 = vsub.f32 1.0, %v3359
        %v5660 = vsub.f32 1.0, %v3360
        %5662 = vset.pattern.permute.xlu0 0
        %5663 = vperm.xlu0 %5662, %v5659
        %v5664 = vpop.permute.xlu0 %5663
        %5667 = vset.pattern.permute.xlu0 0
        %5668 = vperm.xlu0 %5667, %v5660
        %v5669 = vpop.permute.xlu0 %5668
        %v5671 = vmul.f32 %v3284, %v5664
        %v5672 = vmul.f32 %v3285, %v5669
        %v5673 = vadd.f32 %v5657, %v5671
        %v5674 = vadd.f32 %v5658, %v5672
        %v5675 = vld [vmem:[%s20] sm:$0x1]
        %v5676 = vld [vmem:[%s21] sm:$0x1]
        %v5677 = vsel %vm762, %v5673, 0.0
        %5678 = vadd.xlane.f32.xlu0 %v5677
        %v5679 = vpop.xlane.xlu0 %5678
        %v5680 = vsel %vm762, %v5674, 0.0
        %5681 = vadd.xlane.f32.xlu0 %v5680
        %v5682 = vpop.xlane.xlu0 %5681
        %v5683 = vmul.f32 %v5679, %v897
        %v5684 = vmul.f32 %v5682, %v897
        %v5685 = vsub.f32 %v5673, %v5683
        %v5686 = vsub.f32 %v5674, %v5684
        %v5687 = vmul.f32 %v5685, %v5685
        %v5688 = vmul.f32 %v5686, %v5686
        %v5689 = vsel %vm762, %v5687, 0.0
        %5690 = vadd.xlane.f32.xlu0 %v5689
        %v5691 = vpop.xlane.xlu0 %5690
        %v5692 = vsel %vm762, %v5688, 0.0
        %5693 = vadd.xlane.f32.xlu0 %v5692
        %v5694 = vpop.xlane.xlu0 %5693
        %v5695 = vmul.f32 %v5691, %v910
        %v5696 = vmul.f32 %v5694, %v910
        %v5697 = vrsqrt.pop %v5695
        %v5698 = vmul.f32 %v5695, %v5697
        %vm5699 = vcmp.eq.f32.partialorder %v5695, inf
        %v5700 = vsel %vm5699, %v5695, %v5698
        %vm5701 = vcmp.eq.f32.partialorder %v5695, 0.0
        %v5702 = vand.u32 %v5695, 2147483648
        %v5703 = vsel %vm5701, %v5702, %v5700
        %v5704 = vrsqrt.pop %v5696
        %v5705 = vmul.f32 %v5696, %v5704
        %vm5706 = vcmp.eq.f32.partialorder %v5696, inf
        %v5707 = vsel %vm5706, %v5696, %v5705
        %vm5708 = vcmp.eq.f32.partialorder %v5696, 0.0
        %v5709 = vand.u32 %v5696, 2147483648
        %v5710 = vsel %vm5708, %v5709, %v5707
        %v5711 = vadd.f32 %v5703, 1e-06
        %v5712 = vadd.f32 %v5710, 1e-06
        %v5713 = vrcp.pop %v5711
        %v5714 = vrcp.pop %v5712
        %v5716 = vlaneseq
        %v5717 = vshrl.u32 %v5716, 7
        %v5718 = vsub.s32 0, %v5717
        %v5719 = vrot.slane %v5675, %v5718
        %v5721 = vmul.f32 %v5719, %v5685
        %v5722 = vmul.f32 %v5719, %v5686
        %v5723 = vmul.f32 %v5721, %v5713
        %v5724 = vmul.f32 %v5722, %v5714
        %v5726 = vlaneseq
        %v5727 = vshrl.u32 %v5726, 7
        %v5728 = vsub.s32 0, %v5727
        %v5729 = vrot.slane %v5676, %v5728
        %v5731 = vadd.f32 %v5723, %v5729
        %v5732 = vadd.f32 %v5724, %v5729
        %5733 = vst.msk [vmem:[%s707] sm:$0xff] %vm762, %v5731
        %5734 = vst.msk [vmem:[%s707 + $0x8] sm:$0xff] %vm762, %v5732
        %vm5735 = vcmask 7168
        %5736 = vst.msk [vmem:[%s726] sm:$0xff] %vm5735, %v3351
        %5737 = vst.msk [vmem:[%s726 + $0x8] sm:$0xff] %vm5735, %v3352
        %5740 = vrot.lane.b32.xlu0 %v3355, 1
        %v5741 = vpop.permute.xlu0 %5740
        %5742 = vrot.lane.b32.xlu0 %v3356, 1
        %v5743 = vpop.permute.xlu0 %5742
        %vm5746 = vcmask 15368
        %5747 = vst.msk [vmem:[%s726] sm:$0xff] %vm5746, %v5741
        %5748 = vst.msk [vmem:[%s726 + $0x8] sm:$0xff] %vm5746, %v5743
        %s5749 = sand.u32 %s515, 1
        %s5750 = scalar_lea.sflag [#allocation4], %s5749
        %s5751 = sand.u32 %s515, 1
        %s5752 = smul.addr %s5751, 16
        %s5753 = scalar_lea.vmem [#allocation3], %s5752
        %s5754 = smul.u32 2, %s40
        %p5755 = scmp.lt.s32.totalorder %s5754, 3
        %s5756 = scalar_select %p5755, %s5754, 3
        %s5757 = smul.addr %s5756, 8
        %s5758 = scalar_lea.vmem %s23, %s5757
        // Predicated region
        $region109: #{tpu_custom_call.1} parent=107 // pred_check
          %p5759 = pneg %p525
        $region110: #{tpu_custom_call.1} parent=107 // pred_check_branch
          %5761 = sbr.rel (%p5759) target = $region112
        $region111: #{tpu_custom_call.1} parent=107 // pred_region
          %s5762 = smul.u32 2, %s40
          %s5764 = ssub.s32 256, 256
          %5765 = vsyncadd %s5750, %s5764
          %s5766 = smul.addr %s5762, 128
          %s5767 = scalar_lea.hbm %s22, %s5766
          %s5768 = sshll.u32 %s5753, 4
          %s5769 = int_to_ptr.vmem [resolvable:$true] %s5768
          %5774 = dma.vmem_to_hbm [thread:$0]  %s5769, 256, %s5767, %s5750, 128, 128, 8
        $region112: #{tpu_custom_call.1} parent=107 // pred_fallthru
          _
        // Predicated region
        $region113: #{tpu_custom_call.1} parent=107 // pred_check
          %p5775 = pneg %p551
        $region114: #{tpu_custom_call.1} parent=107 // pred_check_branch
          %5777 = sbr.rel (%p5775) target = $region116
        $region115: #{tpu_custom_call.1} parent=107 // pred_region
          %s5778 = smul.u32 2, %s40
        $region116: #{tpu_custom_call.1} parent=107 // pred_fallthru
          _
      $region108: #{tpu_custom_call.1} parent=5 // pred_fallthru
        _
      %p5779 = scmp.le.s32.totalorder 2, %s35
      // Predicated region
      $region117: #{tpu_custom_call.1} parent=5 // pred_check
        %p5780 = pneg %p5779
      $region118: #{tpu_custom_call.1} parent=5 // pred_check_branch
        %5782 = sbr.rel (%p5780) target = $region120
      $region119: #{tpu_custom_call.1} parent=5 // pred_region
        %s5783 = ssub.s32 %s35, 2
        // Predicated region
        $region121: #{tpu_custom_call.1} parent=119 // pred_check
          %p5784 = pneg %p531
        $region122: #{tpu_custom_call.1} parent=119 // pred_check_branch
          %5786 = sbr.rel (%p5784) target = $region124
        $region123: #{tpu_custom_call.1} parent=119 // pred_region
          %s5787 = sand.u32 %s516, 1
          %s5788 = scalar_lea.sflag [#allocation4], %s5787
          %s5789 = sand.u32 %s516, 1
          %s5790 = smul.addr %s5789, 16
          %s5791 = scalar_lea.vmem [#allocation3], %s5790
          %5792 = dma.done %s5788, 256
        $region124: #{tpu_custom_call.1} parent=119 // pred_fallthru
          _
        // Predicated region
        $region125: #{tpu_custom_call.1} parent=119 // pred_check
          %p5793 = pneg %p557
        $region126: #{tpu_custom_call.1} parent=119 // pred_check_branch
          %5795 = sbr.rel (%p5793) target = $region128
        $region127: #{tpu_custom_call.1} parent=119 // pred_region
          %s5796 = smul.u32 2, %s41
          %p5797 = scmp.lt.s32.totalorder %s5796, 3
          %s5798 = scalar_select %p5797, %s5796, 3
          %s5799 = smul.addr %s5798, 8
          %s5800 = scalar_lea.vmem %s23, %s5799
        $region128: #{tpu_custom_call.1} parent=119 // pred_fallthru
          _
      $region120: #{tpu_custom_call.1} parent=5 // pred_fallthru
        _
    $region6: #{tpu_custom_call.1} parent=1 // loop_footer
      %s39 = sadd.s32 1, %s35
    $region7: #{tpu_custom_call.1} parent=1 // loop_footer_branch
      %34 = sbr.rel target = $region3
    $region8: #{tpu_custom_call.1} parent=1 // loop_exit
      _
    %5801 = vsyncpa [#allocation4], 1
    %s5802 = scalar_lea.sflag [#allocation4], 1
    %5803 = vsyncpa %s5802, 1

</llo_original>
